<compile_context>
chip_gen: v7x
topology: tpu7x:2x2x1
jax: 0.10.0
libtpu: 0.0.40
codegen_flags: <defaults>
</compile_context>

<pallas_src>
import numpy as np

import jax
import jax.numpy as jnp
from jax.experimental import pallas as pl
from jax.experimental.pallas import tpu as pltpu

V = 17              # graph nodes
K = 3               # spatial kernel size (= A.shape[0])
C_HID = 64          # per-partition output channels of every st_gcn layer
KC = K * C_HID      # 192 real channels carried between layers
EPS = 1e-5
N_LAYERS = 5
B_BLK = 15          # real samples per grid step (255 rows)
B_OUT = 16          # output rows per grid step (padded to a multiple of 8)
ROWS = 256          # 255 real rows + 1 zero pad row -> full MXU M fill
NC_PAD = 128        # class dim padded to one full lane group
NROW_REAL = B_BLK * V   # 255

assert ROWS % 8 == 0 and ROWS >= NROW_REAL and B_OUT % 8 == 0 and B_OUT >= B_BLK


# ----------------------------------------------------------------------------
# Fused Pallas kernel: 5 st_gcn layers + avg_pool + fcn head (one grid step =
# one block of B_BLK samples, end-to-end, weights resident in VMEM)
# ----------------------------------------------------------------------------
def _fused_kernel(x_ref, w0_ref, b0_ref, abd_ref, wg_ref, bg_ref,
                  wr_ref, br_ref, wh_ref, bh_ref, sel_ref, o_ref):
    """
    x_ref  : (ROWS, C_in) f32      raw input rows (sample-major, node-minor, 1 pad row)
    w0_ref : (C_in, KC)   f32      layer-0 conv weight (data_bn folded)
    b0_ref : (1, KC)      f32
    abd_ref: (N_LAYERS, K, ROWS, ROWS) bf16  per-layer block-diag A^T (importance applied)
    wg_ref : (N_LAYERS-1, KC, KC) bf16       layers 1..4 gcn conv weights
    bg_ref : (N_LAYERS-1, 1, KC)  f32
    wr_ref : (N_LAYERS-1, KC, KC) bf16       residual conv weights (BN folded)
    br_ref : (N_LAYERS-1, 1, KC)  f32
    wh_ref : (KC, NC_PAD) bf16     avg_pool (/V^2) + fcn folded
    bh_ref : (1, NC_PAD)  f32
    sel_ref: (B_OUT, ROWS) bf16    per-sample node-sum selector
    o_ref  : (B_OUT, NC_PAD) f32
    """
    f32 = jnp.float32
    bf16 = jnp.bfloat16
    rows = x_ref.shape[0]
    cin = x_ref.shape[1]

    def spatial_mix(zb, li):
        # out[:, 64k:64k+64] = Abd_k @ z[:, 64k:64k+64]   (block-diag over samples)
        parts = []
        for k in range(K):
            zk = zb[:, k * C_HID:(k + 1) * C_HID]                 # (ROWS, 64) bf16
            parts.append(jnp.dot(abd_ref[li, k], zk,
                                 preferred_element_type=f32))     # (ROWS, 64) f32
        return jnp.concatenate(parts, axis=1)                     # (ROWS, KC) f32

    # ---- layer 0: 1x1 conv (tiny C_in) as VPU broadcast-FMAs, then mix + ReLU
    x0 = x_ref[...]                                               # (ROWS, C_in)
    xg = jnp.broadcast_to(b0_ref[...], (rows, KC))
    for ci in range(cin):                                         # static tiny loop
        xg = xg + x0[:, ci:ci + 1] * w0_ref[ci:ci + 1, :]
    x = jnp.maximum(spatial_mix(xg.astype(bf16), 0), 0.0)         # (ROWS, KC) f32

    # ---- layers 1..4: gcn conv, spatial mix, residual conv, add, ReLU
    for li in range(1, N_LAYERS):
        xb = x.astype(bf16)
        z = jnp.dot(xb, wg_ref[li - 1], preferred_element_type=f32) + bg_ref[li - 1]
        g = spatial_mix(z.astype(bf16), li)
        r = jnp.dot(xb, wr_ref[li - 1], preferred_element_type=f32) + br_ref[li - 1]
        x = jnp.maximum(g + r, 0.0)

    # ---- head: per-sample node sum on the MXU, then pool+fcn folded weight
    pooled = jnp.dot(sel_ref[...], x.astype(bf16),
                     preferred_element_type=f32)                  # (B_OUT, KC) f32
    o_ref[...] = (jnp.dot(pooled.astype(bf16), wh_ref[...],
                          preferred_element_type=f32)
                  + bh_ref[...]).astype(o_ref.dtype)


def _fused_call(x_flat, fp, n_blocks, cin):
    grid = (n_blocks,)
    in_specs = [
        pl.BlockSpec((ROWS, cin), lambda i: (i, 0)),
        pl.BlockSpec(fp["w0"].shape, lambda i: (0, 0)),
        pl.BlockSpec(fp["b0"].shape, lambda i: (0, 0)),
        pl.BlockSpec(fp["abd"].shape, lambda i: (0, 0, 0, 0)),
        pl.BlockSpec(fp["wg"].shape, lambda i: (0, 0, 0)),
        pl.BlockSpec(fp["bg"].shape, lambda i: (0, 0, 0)),
        pl.BlockSpec(fp["wr"].shape, lambda i: (0, 0, 0)),
        pl.BlockSpec(fp["br"].shape, lambda i: (0, 0, 0)),
        pl.BlockSpec(fp["wh"].shape, lambda i: (0, 0)),
        pl.BlockSpec(fp["bh"].shape, lambda i: (0, 0)),
        pl.BlockSpec(fp["sel"].shape, lambda i: (0, 0)),
    ]
    return pl.pallas_call(
        _fused_kernel,
        out_shape=jax.ShapeDtypeStruct((n_blocks * B_OUT, NC_PAD), jnp.float32),
        grid_spec=pltpu.PrefetchScalarGridSpec(
            num_scalar_prefetch=0,
            grid=grid,
            in_specs=in_specs,
            out_specs=pl.BlockSpec((B_OUT, NC_PAD), lambda i: (i, 0)),
        ),
        compiler_params=pltpu.CompilerParams(
            dimension_semantics=("parallel",),
            vmem_limit_bytes=16 * 1024 * 1024,
        ),
    )(x_flat, fp["w0"], fp["b0"], fp["abd"], fp["wg"], fp["bg"],
      fp["wr"], fp["br"], fp["wh"], fp["bh"], fp["sel"])


# ----------------------------------------------------------------------------
# One-time weight preparation (hoisted out of the jitted forward)
# ----------------------------------------------------------------------------
def prepare_params(p, num_class):
    f32 = jnp.float32
    bf16 = jnp.bfloat16

    # data_bn (eval mode) folded into the layer-0 1x1 conv
    s0 = p["bn_gamma"] / jnp.sqrt(p["bn_var"] + EPS)
    t0 = p["bn_beta"] - p["bn_mean"] * s0
    wg0 = p["layers"][0]["wg"]                               # (cin, KC)
    bg0 = p["layers"][0]["bg"]                               # (KC,)
    w0 = (wg0 * s0[:, None]).astype(f32)
    b0 = (bg0 + t0 @ wg0).reshape(1, KC).astype(f32)

    # per-layer, per-k block-diagonal A^T (edge importance applied), pad row/col
    eye_b = jnp.eye(B_BLK, dtype=f32)
    pad_r = ROWS - NROW_REAL
    abd_layers = []
    for li in range(N_LAYERS):
        a = p["A"] * p["importance"][li]
        ks = []
        for k in range(K):
            blk = jnp.kron(eye_b, a[k].T)                    # (255, 255)
            ks.append(jnp.pad(blk, ((0, pad_r), (0, pad_r))))
        abd_layers.append(jnp.stack(ks))
    abd = jnp.stack(abd_layers).astype(bf16)                 # (5, 3, ROWS, ROWS)

    # layers 1..4 conv weights (residual BN folded)
    wg_l, bg_l, wr_l, br_l = [], [], [], []
    for li in range(1, N_LAYERS):
        lp = p["layers"][li]
        sres = lp["r_gamma"] / jnp.sqrt(lp["r_var"] + EPS)
        tres = lp["r_beta"] - lp["r_mean"] * sres
        wg_l.append(lp["wg"])
        bg_l.append(lp["bg"].reshape(1, KC))
        wr_l.append(lp["wr"] * sres[None, :])
        br_l.append((lp["br"] * sres + tres).reshape(1, KC))
    wg = jnp.stack(wg_l).astype(bf16)                        # (4, KC, KC)
    bg = jnp.stack(bg_l).astype(f32)                         # (4, 1, KC)
    wr = jnp.stack(wr_l).astype(bf16)
    br = jnp.stack(br_l).astype(f32)

    # head: avg_pool2d (V-wide channel windows x all V nodes, /V^2, last
    # 192 - 11*17 = 5 channels dropped) folded with the fcn 1x1 Conv1d,
    # class dim zero-padded to NC_PAD for lane-dense stores.
    nh = KC // V                                             # 11
    c_idx = jnp.arange(nh * V)
    wh_real = p["fcn_w"].T[c_idx // V, :] / float(V * V)     # (187, num_class)
    wh = jnp.zeros((KC, NC_PAD), f32).at[:nh * V, :num_class].set(wh_real)
    wh = wh.astype(bf16)
    bh = jnp.zeros((1, NC_PAD), f32).at[0, :num_class].set(p["fcn_b"])

    # per-sample node-sum selector (row 15 / pad columns are zero)
    sel = jnp.kron(eye_b, jnp.ones((1, V), f32))             # (15, 255)
    sel = jnp.pad(sel, ((0, B_OUT - B_BLK), (0, pad_r))).astype(bf16)

    return {"w0": w0, "b0": b0, "abd": abd, "wg": wg, "bg": bg,
            "wr": wr, "br": br, "wh": wh, "bh": bh, "sel": sel}


# ----------------------------------------------------------------------------
# Model forward (Pallas) and pure-JAX reference
# ----------------------------------------------------------------------------
def pallas_forward(x_nvc, fp, num_class):
    """x_nvc: (N, V, C_in) -> logits (N, num_class, 1)."""
    n, v, cin = x_nvc.shape
    assert v == V
    n_blocks = -(-n // B_BLK)
    n_pad = n_blocks * B_BLK

    x = x_nvc.astype(jnp.float32)
    if n_pad != n:
        x = jnp.concatenate([x, jnp.zeros((n_pad - n, V, cin), jnp.float32)], axis=0)
    x = x.reshape(n_blocks, NROW_REAL, cin)
    if ROWS != NROW_REAL:                                    # 1 zero pad row per block
        x = jnp.concatenate(
            [x, jnp.zeros((n_blocks, ROWS - NROW_REAL, cin), jnp.float32)], axis=1)
    x_flat = x.reshape(n_blocks * ROWS, cin)

    out = _fused_call(x_flat, fp, n_blocks, cin)             # (n_blocks*B_OUT, NC_PAD)
    out = out.reshape(n_blocks, B_OUT, NC_PAD)[:, :B_BLK, :num_class]
    out = out.reshape(n_pad, num_class)[:n]
    return out[:, :, None]                                   # (N, num_class, 1)


def reference_forward(x_nvc, p):
    """Pure-JAX f32 mirror of the PyTorch forward (NCV layout)."""
    x = jnp.transpose(x_nvc, (0, 2, 1))                      # (N, C, V)
    s0 = p["bn_gamma"] / jnp.sqrt(p["bn_var"] + EPS)
    t0 = p["bn_beta"] - p["bn_mean"] * s0
    x = x * s0[None, :, None] + t0[None, :, None]
    for li in range(N_LAYERS):
        lp = p["layers"][li]
        a = p["A"] * p["importance"][li]
        z = jnp.einsum("co,ncv->nov", lp["wg"], x) + lp["bg"][None, :, None]
        nb = z.shape[0]
        zk = z.reshape(nb, K, C_HID, V)
        g = jnp.einsum("nkcv,kvw->nkcw", zk, a).reshape(nb, KC, V)
        if li == 0:
            r = 0.0
        else:
            r = jnp.einsum("co,ncv->nov", lp["wr"], x) + lp["br"][None, :, None]
            sres = lp["r_gamma"] / jnp.sqrt(lp["r_var"] + EPS)
            tres = lp["r_beta"] - lp["r_mean"] * sres
            r = r * sres[None, :, None] + tres[None, :, None]
        x = jax.nn.relu(g + r)
    nb, c, v = x.shape
    nh = c // v
    pooled = x[:, :nh * v, :].reshape(nb, nh, v, v).mean(axis=(2, 3))   # (N, 11)
    logits = pooled @ p["fcn_w"].T + p["fcn_b"]
    return logits[:, :, None]


# ----------------------------------------------------------------------------
# Deterministic parameter init (synthetic; no checkpoint)
# ----------------------------------------------------------------------------
def init_params(key, in_channels, num_class):
    keys = iter(jax.random.split(key, 64))

    def nrm(shape, scale=0.1):
        return scale * jax.random.normal(next(keys), shape, jnp.float32)

    p = {}
    p["A"] = jax.random.uniform(next(keys), (K, V, V), jnp.float32, 0.0, 0.3)
    p["importance"] = [jnp.ones((K, V, V), jnp.float32) for _ in range(N_LAYERS)]
    p["bn_gamma"] = 1.0 + nrm((in_channels,), 0.05)
    p["bn_beta"] = nrm((in_channels,), 0.05)
    p["bn_mean"] = nrm((in_channels,), 0.05)
    p["bn_var"] = 1.0 + jnp.abs(nrm((in_channels,), 0.05))

    layers = []
    cin = in_channels
    for li in range(N_LAYERS):
        lp = {"wg": nrm((cin, KC)), "bg": nrm((KC,), 0.05)}
        if li > 0:  # residual = Conv1d(cin, KC, 1) + BatchNorm1d(KC)
            lp["wr"] = nrm((cin, KC))
            lp["br"] = nrm((KC,), 0.05)
            lp["r_gamma"] = 1.0 + nrm((KC,), 0.05)
            lp["r_beta"] = nrm((KC,), 0.05)
            lp["r_mean"] = nrm((KC,), 0.05)
            lp["r_var"] = 1.0 + jnp.abs(nrm((KC,), 0.05))
        layers.append(lp)
        cin = KC
    p["layers"] = layers
    p["fcn_w"] = nrm((num_class, KC // V))
    p["fcn_b"] = nrm((num_class,), 0.05)
    return p


if __name__ == "__main__":
    in_channels, num_class, batch = 3, 10, 2
    key = jax.random.PRNGKey(0)
    kx, kp = jax.random.split(key)
    x = jax.random.normal(kx, (batch, V, in_channels), jnp.float32)   # (N, V, C_in)
    params = init_params(kp, in_channels, num_class)

    folded = prepare_params(params, num_class)          # one-time prep, outside jit
    forward = jax.jit(pallas_forward, static_argnums=2)
    out = jax.block_until_ready(forward(x, folded, num_class))        # (N, num_class, 1)

    ref = reference_forward(x, params)
    # bf16 MXU operands with f32 accumulation -> slightly relaxed tolerance vs pure f32
    np.testing.assert_allclose(np.asarray(out), np.asarray(ref), rtol=3e-2, atol=3e-2)
    assert out.shape == (batch, num_class, 1)
    print("KERNEL_OK")
</pallas_src>

<mosaic_0001>
module attributes {stable_mosaic.version = 11 : i64} {
  func.func @_fused_kernel(%arg0: i32, %arg1: memref<256x3xf32, #tpu.memory_space<vmem>>, %arg2: memref<3x192xf32, #tpu.memory_space<vmem>>, %arg3: memref<1x192xf32, #tpu.memory_space<vmem>>, %arg4: memref<5x3x256x256xbf16, #tpu.memory_space<vmem>>, %arg5: memref<4x192x192xbf16, #tpu.memory_space<vmem>>, %arg6: memref<4x1x192xf32, #tpu.memory_space<vmem>>, %arg7: memref<4x192x192xbf16, #tpu.memory_space<vmem>>, %arg8: memref<4x1x192xf32, #tpu.memory_space<vmem>>, %arg9: memref<192x128xbf16, #tpu.memory_space<vmem>>, %arg10: memref<1x128xf32, #tpu.memory_space<vmem>>, %arg11: memref<16x256xbf16, #tpu.memory_space<vmem>>, %arg12: memref<16x128xf32, #tpu.memory_space<vmem>>) attributes {dimension_semantics = [#tpu.dimension_semantics<parallel>], iteration_bounds = array<i64: 1>, scalar_prefetch = 0 : i64, scratch_operands = 0 : i64, tpu.core_type = #tpu.core_type<tc>, window_params = [{transform_indices = @transform_0, window_bounds = array<i64: 256, 3>}, {pipeline_mode = #tpu.pipeline_mode<synchronous>, transform_indices = @transform_1, window_bounds = array<i64: 3, 192>}, {pipeline_mode = #tpu.pipeline_mode<synchronous>, transform_indices = @transform_2, window_bounds = array<i64: 1, 192>}, {pipeline_mode = #tpu.pipeline_mode<synchronous>, transform_indices = @transform_3, window_bounds = array<i64: 5, 3, 256, 256>}, {pipeline_mode = #tpu.pipeline_mode<synchronous>, transform_indices = @transform_4, window_bounds = array<i64: 4, 192, 192>}, {pipeline_mode = #tpu.pipeline_mode<synchronous>, transform_indices = @transform_5, window_bounds = array<i64: 4, 1, 192>}, {pipeline_mode = #tpu.pipeline_mode<synchronous>, transform_indices = @transform_6, window_bounds = array<i64: 4, 192, 192>}, {pipeline_mode = #tpu.pipeline_mode<synchronous>, transform_indices = @transform_7, window_bounds = array<i64: 4, 1, 192>}, {pipeline_mode = #tpu.pipeline_mode<synchronous>, transform_indices = @transform_8, window_bounds = array<i64: 192, 128>}, {pipeline_mode = #tpu.pipeline_mode<synchronous>, transform_indices = @transform_9, window_bounds = array<i64: 1, 128>}, {pipeline_mode = #tpu.pipeline_mode<synchronous>, transform_indices = @transform_10, window_bounds = array<i64: 16, 256>}, {transform_indices = @transform_11, window_bounds = array<i64: 16, 128>}]} {
    %c0 = arith.constant 0 : index
    %c0_0 = arith.constant 0 : index
    %0 = vector.load %arg1[%c0, %c0_0] : memref<256x3xf32, #tpu.memory_space<vmem>>, vector<256x3xf32>
    %c0_1 = arith.constant 0 : index
    %c0_2 = arith.constant 0 : index
    %1 = vector.load %arg3[%c0_1, %c0_2] : memref<1x192xf32, #tpu.memory_space<vmem>>, vector<1x192xf32>
    %2 = vector.shape_cast %1 : vector<1x192xf32> to vector<1x192xf32>
    %3 = vector.broadcast %2 : vector<1x192xf32> to vector<256x192xf32>
    %4 = vector.extract_strided_slice %0 {offsets = [0, 0], sizes = [256, 1], strides = [1, 1]} : vector<256x3xf32> to vector<256x1xf32>
    %c0_3 = arith.constant 0 : index
    %c0_4 = arith.constant 0 : index
    %5 = vector.load %arg2[%c0_3, %c0_4] : memref<3x192xf32, #tpu.memory_space<vmem>>, vector<1x192xf32>
    %6 = vector.broadcast %4 : vector<256x1xf32> to vector<256x192xf32>
    %7 = vector.broadcast %5 : vector<1x192xf32> to vector<256x192xf32>
    %8 = arith.mulf %6, %7 : vector<256x192xf32>
    %9 = arith.addf %3, %8 : vector<256x192xf32>
    %10 = vector.extract_strided_slice %0 {offsets = [0, 1], sizes = [256, 1], strides = [1, 1]} : vector<256x3xf32> to vector<256x1xf32>
    %c1 = arith.constant 1 : index
    %c0_5 = arith.constant 0 : index
    %11 = vector.load %arg2[%c1, %c0_5] : memref<3x192xf32, #tpu.memory_space<vmem>>, vector<1x192xf32>
    %12 = vector.broadcast %10 : vector<256x1xf32> to vector<256x192xf32>
    %13 = vector.broadcast %11 : vector<1x192xf32> to vector<256x192xf32>
    %14 = arith.mulf %12, %13 : vector<256x192xf32>
    %15 = arith.addf %9, %14 : vector<256x192xf32>
    %16 = vector.extract_strided_slice %0 {offsets = [0, 2], sizes = [256, 1], strides = [1, 1]} : vector<256x3xf32> to vector<256x1xf32>
    %c2 = arith.constant 2 : index
    %c0_6 = arith.constant 0 : index
    %17 = vector.load %arg2[%c2, %c0_6] : memref<3x192xf32, #tpu.memory_space<vmem>>, vector<1x192xf32>
    %18 = vector.broadcast %16 : vector<256x1xf32> to vector<256x192xf32>
    %19 = vector.broadcast %17 : vector<1x192xf32> to vector<256x192xf32>
    %20 = arith.mulf %18, %19 : vector<256x192xf32>
    %21 = arith.addf %15, %20 : vector<256x192xf32>
    %22 = arith.truncf %21 : vector<256x192xf32> to vector<256x192xbf16>
    %23 = vector.extract_strided_slice %22 {offsets = [0, 0], sizes = [256, 64], strides = [1, 1]} : vector<256x192xbf16> to vector<256x64xbf16>
    %c0_7 = arith.constant 0 : index
    %c0_8 = arith.constant 0 : index
    %c0_9 = arith.constant 0 : index
    %c0_10 = arith.constant 0 : index
    %24 = vector.load %arg4[%c0_7, %c0_8, %c0_9, %c0_10] : memref<5x3x256x256xbf16, #tpu.memory_space<vmem>>, vector<1x1x256x256xbf16>
    %25 = vector.shape_cast %24 : vector<1x1x256x256xbf16> to vector<256x256xbf16>
    %cst = arith.constant dense<0.000000e+00> : vector<256x64xf32>
    %26 = tpu.matmul %25, %23, %cst {dimension_numbers = #tpu.dot_dimension_numbers<[1], [0], [0], [1], [0, 0, 1, 1], [], []>} : vector<256x256xbf16>, vector<256x64xbf16>, vector<256x64xf32> -> vector<256x64xf32>
    %27 = vector.extract_strided_slice %22 {offsets = [0, 64], sizes = [256, 64], strides = [1, 1]} : vector<256x192xbf16> to vector<256x64xbf16>
    %c0_11 = arith.constant 0 : index
    %c1_12 = arith.constant 1 : index
    %c0_13 = arith.constant 0 : index
    %c0_14 = arith.constant 0 : index
    %28 = vector.load %arg4[%c0_11, %c1_12, %c0_13, %c0_14] : memref<5x3x256x256xbf16, #tpu.memory_space<vmem>>, vector<1x1x256x256xbf16>
    %29 = vector.shape_cast %28 : vector<1x1x256x256xbf16> to vector<256x256xbf16>
    %cst_15 = arith.constant dense<0.000000e+00> : vector<256x64xf32>
    %30 = tpu.matmul %29, %27, %cst_15 {dimension_numbers = #tpu.dot_dimension_numbers<[1], [0], [0], [1], [0, 0, 1, 1], [], []>} : vector<256x256xbf16>, vector<256x64xbf16>, vector<256x64xf32> -> vector<256x64xf32>
    %31 = vector.extract_strided_slice %22 {offsets = [0, 128], sizes = [256, 64], strides = [1, 1]} : vector<256x192xbf16> to vector<256x64xbf16>
    %c0_16 = arith.constant 0 : index
    %c2_17 = arith.constant 2 : index
    %c0_18 = arith.constant 0 : index
    %c0_19 = arith.constant 0 : index
    %32 = vector.load %arg4[%c0_16, %c2_17, %c0_18, %c0_19] : memref<5x3x256x256xbf16, #tpu.memory_space<vmem>>, vector<1x1x256x256xbf16>
    %33 = vector.shape_cast %32 : vector<1x1x256x256xbf16> to vector<256x256xbf16>
    %cst_20 = arith.constant dense<0.000000e+00> : vector<256x64xf32>
    %34 = tpu.matmul %33, %31, %cst_20 {dimension_numbers = #tpu.dot_dimension_numbers<[1], [0], [0], [1], [0, 0, 1, 1], [], []>} : vector<256x256xbf16>, vector<256x64xbf16>, vector<256x64xf32> -> vector<256x64xf32>
    %35 = tpu.concatenate %26, %30, %34 in 1 : vector<256x64xf32>, vector<256x64xf32>, vector<256x64xf32> -> vector<256x192xf32>
    %cst_21 = arith.constant 0.000000e+00 : f32
    %36 = vector.broadcast %cst_21 : f32 to vector<256x192xf32>
    %37 = arith.maximumf %35, %36 : vector<256x192xf32>
    %38 = arith.truncf %37 : vector<256x192xf32> to vector<256x192xbf16>
    %c0_22 = arith.constant 0 : index
    %c0_23 = arith.constant 0 : index
    %c0_24 = arith.constant 0 : index
    %39 = vector.load %arg5[%c0_22, %c0_23, %c0_24] : memref<4x192x192xbf16, #tpu.memory_space<vmem>>, vector<1x192x192xbf16>
    %40 = vector.shape_cast %39 : vector<1x192x192xbf16> to vector<192x192xbf16>
    %cst_25 = arith.constant dense<0.000000e+00> : vector<256x192xf32>
    %41 = tpu.matmul %38, %40, %cst_25 {dimension_numbers = #tpu.dot_dimension_numbers<[1], [0], [0], [1], [0, 0, 1, 1], [], []>} : vector<256x192xbf16>, vector<192x192xbf16>, vector<256x192xf32> -> vector<256x192xf32>
    %c0_26 = arith.constant 0 : index
    %c0_27 = arith.constant 0 : index
    %c0_28 = arith.constant 0 : index
    %42 = vector.load %arg6[%c0_26, %c0_27, %c0_28] : memref<4x1x192xf32, #tpu.memory_space<vmem>>, vector<1x1x192xf32>
    %43 = vector.shape_cast %42 : vector<1x1x192xf32> to vector<1x192xf32>
    %44 = vector.broadcast %43 : vector<1x192xf32> to vector<256x192xf32>
    %45 = arith.addf %41, %44 : vector<256x192xf32>
    %46 = arith.truncf %45 : vector<256x192xf32> to vector<256x192xbf16>
    %47 = vector.extract_strided_slice %46 {offsets = [0, 0], sizes = [256, 64], strides = [1, 1]} : vector<256x192xbf16> to vector<256x64xbf16>
    %c1_29 = arith.constant 1 : index
    %c0_30 = arith.constant 0 : index
    %c0_31 = arith.constant 0 : index
    %c0_32 = arith.constant 0 : index
    %48 = vector.load %arg4[%c1_29, %c0_30, %c0_31, %c0_32] : memref<5x3x256x256xbf16, #tpu.memory_space<vmem>>, vector<1x1x256x256xbf16>
    %49 = vector.shape_cast %48 : vector<1x1x256x256xbf16> to vector<256x256xbf16>
    %cst_33 = arith.constant dense<0.000000e+00> : vector<256x64xf32>
    %50 = tpu.matmul %49, %47, %cst_33 {dimension_numbers = #tpu.dot_dimension_numbers<[1], [0], [0], [1], [0, 0, 1, 1], [], []>} : vector<256x256xbf16>, vector<256x64xbf16>, vector<256x64xf32> -> vector<256x64xf32>
    %51 = vector.extract_strided_slice %46 {offsets = [0, 64], sizes = [256, 64], strides = [1, 1]} : vector<256x192xbf16> to vector<256x64xbf16>
    %c1_34 = arith.constant 1 : index
    %c1_35 = arith.constant 1 : index
    %c0_36 = arith.constant 0 : index
    %c0_37 = arith.constant 0 : index
    %52 = vector.load %arg4[%c1_34, %c1_35, %c0_36, %c0_37] : memref<5x3x256x256xbf16, #tpu.memory_space<vmem>>, vector<1x1x256x256xbf16>
    %53 = vector.shape_cast %52 : vector<1x1x256x256xbf16> to vector<256x256xbf16>
    %cst_38 = arith.constant dense<0.000000e+00> : vector<256x64xf32>
    %54 = tpu.matmul %53, %51, %cst_38 {dimension_numbers = #tpu.dot_dimension_numbers<[1], [0], [0], [1], [0, 0, 1, 1], [], []>} : vector<256x256xbf16>, vector<256x64xbf16>, vector<256x64xf32> -> vector<256x64xf32>
    %55 = vector.extract_strided_slice %46 {offsets = [0, 128], sizes = [256, 64], strides = [1, 1]} : vector<256x192xbf16> to vector<256x64xbf16>
    %c1_39 = arith.constant 1 : index
    %c2_40 = arith.constant 2 : index
    %c0_41 = arith.constant 0 : index
    %c0_42 = arith.constant 0 : index
    %56 = vector.load %arg4[%c1_39, %c2_40, %c0_41, %c0_42] : memref<5x3x256x256xbf16, #tpu.memory_space<vmem>>, vector<1x1x256x256xbf16>
    %57 = vector.shape_cast %56 : vector<1x1x256x256xbf16> to vector<256x256xbf16>
    %cst_43 = arith.constant dense<0.000000e+00> : vector<256x64xf32>
    %58 = tpu.matmul %57, %55, %cst_43 {dimension_numbers = #tpu.dot_dimension_numbers<[1], [0], [0], [1], [0, 0, 1, 1], [], []>} : vector<256x256xbf16>, vector<256x64xbf16>, vector<256x64xf32> -> vector<256x64xf32>
    %59 = tpu.concatenate %50, %54, %58 in 1 : vector<256x64xf32>, vector<256x64xf32>, vector<256x64xf32> -> vector<256x192xf32>
    %c0_44 = arith.constant 0 : index
    %c0_45 = arith.constant 0 : index
    %c0_46 = arith.constant 0 : index
    %60 = vector.load %arg7[%c0_44, %c0_45, %c0_46] : memref<4x192x192xbf16, #tpu.memory_space<vmem>>, vector<1x192x192xbf16>
    %61 = vector.shape_cast %60 : vector<1x192x192xbf16> to vector<192x192xbf16>
    %cst_47 = arith.constant dense<0.000000e+00> : vector<256x192xf32>
    %62 = tpu.matmul %38, %61, %cst_47 {dimension_numbers = #tpu.dot_dimension_numbers<[1], [0], [0], [1], [0, 0, 1, 1], [], []>} : vector<256x192xbf16>, vector<192x192xbf16>, vector<256x192xf32> -> vector<256x192xf32>
    %c0_48 = arith.constant 0 : index
    %c0_49 = arith.constant 0 : index
    %c0_50 = arith.constant 0 : index
    %63 = vector.load %arg8[%c0_48, %c0_49, %c0_50] : memref<4x1x192xf32, #tpu.memory_space<vmem>>, vector<1x1x192xf32>
    %64 = vector.shape_cast %63 : vector<1x1x192xf32> to vector<1x192xf32>
    %65 = vector.broadcast %64 : vector<1x192xf32> to vector<256x192xf32>
    %66 = arith.addf %62, %65 : vector<256x192xf32>
    %67 = arith.addf %59, %66 : vector<256x192xf32>
    %cst_51 = arith.constant 0.000000e+00 : f32
    %68 = vector.broadcast %cst_51 : f32 to vector<256x192xf32>
    %69 = arith.maximumf %67, %68 : vector<256x192xf32>
    %70 = arith.truncf %69 : vector<256x192xf32> to vector<256x192xbf16>
    %c1_52 = arith.constant 1 : index
    %c0_53 = arith.constant 0 : index
    %c0_54 = arith.constant 0 : index
    %71 = vector.load %arg5[%c1_52, %c0_53, %c0_54] : memref<4x192x192xbf16, #tpu.memory_space<vmem>>, vector<1x192x192xbf16>
    %72 = vector.shape_cast %71 : vector<1x192x192xbf16> to vector<192x192xbf16>
    %cst_55 = arith.constant dense<0.000000e+00> : vector<256x192xf32>
    %73 = tpu.matmul %70, %72, %cst_55 {dimension_numbers = #tpu.dot_dimension_numbers<[1], [0], [0], [1], [0, 0, 1, 1], [], []>} : vector<256x192xbf16>, vector<192x192xbf16>, vector<256x192xf32> -> vector<256x192xf32>
    %c1_56 = arith.constant 1 : index
    %c0_57 = arith.constant 0 : index
    %c0_58 = arith.constant 0 : index
    %74 = vector.load %arg6[%c1_56, %c0_57, %c0_58] : memref<4x1x192xf32, #tpu.memory_space<vmem>>, vector<1x1x192xf32>
    %75 = vector.shape_cast %74 : vector<1x1x192xf32> to vector<1x192xf32>
    %76 = vector.broadcast %75 : vector<1x192xf32> to vector<256x192xf32>
    %77 = arith.addf %73, %76 : vector<256x192xf32>
    %78 = arith.truncf %77 : vector<256x192xf32> to vector<256x192xbf16>
    %79 = vector.extract_strided_slice %78 {offsets = [0, 0], sizes = [256, 64], strides = [1, 1]} : vector<256x192xbf16> to vector<256x64xbf16>
    %c2_59 = arith.constant 2 : index
    %c0_60 = arith.constant 0 : index
    %c0_61 = arith.constant 0 : index
    %c0_62 = arith.constant 0 : index
    %80 = vector.load %arg4[%c2_59, %c0_60, %c0_61, %c0_62] : memref<5x3x256x256xbf16, #tpu.memory_space<vmem>>, vector<1x1x256x256xbf16>
    %81 = vector.shape_cast %80 : vector<1x1x256x256xbf16> to vector<256x256xbf16>
    %cst_63 = arith.constant dense<0.000000e+00> : vector<256x64xf32>
    %82 = tpu.matmul %81, %79, %cst_63 {dimension_numbers = #tpu.dot_dimension_numbers<[1], [0], [0], [1], [0, 0, 1, 1], [], []>} : vector<256x256xbf16>, vector<256x64xbf16>, vector<256x64xf32> -> vector<256x64xf32>
    %83 = vector.extract_strided_slice %78 {offsets = [0, 64], sizes = [256, 64], strides = [1, 1]} : vector<256x192xbf16> to vector<256x64xbf16>
    %c2_64 = arith.constant 2 : index
    %c1_65 = arith.constant 1 : index
    %c0_66 = arith.constant 0 : index
    %c0_67 = arith.constant 0 : index
    %84 = vector.load %arg4[%c2_64, %c1_65, %c0_66, %c0_67] : memref<5x3x256x256xbf16, #tpu.memory_space<vmem>>, vector<1x1x256x256xbf16>
    %85 = vector.shape_cast %84 : vector<1x1x256x256xbf16> to vector<256x256xbf16>
    %cst_68 = arith.constant dense<0.000000e+00> : vector<256x64xf32>
    %86 = tpu.matmul %85, %83, %cst_68 {dimension_numbers = #tpu.dot_dimension_numbers<[1], [0], [0], [1], [0, 0, 1, 1], [], []>} : vector<256x256xbf16>, vector<256x64xbf16>, vector<256x64xf32> -> vector<256x64xf32>
    %87 = vector.extract_strided_slice %78 {offsets = [0, 128], sizes = [256, 64], strides = [1, 1]} : vector<256x192xbf16> to vector<256x64xbf16>
    %c2_69 = arith.constant 2 : index
    %c2_70 = arith.constant 2 : index
    %c0_71 = arith.constant 0 : index
    %c0_72 = arith.constant 0 : index
    %88 = vector.load %arg4[%c2_69, %c2_70, %c0_71, %c0_72] : memref<5x3x256x256xbf16, #tpu.memory_space<vmem>>, vector<1x1x256x256xbf16>
    %89 = vector.shape_cast %88 : vector<1x1x256x256xbf16> to vector<256x256xbf16>
    %cst_73 = arith.constant dense<0.000000e+00> : vector<256x64xf32>
    %90 = tpu.matmul %89, %87, %cst_73 {dimension_numbers = #tpu.dot_dimension_numbers<[1], [0], [0], [1], [0, 0, 1, 1], [], []>} : vector<256x256xbf16>, vector<256x64xbf16>, vector<256x64xf32> -> vector<256x64xf32>
    %91 = tpu.concatenate %82, %86, %90 in 1 : vector<256x64xf32>, vector<256x64xf32>, vector<256x64xf32> -> vector<256x192xf32>
    %c1_74 = arith.constant 1 : index
    %c0_75 = arith.constant 0 : index
    %c0_76 = arith.constant 0 : index
    %92 = vector.load %arg7[%c1_74, %c0_75, %c0_76] : memref<4x192x192xbf16, #tpu.memory_space<vmem>>, vector<1x192x192xbf16>
    %93 = vector.shape_cast %92 : vector<1x192x192xbf16> to vector<192x192xbf16>
    %cst_77 = arith.constant dense<0.000000e+00> : vector<256x192xf32>
    %94 = tpu.matmul %70, %93, %cst_77 {dimension_numbers = #tpu.dot_dimension_numbers<[1], [0], [0], [1], [0, 0, 1, 1], [], []>} : vector<256x192xbf16>, vector<192x192xbf16>, vector<256x192xf32> -> vector<256x192xf32>
    %c1_78 = arith.constant 1 : index
    %c0_79 = arith.constant 0 : index
    %c0_80 = arith.constant 0 : index
    %95 = vector.load %arg8[%c1_78, %c0_79, %c0_80] : memref<4x1x192xf32, #tpu.memory_space<vmem>>, vector<1x1x192xf32>
    %96 = vector.shape_cast %95 : vector<1x1x192xf32> to vector<1x192xf32>
    %97 = vector.broadcast %96 : vector<1x192xf32> to vector<256x192xf32>
    %98 = arith.addf %94, %97 : vector<256x192xf32>
    %99 = arith.addf %91, %98 : vector<256x192xf32>
    %cst_81 = arith.constant 0.000000e+00 : f32
    %100 = vector.broadcast %cst_81 : f32 to vector<256x192xf32>
    %101 = arith.maximumf %99, %100 : vector<256x192xf32>
    %102 = arith.truncf %101 : vector<256x192xf32> to vector<256x192xbf16>
    %c2_82 = arith.constant 2 : index
    %c0_83 = arith.constant 0 : index
    %c0_84 = arith.constant 0 : index
    %103 = vector.load %arg5[%c2_82, %c0_83, %c0_84] : memref<4x192x192xbf16, #tpu.memory_space<vmem>>, vector<1x192x192xbf16>
    %104 = vector.shape_cast %103 : vector<1x192x192xbf16> to vector<192x192xbf16>
    %cst_85 = arith.constant dense<0.000000e+00> : vector<256x192xf32>
    %105 = tpu.matmul %102, %104, %cst_85 {dimension_numbers = #tpu.dot_dimension_numbers<[1], [0], [0], [1], [0, 0, 1, 1], [], []>} : vector<256x192xbf16>, vector<192x192xbf16>, vector<256x192xf32> -> vector<256x192xf32>
    %c2_86 = arith.constant 2 : index
    %c0_87 = arith.constant 0 : index
    %c0_88 = arith.constant 0 : index
    %106 = vector.load %arg6[%c2_86, %c0_87, %c0_88] : memref<4x1x192xf32, #tpu.memory_space<vmem>>, vector<1x1x192xf32>
    %107 = vector.shape_cast %106 : vector<1x1x192xf32> to vector<1x192xf32>
    %108 = vector.broadcast %107 : vector<1x192xf32> to vector<256x192xf32>
    %109 = arith.addf %105, %108 : vector<256x192xf32>
    %110 = arith.truncf %109 : vector<256x192xf32> to vector<256x192xbf16>
    %111 = vector.extract_strided_slice %110 {offsets = [0, 0], sizes = [256, 64], strides = [1, 1]} : vector<256x192xbf16> to vector<256x64xbf16>
    %c3 = arith.constant 3 : index
    %c0_89 = arith.constant 0 : index
    %c0_90 = arith.constant 0 : index
    %c0_91 = arith.constant 0 : index
    %112 = vector.load %arg4[%c3, %c0_89, %c0_90, %c0_91] : memref<5x3x256x256xbf16, #tpu.memory_space<vmem>>, vector<1x1x256x256xbf16>
    %113 = vector.shape_cast %112 : vector<1x1x256x256xbf16> to vector<256x256xbf16>
    %cst_92 = arith.constant dense<0.000000e+00> : vector<256x64xf32>
    %114 = tpu.matmul %113, %111, %cst_92 {dimension_numbers = #tpu.dot_dimension_numbers<[1], [0], [0], [1], [0, 0, 1, 1], [], []>} : vector<256x256xbf16>, vector<256x64xbf16>, vector<256x64xf32> -> vector<256x64xf32>
    %115 = vector.extract_strided_slice %110 {offsets = [0, 64], sizes = [256, 64], strides = [1, 1]} : vector<256x192xbf16> to vector<256x64xbf16>
    %c3_93 = arith.constant 3 : index
    %c1_94 = arith.constant 1 : index
    %c0_95 = arith.constant 0 : index
    %c0_96 = arith.constant 0 : index
    %116 = vector.load %arg4[%c3_93, %c1_94, %c0_95, %c0_96] : memref<5x3x256x256xbf16, #tpu.memory_space<vmem>>, vector<1x1x256x256xbf16>
    %117 = vector.shape_cast %116 : vector<1x1x256x256xbf16> to vector<256x256xbf16>
    %cst_97 = arith.constant dense<0.000000e+00> : vector<256x64xf32>
    %118 = tpu.matmul %117, %115, %cst_97 {dimension_numbers = #tpu.dot_dimension_numbers<[1], [0], [0], [1], [0, 0, 1, 1], [], []>} : vector<256x256xbf16>, vector<256x64xbf16>, vector<256x64xf32> -> vector<256x64xf32>
    %119 = vector.extract_strided_slice %110 {offsets = [0, 128], sizes = [256, 64], strides = [1, 1]} : vector<256x192xbf16> to vector<256x64xbf16>
    %c3_98 = arith.constant 3 : index
    %c2_99 = arith.constant 2 : index
    %c0_100 = arith.constant 0 : index
    %c0_101 = arith.constant 0 : index
    %120 = vector.load %arg4[%c3_98, %c2_99, %c0_100, %c0_101] : memref<5x3x256x256xbf16, #tpu.memory_space<vmem>>, vector<1x1x256x256xbf16>
    %121 = vector.shape_cast %120 : vector<1x1x256x256xbf16> to vector<256x256xbf16>
    %cst_102 = arith.constant dense<0.000000e+00> : vector<256x64xf32>
    %122 = tpu.matmul %121, %119, %cst_102 {dimension_numbers = #tpu.dot_dimension_numbers<[1], [0], [0], [1], [0, 0, 1, 1], [], []>} : vector<256x256xbf16>, vector<256x64xbf16>, vector<256x64xf32> -> vector<256x64xf32>
    %123 = tpu.concatenate %114, %118, %122 in 1 : vector<256x64xf32>, vector<256x64xf32>, vector<256x64xf32> -> vector<256x192xf32>
    %c2_103 = arith.constant 2 : index
    %c0_104 = arith.constant 0 : index
    %c0_105 = arith.constant 0 : index
    %124 = vector.load %arg7[%c2_103, %c0_104, %c0_105] : memref<4x192x192xbf16, #tpu.memory_space<vmem>>, vector<1x192x192xbf16>
    %125 = vector.shape_cast %124 : vector<1x192x192xbf16> to vector<192x192xbf16>
    %cst_106 = arith.constant dense<0.000000e+00> : vector<256x192xf32>
    %126 = tpu.matmul %102, %125, %cst_106 {dimension_numbers = #tpu.dot_dimension_numbers<[1], [0], [0], [1], [0, 0, 1, 1], [], []>} : vector<256x192xbf16>, vector<192x192xbf16>, vector<256x192xf32> -> vector<256x192xf32>
    %c2_107 = arith.constant 2 : index
    %c0_108 = arith.constant 0 : index
    %c0_109 = arith.constant 0 : index
    %127 = vector.load %arg8[%c2_107, %c0_108, %c0_109] : memref<4x1x192xf32, #tpu.memory_space<vmem>>, vector<1x1x192xf32>
    %128 = vector.shape_cast %127 : vector<1x1x192xf32> to vector<1x192xf32>
    %129 = vector.broadcast %128 : vector<1x192xf32> to vector<256x192xf32>
    %130 = arith.addf %126, %129 : vector<256x192xf32>
    %131 = arith.addf %123, %130 : vector<256x192xf32>
    %cst_110 = arith.constant 0.000000e+00 : f32
    %132 = vector.broadcast %cst_110 : f32 to vector<256x192xf32>
    %133 = arith.maximumf %131, %132 : vector<256x192xf32>
    %134 = arith.truncf %133 : vector<256x192xf32> to vector<256x192xbf16>
    %c3_111 = arith.constant 3 : index
    %c0_112 = arith.constant 0 : index
    %c0_113 = arith.constant 0 : index
    %135 = vector.load %arg5[%c3_111, %c0_112, %c0_113] : memref<4x192x192xbf16, #tpu.memory_space<vmem>>, vector<1x192x192xbf16>
    %136 = vector.shape_cast %135 : vector<1x192x192xbf16> to vector<192x192xbf16>
    %cst_114 = arith.constant dense<0.000000e+00> : vector<256x192xf32>
    %137 = tpu.matmul %134, %136, %cst_114 {dimension_numbers = #tpu.dot_dimension_numbers<[1], [0], [0], [1], [0, 0, 1, 1], [], []>} : vector<256x192xbf16>, vector<192x192xbf16>, vector<256x192xf32> -> vector<256x192xf32>
    %c3_115 = arith.constant 3 : index
    %c0_116 = arith.constant 0 : index
    %c0_117 = arith.constant 0 : index
    %138 = vector.load %arg6[%c3_115, %c0_116, %c0_117] : memref<4x1x192xf32, #tpu.memory_space<vmem>>, vector<1x1x192xf32>
    %139 = vector.shape_cast %138 : vector<1x1x192xf32> to vector<1x192xf32>
    %140 = vector.broadcast %139 : vector<1x192xf32> to vector<256x192xf32>
    %141 = arith.addf %137, %140 : vector<256x192xf32>
    %142 = arith.truncf %141 : vector<256x192xf32> to vector<256x192xbf16>
    %143 = vector.extract_strided_slice %142 {offsets = [0, 0], sizes = [256, 64], strides = [1, 1]} : vector<256x192xbf16> to vector<256x64xbf16>
    %c4 = arith.constant 4 : index
    %c0_118 = arith.constant 0 : index
    %c0_119 = arith.constant 0 : index
    %c0_120 = arith.constant 0 : index
    %144 = vector.load %arg4[%c4, %c0_118, %c0_119, %c0_120] : memref<5x3x256x256xbf16, #tpu.memory_space<vmem>>, vector<1x1x256x256xbf16>
    %145 = vector.shape_cast %144 : vector<1x1x256x256xbf16> to vector<256x256xbf16>
    %cst_121 = arith.constant dense<0.000000e+00> : vector<256x64xf32>
    %146 = tpu.matmul %145, %143, %cst_121 {dimension_numbers = #tpu.dot_dimension_numbers<[1], [0], [0], [1], [0, 0, 1, 1], [], []>} : vector<256x256xbf16>, vector<256x64xbf16>, vector<256x64xf32> -> vector<256x64xf32>
    %147 = vector.extract_strided_slice %142 {offsets = [0, 64], sizes = [256, 64], strides = [1, 1]} : vector<256x192xbf16> to vector<256x64xbf16>
    %c4_122 = arith.constant 4 : index
    %c1_123 = arith.constant 1 : index
    %c0_124 = arith.constant 0 : index
    %c0_125 = arith.constant 0 : index
    %148 = vector.load %arg4[%c4_122, %c1_123, %c0_124, %c0_125] : memref<5x3x256x256xbf16, #tpu.memory_space<vmem>>, vector<1x1x256x256xbf16>
    %149 = vector.shape_cast %148 : vector<1x1x256x256xbf16> to vector<256x256xbf16>
    %cst_126 = arith.constant dense<0.000000e+00> : vector<256x64xf32>
    %150 = tpu.matmul %149, %147, %cst_126 {dimension_numbers = #tpu.dot_dimension_numbers<[1], [0], [0], [1], [0, 0, 1, 1], [], []>} : vector<256x256xbf16>, vector<256x64xbf16>, vector<256x64xf32> -> vector<256x64xf32>
    %151 = vector.extract_strided_slice %142 {offsets = [0, 128], sizes = [256, 64], strides = [1, 1]} : vector<256x192xbf16> to vector<256x64xbf16>
    %c4_127 = arith.constant 4 : index
    %c2_128 = arith.constant 2 : index
    %c0_129 = arith.constant 0 : index
    %c0_130 = arith.constant 0 : index
    %152 = vector.load %arg4[%c4_127, %c2_128, %c0_129, %c0_130] : memref<5x3x256x256xbf16, #tpu.memory_space<vmem>>, vector<1x1x256x256xbf16>
    %153 = vector.shape_cast %152 : vector<1x1x256x256xbf16> to vector<256x256xbf16>
    %cst_131 = arith.constant dense<0.000000e+00> : vector<256x64xf32>
    %154 = tpu.matmul %153, %151, %cst_131 {dimension_numbers = #tpu.dot_dimension_numbers<[1], [0], [0], [1], [0, 0, 1, 1], [], []>} : vector<256x256xbf16>, vector<256x64xbf16>, vector<256x64xf32> -> vector<256x64xf32>
    %155 = tpu.concatenate %146, %150, %154 in 1 : vector<256x64xf32>, vector<256x64xf32>, vector<256x64xf32> -> vector<256x192xf32>
    %c3_132 = arith.constant 3 : index
    %c0_133 = arith.constant 0 : index
    %c0_134 = arith.constant 0 : index
    %156 = vector.load %arg7[%c3_132, %c0_133, %c0_134] : memref<4x192x192xbf16, #tpu.memory_space<vmem>>, vector<1x192x192xbf16>
    %157 = vector.shape_cast %156 : vector<1x192x192xbf16> to vector<192x192xbf16>
    %cst_135 = arith.constant dense<0.000000e+00> : vector<256x192xf32>
    %158 = tpu.matmul %134, %157, %cst_135 {dimension_numbers = #tpu.dot_dimension_numbers<[1], [0], [0], [1], [0, 0, 1, 1], [], []>} : vector<256x192xbf16>, vector<192x192xbf16>, vector<256x192xf32> -> vector<256x192xf32>
    %c3_136 = arith.constant 3 : index
    %c0_137 = arith.constant 0 : index
    %c0_138 = arith.constant 0 : index
    %159 = vector.load %arg8[%c3_136, %c0_137, %c0_138] : memref<4x1x192xf32, #tpu.memory_space<vmem>>, vector<1x1x192xf32>
    %160 = vector.shape_cast %159 : vector<1x1x192xf32> to vector<1x192xf32>
    %161 = vector.broadcast %160 : vector<1x192xf32> to vector<256x192xf32>
    %162 = arith.addf %158, %161 : vector<256x192xf32>
    %163 = arith.addf %155, %162 : vector<256x192xf32>
    %cst_139 = arith.constant 0.000000e+00 : f32
    %164 = vector.broadcast %cst_139 : f32 to vector<256x192xf32>
    %165 = arith.maximumf %163, %164 : vector<256x192xf32>
    %c0_140 = arith.constant 0 : index
    %c0_141 = arith.constant 0 : index
    %166 = vector.load %arg11[%c0_140, %c0_141] : memref<16x256xbf16, #tpu.memory_space<vmem>>, vector<16x256xbf16>
    %167 = arith.truncf %165 : vector<256x192xf32> to vector<256x192xbf16>
    %cst_142 = arith.constant dense<0.000000e+00> : vector<16x192xf32>
    %168 = tpu.matmul %166, %167, %cst_142 {dimension_numbers = #tpu.dot_dimension_numbers<[1], [0], [0], [1], [0, 0, 1, 1], [], []>} : vector<16x256xbf16>, vector<256x192xbf16>, vector<16x192xf32> -> vector<16x192xf32>
    %169 = arith.truncf %168 : vector<16x192xf32> to vector<16x192xbf16>
    %c0_143 = arith.constant 0 : index
    %c0_144 = arith.constant 0 : index
    %170 = vector.load %arg9[%c0_143, %c0_144] : memref<192x128xbf16, #tpu.memory_space<vmem>>, vector<192x128xbf16>
    %cst_145 = arith.constant dense<0.000000e+00> : vector<16x128xf32>
    %171 = tpu.matmul %169, %170, %cst_145 {dimension_numbers = #tpu.dot_dimension_numbers<[1], [0], [0], [1], [0, 0, 1, 1], [], []>} : vector<16x192xbf16>, vector<192x128xbf16>, vector<16x128xf32> -> vector<16x128xf32>
    %c0_146 = arith.constant 0 : index
    %c0_147 = arith.constant 0 : index
    %172 = vector.load %arg10[%c0_146, %c0_147] : memref<1x128xf32, #tpu.memory_space<vmem>>, vector<1x128xf32>
    %173 = vector.broadcast %172 : vector<1x128xf32> to vector<16x128xf32>
    %174 = arith.addf %171, %173 : vector<16x128xf32>
    %c0_148 = arith.constant 0 : index
    %c0_149 = arith.constant 0 : index
    %175 = vector.load %arg12[%c0_148, %c0_149] : memref<16x128xf32, #tpu.memory_space<vmem>>, vector<16x128xf32>
    tpu.vector_store %arg12[%c0_148, %c0_149], %174 {strides = array<i32>} : memref<16x128xf32, #tpu.memory_space<vmem>>, vector<16x128xf32>,
    return
  }
  func.func @transform_0(%arg0: i32) -> (i32, i32) {
    %c0_i32 = arith.constant 0 : i32
    %c0_i32_0 = arith.constant 0 : i32
    return %arg0, %c0_i32 : i32, i32
  }
  func.func @transform_1(%arg0: i32) -> (i32, i32) {
    %c0_i32 = arith.constant 0 : i32
    %c0_i32_0 = arith.constant 0 : i32
    %c0_i32_1 = arith.constant 0 : i32
    return %c0_i32, %c0_i32_0 : i32, i32
  }
  func.func @transform_2(%arg0: i32) -> (i32, i32) {
    %c0_i32 = arith.constant 0 : i32
    %c0_i32_0 = arith.constant 0 : i32
    %c0_i32_1 = arith.constant 0 : i32
    return %c0_i32, %c0_i32_0 : i32, i32
  }
  func.func @transform_3(%arg0: i32) -> (i32, i32, i32, i32) {
    %c0_i32 = arith.constant 0 : i32
    %c0_i32_0 = arith.constant 0 : i32
    %c0_i32_1 = arith.constant 0 : i32
    %c0_i32_2 = arith.constant 0 : i32
    %c0_i32_3 = arith.constant 0 : i32
    return %c0_i32, %c0_i32_0, %c0_i32_1, %c0_i32_2 : i32, i32, i32, i32
  }
  func.func @transform_4(%arg0: i32) -> (i32, i32, i32) {
    %c0_i32 = arith.constant 0 : i32
    %c0_i32_0 = arith.constant 0 : i32
    %c0_i32_1 = arith.constant 0 : i32
    %c0_i32_2 = arith.constant 0 : i32
    return %c0_i32, %c0_i32_0, %c0_i32_1 : i32, i32, i32
  }
  func.func @transform_5(%arg0: i32) -> (i32, i32, i32) {
    %c0_i32 = arith.constant 0 : i32
    %c0_i32_0 = arith.constant 0 : i32
    %c0_i32_1 = arith.constant 0 : i32
    %c0_i32_2 = arith.constant 0 : i32
    return %c0_i32, %c0_i32_0, %c0_i32_1 : i32, i32, i32
  }
  func.func @transform_6(%arg0: i32) -> (i32, i32, i32) {
    %c0_i32 = arith.constant 0 : i32
    %c0_i32_0 = arith.constant 0 : i32
    %c0_i32_1 = arith.constant 0 : i32
    %c0_i32_2 = arith.constant 0 : i32
    return %c0_i32, %c0_i32_0, %c0_i32_1 : i32, i32, i32
  }
  func.func @transform_7(%arg0: i32) -> (i32, i32, i32) {
    %c0_i32 = arith.constant 0 : i32
    %c0_i32_0 = arith.constant 0 : i32
    %c0_i32_1 = arith.constant 0 : i32
    %c0_i32_2 = arith.constant 0 : i32
    return %c0_i32, %c0_i32_0, %c0_i32_1 : i32, i32, i32
  }
  func.func @transform_8(%arg0: i32) -> (i32, i32) {
    %c0_i32 = arith.constant 0 : i32
    %c0_i32_0 = arith.constant 0 : i32
    %c0_i32_1 = arith.constant 0 : i32
    return %c0_i32, %c0_i32_0 : i32, i32
  }
  func.func @transform_9(%arg0: i32) -> (i32, i32) {
    %c0_i32 = arith.constant 0 : i32
    %c0_i32_0 = arith.constant 0 : i32
    %c0_i32_1 = arith.constant 0 : i32
    return %c0_i32, %c0_i32_0 : i32, i32
  }
  func.func @transform_10(%arg0: i32) -> (i32, i32) {
    %c0_i32 = arith.constant 0 : i32
    %c0_i32_0 = arith.constant 0 : i32
    %c0_i32_1 = arith.constant 0 : i32
    return %c0_i32, %c0_i32_0 : i32, i32
  }
  func.func @transform_11(%arg0: i32) -> (i32, i32) {
    %c0_i32 = arith.constant 0 : i32
    %c0_i32_0 = arith.constant 0 : i32
    return %arg0, %c0_i32 : i32, i32
  }
}

</mosaic_0001>

<llo_original>
// kernel: pallas_forward.1
$region0: #{pallas_forward.1}
  #allocation0 [shape = 'u32[]', space=smem, size = 0x4, offset = 0x4, fixed_abs, tag = 'smem constant byte address 0x4 - core index']
  #allocation1 [shape = 'u32[144,128]{1,0:T(1,128)}', space=vmem, size = 0x12000, scoped, tag = 'internal scratch']
  %s0 = inlined_call_operand.vmem [shape: f32[256,3], index: 0, kind: input, shape index: {}]
  %s1 = inlined_call_operand.hbm [shape: f32[3,192], index: 1, kind: input, shape index: {}]
  %s2 = inlined_call_operand.hbm [shape: f32[1,192], index: 2, kind: input, shape index: {}]
  %s3 = inlined_call_operand.hbm [shape: bf16[5,3,256,256], index: 3, kind: input, shape index: {}]
  %s4 = inlined_call_operand.hbm [shape: bf16[4,192,192], index: 4, kind: input, shape index: {}]
  %s5 = inlined_call_operand.hbm [shape: f32[4,1,192], index: 5, kind: input, shape index: {}]
  %s6 = inlined_call_operand.hbm [shape: bf16[4,192,192], index: 6, kind: input, shape index: {}]
  %s7 = inlined_call_operand.hbm [shape: f32[4,1,192], index: 7, kind: input, shape index: {}]
  %s8 = inlined_call_operand.hbm [shape: bf16[192,128], index: 8, kind: input, shape index: {}]
  %s9 = inlined_call_operand.hbm [shape: f32[1,128], index: 9, kind: input, shape index: {}]
  %s10 = inlined_call_operand.hbm [shape: bf16[16,256], index: 10, kind: input, shape index: {}]
  %s11 = inlined_call_operand.vmem [shape: f32[16,128], index: 11, kind: output, shape index: {}]
  %s12 = sld [smem:[#allocation0]]
  $region94: #{pallas_forward.1} parent=0
    _
  %s14 = ssub.s32 1, %s12
  %s15 = scalar_select 0, %s14, %s12
  $region1: #{pallas_forward.1} parent=0
    #allocation2 [shape = 'u8[4096]{0}', space=vmem, size = 0x1000, scoped, tag = 'input window, operand 1, single buffered']
    #allocation3 [shape = 's32[1]{0}', space=sflag, size = 0x4, scoped, tag = 'scoped memory for pallas_forward.1']
    #allocation4 [shape = 'u8[1024]{0}', space=vmem, size = 0x400, scoped, tag = 'input window, operand 2, single buffered']
    #allocation5 [shape = 's32[1]{0}', space=sflag, size = 0x4, scoped, tag = 'scoped memory for pallas_forward.1']
    #allocation6 [shape = 'u8[1966080]{0}', space=vmem, size = 0x1e0000, scoped, tag = 'input window, operand 3, single buffered']
    #allocation7 [shape = 'u8[393216]{0}', space=vmem, size = 0x60000, scoped, tag = 'input window, operand 4, single buffered']
    #allocation8 [shape = 's32[1]{0}', space=sflag, size = 0x4, scoped, tag = 'scoped memory for pallas_forward.1']
    #allocation9 [shape = 'u8[4096]{0}', space=vmem, size = 0x1000, scoped, tag = 'input window, operand 5, single buffered']
    #allocation10 [shape = 'u8[393216]{0}', space=vmem, size = 0x60000, scoped, tag = 'input window, operand 6, single buffered']
    #allocation11 [shape = 's32[1]{0}', space=sflag, size = 0x4, scoped, tag = 'scoped memory for pallas_forward.1']
    #allocation12 [shape = 'u8[4096]{0}', space=vmem, size = 0x1000, scoped, tag = 'input window, operand 7, single buffered']
    #allocation13 [shape = 'u8[49152]{0}', space=vmem, size = 0xc000, scoped, tag = 'input window, operand 8, single buffered']
    #allocation14 [shape = 's32[1]{0}', space=sflag, size = 0x4, scoped, tag = 'scoped memory for pallas_forward.1']
    #allocation15 [shape = 'u8[512]{0}', space=vmem, size = 0x400, scoped, tag = 'input window, operand 9, single buffered']
    #allocation16 [shape = 'u8[8192]{0}', space=vmem, size = 0x2000, scoped, tag = 'input window, operand 10, single buffered']
    #allocation17 [shape = 's32[1]{0}', space=sflag, size = 0x4, scoped, tag = 'scoped memory for pallas_forward.1']
    %16 = vsyncpa [#allocation3], 0
    %17 = vsyncpa [#allocation5], 0
    %18 = vsyncpa [#allocation8], 0
    %19 = vsyncpa [#allocation11], 0
    %20 = vsyncpa [#allocation14], 0
    %21 = vsyncpa [#allocation17], 0
    // Predicated region
    $region2: #{pallas_forward.1} parent=1 // pred_check
      _
    $region3: #{pallas_forward.1} parent=1 // pred_check_branch
      %23 = sbr.rel (0) target = $region5
    $region4: #{pallas_forward.1} parent=1 // pred_region
      _
    $region5: #{pallas_forward.1} parent=1 // pred_fallthru
      _
    // Predicated region
    $region6: #{pallas_forward.1} parent=1 // pred_check
      _
    $region7: #{pallas_forward.1} parent=1 // pred_check_branch
      %25 = sbr.rel (0) target = $region9
    $region8: #{pallas_forward.1} parent=1 // pred_region
      %s27 = ssub.s32 128, 128
      %28 = vsyncadd [#allocation3], %s27
      %s30 = sshll.u32 [#allocation2], 4
      %s31 = int_to_ptr.vmem [resolvable:$true] %s30
      %33 = dma.hbm_to_vmem [thread:$0]  %s1, 128, %s31, [#allocation3]
    $region9: #{pallas_forward.1} parent=1 // pred_fallthru
      _
    // Predicated region
    $region10: #{pallas_forward.1} parent=1 // pred_check
      _
    $region11: #{pallas_forward.1} parent=1 // pred_check_branch
      %35 = sbr.rel (0) target = $region13
    $region12: #{pallas_forward.1} parent=1 // pred_region
      %s37 = ssub.s32 32, 32
      %38 = vsyncadd [#allocation5], %s37
      %s40 = sshll.u32 [#allocation4], 4
      %s41 = int_to_ptr.vmem [resolvable:$true] %s40
      %43 = dma.hbm_to_vmem [thread:$0]  %s2, 32, %s41, [#allocation5]
    $region13: #{pallas_forward.1} parent=1 // pred_fallthru
      _
    // Predicated region
    $region14: #{pallas_forward.1} parent=1 // pred_check
      _
    $region15: #{pallas_forward.1} parent=1 // pred_check_branch
      %45 = sbr.rel (0) target = $region17
    $region16: #{pallas_forward.1} parent=1 // pred_region
      %s47 = ssub.s32 61440, 61440
      %48 = vsyncadd [#allocation5], %s47
      %s49 = sshll.u32 [#allocation6], 4
      %s50 = int_to_ptr.vmem [resolvable:$true] %s49
      %55 = dma.hbm_to_vmem [thread:$0]  %s3, 61440, %s50, [#allocation5], 128, 128, 8
    $region17: #{pallas_forward.1} parent=1 // pred_fallthru
      _
    // Predicated region
    $region18: #{pallas_forward.1} parent=1 // pred_check
      _
    $region19: #{pallas_forward.1} parent=1 // pred_check_branch
      %57 = sbr.rel (0) target = $region21
    $region20: #{pallas_forward.1} parent=1 // pred_region
      %s59 = ssub.s32 12288, 12288
      %60 = vsyncadd [#allocation8], %s59
      %s61 = sshll.u32 [#allocation7], 4
      %s62 = int_to_ptr.vmem [resolvable:$true] %s61
      %67 = dma.hbm_to_vmem [thread:$0]  %s4, 12288, %s62, [#allocation8], 128, 128, 8
    $region21: #{pallas_forward.1} parent=1 // pred_fallthru
      _
    // Predicated region
    $region22: #{pallas_forward.1} parent=1 // pred_check
      _
    $region23: #{pallas_forward.1} parent=1 // pred_check_branch
      %69 = sbr.rel (0) target = $region25
    $region24: #{pallas_forward.1} parent=1 // pred_region
      %s71 = ssub.s32 128, 128
      %72 = vsyncadd [#allocation8], %s71
      %s73 = sshll.u32 [#allocation9], 4
      %s74 = int_to_ptr.vmem [resolvable:$true] %s73
      %79 = dma.hbm_to_vmem [thread:$0]  %s5, 128, %s74, [#allocation8], 32, 32, 2
    $region25: #{pallas_forward.1} parent=1 // pred_fallthru
      _
    // Predicated region
    $region26: #{pallas_forward.1} parent=1 // pred_check
      _
    $region27: #{pallas_forward.1} parent=1 // pred_check_branch
      %81 = sbr.rel (0) target = $region29
    $region28: #{pallas_forward.1} parent=1 // pred_region
      %s83 = ssub.s32 12288, 12288
      %84 = vsyncadd [#allocation11], %s83
      %s85 = sshll.u32 [#allocation10], 4
      %s86 = int_to_ptr.vmem [resolvable:$true] %s85
      %91 = dma.hbm_to_vmem [thread:$0]  %s6, 12288, %s86, [#allocation11], 128, 128, 8
    $region29: #{pallas_forward.1} parent=1 // pred_fallthru
      _
    // Predicated region
    $region30: #{pallas_forward.1} parent=1 // pred_check
      _
    $region31: #{pallas_forward.1} parent=1 // pred_check_branch
      %93 = sbr.rel (0) target = $region33
    $region32: #{pallas_forward.1} parent=1 // pred_region
      %s95 = ssub.s32 128, 128
      %96 = vsyncadd [#allocation11], %s95
      %s97 = sshll.u32 [#allocation12], 4
      %s98 = int_to_ptr.vmem [resolvable:$true] %s97
      %103 = dma.hbm_to_vmem [thread:$0]  %s7, 128, %s98, [#allocation11], 32, 32, 2
    $region33: #{pallas_forward.1} parent=1 // pred_fallthru
      _
    // Predicated region
    $region34: #{pallas_forward.1} parent=1 // pred_check
      _
    $region35: #{pallas_forward.1} parent=1 // pred_check_branch
      %105 = sbr.rel (0) target = $region37
    $region36: #{pallas_forward.1} parent=1 // pred_region
      %s107 = ssub.s32 1536, 1536
      %108 = vsyncadd [#allocation14], %s107
      %s109 = sshll.u32 [#allocation13], 4
      %s110 = int_to_ptr.vmem [resolvable:$true] %s109
      %115 = dma.hbm_to_vmem [thread:$0]  %s8, 1536, %s110, [#allocation14], 64, 64, 4
    $region37: #{pallas_forward.1} parent=1 // pred_fallthru
      _
    // Predicated region
    $region38: #{pallas_forward.1} parent=1 // pred_check
      _
    $region39: #{pallas_forward.1} parent=1 // pred_check_branch
      %117 = sbr.rel (0) target = $region41
    $region40: #{pallas_forward.1} parent=1 // pred_region
      %s119 = ssub.s32 16, 16
      %120 = vsyncadd [#allocation14], %s119
      %s122 = sshll.u32 [#allocation15], 4
      %s123 = int_to_ptr.vmem [resolvable:$true] %s122
      %125 = dma.hbm_to_vmem [thread:$0]  %s9, 16, %s123, [#allocation14]
    $region41: #{pallas_forward.1} parent=1 // pred_fallthru
      _
    // Predicated region
    $region42: #{pallas_forward.1} parent=1 // pred_check
      _
    $region43: #{pallas_forward.1} parent=1 // pred_check_branch
      %127 = sbr.rel (0) target = $region45
    $region44: #{pallas_forward.1} parent=1 // pred_region
      %s129 = ssub.s32 256, 256
      %130 = vsyncadd [#allocation17], %s129
      %s131 = sshll.u32 [#allocation16], 4
      %s132 = int_to_ptr.vmem [resolvable:$true] %s131
      %137 = dma.hbm_to_vmem [thread:$0]  %s10, 256, %s132, [#allocation17], 128, 128, 8
    $region45: #{pallas_forward.1} parent=1 // pred_fallthru
      _
    // Predicated region
    $region46: #{pallas_forward.1} parent=1 // pred_check
      _
    $region47: #{pallas_forward.1} parent=1 // pred_check_branch
      %139 = sbr.rel (0) target = $region49
    $region48: #{pallas_forward.1} parent=1 // pred_region
      %140 = dma.done [#allocation3], 128
    $region49: #{pallas_forward.1} parent=1 // pred_fallthru
      _
    // Predicated region
    $region50: #{pallas_forward.1} parent=1 // pred_check
      _
    $region51: #{pallas_forward.1} parent=1 // pred_check_branch
      %142 = sbr.rel (0) target = $region53
    $region52: #{pallas_forward.1} parent=1 // pred_region
      %143 = dma.done [#allocation5], 32
    $region53: #{pallas_forward.1} parent=1 // pred_fallthru
      _
    // Predicated region
    $region54: #{pallas_forward.1} parent=1 // pred_check
      _
    $region55: #{pallas_forward.1} parent=1 // pred_check_branch
      %145 = sbr.rel (0) target = $region57
    $region56: #{pallas_forward.1} parent=1 // pred_region
      %146 = dma.done [#allocation5], 61440
    $region57: #{pallas_forward.1} parent=1 // pred_fallthru
      _
    // Predicated region
    $region58: #{pallas_forward.1} parent=1 // pred_check
      _
    $region59: #{pallas_forward.1} parent=1 // pred_check_branch
      %148 = sbr.rel (0) target = $region61
    $region60: #{pallas_forward.1} parent=1 // pred_region
      %149 = dma.done [#allocation8], 12288
    $region61: #{pallas_forward.1} parent=1 // pred_fallthru
      _
    // Predicated region
    $region62: #{pallas_forward.1} parent=1 // pred_check
      _
    $region63: #{pallas_forward.1} parent=1 // pred_check_branch
      %151 = sbr.rel (0) target = $region65
    $region64: #{pallas_forward.1} parent=1 // pred_region
      %152 = dma.done [#allocation8], 128
    $region65: #{pallas_forward.1} parent=1 // pred_fallthru
      _
    // Predicated region
    $region66: #{pallas_forward.1} parent=1 // pred_check
      _
    $region67: #{pallas_forward.1} parent=1 // pred_check_branch
      %154 = sbr.rel (0) target = $region69
    $region68: #{pallas_forward.1} parent=1 // pred_region
      %155 = dma.done [#allocation11], 12288
    $region69: #{pallas_forward.1} parent=1 // pred_fallthru
      _
    // Predicated region
    $region70: #{pallas_forward.1} parent=1 // pred_check
      _
    $region71: #{pallas_forward.1} parent=1 // pred_check_branch
      %157 = sbr.rel (0) target = $region73
    $region72: #{pallas_forward.1} parent=1 // pred_region
      %158 = dma.done [#allocation11], 128
    $region73: #{pallas_forward.1} parent=1 // pred_fallthru
      _
    // Predicated region
    $region74: #{pallas_forward.1} parent=1 // pred_check
      _
    $region75: #{pallas_forward.1} parent=1 // pred_check_branch
      %160 = sbr.rel (0) target = $region77
    $region76: #{pallas_forward.1} parent=1 // pred_region
      %161 = dma.done [#allocation14], 1536
    $region77: #{pallas_forward.1} parent=1 // pred_fallthru
      _
    // Predicated region
    $region78: #{pallas_forward.1} parent=1 // pred_check
      _
    $region79: #{pallas_forward.1} parent=1 // pred_check_branch
      %163 = sbr.rel (0) target = $region81
    $region80: #{pallas_forward.1} parent=1 // pred_region
      %164 = dma.done [#allocation14], 16
    $region81: #{pallas_forward.1} parent=1 // pred_fallthru
      _
    // Predicated region
    $region82: #{pallas_forward.1} parent=1 // pred_check
      _
    $region83: #{pallas_forward.1} parent=1 // pred_check_branch
      %166 = sbr.rel (0) target = $region85
    $region84: #{pallas_forward.1} parent=1 // pred_region
      %167 = dma.done [#allocation17], 256
    $region85: #{pallas_forward.1} parent=1 // pred_fallthru
      _
    %v169 = vld [vmem:[%s0] sm:$0xff]
    %v170 = vld [vmem:[%s0 + $0x8] sm:$0xff]
    %v171 = vld [vmem:[%s0 + $0x10] sm:$0xff]
    %v172 = vld [vmem:[%s0 + $0x18] sm:$0xff]
    %v173 = vld [vmem:[%s0 + $0x20] sm:$0xff]
    %v174 = vld [vmem:[%s0 + $0x28] sm:$0xff]
    %v175 = vld [vmem:[%s0 + $0x30] sm:$0xff]
    %v176 = vld [vmem:[%s0 + $0x38] sm:$0xff]
    %v177 = vld [vmem:[%s0 + $0x40] sm:$0xff]
    %v178 = vld [vmem:[%s0 + $0x48] sm:$0xff]
    %v179 = vld [vmem:[%s0 + $0x50] sm:$0xff]
    %v180 = vld [vmem:[%s0 + $0x58] sm:$0xff]
    %v181 = vld [vmem:[%s0 + $0x60] sm:$0xff]
    %v182 = vld [vmem:[%s0 + $0x68] sm:$0xff]
    %v183 = vld [vmem:[%s0 + $0x70] sm:$0xff]
    %v184 = vld [vmem:[%s0 + $0x78] sm:$0xff]
    %v185 = vld [vmem:[%s0 + $0x80] sm:$0xff]
    %v186 = vld [vmem:[%s0 + $0x88] sm:$0xff]
    %v187 = vld [vmem:[%s0 + $0x90] sm:$0xff]
    %v188 = vld [vmem:[%s0 + $0x98] sm:$0xff]
    %v189 = vld [vmem:[%s0 + $0xa0] sm:$0xff]
    %v190 = vld [vmem:[%s0 + $0xa8] sm:$0xff]
    %v191 = vld [vmem:[%s0 + $0xb0] sm:$0xff]
    %v192 = vld [vmem:[%s0 + $0xb8] sm:$0xff]
    %v193 = vld [vmem:[%s0 + $0xc0] sm:$0xff]
    %v194 = vld [vmem:[%s0 + $0xc8] sm:$0xff]
    %v195 = vld [vmem:[%s0 + $0xd0] sm:$0xff]
    %v196 = vld [vmem:[%s0 + $0xd8] sm:$0xff]
    %v197 = vld [vmem:[%s0 + $0xe0] sm:$0xff]
    %v198 = vld [vmem:[%s0 + $0xe8] sm:$0xff]
    %v199 = vld [vmem:[%s0 + $0xf0] sm:$0xff]
    %v200 = vld [vmem:[%s0 + $0xf8] sm:$0xff]
    %v201 = vld [vmem:[#allocation4] sm:$0x3]
    %v203 = vlaneseq
    %v204 = vshrl.u32 %v203, 7
    %v205 = vsub.s32 0, %v204
    %v206 = vrot.slane %v201, %v205
    %v207 = vlaneseq
    %v208 = vshrl.u32 %v207, 7
    %v209 = vsub.s32 1, %v208
    %v210 = vrot.slane %v201, %v209
    %v213 = vld [vmem:[#allocation2] ss:$4 sm:$0x3]
    %215 = vset.pattern.permute.xlu0 0
    %216 = vperm.xlu0 %215, %v169
    %v217 = vpop.permute.xlu0 %216
    %220 = vset.pattern.permute.xlu0 0
    %221 = vperm.xlu0 %220, %v170
    %v222 = vpop.permute.xlu0 %221
    %225 = vset.pattern.permute.xlu0 0
    %226 = vperm.xlu0 %225, %v171
    %v227 = vpop.permute.xlu0 %226
    %230 = vset.pattern.permute.xlu0 0
    %231 = vperm.xlu0 %230, %v172
    %v232 = vpop.permute.xlu0 %231
    %235 = vset.pattern.permute.xlu0 0
    %236 = vperm.xlu0 %235, %v173
    %v237 = vpop.permute.xlu0 %236
    %240 = vset.pattern.permute.xlu0 0
    %241 = vperm.xlu0 %240, %v174
    %v242 = vpop.permute.xlu0 %241
    %245 = vset.pattern.permute.xlu0 0
    %246 = vperm.xlu0 %245, %v175
    %v247 = vpop.permute.xlu0 %246
    %250 = vset.pattern.permute.xlu0 0
    %251 = vperm.xlu0 %250, %v176
    %v252 = vpop.permute.xlu0 %251
    %255 = vset.pattern.permute.xlu0 0
    %256 = vperm.xlu0 %255, %v177
    %v257 = vpop.permute.xlu0 %256
    %260 = vset.pattern.permute.xlu0 0
    %261 = vperm.xlu0 %260, %v178
    %v262 = vpop.permute.xlu0 %261
    %265 = vset.pattern.permute.xlu0 0
    %266 = vperm.xlu0 %265, %v179
    %v267 = vpop.permute.xlu0 %266
    %270 = vset.pattern.permute.xlu0 0
    %271 = vperm.xlu0 %270, %v180
    %v272 = vpop.permute.xlu0 %271
    %275 = vset.pattern.permute.xlu0 0
    %276 = vperm.xlu0 %275, %v181
    %v277 = vpop.permute.xlu0 %276
    %280 = vset.pattern.permute.xlu0 0
    %281 = vperm.xlu0 %280, %v182
    %v282 = vpop.permute.xlu0 %281
    %285 = vset.pattern.permute.xlu0 0
    %286 = vperm.xlu0 %285, %v183
    %v287 = vpop.permute.xlu0 %286
    %290 = vset.pattern.permute.xlu0 0
    %291 = vperm.xlu0 %290, %v184
    %v292 = vpop.permute.xlu0 %291
    %295 = vset.pattern.permute.xlu0 0
    %296 = vperm.xlu0 %295, %v185
    %v297 = vpop.permute.xlu0 %296
    %300 = vset.pattern.permute.xlu0 0
    %301 = vperm.xlu0 %300, %v186
    %v302 = vpop.permute.xlu0 %301
    %305 = vset.pattern.permute.xlu0 0
    %306 = vperm.xlu0 %305, %v187
    %v307 = vpop.permute.xlu0 %306
    %310 = vset.pattern.permute.xlu0 0
    %311 = vperm.xlu0 %310, %v188
    %v312 = vpop.permute.xlu0 %311
    %315 = vset.pattern.permute.xlu0 0
    %316 = vperm.xlu0 %315, %v189
    %v317 = vpop.permute.xlu0 %316
    %320 = vset.pattern.permute.xlu0 0
    %321 = vperm.xlu0 %320, %v190
    %v322 = vpop.permute.xlu0 %321
    %325 = vset.pattern.permute.xlu0 0
    %326 = vperm.xlu0 %325, %v191
    %v327 = vpop.permute.xlu0 %326
    %330 = vset.pattern.permute.xlu0 0
    %331 = vperm.xlu0 %330, %v192
    %v332 = vpop.permute.xlu0 %331
    %335 = vset.pattern.permute.xlu0 0
    %336 = vperm.xlu0 %335, %v193
    %v337 = vpop.permute.xlu0 %336
    %340 = vset.pattern.permute.xlu0 0
    %341 = vperm.xlu0 %340, %v194
    %v342 = vpop.permute.xlu0 %341
    %345 = vset.pattern.permute.xlu0 0
    %346 = vperm.xlu0 %345, %v195
    %v347 = vpop.permute.xlu0 %346
    %350 = vset.pattern.permute.xlu0 0
    %351 = vperm.xlu0 %350, %v196
    %v352 = vpop.permute.xlu0 %351
    %355 = vset.pattern.permute.xlu0 0
    %356 = vperm.xlu0 %355, %v197
    %v357 = vpop.permute.xlu0 %356
    %360 = vset.pattern.permute.xlu0 0
    %361 = vperm.xlu0 %360, %v198
    %v362 = vpop.permute.xlu0 %361
    %365 = vset.pattern.permute.xlu0 0
    %366 = vperm.xlu0 %365, %v199
    %v367 = vpop.permute.xlu0 %366
    %370 = vset.pattern.permute.xlu0 0
    %371 = vperm.xlu0 %370, %v200
    %v372 = vpop.permute.xlu0 %371
    %v375 = vlaneseq
    %v376 = vshrl.u32 %v375, 7
    %v377 = vsub.s32 0, %v376
    %v378 = vrot.slane %v213, %v377
    %v379 = vlaneseq
    %v380 = vshrl.u32 %v379, 7
    %v381 = vsub.s32 1, %v380
    %v382 = vrot.slane %v213, %v381
    %v385 = vmul.f32 %v217, %v378
    %v386 = vmul.f32 %v217, %v382
    %v387 = vmul.f32 %v222, %v378
    %v388 = vmul.f32 %v222, %v382
    %v389 = vmul.f32 %v227, %v378
    %v390 = vmul.f32 %v227, %v382
    %v391 = vmul.f32 %v232, %v378
    %v392 = vmul.f32 %v232, %v382
    %v393 = vmul.f32 %v237, %v378
    %v394 = vmul.f32 %v237, %v382
    %v395 = vmul.f32 %v242, %v378
    %v396 = vmul.f32 %v242, %v382
    %v397 = vmul.f32 %v247, %v378
    %v398 = vmul.f32 %v247, %v382
    %v399 = vmul.f32 %v252, %v378
    %v400 = vmul.f32 %v252, %v382
    %v401 = vmul.f32 %v257, %v378
    %v402 = vmul.f32 %v257, %v382
    %v403 = vmul.f32 %v262, %v378
    %v404 = vmul.f32 %v262, %v382
    %v405 = vmul.f32 %v267, %v378
    %v406 = vmul.f32 %v267, %v382
    %v407 = vmul.f32 %v272, %v378
    %v408 = vmul.f32 %v272, %v382
    %v409 = vmul.f32 %v277, %v378
    %v410 = vmul.f32 %v277, %v382
    %v411 = vmul.f32 %v282, %v378
    %v412 = vmul.f32 %v282, %v382
    %v413 = vmul.f32 %v287, %v378
    %v414 = vmul.f32 %v287, %v382
    %v415 = vmul.f32 %v292, %v378
    %v416 = vmul.f32 %v292, %v382
    %v417 = vmul.f32 %v297, %v378
    %v418 = vmul.f32 %v297, %v382
    %v419 = vmul.f32 %v302, %v378
    %v420 = vmul.f32 %v302, %v382
    %v421 = vmul.f32 %v307, %v378
    %v422 = vmul.f32 %v307, %v382
    %v423 = vmul.f32 %v312, %v378
    %v424 = vmul.f32 %v312, %v382
    %v425 = vmul.f32 %v317, %v378
    %v426 = vmul.f32 %v317, %v382
    %v427 = vmul.f32 %v322, %v378
    %v428 = vmul.f32 %v322, %v382
    %v429 = vmul.f32 %v327, %v378
    %v430 = vmul.f32 %v327, %v382
    %v431 = vmul.f32 %v332, %v378
    %v432 = vmul.f32 %v332, %v382
    %v433 = vmul.f32 %v337, %v378
    %v434 = vmul.f32 %v337, %v382
    %v435 = vmul.f32 %v342, %v378
    %v436 = vmul.f32 %v342, %v382
    %v437 = vmul.f32 %v347, %v378
    %v438 = vmul.f32 %v347, %v382
    %v439 = vmul.f32 %v352, %v378
    %v440 = vmul.f32 %v352, %v382
    %v441 = vmul.f32 %v357, %v378
    %v442 = vmul.f32 %v357, %v382
    %v443 = vmul.f32 %v362, %v378
    %v444 = vmul.f32 %v362, %v382
    %v445 = vmul.f32 %v367, %v378
    %v446 = vmul.f32 %v367, %v382
    %v447 = vmul.f32 %v372, %v378
    %v448 = vmul.f32 %v372, %v382
    %v449 = vadd.f32 %v206, %v385
    %v450 = vadd.f32 %v210, %v386
    %v451 = vadd.f32 %v206, %v387
    %v452 = vadd.f32 %v210, %v388
    %v453 = vadd.f32 %v206, %v389
    %v454 = vadd.f32 %v210, %v390
    %v455 = vadd.f32 %v206, %v391
    %v456 = vadd.f32 %v210, %v392
    %v457 = vadd.f32 %v206, %v393
    %v458 = vadd.f32 %v210, %v394
    %v459 = vadd.f32 %v206, %v395
    %v460 = vadd.f32 %v210, %v396
    %v461 = vadd.f32 %v206, %v397
    %v462 = vadd.f32 %v210, %v398
    %v463 = vadd.f32 %v206, %v399
    %v464 = vadd.f32 %v210, %v400
    %v465 = vadd.f32 %v206, %v401
    %v466 = vadd.f32 %v210, %v402
    %v467 = vadd.f32 %v206, %v403
    %v468 = vadd.f32 %v210, %v404
    %v469 = vadd.f32 %v206, %v405
    %v470 = vadd.f32 %v210, %v406
    %v471 = vadd.f32 %v206, %v407
    %v472 = vadd.f32 %v210, %v408
    %v473 = vadd.f32 %v206, %v409
    %v474 = vadd.f32 %v210, %v410
    %v475 = vadd.f32 %v206, %v411
    %v476 = vadd.f32 %v210, %v412
    %v477 = vadd.f32 %v206, %v413
    %v478 = vadd.f32 %v210, %v414
    %v479 = vadd.f32 %v206, %v415
    %v480 = vadd.f32 %v210, %v416
    %v481 = vadd.f32 %v206, %v417
    %v482 = vadd.f32 %v210, %v418
    %v483 = vadd.f32 %v206, %v419
    %v484 = vadd.f32 %v210, %v420
    %v485 = vadd.f32 %v206, %v421
    %v486 = vadd.f32 %v210, %v422
    %v487 = vadd.f32 %v206, %v423
    %v488 = vadd.f32 %v210, %v424
    %v489 = vadd.f32 %v206, %v425
    %v490 = vadd.f32 %v210, %v426
    %v491 = vadd.f32 %v206, %v427
    %v492 = vadd.f32 %v210, %v428
    %v493 = vadd.f32 %v206, %v429
    %v494 = vadd.f32 %v210, %v430
    %v495 = vadd.f32 %v206, %v431
    %v496 = vadd.f32 %v210, %v432
    %v497 = vadd.f32 %v206, %v433
    %v498 = vadd.f32 %v210, %v434
    %v499 = vadd.f32 %v206, %v435
    %v500 = vadd.f32 %v210, %v436
    %v501 = vadd.f32 %v206, %v437
    %v502 = vadd.f32 %v210, %v438
    %v503 = vadd.f32 %v206, %v439
    %v504 = vadd.f32 %v210, %v440
    %v505 = vadd.f32 %v206, %v441
    %v506 = vadd.f32 %v210, %v442
    %v507 = vadd.f32 %v206, %v443
    %v508 = vadd.f32 %v210, %v444
    %v509 = vadd.f32 %v206, %v445
    %v510 = vadd.f32 %v210, %v446
    %v511 = vadd.f32 %v206, %v447
    %v512 = vadd.f32 %v210, %v448
    %s513 = scalar_lea.vmem [#allocation2], 1
    %v514 = vld [vmem:[%s513] ss:$4 sm:$0x3]
    %515 = vset.pattern.permute.xlu0 1
    %516 = vperm.xlu0 %515, %v169
    %v517 = vpop.permute.xlu0 %516
    %519 = vset.pattern.permute.xlu0 1
    %520 = vperm.xlu0 %519, %v170
    %v521 = vpop.permute.xlu0 %520
    %523 = vset.pattern.permute.xlu0 1
    %524 = vperm.xlu0 %523, %v171
    %v525 = vpop.permute.xlu0 %524
    %527 = vset.pattern.permute.xlu0 1
    %528 = vperm.xlu0 %527, %v172
    %v529 = vpop.permute.xlu0 %528
    %531 = vset.pattern.permute.xlu0 1
    %532 = vperm.xlu0 %531, %v173
    %v533 = vpop.permute.xlu0 %532
    %535 = vset.pattern.permute.xlu0 1
    %536 = vperm.xlu0 %535, %v174
    %v537 = vpop.permute.xlu0 %536
    %539 = vset.pattern.permute.xlu0 1
    %540 = vperm.xlu0 %539, %v175
    %v541 = vpop.permute.xlu0 %540
    %543 = vset.pattern.permute.xlu0 1
    %544 = vperm.xlu0 %543, %v176
    %v545 = vpop.permute.xlu0 %544
    %547 = vset.pattern.permute.xlu0 1
    %548 = vperm.xlu0 %547, %v177
    %v549 = vpop.permute.xlu0 %548
    %551 = vset.pattern.permute.xlu0 1
    %552 = vperm.xlu0 %551, %v178
    %v553 = vpop.permute.xlu0 %552
    %555 = vset.pattern.permute.xlu0 1
    %556 = vperm.xlu0 %555, %v179
    %v557 = vpop.permute.xlu0 %556
    %559 = vset.pattern.permute.xlu0 1
    %560 = vperm.xlu0 %559, %v180
    %v561 = vpop.permute.xlu0 %560
    %563 = vset.pattern.permute.xlu0 1
    %564 = vperm.xlu0 %563, %v181
    %v565 = vpop.permute.xlu0 %564
    %567 = vset.pattern.permute.xlu0 1
    %568 = vperm.xlu0 %567, %v182
    %v569 = vpop.permute.xlu0 %568
    %571 = vset.pattern.permute.xlu0 1
    %572 = vperm.xlu0 %571, %v183
    %v573 = vpop.permute.xlu0 %572
    %575 = vset.pattern.permute.xlu0 1
    %576 = vperm.xlu0 %575, %v184
    %v577 = vpop.permute.xlu0 %576
    %579 = vset.pattern.permute.xlu0 1
    %580 = vperm.xlu0 %579, %v185
    %v581 = vpop.permute.xlu0 %580
    %583 = vset.pattern.permute.xlu0 1
    %584 = vperm.xlu0 %583, %v186
    %v585 = vpop.permute.xlu0 %584
    %587 = vset.pattern.permute.xlu0 1
    %588 = vperm.xlu0 %587, %v187
    %v589 = vpop.permute.xlu0 %588
    %591 = vset.pattern.permute.xlu0 1
    %592 = vperm.xlu0 %591, %v188
    %v593 = vpop.permute.xlu0 %592
    %595 = vset.pattern.permute.xlu0 1
    %596 = vperm.xlu0 %595, %v189
    %v597 = vpop.permute.xlu0 %596
    %599 = vset.pattern.permute.xlu0 1
    %600 = vperm.xlu0 %599, %v190
    %v601 = vpop.permute.xlu0 %600
    %603 = vset.pattern.permute.xlu0 1
    %604 = vperm.xlu0 %603, %v191
    %v605 = vpop.permute.xlu0 %604
    %607 = vset.pattern.permute.xlu0 1
    %608 = vperm.xlu0 %607, %v192
    %v609 = vpop.permute.xlu0 %608
    %611 = vset.pattern.permute.xlu0 1
    %612 = vperm.xlu0 %611, %v193
    %v613 = vpop.permute.xlu0 %612
    %615 = vset.pattern.permute.xlu0 1
    %616 = vperm.xlu0 %615, %v194
    %v617 = vpop.permute.xlu0 %616
    %619 = vset.pattern.permute.xlu0 1
    %620 = vperm.xlu0 %619, %v195
    %v621 = vpop.permute.xlu0 %620
    %623 = vset.pattern.permute.xlu0 1
    %624 = vperm.xlu0 %623, %v196
    %v625 = vpop.permute.xlu0 %624
    %627 = vset.pattern.permute.xlu0 1
    %628 = vperm.xlu0 %627, %v197
    %v629 = vpop.permute.xlu0 %628
    %631 = vset.pattern.permute.xlu0 1
    %632 = vperm.xlu0 %631, %v198
    %v633 = vpop.permute.xlu0 %632
    %635 = vset.pattern.permute.xlu0 1
    %636 = vperm.xlu0 %635, %v199
    %v637 = vpop.permute.xlu0 %636
    %639 = vset.pattern.permute.xlu0 1
    %640 = vperm.xlu0 %639, %v200
    %v641 = vpop.permute.xlu0 %640
    %v644 = vlaneseq
    %v645 = vshrl.u32 %v644, 7
    %v646 = vsub.s32 0, %v645
    %v647 = vrot.slane %v514, %v646
    %v648 = vlaneseq
    %v649 = vshrl.u32 %v648, 7
    %v650 = vsub.s32 1, %v649
    %v651 = vrot.slane %v514, %v650
    %v654 = vmul.f32 %v517, %v647
    %v655 = vmul.f32 %v517, %v651
    %v656 = vmul.f32 %v521, %v647
    %v657 = vmul.f32 %v521, %v651
    %v658 = vmul.f32 %v525, %v647
    %v659 = vmul.f32 %v525, %v651
    %v660 = vmul.f32 %v529, %v647
    %v661 = vmul.f32 %v529, %v651
    %v662 = vmul.f32 %v533, %v647
    %v663 = vmul.f32 %v533, %v651
    %v664 = vmul.f32 %v537, %v647
    %v665 = vmul.f32 %v537, %v651
    %v666 = vmul.f32 %v541, %v647
    %v667 = vmul.f32 %v541, %v651
    %v668 = vmul.f32 %v545, %v647
    %v669 = vmul.f32 %v545, %v651
    %v670 = vmul.f32 %v549, %v647
    %v671 = vmul.f32 %v549, %v651
    %v672 = vmul.f32 %v553, %v647
    %v673 = vmul.f32 %v553, %v651
    %v674 = vmul.f32 %v557, %v647
    %v675 = vmul.f32 %v557, %v651
    %v676 = vmul.f32 %v561, %v647
    %v677 = vmul.f32 %v561, %v651
    %v678 = vmul.f32 %v565, %v647
    %v679 = vmul.f32 %v565, %v651
    %v680 = vmul.f32 %v569, %v647
    %v681 = vmul.f32 %v569, %v651
    %v682 = vmul.f32 %v573, %v647
    %v683 = vmul.f32 %v573, %v651
    %v684 = vmul.f32 %v577, %v647
    %v685 = vmul.f32 %v577, %v651
    %v686 = vmul.f32 %v581, %v647
    %v687 = vmul.f32 %v581, %v651
    %v688 = vmul.f32 %v585, %v647
    %v689 = vmul.f32 %v585, %v651
    %v690 = vmul.f32 %v589, %v647
    %v691 = vmul.f32 %v589, %v651
    %v692 = vmul.f32 %v593, %v647
    %v693 = vmul.f32 %v593, %v651
    %v694 = vmul.f32 %v597, %v647
    %v695 = vmul.f32 %v597, %v651
    %v696 = vmul.f32 %v601, %v647
    %v697 = vmul.f32 %v601, %v651
    %v698 = vmul.f32 %v605, %v647
    %v699 = vmul.f32 %v605, %v651
    %v700 = vmul.f32 %v609, %v647
    %v701 = vmul.f32 %v609, %v651
    %v702 = vmul.f32 %v613, %v647
    %v703 = vmul.f32 %v613, %v651
    %v704 = vmul.f32 %v617, %v647
    %v705 = vmul.f32 %v617, %v651
    %v706 = vmul.f32 %v621, %v647
    %v707 = vmul.f32 %v621, %v651
    %v708 = vmul.f32 %v625, %v647
    %v709 = vmul.f32 %v625, %v651
    %v710 = vmul.f32 %v629, %v647
    %v711 = vmul.f32 %v629, %v651
    %v712 = vmul.f32 %v633, %v647
    %v713 = vmul.f32 %v633, %v651
    %v714 = vmul.f32 %v637, %v647
    %v715 = vmul.f32 %v637, %v651
    %v716 = vmul.f32 %v641, %v647
    %v717 = vmul.f32 %v641, %v651
    %v718 = vadd.f32 %v449, %v654
    %v719 = vadd.f32 %v450, %v655
    %v720 = vadd.f32 %v451, %v656
    %v721 = vadd.f32 %v452, %v657
    %v722 = vadd.f32 %v453, %v658
    %v723 = vadd.f32 %v454, %v659
    %v724 = vadd.f32 %v455, %v660
    %v725 = vadd.f32 %v456, %v661
    %v726 = vadd.f32 %v457, %v662
    %v727 = vadd.f32 %v458, %v663
    %v728 = vadd.f32 %v459, %v664
    %v729 = vadd.f32 %v460, %v665
    %v730 = vadd.f32 %v461, %v666
    %v731 = vadd.f32 %v462, %v667
    %v732 = vadd.f32 %v463, %v668
    %v733 = vadd.f32 %v464, %v669
    %v734 = vadd.f32 %v465, %v670
    %v735 = vadd.f32 %v466, %v671
    %v736 = vadd.f32 %v467, %v672
    %v737 = vadd.f32 %v468, %v673
    %v738 = vadd.f32 %v469, %v674
    %v739 = vadd.f32 %v470, %v675
    %v740 = vadd.f32 %v471, %v676
    %v741 = vadd.f32 %v472, %v677
    %v742 = vadd.f32 %v473, %v678
    %v743 = vadd.f32 %v474, %v679
    %v744 = vadd.f32 %v475, %v680
    %v745 = vadd.f32 %v476, %v681
    %v746 = vadd.f32 %v477, %v682
    %v747 = vadd.f32 %v478, %v683
    %v748 = vadd.f32 %v479, %v684
    %v749 = vadd.f32 %v480, %v685
    %v750 = vadd.f32 %v481, %v686
    %v751 = vadd.f32 %v482, %v687
    %v752 = vadd.f32 %v483, %v688
    %v753 = vadd.f32 %v484, %v689
    %v754 = vadd.f32 %v485, %v690
    %v755 = vadd.f32 %v486, %v691
    %v756 = vadd.f32 %v487, %v692
    %v757 = vadd.f32 %v488, %v693
    %v758 = vadd.f32 %v489, %v694
    %v759 = vadd.f32 %v490, %v695
    %v760 = vadd.f32 %v491, %v696
    %v761 = vadd.f32 %v492, %v697
    %v762 = vadd.f32 %v493, %v698
    %v763 = vadd.f32 %v494, %v699
    %v764 = vadd.f32 %v495, %v700
    %v765 = vadd.f32 %v496, %v701
    %v766 = vadd.f32 %v497, %v702
    %v767 = vadd.f32 %v498, %v703
    %v768 = vadd.f32 %v499, %v704
    %v769 = vadd.f32 %v500, %v705
    %v770 = vadd.f32 %v501, %v706
    %v771 = vadd.f32 %v502, %v707
    %v772 = vadd.f32 %v503, %v708
    %v773 = vadd.f32 %v504, %v709
    %v774 = vadd.f32 %v505, %v710
    %v775 = vadd.f32 %v506, %v711
    %v776 = vadd.f32 %v507, %v712
    %v777 = vadd.f32 %v508, %v713
    %v778 = vadd.f32 %v509, %v714
    %v779 = vadd.f32 %v510, %v715
    %v780 = vadd.f32 %v511, %v716
    %v781 = vadd.f32 %v512, %v717
    %s782 = scalar_lea.vmem [#allocation2], 2
    %v783 = vld [vmem:[%s782] ss:$4 sm:$0x3]
    %784 = vset.pattern.permute.xlu0 2
    %785 = vperm.xlu0 %784, %v169
    %v786 = vpop.permute.xlu0 %785
    %788 = vset.pattern.permute.xlu0 2
    %789 = vperm.xlu0 %788, %v170
    %v790 = vpop.permute.xlu0 %789
    %792 = vset.pattern.permute.xlu0 2
    %793 = vperm.xlu0 %792, %v171
    %v794 = vpop.permute.xlu0 %793
    %796 = vset.pattern.permute.xlu0 2
    %797 = vperm.xlu0 %796, %v172
    %v798 = vpop.permute.xlu0 %797
    %800 = vset.pattern.permute.xlu0 2
    %801 = vperm.xlu0 %800, %v173
    %v802 = vpop.permute.xlu0 %801
    %804 = vset.pattern.permute.xlu0 2
    %805 = vperm.xlu0 %804, %v174
    %v806 = vpop.permute.xlu0 %805
    %808 = vset.pattern.permute.xlu0 2
    %809 = vperm.xlu0 %808, %v175
    %v810 = vpop.permute.xlu0 %809
    %812 = vset.pattern.permute.xlu0 2
    %813 = vperm.xlu0 %812, %v176
    %v814 = vpop.permute.xlu0 %813
    %816 = vset.pattern.permute.xlu0 2
    %817 = vperm.xlu0 %816, %v177
    %v818 = vpop.permute.xlu0 %817
    %820 = vset.pattern.permute.xlu0 2
    %821 = vperm.xlu0 %820, %v178
    %v822 = vpop.permute.xlu0 %821
    %824 = vset.pattern.permute.xlu0 2
    %825 = vperm.xlu0 %824, %v179
    %v826 = vpop.permute.xlu0 %825
    %828 = vset.pattern.permute.xlu0 2
    %829 = vperm.xlu0 %828, %v180
    %v830 = vpop.permute.xlu0 %829
    %832 = vset.pattern.permute.xlu0 2
    %833 = vperm.xlu0 %832, %v181
    %v834 = vpop.permute.xlu0 %833
    %836 = vset.pattern.permute.xlu0 2
    %837 = vperm.xlu0 %836, %v182
    %v838 = vpop.permute.xlu0 %837
    %840 = vset.pattern.permute.xlu0 2
    %841 = vperm.xlu0 %840, %v183
    %v842 = vpop.permute.xlu0 %841
    %844 = vset.pattern.permute.xlu0 2
    %845 = vperm.xlu0 %844, %v184
    %v846 = vpop.permute.xlu0 %845
    %848 = vset.pattern.permute.xlu0 2
    %849 = vperm.xlu0 %848, %v185
    %v850 = vpop.permute.xlu0 %849
    %852 = vset.pattern.permute.xlu0 2
    %853 = vperm.xlu0 %852, %v186
    %v854 = vpop.permute.xlu0 %853
    %856 = vset.pattern.permute.xlu0 2
    %857 = vperm.xlu0 %856, %v187
    %v858 = vpop.permute.xlu0 %857
    %860 = vset.pattern.permute.xlu0 2
    %861 = vperm.xlu0 %860, %v188
    %v862 = vpop.permute.xlu0 %861
    %864 = vset.pattern.permute.xlu0 2
    %865 = vperm.xlu0 %864, %v189
    %v866 = vpop.permute.xlu0 %865
    %868 = vset.pattern.permute.xlu0 2
    %869 = vperm.xlu0 %868, %v190
    %v870 = vpop.permute.xlu0 %869
    %872 = vset.pattern.permute.xlu0 2
    %873 = vperm.xlu0 %872, %v191
    %v874 = vpop.permute.xlu0 %873
    %876 = vset.pattern.permute.xlu0 2
    %877 = vperm.xlu0 %876, %v192
    %v878 = vpop.permute.xlu0 %877
    %880 = vset.pattern.permute.xlu0 2
    %881 = vperm.xlu0 %880, %v193
    %v882 = vpop.permute.xlu0 %881
    %884 = vset.pattern.permute.xlu0 2
    %885 = vperm.xlu0 %884, %v194
    %v886 = vpop.permute.xlu0 %885
    %888 = vset.pattern.permute.xlu0 2
    %889 = vperm.xlu0 %888, %v195
    %v890 = vpop.permute.xlu0 %889
    %892 = vset.pattern.permute.xlu0 2
    %893 = vperm.xlu0 %892, %v196
    %v894 = vpop.permute.xlu0 %893
    %896 = vset.pattern.permute.xlu0 2
    %897 = vperm.xlu0 %896, %v197
    %v898 = vpop.permute.xlu0 %897
    %900 = vset.pattern.permute.xlu0 2
    %901 = vperm.xlu0 %900, %v198
    %v902 = vpop.permute.xlu0 %901
    %904 = vset.pattern.permute.xlu0 2
    %905 = vperm.xlu0 %904, %v199
    %v906 = vpop.permute.xlu0 %905
    %908 = vset.pattern.permute.xlu0 2
    %909 = vperm.xlu0 %908, %v200
    %v910 = vpop.permute.xlu0 %909
    %v913 = vlaneseq
    %v914 = vshrl.u32 %v913, 7
    %v915 = vsub.s32 0, %v914
    %v916 = vrot.slane %v783, %v915
    %v917 = vlaneseq
    %v918 = vshrl.u32 %v917, 7
    %v919 = vsub.s32 1, %v918
    %v920 = vrot.slane %v783, %v919
    %v923 = vmul.f32 %v786, %v916
    %v924 = vmul.f32 %v786, %v920
    %v925 = vmul.f32 %v790, %v916
    %v926 = vmul.f32 %v790, %v920
    %v927 = vmul.f32 %v794, %v916
    %v928 = vmul.f32 %v794, %v920
    %v929 = vmul.f32 %v798, %v916
    %v930 = vmul.f32 %v798, %v920
    %v931 = vmul.f32 %v802, %v916
    %v932 = vmul.f32 %v802, %v920
    %v933 = vmul.f32 %v806, %v916
    %v934 = vmul.f32 %v806, %v920
    %v935 = vmul.f32 %v810, %v916
    %v936 = vmul.f32 %v810, %v920
    %v937 = vmul.f32 %v814, %v916
    %v938 = vmul.f32 %v814, %v920
    %v939 = vmul.f32 %v818, %v916
    %v940 = vmul.f32 %v818, %v920
    %v941 = vmul.f32 %v822, %v916
    %v942 = vmul.f32 %v822, %v920
    %v943 = vmul.f32 %v826, %v916
    %v944 = vmul.f32 %v826, %v920
    %v945 = vmul.f32 %v830, %v916
    %v946 = vmul.f32 %v830, %v920
    %v947 = vmul.f32 %v834, %v916
    %v948 = vmul.f32 %v834, %v920
    %v949 = vmul.f32 %v838, %v916
    %v950 = vmul.f32 %v838, %v920
    %v951 = vmul.f32 %v842, %v916
    %v952 = vmul.f32 %v842, %v920
    %v953 = vmul.f32 %v846, %v916
    %v954 = vmul.f32 %v846, %v920
    %v955 = vmul.f32 %v850, %v916
    %v956 = vmul.f32 %v850, %v920
    %v957 = vmul.f32 %v854, %v916
    %v958 = vmul.f32 %v854, %v920
    %v959 = vmul.f32 %v858, %v916
    %v960 = vmul.f32 %v858, %v920
    %v961 = vmul.f32 %v862, %v916
    %v962 = vmul.f32 %v862, %v920
    %v963 = vmul.f32 %v866, %v916
    %v964 = vmul.f32 %v866, %v920
    %v965 = vmul.f32 %v870, %v916
    %v966 = vmul.f32 %v870, %v920
    %v967 = vmul.f32 %v874, %v916
    %v968 = vmul.f32 %v874, %v920
    %v969 = vmul.f32 %v878, %v916
    %v970 = vmul.f32 %v878, %v920
    %v971 = vmul.f32 %v882, %v916
    %v972 = vmul.f32 %v882, %v920
    %v973 = vmul.f32 %v886, %v916
    %v974 = vmul.f32 %v886, %v920
    %v975 = vmul.f32 %v890, %v916
    %v976 = vmul.f32 %v890, %v920
    %v977 = vmul.f32 %v894, %v916
    %v978 = vmul.f32 %v894, %v920
    %v979 = vmul.f32 %v898, %v916
    %v980 = vmul.f32 %v898, %v920
    %v981 = vmul.f32 %v902, %v916
    %v982 = vmul.f32 %v902, %v920
    %v983 = vmul.f32 %v906, %v916
    %v984 = vmul.f32 %v906, %v920
    %v985 = vmul.f32 %v910, %v916
    %v986 = vmul.f32 %v910, %v920
    %v987 = vadd.f32 %v718, %v923
    %v988 = vadd.f32 %v719, %v924
    %v989 = vadd.f32 %v720, %v925
    %v990 = vadd.f32 %v721, %v926
    %v991 = vadd.f32 %v722, %v927
    %v992 = vadd.f32 %v723, %v928
    %v993 = vadd.f32 %v724, %v929
    %v994 = vadd.f32 %v725, %v930
    %v995 = vadd.f32 %v726, %v931
    %v996 = vadd.f32 %v727, %v932
    %v997 = vadd.f32 %v728, %v933
    %v998 = vadd.f32 %v729, %v934
    %v999 = vadd.f32 %v730, %v935
    %v1000 = vadd.f32 %v731, %v936
    %v1001 = vadd.f32 %v732, %v937
    %v1002 = vadd.f32 %v733, %v938
    %v1003 = vadd.f32 %v734, %v939
    %v1004 = vadd.f32 %v735, %v940
    %v1005 = vadd.f32 %v736, %v941
    %v1006 = vadd.f32 %v737, %v942
    %v1007 = vadd.f32 %v738, %v943
    %v1008 = vadd.f32 %v739, %v944
    %v1009 = vadd.f32 %v740, %v945
    %v1010 = vadd.f32 %v741, %v946
    %v1011 = vadd.f32 %v742, %v947
    %v1012 = vadd.f32 %v743, %v948
    %v1013 = vadd.f32 %v744, %v949
    %v1014 = vadd.f32 %v745, %v950
    %v1015 = vadd.f32 %v746, %v951
    %v1016 = vadd.f32 %v747, %v952
    %v1017 = vadd.f32 %v748, %v953
    %v1018 = vadd.f32 %v749, %v954
    %v1019 = vadd.f32 %v750, %v955
    %v1020 = vadd.f32 %v751, %v956
    %v1021 = vadd.f32 %v752, %v957
    %v1022 = vadd.f32 %v753, %v958
    %v1023 = vadd.f32 %v754, %v959
    %v1024 = vadd.f32 %v755, %v960
    %v1025 = vadd.f32 %v756, %v961
    %v1026 = vadd.f32 %v757, %v962
    %v1027 = vadd.f32 %v758, %v963
    %v1028 = vadd.f32 %v759, %v964
    %v1029 = vadd.f32 %v760, %v965
    %v1030 = vadd.f32 %v761, %v966
    %v1031 = vadd.f32 %v762, %v967
    %v1032 = vadd.f32 %v763, %v968
    %v1033 = vadd.f32 %v764, %v969
    %v1034 = vadd.f32 %v765, %v970
    %v1035 = vadd.f32 %v766, %v971
    %v1036 = vadd.f32 %v767, %v972
    %v1037 = vadd.f32 %v768, %v973
    %v1038 = vadd.f32 %v769, %v974
    %v1039 = vadd.f32 %v770, %v975
    %v1040 = vadd.f32 %v771, %v976
    %v1041 = vadd.f32 %v772, %v977
    %v1042 = vadd.f32 %v773, %v978
    %v1043 = vadd.f32 %v774, %v979
    %v1044 = vadd.f32 %v775, %v980
    %v1045 = vadd.f32 %v776, %v981
    %v1046 = vadd.f32 %v777, %v982
    %v1047 = vadd.f32 %v778, %v983
    %v1048 = vadd.f32 %v779, %v984
    %v1049 = vadd.f32 %v780, %v985
    %v1050 = vadd.f32 %v781, %v986
    %v1051 = vpack.c.bf16 %v989, %v987
    %v1052 = vpack.c.bf16 %v990, %v988
    %v1053 = vpack.c.bf16 %v993, %v991
    %v1054 = vpack.c.bf16 %v994, %v992
    %v1055 = vpack.c.bf16 %v997, %v995
    %v1056 = vpack.c.bf16 %v998, %v996
    %v1057 = vpack.c.bf16 %v1001, %v999
    %v1058 = vpack.c.bf16 %v1002, %v1000
    %v1059 = vpack.c.bf16 %v1005, %v1003
    %v1060 = vpack.c.bf16 %v1006, %v1004
    %v1061 = vpack.c.bf16 %v1009, %v1007
    %v1062 = vpack.c.bf16 %v1010, %v1008
    %v1063 = vpack.c.bf16 %v1013, %v1011
    %v1064 = vpack.c.bf16 %v1014, %v1012
    %v1065 = vpack.c.bf16 %v1017, %v1015
    %v1066 = vpack.c.bf16 %v1018, %v1016
    %v1067 = vpack.c.bf16 %v1021, %v1019
    %v1068 = vpack.c.bf16 %v1022, %v1020
    %v1069 = vpack.c.bf16 %v1025, %v1023
    %v1070 = vpack.c.bf16 %v1026, %v1024
    %v1071 = vpack.c.bf16 %v1029, %v1027
    %v1072 = vpack.c.bf16 %v1030, %v1028
    %v1073 = vpack.c.bf16 %v1033, %v1031
    %v1074 = vpack.c.bf16 %v1034, %v1032
    %v1075 = vpack.c.bf16 %v1037, %v1035
    %v1076 = vpack.c.bf16 %v1038, %v1036
    %v1077 = vpack.c.bf16 %v1041, %v1039
    %v1078 = vpack.c.bf16 %v1042, %v1040
    %v1079 = vpack.c.bf16 %v1045, %v1043
    %v1080 = vpack.c.bf16 %v1046, %v1044
    %v1081 = vpack.c.bf16 %v1049, %v1047
    %v1082 = vpack.c.bf16 %v1050, %v1048
    %v1083 = vld [vmem:[#allocation6] sm:$0xff]
    %v1084 = vld [vmem:[#allocation6 + $0x8] sm:$0xff]
    %v1085 = vld [vmem:[#allocation6 + $0x10] sm:$0xff]
    %v1086 = vld [vmem:[#allocation6 + $0x18] sm:$0xff]
    %v1087 = vld [vmem:[#allocation6 + $0x20] sm:$0xff]
    %v1088 = vld [vmem:[#allocation6 + $0x28] sm:$0xff]
    %v1089 = vld [vmem:[#allocation6 + $0x30] sm:$0xff]
    %v1090 = vld [vmem:[#allocation6 + $0x38] sm:$0xff]
    %v1091 = vld [vmem:[#allocation6 + $0x40] sm:$0xff]
    %v1092 = vld [vmem:[#allocation6 + $0x48] sm:$0xff]
    %v1093 = vld [vmem:[#allocation6 + $0x50] sm:$0xff]
    %v1094 = vld [vmem:[#allocation6 + $0x58] sm:$0xff]
    %v1095 = vld [vmem:[#allocation6 + $0x60] sm:$0xff]
    %v1096 = vld [vmem:[#allocation6 + $0x68] sm:$0xff]
    %v1097 = vld [vmem:[#allocation6 + $0x70] sm:$0xff]
    %v1098 = vld [vmem:[#allocation6 + $0x78] sm:$0xff]
    %v1099 = vld [vmem:[#allocation6 + $0x80] sm:$0xff]
    %v1100 = vld [vmem:[#allocation6 + $0x88] sm:$0xff]
    %v1101 = vld [vmem:[#allocation6 + $0x90] sm:$0xff]
    %v1102 = vld [vmem:[#allocation6 + $0x98] sm:$0xff]
    %v1103 = vld [vmem:[#allocation6 + $0xa0] sm:$0xff]
    %v1104 = vld [vmem:[#allocation6 + $0xa8] sm:$0xff]
    %v1105 = vld [vmem:[#allocation6 + $0xb0] sm:$0xff]
    %v1106 = vld [vmem:[#allocation6 + $0xb8] sm:$0xff]
    %v1107 = vld [vmem:[#allocation6 + $0xc0] sm:$0xff]
    %v1108 = vld [vmem:[#allocation6 + $0xc8] sm:$0xff]
    %v1109 = vld [vmem:[#allocation6 + $0xd0] sm:$0xff]
    %v1110 = vld [vmem:[#allocation6 + $0xd8] sm:$0xff]
    %v1111 = vld [vmem:[#allocation6 + $0xe0] sm:$0xff]
    %v1112 = vld [vmem:[#allocation6 + $0xe8] sm:$0xff]
    %v1113 = vld [vmem:[#allocation6 + $0xf0] sm:$0xff]
    %v1114 = vld [vmem:[#allocation6 + $0xf8] sm:$0xff]
    %v1147 = vunpack.c.l.b16 %v1083
    %v1148 = vunpack.c.h.b16 %v1083
    %v1149 = vunpack.c.l.b16 %v1084
    %v1150 = vunpack.c.h.b16 %v1084
    %v1151 = vunpack.c.l.b16 %v1085
    %v1152 = vunpack.c.h.b16 %v1085
    %v1153 = vunpack.c.l.b16 %v1086
    %v1154 = vunpack.c.h.b16 %v1086
    %v1155 = vunpack.c.l.b16 %v1087
    %v1156 = vunpack.c.h.b16 %v1087
    %v1157 = vunpack.c.l.b16 %v1088
    %v1158 = vunpack.c.h.b16 %v1088
    %v1159 = vunpack.c.l.b16 %v1089
    %v1160 = vunpack.c.h.b16 %v1089
    %v1161 = vunpack.c.l.b16 %v1090
    %v1162 = vunpack.c.h.b16 %v1090
    %v1163 = vunpack.c.l.b16 %v1091
    %v1164 = vunpack.c.h.b16 %v1091
    %v1165 = vunpack.c.l.b16 %v1092
    %v1166 = vunpack.c.h.b16 %v1092
    %v1167 = vunpack.c.l.b16 %v1093
    %v1168 = vunpack.c.h.b16 %v1093
    %v1169 = vunpack.c.l.b16 %v1094
    %v1170 = vunpack.c.h.b16 %v1094
    %v1171 = vunpack.c.l.b16 %v1095
    %v1172 = vunpack.c.h.b16 %v1095
    %v1173 = vunpack.c.l.b16 %v1096
    %v1174 = vunpack.c.h.b16 %v1096
    %v1175 = vunpack.c.l.b16 %v1097
    %v1176 = vunpack.c.h.b16 %v1097
    %v1177 = vunpack.c.l.b16 %v1098
    %v1178 = vunpack.c.h.b16 %v1098
    %v1179 = vunpack.c.l.b16 %v1099
    %v1180 = vunpack.c.h.b16 %v1099
    %v1181 = vunpack.c.l.b16 %v1100
    %v1182 = vunpack.c.h.b16 %v1100
    %v1183 = vunpack.c.l.b16 %v1101
    %v1184 = vunpack.c.h.b16 %v1101
    %v1185 = vunpack.c.l.b16 %v1102
    %v1186 = vunpack.c.h.b16 %v1102
    %v1187 = vunpack.c.l.b16 %v1103
    %v1188 = vunpack.c.h.b16 %v1103
    %v1189 = vunpack.c.l.b16 %v1104
    %v1190 = vunpack.c.h.b16 %v1104
    %v1191 = vunpack.c.l.b16 %v1105
    %v1192 = vunpack.c.h.b16 %v1105
    %v1193 = vunpack.c.l.b16 %v1106
    %v1194 = vunpack.c.h.b16 %v1106
    %v1195 = vunpack.c.l.b16 %v1107
    %v1196 = vunpack.c.h.b16 %v1107
    %v1197 = vunpack.c.l.b16 %v1108
    %v1198 = vunpack.c.h.b16 %v1108
    %v1199 = vunpack.c.l.b16 %v1109
    %v1200 = vunpack.c.h.b16 %v1109
    %v1201 = vunpack.c.l.b16 %v1110
    %v1202 = vunpack.c.h.b16 %v1110
    %v1203 = vunpack.c.l.b16 %v1111
    %v1204 = vunpack.c.h.b16 %v1111
    %v1205 = vunpack.c.l.b16 %v1112
    %v1206 = vunpack.c.h.b16 %v1112
    %v1207 = vunpack.c.l.b16 %v1113
    %v1208 = vunpack.c.h.b16 %v1113
    %v1209 = vunpack.c.l.b16 %v1114
    %v1210 = vunpack.c.h.b16 %v1114
    %v1211 = vpack.c.b16 %v1149, %v1147
    %v1212 = vpack.c.b16 %v1150, %v1148
    %v1213 = vpack.c.b16 %v1153, %v1151
    %v1214 = vpack.c.b16 %v1154, %v1152
    %v1215 = vpack.c.b16 %v1157, %v1155
    %v1216 = vpack.c.b16 %v1158, %v1156
    %v1217 = vpack.c.b16 %v1161, %v1159
    %v1218 = vpack.c.b16 %v1162, %v1160
    %v1219 = vpack.c.b16 %v1165, %v1163
    %v1220 = vpack.c.b16 %v1166, %v1164
    %v1221 = vpack.c.b16 %v1169, %v1167
    %v1222 = vpack.c.b16 %v1170, %v1168
    %v1223 = vpack.c.b16 %v1173, %v1171
    %v1224 = vpack.c.b16 %v1174, %v1172
    %v1225 = vpack.c.b16 %v1177, %v1175
    %v1226 = vpack.c.b16 %v1178, %v1176
    %v1227 = vpack.c.b16 %v1181, %v1179
    %v1228 = vpack.c.b16 %v1182, %v1180
    %v1229 = vpack.c.b16 %v1185, %v1183
    %v1230 = vpack.c.b16 %v1186, %v1184
    %v1231 = vpack.c.b16 %v1189, %v1187
    %v1232 = vpack.c.b16 %v1190, %v1188
    %v1233 = vpack.c.b16 %v1193, %v1191
    %v1234 = vpack.c.b16 %v1194, %v1192
    %v1235 = vpack.c.b16 %v1197, %v1195
    %v1236 = vpack.c.b16 %v1198, %v1196
    %v1237 = vpack.c.b16 %v1201, %v1199
    %v1238 = vpack.c.b16 %v1202, %v1200
    %v1239 = vpack.c.b16 %v1205, %v1203
    %v1240 = vpack.c.b16 %v1206, %v1204
    %v1241 = vpack.c.b16 %v1209, %v1207
    %v1242 = vpack.c.b16 %v1210, %v1208
    %1275 = vmatprep.subr.bf16.mxu0 0
    %1276 = vmatpush1.bf16.msra.mxu0 %v1051
    %1277 = vmatprep.subr.bf16.mxu0 0
    %1278 = vmatpush1.bf16.msra.mxu0 %v1053
    %1279 = vmatprep.subr.bf16.mxu0 0
    %1280 = vmatpush1.bf16.msra.mxu0 %v1055
    %1281 = vmatprep.subr.bf16.mxu0 0
    %1282 = vmatpush1.bf16.msra.mxu0 %v1057
    %1283 = vmatprep.subr.bf16.mxu0 0
    %1284 = vmatpush1.bf16.msra.mxu0 %v1059
    %1285 = vmatprep.subr.bf16.mxu0 0
    %1286 = vmatpush1.bf16.msra.mxu0 %v1061
    %1287 = vmatprep.subr.bf16.mxu0 0
    %1288 = vmatpush1.bf16.msra.mxu0 %v1063
    %1289 = vmatprep.subr.bf16.mxu0 0
    %1290 = vmatpush1.bf16.msra.mxu0 %v1065
    %1291 = vmatprep.subr.bf16.mxu0 0
    %1292 = vmatpush1.bf16.msra.mxu0 %v1067
    %1293 = vmatprep.subr.bf16.mxu0 0
    %1294 = vmatpush1.bf16.msra.mxu0 %v1069
    %1295 = vmatprep.subr.bf16.mxu0 0
    %1296 = vmatpush1.bf16.msra.mxu0 %v1071
    %1297 = vmatprep.subr.bf16.mxu0 0
    %1298 = vmatpush1.bf16.msra.mxu0 %v1073
    %1299 = vmatprep.subr.bf16.mxu0 0
    %1300 = vmatpush1.bf16.msra.mxu0 %v1075
    %1301 = vmatprep.subr.bf16.mxu0 0
    %1302 = vmatpush1.bf16.msra.mxu0 %v1077
    %1303 = vmatprep.subr.bf16.mxu0 0
    %1304 = vmatpush1.bf16.msra.mxu0 %v1079
    %1305 = vmatprep.subr.bf16.mxu0 0
    %1306 = vmatpush1.bf16.msra.mxu0 %v1081
    %1307 = vmatprep.mubr.bf16.mxu0 %v1212
    %1308 = vmatmul.mubr.bf16.gmra.mrb[0].mxu0 %v1211
    %v1309 = vpop.f32.mrb[0].mxu0
    %v1310 = vadd.f32 0.0, %v1309
    %v1311 = vpop.f32.mrb[0].mxu0
    %v1312 = vpop.f32.mrb[0].mxu0
    %v1313 = vadd.f32 0.0, %v1312
    %v1314 = vpop.f32.mrb[0].mxu0
    %1315 = vmatprep.mubr.bf16.mxu0 %v1214
    %1316 = vmatmul.mubr.bf16.gmra.mrb[0].mxu0 %v1213
    %v1317 = vpop.f32.mrb[0].mxu0
    %v1318 = vadd.f32 0.0, %v1317
    %v1319 = vpop.f32.mrb[0].mxu0
    %v1320 = vpop.f32.mrb[0].mxu0
    %v1321 = vadd.f32 0.0, %v1320
    %v1322 = vpop.f32.mrb[0].mxu0
    %1323 = vmatprep.mubr.bf16.mxu0 %v1216
    %1324 = vmatmul.mubr.bf16.gmra.mrb[0].mxu0 %v1215
    %v1325 = vpop.f32.mrb[0].mxu0
    %v1326 = vadd.f32 0.0, %v1325
    %v1327 = vpop.f32.mrb[0].mxu0
    %v1328 = vpop.f32.mrb[0].mxu0
    %v1329 = vadd.f32 0.0, %v1328
    %v1330 = vpop.f32.mrb[0].mxu0
    %1331 = vmatprep.mubr.bf16.mxu0 %v1218
    %1332 = vmatmul.mubr.bf16.gmra.mrb[0].mxu0 %v1217
    %v1333 = vpop.f32.mrb[0].mxu0
    %v1334 = vadd.f32 0.0, %v1333
    %v1335 = vpop.f32.mrb[0].mxu0
    %v1336 = vpop.f32.mrb[0].mxu0
    %v1337 = vadd.f32 0.0, %v1336
    %v1338 = vpop.f32.mrb[0].mxu0
    %1339 = vmatprep.mubr.bf16.mxu0 %v1220
    %1340 = vmatmul.mubr.bf16.gmra.mrb[0].mxu0 %v1219
    %v1341 = vpop.f32.mrb[0].mxu0
    %v1342 = vadd.f32 0.0, %v1341
    %v1343 = vpop.f32.mrb[0].mxu0
    %v1344 = vpop.f32.mrb[0].mxu0
    %v1345 = vadd.f32 0.0, %v1344
    %v1346 = vpop.f32.mrb[0].mxu0
    %1347 = vmatprep.mubr.bf16.mxu0 %v1222
    %1348 = vmatmul.mubr.bf16.gmra.mrb[0].mxu0 %v1221
    %v1349 = vpop.f32.mrb[0].mxu0
    %v1350 = vadd.f32 0.0, %v1349
    %v1351 = vpop.f32.mrb[0].mxu0
    %v1352 = vpop.f32.mrb[0].mxu0
    %v1353 = vadd.f32 0.0, %v1352
    %v1354 = vpop.f32.mrb[0].mxu0
    %1355 = vmatprep.mubr.bf16.mxu0 %v1224
    %1356 = vmatmul.mubr.bf16.gmra.mrb[0].mxu0 %v1223
    %v1357 = vpop.f32.mrb[0].mxu0
    %v1358 = vadd.f32 0.0, %v1357
    %v1359 = vpop.f32.mrb[0].mxu0
    %v1360 = vpop.f32.mrb[0].mxu0
    %v1361 = vadd.f32 0.0, %v1360
    %v1362 = vpop.f32.mrb[0].mxu0
    %1363 = vmatprep.mubr.bf16.mxu0 %v1226
    %1364 = vmatmul.mubr.bf16.gmra.mrb[0].mxu0 %v1225
    %v1365 = vpop.f32.mrb[0].mxu0
    %v1366 = vadd.f32 0.0, %v1365
    %v1367 = vpop.f32.mrb[0].mxu0
    %v1368 = vpop.f32.mrb[0].mxu0
    %v1369 = vadd.f32 0.0, %v1368
    %v1370 = vpop.f32.mrb[0].mxu0
    %1371 = vmatprep.mubr.bf16.mxu0 %v1228
    %1372 = vmatmul.mubr.bf16.gmra.mrb[0].mxu0 %v1227
    %v1373 = vpop.f32.mrb[0].mxu0
    %v1374 = vadd.f32 0.0, %v1373
    %v1375 = vpop.f32.mrb[0].mxu0
    %v1376 = vpop.f32.mrb[0].mxu0
    %v1377 = vadd.f32 0.0, %v1376
    %v1378 = vpop.f32.mrb[0].mxu0
    %1379 = vmatprep.mubr.bf16.mxu0 %v1230
    %1380 = vmatmul.mubr.bf16.gmra.mrb[0].mxu0 %v1229
    %v1381 = vpop.f32.mrb[0].mxu0
    %v1382 = vadd.f32 0.0, %v1381
    %v1383 = vpop.f32.mrb[0].mxu0
    %v1384 = vpop.f32.mrb[0].mxu0
    %v1385 = vadd.f32 0.0, %v1384
    %v1386 = vpop.f32.mrb[0].mxu0
    %1387 = vmatprep.mubr.bf16.mxu0 %v1232
    %1388 = vmatmul.mubr.bf16.gmra.mrb[0].mxu0 %v1231
    %v1389 = vpop.f32.mrb[0].mxu0
    %v1390 = vadd.f32 0.0, %v1389
    %v1391 = vpop.f32.mrb[0].mxu0
    %v1392 = vpop.f32.mrb[0].mxu0
    %v1393 = vadd.f32 0.0, %v1392
    %v1394 = vpop.f32.mrb[0].mxu0
    %1395 = vmatprep.mubr.bf16.mxu0 %v1234
    %1396 = vmatmul.mubr.bf16.gmra.mrb[0].mxu0 %v1233
    %v1397 = vpop.f32.mrb[0].mxu0
    %v1398 = vadd.f32 0.0, %v1397
    %v1399 = vpop.f32.mrb[0].mxu0
    %v1400 = vpop.f32.mrb[0].mxu0
    %v1401 = vadd.f32 0.0, %v1400
    %v1402 = vpop.f32.mrb[0].mxu0
    %1403 = vmatprep.mubr.bf16.mxu0 %v1236
    %1404 = vmatmul.mubr.bf16.gmra.mrb[0].mxu0 %v1235
    %v1405 = vpop.f32.mrb[0].mxu0
    %v1406 = vadd.f32 0.0, %v1405
    %v1407 = vpop.f32.mrb[0].mxu0
    %v1408 = vpop.f32.mrb[0].mxu0
    %v1409 = vadd.f32 0.0, %v1408
    %v1410 = vpop.f32.mrb[0].mxu0
    %1411 = vmatprep.mubr.bf16.mxu0 %v1238
    %1412 = vmatmul.mubr.bf16.gmra.mrb[0].mxu0 %v1237
    %v1413 = vpop.f32.mrb[0].mxu0
    %v1414 = vadd.f32 0.0, %v1413
    %v1415 = vpop.f32.mrb[0].mxu0
    %v1416 = vpop.f32.mrb[0].mxu0
    %v1417 = vadd.f32 0.0, %v1416
    %v1418 = vpop.f32.mrb[0].mxu0
    %1419 = vmatprep.mubr.bf16.mxu0 %v1240
    %1420 = vmatmul.mubr.bf16.gmra.mrb[0].mxu0 %v1239
    %v1421 = vpop.f32.mrb[0].mxu0
    %v1422 = vadd.f32 0.0, %v1421
    %v1423 = vpop.f32.mrb[0].mxu0
    %v1424 = vpop.f32.mrb[0].mxu0
    %v1425 = vadd.f32 0.0, %v1424
    %v1426 = vpop.f32.mrb[0].mxu0
    %1427 = vmatprep.mubr.bf16.mxu0 %v1242
    %1428 = vmatmul.mubr.bf16.gmra.mrb[0].mxu0 %v1241
    %v1429 = vpop.f32.mrb[0].mxu0
    %v1430 = vadd.f32 0.0, %v1429
    %v1431 = vpop.f32.mrb[0].mxu0
    %v1432 = vpop.f32.mrb[0].mxu0
    %v1433 = vadd.f32 0.0, %v1432
    %v1434 = vpop.f32.mrb[0].mxu0
    %1435 = vdwg.mxu0
    %s1436 = scalar_lea.vmem [#allocation6], 256
    %v1437 = vld [vmem:[%s1436] sm:$0xff]
    %v1438 = vld [vmem:[%s1436 + $0x8] sm:$0xff]
    %v1439 = vld [vmem:[%s1436 + $0x10] sm:$0xff]
    %v1440 = vld [vmem:[%s1436 + $0x18] sm:$0xff]
    %v1441 = vld [vmem:[%s1436 + $0x20] sm:$0xff]
    %v1442 = vld [vmem:[%s1436 + $0x28] sm:$0xff]
    %v1443 = vld [vmem:[%s1436 + $0x30] sm:$0xff]
    %v1444 = vld [vmem:[%s1436 + $0x38] sm:$0xff]
    %v1445 = vld [vmem:[%s1436 + $0x40] sm:$0xff]
    %v1446 = vld [vmem:[%s1436 + $0x48] sm:$0xff]
    %v1447 = vld [vmem:[%s1436 + $0x50] sm:$0xff]
    %v1448 = vld [vmem:[%s1436 + $0x58] sm:$0xff]
    %v1449 = vld [vmem:[%s1436 + $0x60] sm:$0xff]
    %v1450 = vld [vmem:[%s1436 + $0x68] sm:$0xff]
    %v1451 = vld [vmem:[%s1436 + $0x70] sm:$0xff]
    %v1452 = vld [vmem:[%s1436 + $0x78] sm:$0xff]
    %v1453 = vld [vmem:[%s1436 + $0x80] sm:$0xff]
    %v1454 = vld [vmem:[%s1436 + $0x88] sm:$0xff]
    %v1455 = vld [vmem:[%s1436 + $0x90] sm:$0xff]
    %v1456 = vld [vmem:[%s1436 + $0x98] sm:$0xff]
    %v1457 = vld [vmem:[%s1436 + $0xa0] sm:$0xff]
    %v1458 = vld [vmem:[%s1436 + $0xa8] sm:$0xff]
    %v1459 = vld [vmem:[%s1436 + $0xb0] sm:$0xff]
    %v1460 = vld [vmem:[%s1436 + $0xb8] sm:$0xff]
    %v1461 = vld [vmem:[%s1436 + $0xc0] sm:$0xff]
    %v1462 = vld [vmem:[%s1436 + $0xc8] sm:$0xff]
    %v1463 = vld [vmem:[%s1436 + $0xd0] sm:$0xff]
    %v1464 = vld [vmem:[%s1436 + $0xd8] sm:$0xff]
    %v1465 = vld [vmem:[%s1436 + $0xe0] sm:$0xff]
    %v1466 = vld [vmem:[%s1436 + $0xe8] sm:$0xff]
    %v1467 = vld [vmem:[%s1436 + $0xf0] sm:$0xff]
    %v1468 = vld [vmem:[%s1436 + $0xf8] sm:$0xff]
    %v1501 = vunpack.c.l.b16 %v1437
    %v1502 = vunpack.c.h.b16 %v1437
    %v1503 = vunpack.c.l.b16 %v1438
    %v1504 = vunpack.c.h.b16 %v1438
    %v1505 = vunpack.c.l.b16 %v1439
    %v1506 = vunpack.c.h.b16 %v1439
    %v1507 = vunpack.c.l.b16 %v1440
    %v1508 = vunpack.c.h.b16 %v1440
    %v1509 = vunpack.c.l.b16 %v1441
    %v1510 = vunpack.c.h.b16 %v1441
    %v1511 = vunpack.c.l.b16 %v1442
    %v1512 = vunpack.c.h.b16 %v1442
    %v1513 = vunpack.c.l.b16 %v1443
    %v1514 = vunpack.c.h.b16 %v1443
    %v1515 = vunpack.c.l.b16 %v1444
    %v1516 = vunpack.c.h.b16 %v1444
    %v1517 = vunpack.c.l.b16 %v1445
    %v1518 = vunpack.c.h.b16 %v1445
    %v1519 = vunpack.c.l.b16 %v1446
    %v1520 = vunpack.c.h.b16 %v1446
    %v1521 = vunpack.c.l.b16 %v1447
    %v1522 = vunpack.c.h.b16 %v1447
    %v1523 = vunpack.c.l.b16 %v1448
    %v1524 = vunpack.c.h.b16 %v1448
    %v1525 = vunpack.c.l.b16 %v1449
    %v1526 = vunpack.c.h.b16 %v1449
    %v1527 = vunpack.c.l.b16 %v1450
    %v1528 = vunpack.c.h.b16 %v1450
    %v1529 = vunpack.c.l.b16 %v1451
    %v1530 = vunpack.c.h.b16 %v1451
    %v1531 = vunpack.c.l.b16 %v1452
    %v1532 = vunpack.c.h.b16 %v1452
    %v1533 = vunpack.c.l.b16 %v1453
    %v1534 = vunpack.c.h.b16 %v1453
    %v1535 = vunpack.c.l.b16 %v1454
    %v1536 = vunpack.c.h.b16 %v1454
    %v1537 = vunpack.c.l.b16 %v1455
    %v1538 = vunpack.c.h.b16 %v1455
    %v1539 = vunpack.c.l.b16 %v1456
    %v1540 = vunpack.c.h.b16 %v1456
    %v1541 = vunpack.c.l.b16 %v1457
    %v1542 = vunpack.c.h.b16 %v1457
    %v1543 = vunpack.c.l.b16 %v1458
    %v1544 = vunpack.c.h.b16 %v1458
    %v1545 = vunpack.c.l.b16 %v1459
    %v1546 = vunpack.c.h.b16 %v1459
    %v1547 = vunpack.c.l.b16 %v1460
    %v1548 = vunpack.c.h.b16 %v1460
    %v1549 = vunpack.c.l.b16 %v1461
    %v1550 = vunpack.c.h.b16 %v1461
    %v1551 = vunpack.c.l.b16 %v1462
    %v1552 = vunpack.c.h.b16 %v1462
    %v1553 = vunpack.c.l.b16 %v1463
    %v1554 = vunpack.c.h.b16 %v1463
    %v1555 = vunpack.c.l.b16 %v1464
    %v1556 = vunpack.c.h.b16 %v1464
    %v1557 = vunpack.c.l.b16 %v1465
    %v1558 = vunpack.c.h.b16 %v1465
    %v1559 = vunpack.c.l.b16 %v1466
    %v1560 = vunpack.c.h.b16 %v1466
    %v1561 = vunpack.c.l.b16 %v1467
    %v1562 = vunpack.c.h.b16 %v1467
    %v1563 = vunpack.c.l.b16 %v1468
    %v1564 = vunpack.c.h.b16 %v1468
    %v1565 = vpack.c.b16 %v1503, %v1501
    %v1566 = vpack.c.b16 %v1504, %v1502
    %v1567 = vpack.c.b16 %v1507, %v1505
    %v1568 = vpack.c.b16 %v1508, %v1506
    %v1569 = vpack.c.b16 %v1511, %v1509
    %v1570 = vpack.c.b16 %v1512, %v1510
    %v1571 = vpack.c.b16 %v1515, %v1513
    %v1572 = vpack.c.b16 %v1516, %v1514
    %v1573 = vpack.c.b16 %v1519, %v1517
    %v1574 = vpack.c.b16 %v1520, %v1518
    %v1575 = vpack.c.b16 %v1523, %v1521
    %v1576 = vpack.c.b16 %v1524, %v1522
    %v1577 = vpack.c.b16 %v1527, %v1525
    %v1578 = vpack.c.b16 %v1528, %v1526
    %v1579 = vpack.c.b16 %v1531, %v1529
    %v1580 = vpack.c.b16 %v1532, %v1530
    %v1581 = vpack.c.b16 %v1535, %v1533
    %v1582 = vpack.c.b16 %v1536, %v1534
    %v1583 = vpack.c.b16 %v1539, %v1537
    %v1584 = vpack.c.b16 %v1540, %v1538
    %v1585 = vpack.c.b16 %v1543, %v1541
    %v1586 = vpack.c.b16 %v1544, %v1542
    %v1587 = vpack.c.b16 %v1547, %v1545
    %v1588 = vpack.c.b16 %v1548, %v1546
    %v1589 = vpack.c.b16 %v1551, %v1549
    %v1590 = vpack.c.b16 %v1552, %v1550
    %v1591 = vpack.c.b16 %v1555, %v1553
    %v1592 = vpack.c.b16 %v1556, %v1554
    %v1593 = vpack.c.b16 %v1559, %v1557
    %v1594 = vpack.c.b16 %v1560, %v1558
    %v1595 = vpack.c.b16 %v1563, %v1561
    %v1596 = vpack.c.b16 %v1564, %v1562
    %1645 = vrot.lane.b32.xlu0 %v1051, 64
    %v1646 = vpop.permute.xlu0 %1645
    %1647 = vrot.lane.b32.xlu0 %v1053, 64
    %v1648 = vpop.permute.xlu0 %1647
    %1649 = vrot.lane.b32.xlu0 %v1055, 64
    %v1650 = vpop.permute.xlu0 %1649
    %1651 = vrot.lane.b32.xlu0 %v1057, 64
    %v1652 = vpop.permute.xlu0 %1651
    %1653 = vrot.lane.b32.xlu0 %v1059, 64
    %v1654 = vpop.permute.xlu0 %1653
    %1655 = vrot.lane.b32.xlu0 %v1061, 64
    %v1656 = vpop.permute.xlu0 %1655
    %1657 = vrot.lane.b32.xlu0 %v1063, 64
    %v1658 = vpop.permute.xlu0 %1657
    %1659 = vrot.lane.b32.xlu0 %v1065, 64
    %v1660 = vpop.permute.xlu0 %1659
    %1661 = vrot.lane.b32.xlu0 %v1067, 64
    %v1662 = vpop.permute.xlu0 %1661
    %1663 = vrot.lane.b32.xlu0 %v1069, 64
    %v1664 = vpop.permute.xlu0 %1663
    %1665 = vrot.lane.b32.xlu0 %v1071, 64
    %v1666 = vpop.permute.xlu0 %1665
    %1667 = vrot.lane.b32.xlu0 %v1073, 64
    %v1668 = vpop.permute.xlu0 %1667
    %1669 = vrot.lane.b32.xlu0 %v1075, 64
    %v1670 = vpop.permute.xlu0 %1669
    %1671 = vrot.lane.b32.xlu0 %v1077, 64
    %v1672 = vpop.permute.xlu0 %1671
    %1673 = vrot.lane.b32.xlu0 %v1079, 64
    %v1674 = vpop.permute.xlu0 %1673
    %1675 = vrot.lane.b32.xlu0 %v1081, 64
    %v1676 = vpop.permute.xlu0 %1675
    %1693 = vmatprep.subr.bf16.mxu0 0
    %1694 = vmatpush1.bf16.msra.mxu0 %v1646
    %1695 = vmatprep.subr.bf16.mxu0 0
    %1696 = vmatpush1.bf16.msra.mxu0 %v1648
    %1697 = vmatprep.subr.bf16.mxu0 0
    %1698 = vmatpush1.bf16.msra.mxu0 %v1650
    %1699 = vmatprep.subr.bf16.mxu0 0
    %1700 = vmatpush1.bf16.msra.mxu0 %v1652
    %1701 = vmatprep.subr.bf16.mxu0 0
    %1702 = vmatpush1.bf16.msra.mxu0 %v1654
    %1703 = vmatprep.subr.bf16.mxu0 0
    %1704 = vmatpush1.bf16.msra.mxu0 %v1656
    %1705 = vmatprep.subr.bf16.mxu0 0
    %1706 = vmatpush1.bf16.msra.mxu0 %v1658
    %1707 = vmatprep.subr.bf16.mxu0 0
    %1708 = vmatpush1.bf16.msra.mxu0 %v1660
    %1709 = vmatprep.subr.bf16.mxu0 0
    %1710 = vmatpush1.bf16.msra.mxu0 %v1662
    %1711 = vmatprep.subr.bf16.mxu0 0
    %1712 = vmatpush1.bf16.msra.mxu0 %v1664
    %1713 = vmatprep.subr.bf16.mxu0 0
    %1714 = vmatpush1.bf16.msra.mxu0 %v1666
    %1715 = vmatprep.subr.bf16.mxu0 0
    %1716 = vmatpush1.bf16.msra.mxu0 %v1668
    %1717 = vmatprep.subr.bf16.mxu0 0
    %1718 = vmatpush1.bf16.msra.mxu0 %v1670
    %1719 = vmatprep.subr.bf16.mxu0 0
    %1720 = vmatpush1.bf16.msra.mxu0 %v1672
    %1721 = vmatprep.subr.bf16.mxu0 0
    %1722 = vmatpush1.bf16.msra.mxu0 %v1674
    %1723 = vmatprep.subr.bf16.mxu0 0
    %1724 = vmatpush1.bf16.msra.mxu0 %v1676
    %1725 = vmatprep.mubr.bf16.mxu0 %v1566
    %1726 = vmatmul.mubr.bf16.gmra.mrb[0].mxu0 %v1565
    %v1727 = vpop.f32.mrb[0].mxu0
    %v1728 = vadd.f32 0.0, %v1727
    %v1729 = vpop.f32.mrb[0].mxu0
    %v1730 = vpop.f32.mrb[0].mxu0
    %v1731 = vadd.f32 0.0, %v1730
    %v1732 = vpop.f32.mrb[0].mxu0
    %1733 = vmatprep.mubr.bf16.mxu0 %v1568
    %1734 = vmatmul.mubr.bf16.gmra.mrb[0].mxu0 %v1567
    %v1735 = vpop.f32.mrb[0].mxu0
    %v1736 = vadd.f32 0.0, %v1735
    %v1737 = vpop.f32.mrb[0].mxu0
    %v1738 = vpop.f32.mrb[0].mxu0
    %v1739 = vadd.f32 0.0, %v1738
    %v1740 = vpop.f32.mrb[0].mxu0
    %1741 = vmatprep.mubr.bf16.mxu0 %v1570
    %1742 = vmatmul.mubr.bf16.gmra.mrb[0].mxu0 %v1569
    %v1743 = vpop.f32.mrb[0].mxu0
    %v1744 = vadd.f32 0.0, %v1743
    %v1745 = vpop.f32.mrb[0].mxu0
    %v1746 = vpop.f32.mrb[0].mxu0
    %v1747 = vadd.f32 0.0, %v1746
    %v1748 = vpop.f32.mrb[0].mxu0
    %1749 = vmatprep.mubr.bf16.mxu0 %v1572
    %1750 = vmatmul.mubr.bf16.gmra.mrb[0].mxu0 %v1571
    %v1751 = vpop.f32.mrb[0].mxu0
    %v1752 = vadd.f32 0.0, %v1751
    %v1753 = vpop.f32.mrb[0].mxu0
    %v1754 = vpop.f32.mrb[0].mxu0
    %v1755 = vadd.f32 0.0, %v1754
    %v1756 = vpop.f32.mrb[0].mxu0
    %1757 = vmatprep.mubr.bf16.mxu0 %v1574
    %1758 = vmatmul.mubr.bf16.gmra.mrb[0].mxu0 %v1573
    %v1759 = vpop.f32.mrb[0].mxu0
    %v1760 = vadd.f32 0.0, %v1759
    %v1761 = vpop.f32.mrb[0].mxu0
    %v1762 = vpop.f32.mrb[0].mxu0
    %v1763 = vadd.f32 0.0, %v1762
    %v1764 = vpop.f32.mrb[0].mxu0
    %1765 = vmatprep.mubr.bf16.mxu0 %v1576
    %1766 = vmatmul.mubr.bf16.gmra.mrb[0].mxu0 %v1575
    %v1767 = vpop.f32.mrb[0].mxu0
    %v1768 = vadd.f32 0.0, %v1767
    %v1769 = vpop.f32.mrb[0].mxu0
    %v1770 = vpop.f32.mrb[0].mxu0
    %v1771 = vadd.f32 0.0, %v1770
    %v1772 = vpop.f32.mrb[0].mxu0
    %1773 = vmatprep.mubr.bf16.mxu0 %v1578
    %1774 = vmatmul.mubr.bf16.gmra.mrb[0].mxu0 %v1577
    %v1775 = vpop.f32.mrb[0].mxu0
    %v1776 = vadd.f32 0.0, %v1775
    %v1777 = vpop.f32.mrb[0].mxu0
    %v1778 = vpop.f32.mrb[0].mxu0
    %v1779 = vadd.f32 0.0, %v1778
    %v1780 = vpop.f32.mrb[0].mxu0
    %1781 = vmatprep.mubr.bf16.mxu0 %v1580
    %1782 = vmatmul.mubr.bf16.gmra.mrb[0].mxu0 %v1579
    %v1783 = vpop.f32.mrb[0].mxu0
    %v1784 = vadd.f32 0.0, %v1783
    %v1785 = vpop.f32.mrb[0].mxu0
    %v1786 = vpop.f32.mrb[0].mxu0
    %v1787 = vadd.f32 0.0, %v1786
    %v1788 = vpop.f32.mrb[0].mxu0
    %1789 = vmatprep.mubr.bf16.mxu0 %v1582
    %1790 = vmatmul.mubr.bf16.gmra.mrb[0].mxu0 %v1581
    %v1791 = vpop.f32.mrb[0].mxu0
    %v1792 = vadd.f32 0.0, %v1791
    %v1793 = vpop.f32.mrb[0].mxu0
    %v1794 = vpop.f32.mrb[0].mxu0
    %v1795 = vadd.f32 0.0, %v1794
    %v1796 = vpop.f32.mrb[0].mxu0
    %1797 = vmatprep.mubr.bf16.mxu0 %v1584
    %1798 = vmatmul.mubr.bf16.gmra.mrb[0].mxu0 %v1583
    %v1799 = vpop.f32.mrb[0].mxu0
    %v1800 = vadd.f32 0.0, %v1799
    %v1801 = vpop.f32.mrb[0].mxu0
    %v1802 = vpop.f32.mrb[0].mxu0
    %v1803 = vadd.f32 0.0, %v1802
    %v1804 = vpop.f32.mrb[0].mxu0
    %1805 = vmatprep.mubr.bf16.mxu0 %v1586
    %1806 = vmatmul.mubr.bf16.gmra.mrb[0].mxu0 %v1585
    %v1807 = vpop.f32.mrb[0].mxu0
    %v1808 = vadd.f32 0.0, %v1807
    %v1809 = vpop.f32.mrb[0].mxu0
    %v1810 = vpop.f32.mrb[0].mxu0
    %v1811 = vadd.f32 0.0, %v1810
    %v1812 = vpop.f32.mrb[0].mxu0
    %1813 = vmatprep.mubr.bf16.mxu0 %v1588
    %1814 = vmatmul.mubr.bf16.gmra.mrb[0].mxu0 %v1587
    %v1815 = vpop.f32.mrb[0].mxu0
    %v1816 = vadd.f32 0.0, %v1815
    %v1817 = vpop.f32.mrb[0].mxu0
    %v1818 = vpop.f32.mrb[0].mxu0
    %v1819 = vadd.f32 0.0, %v1818
    %v1820 = vpop.f32.mrb[0].mxu0
    %1821 = vmatprep.mubr.bf16.mxu0 %v1590
    %1822 = vmatmul.mubr.bf16.gmra.mrb[0].mxu0 %v1589
    %v1823 = vpop.f32.mrb[0].mxu0
    %v1824 = vadd.f32 0.0, %v1823
    %v1825 = vpop.f32.mrb[0].mxu0
    %v1826 = vpop.f32.mrb[0].mxu0
    %v1827 = vadd.f32 0.0, %v1826
    %v1828 = vpop.f32.mrb[0].mxu0
    %1829 = vmatprep.mubr.bf16.mxu0 %v1592
    %1830 = vmatmul.mubr.bf16.gmra.mrb[0].mxu0 %v1591
    %v1831 = vpop.f32.mrb[0].mxu0
    %v1832 = vadd.f32 0.0, %v1831
    %v1833 = vpop.f32.mrb[0].mxu0
    %v1834 = vpop.f32.mrb[0].mxu0
    %v1835 = vadd.f32 0.0, %v1834
    %v1836 = vpop.f32.mrb[0].mxu0
    %1837 = vmatprep.mubr.bf16.mxu0 %v1594
    %1838 = vmatmul.mubr.bf16.gmra.mrb[0].mxu0 %v1593
    %v1839 = vpop.f32.mrb[0].mxu0
    %v1840 = vadd.f32 0.0, %v1839
    %v1841 = vpop.f32.mrb[0].mxu0
    %v1842 = vpop.f32.mrb[0].mxu0
    %v1843 = vadd.f32 0.0, %v1842
    %v1844 = vpop.f32.mrb[0].mxu0
    %1845 = vmatprep.mubr.bf16.mxu0 %v1596
    %1846 = vmatmul.mubr.bf16.gmra.mrb[0].mxu0 %v1595
    %v1847 = vpop.f32.mrb[0].mxu0
    %v1848 = vadd.f32 0.0, %v1847
    %v1849 = vpop.f32.mrb[0].mxu0
    %v1850 = vpop.f32.mrb[0].mxu0
    %v1851 = vadd.f32 0.0, %v1850
    %v1852 = vpop.f32.mrb[0].mxu0
    %1853 = vdwg.mxu0
    %s1854 = scalar_lea.vmem [#allocation6], 512
    %v1855 = vld [vmem:[%s1854] sm:$0xff]
    %v1856 = vld [vmem:[%s1854 + $0x8] sm:$0xff]
    %v1857 = vld [vmem:[%s1854 + $0x10] sm:$0xff]
    %v1858 = vld [vmem:[%s1854 + $0x18] sm:$0xff]
    %v1859 = vld [vmem:[%s1854 + $0x20] sm:$0xff]
    %v1860 = vld [vmem:[%s1854 + $0x28] sm:$0xff]
    %v1861 = vld [vmem:[%s1854 + $0x30] sm:$0xff]
    %v1862 = vld [vmem:[%s1854 + $0x38] sm:$0xff]
    %v1863 = vld [vmem:[%s1854 + $0x40] sm:$0xff]
    %v1864 = vld [vmem:[%s1854 + $0x48] sm:$0xff]
    %v1865 = vld [vmem:[%s1854 + $0x50] sm:$0xff]
    %v1866 = vld [vmem:[%s1854 + $0x58] sm:$0xff]
    %v1867 = vld [vmem:[%s1854 + $0x60] sm:$0xff]
    %v1868 = vld [vmem:[%s1854 + $0x68] sm:$0xff]
    %v1869 = vld [vmem:[%s1854 + $0x70] sm:$0xff]
    %v1870 = vld [vmem:[%s1854 + $0x78] sm:$0xff]
    %v1871 = vld [vmem:[%s1854 + $0x80] sm:$0xff]
    %v1872 = vld [vmem:[%s1854 + $0x88] sm:$0xff]
    %v1873 = vld [vmem:[%s1854 + $0x90] sm:$0xff]
    %v1874 = vld [vmem:[%s1854 + $0x98] sm:$0xff]
    %v1875 = vld [vmem:[%s1854 + $0xa0] sm:$0xff]
    %v1876 = vld [vmem:[%s1854 + $0xa8] sm:$0xff]
    %v1877 = vld [vmem:[%s1854 + $0xb0] sm:$0xff]
    %v1878 = vld [vmem:[%s1854 + $0xb8] sm:$0xff]
    %v1879 = vld [vmem:[%s1854 + $0xc0] sm:$0xff]
    %v1880 = vld [vmem:[%s1854 + $0xc8] sm:$0xff]
    %v1881 = vld [vmem:[%s1854 + $0xd0] sm:$0xff]
    %v1882 = vld [vmem:[%s1854 + $0xd8] sm:$0xff]
    %v1883 = vld [vmem:[%s1854 + $0xe0] sm:$0xff]
    %v1884 = vld [vmem:[%s1854 + $0xe8] sm:$0xff]
    %v1885 = vld [vmem:[%s1854 + $0xf0] sm:$0xff]
    %v1886 = vld [vmem:[%s1854 + $0xf8] sm:$0xff]
    %v1919 = vunpack.c.l.b16 %v1855
    %v1920 = vunpack.c.h.b16 %v1855
    %v1921 = vunpack.c.l.b16 %v1856
    %v1922 = vunpack.c.h.b16 %v1856
    %v1923 = vunpack.c.l.b16 %v1857
    %v1924 = vunpack.c.h.b16 %v1857
    %v1925 = vunpack.c.l.b16 %v1858
    %v1926 = vunpack.c.h.b16 %v1858
    %v1927 = vunpack.c.l.b16 %v1859
    %v1928 = vunpack.c.h.b16 %v1859
    %v1929 = vunpack.c.l.b16 %v1860
    %v1930 = vunpack.c.h.b16 %v1860
    %v1931 = vunpack.c.l.b16 %v1861
    %v1932 = vunpack.c.h.b16 %v1861
    %v1933 = vunpack.c.l.b16 %v1862
    %v1934 = vunpack.c.h.b16 %v1862
    %v1935 = vunpack.c.l.b16 %v1863
    %v1936 = vunpack.c.h.b16 %v1863
    %v1937 = vunpack.c.l.b16 %v1864
    %v1938 = vunpack.c.h.b16 %v1864
    %v1939 = vunpack.c.l.b16 %v1865
    %v1940 = vunpack.c.h.b16 %v1865
    %v1941 = vunpack.c.l.b16 %v1866
    %v1942 = vunpack.c.h.b16 %v1866
    %v1943 = vunpack.c.l.b16 %v1867
    %v1944 = vunpack.c.h.b16 %v1867
    %v1945 = vunpack.c.l.b16 %v1868
    %v1946 = vunpack.c.h.b16 %v1868
    %v1947 = vunpack.c.l.b16 %v1869
    %v1948 = vunpack.c.h.b16 %v1869
    %v1949 = vunpack.c.l.b16 %v1870
    %v1950 = vunpack.c.h.b16 %v1870
    %v1951 = vunpack.c.l.b16 %v1871
    %v1952 = vunpack.c.h.b16 %v1871
    %v1953 = vunpack.c.l.b16 %v1872
    %v1954 = vunpack.c.h.b16 %v1872
    %v1955 = vunpack.c.l.b16 %v1873
    %v1956 = vunpack.c.h.b16 %v1873
    %v1957 = vunpack.c.l.b16 %v1874
    %v1958 = vunpack.c.h.b16 %v1874
    %v1959 = vunpack.c.l.b16 %v1875
    %v1960 = vunpack.c.h.b16 %v1875
    %v1961 = vunpack.c.l.b16 %v1876
    %v1962 = vunpack.c.h.b16 %v1876
    %v1963 = vunpack.c.l.b16 %v1877
    %v1964 = vunpack.c.h.b16 %v1877
    %v1965 = vunpack.c.l.b16 %v1878
    %v1966 = vunpack.c.h.b16 %v1878
    %v1967 = vunpack.c.l.b16 %v1879
    %v1968 = vunpack.c.h.b16 %v1879
    %v1969 = vunpack.c.l.b16 %v1880
    %v1970 = vunpack.c.h.b16 %v1880
    %v1971 = vunpack.c.l.b16 %v1881
    %v1972 = vunpack.c.h.b16 %v1881
    %v1973 = vunpack.c.l.b16 %v1882
    %v1974 = vunpack.c.h.b16 %v1882
    %v1975 = vunpack.c.l.b16 %v1883
    %v1976 = vunpack.c.h.b16 %v1883
    %v1977 = vunpack.c.l.b16 %v1884
    %v1978 = vunpack.c.h.b16 %v1884
    %v1979 = vunpack.c.l.b16 %v1885
    %v1980 = vunpack.c.h.b16 %v1885
    %v1981 = vunpack.c.l.b16 %v1886
    %v1982 = vunpack.c.h.b16 %v1886
    %v1983 = vpack.c.b16 %v1921, %v1919
    %v1984 = vpack.c.b16 %v1922, %v1920
    %v1985 = vpack.c.b16 %v1925, %v1923
    %v1986 = vpack.c.b16 %v1926, %v1924
    %v1987 = vpack.c.b16 %v1929, %v1927
    %v1988 = vpack.c.b16 %v1930, %v1928
    %v1989 = vpack.c.b16 %v1933, %v1931
    %v1990 = vpack.c.b16 %v1934, %v1932
    %v1991 = vpack.c.b16 %v1937, %v1935
    %v1992 = vpack.c.b16 %v1938, %v1936
    %v1993 = vpack.c.b16 %v1941, %v1939
    %v1994 = vpack.c.b16 %v1942, %v1940
    %v1995 = vpack.c.b16 %v1945, %v1943
    %v1996 = vpack.c.b16 %v1946, %v1944
    %v1997 = vpack.c.b16 %v1949, %v1947
    %v1998 = vpack.c.b16 %v1950, %v1948
    %v1999 = vpack.c.b16 %v1953, %v1951
    %v2000 = vpack.c.b16 %v1954, %v1952
    %v2001 = vpack.c.b16 %v1957, %v1955
    %v2002 = vpack.c.b16 %v1958, %v1956
    %v2003 = vpack.c.b16 %v1961, %v1959
    %v2004 = vpack.c.b16 %v1962, %v1960
    %v2005 = vpack.c.b16 %v1965, %v1963
    %v2006 = vpack.c.b16 %v1966, %v1964
    %v2007 = vpack.c.b16 %v1969, %v1967
    %v2008 = vpack.c.b16 %v1970, %v1968
    %v2009 = vpack.c.b16 %v1973, %v1971
    %v2010 = vpack.c.b16 %v1974, %v1972
    %v2011 = vpack.c.b16 %v1977, %v1975
    %v2012 = vpack.c.b16 %v1978, %v1976
    %v2013 = vpack.c.b16 %v1981, %v1979
    %v2014 = vpack.c.b16 %v1982, %v1980
    %2047 = vmatprep.subr.bf16.mxu0 0
    %2048 = vmatpush1.bf16.msra.mxu0 %v1052
    %2049 = vmatprep.subr.bf16.mxu0 0
    %2050 = vmatpush1.bf16.msra.mxu0 %v1054
    %2051 = vmatprep.subr.bf16.mxu0 0
    %2052 = vmatpush1.bf16.msra.mxu0 %v1056
    %2053 = vmatprep.subr.bf16.mxu0 0
    %2054 = vmatpush1.bf16.msra.mxu0 %v1058
    %2055 = vmatprep.subr.bf16.mxu0 0
    %2056 = vmatpush1.bf16.msra.mxu0 %v1060
    %2057 = vmatprep.subr.bf16.mxu0 0
    %2058 = vmatpush1.bf16.msra.mxu0 %v1062
    %2059 = vmatprep.subr.bf16.mxu0 0
    %2060 = vmatpush1.bf16.msra.mxu0 %v1064
    %2061 = vmatprep.subr.bf16.mxu0 0
    %2062 = vmatpush1.bf16.msra.mxu0 %v1066
    %2063 = vmatprep.subr.bf16.mxu0 0
    %2064 = vmatpush1.bf16.msra.mxu0 %v1068
    %2065 = vmatprep.subr.bf16.mxu0 0
    %2066 = vmatpush1.bf16.msra.mxu0 %v1070
    %2067 = vmatprep.subr.bf16.mxu0 0
    %2068 = vmatpush1.bf16.msra.mxu0 %v1072
    %2069 = vmatprep.subr.bf16.mxu0 0
    %2070 = vmatpush1.bf16.msra.mxu0 %v1074
    %2071 = vmatprep.subr.bf16.mxu0 0
    %2072 = vmatpush1.bf16.msra.mxu0 %v1076
    %2073 = vmatprep.subr.bf16.mxu0 0
    %2074 = vmatpush1.bf16.msra.mxu0 %v1078
    %2075 = vmatprep.subr.bf16.mxu0 0
    %2076 = vmatpush1.bf16.msra.mxu0 %v1080
    %2077 = vmatprep.subr.bf16.mxu0 0
    %2078 = vmatpush1.bf16.msra.mxu0 %v1082
    %2079 = vmatprep.mubr.bf16.mxu0 %v1984
    %2080 = vmatmul.mubr.bf16.gmra.mrb[0].mxu0 %v1983
    %v2081 = vpop.f32.mrb[0].mxu0
    %v2082 = vadd.f32 0.0, %v2081
    %v2083 = vpop.f32.mrb[0].mxu0
    %v2084 = vpop.f32.mrb[0].mxu0
    %v2085 = vadd.f32 0.0, %v2084
    %v2086 = vpop.f32.mrb[0].mxu0
    %2087 = vmatprep.mubr.bf16.mxu0 %v1986
    %2088 = vmatmul.mubr.bf16.gmra.mrb[0].mxu0 %v1985
    %v2089 = vpop.f32.mrb[0].mxu0
    %v2090 = vadd.f32 0.0, %v2089
    %v2091 = vpop.f32.mrb[0].mxu0
    %v2092 = vpop.f32.mrb[0].mxu0
    %v2093 = vadd.f32 0.0, %v2092
    %v2094 = vpop.f32.mrb[0].mxu0
    %2095 = vmatprep.mubr.bf16.mxu0 %v1988
    %2096 = vmatmul.mubr.bf16.gmra.mrb[0].mxu0 %v1987
    %v2097 = vpop.f32.mrb[0].mxu0
    %v2098 = vadd.f32 0.0, %v2097
    %v2099 = vpop.f32.mrb[0].mxu0
    %v2100 = vpop.f32.mrb[0].mxu0
    %v2101 = vadd.f32 0.0, %v2100
    %v2102 = vpop.f32.mrb[0].mxu0
    %2103 = vmatprep.mubr.bf16.mxu0 %v1990
    %2104 = vmatmul.mubr.bf16.gmra.mrb[0].mxu0 %v1989
    %v2105 = vpop.f32.mrb[0].mxu0
    %v2106 = vadd.f32 0.0, %v2105
    %v2107 = vpop.f32.mrb[0].mxu0
    %v2108 = vpop.f32.mrb[0].mxu0
    %v2109 = vadd.f32 0.0, %v2108
    %v2110 = vpop.f32.mrb[0].mxu0
    %2111 = vmatprep.mubr.bf16.mxu0 %v1992
    %2112 = vmatmul.mubr.bf16.gmra.mrb[0].mxu0 %v1991
    %v2113 = vpop.f32.mrb[0].mxu0
    %v2114 = vadd.f32 0.0, %v2113
    %v2115 = vpop.f32.mrb[0].mxu0
    %v2116 = vpop.f32.mrb[0].mxu0
    %v2117 = vadd.f32 0.0, %v2116
    %v2118 = vpop.f32.mrb[0].mxu0
    %2119 = vmatprep.mubr.bf16.mxu0 %v1994
    %2120 = vmatmul.mubr.bf16.gmra.mrb[0].mxu0 %v1993
    %v2121 = vpop.f32.mrb[0].mxu0
    %v2122 = vadd.f32 0.0, %v2121
    %v2123 = vpop.f32.mrb[0].mxu0
    %v2124 = vpop.f32.mrb[0].mxu0
    %v2125 = vadd.f32 0.0, %v2124
    %v2126 = vpop.f32.mrb[0].mxu0
    %2127 = vmatprep.mubr.bf16.mxu0 %v1996
    %2128 = vmatmul.mubr.bf16.gmra.mrb[0].mxu0 %v1995
    %v2129 = vpop.f32.mrb[0].mxu0
    %v2130 = vadd.f32 0.0, %v2129
    %v2131 = vpop.f32.mrb[0].mxu0
    %v2132 = vpop.f32.mrb[0].mxu0
    %v2133 = vadd.f32 0.0, %v2132
    %v2134 = vpop.f32.mrb[0].mxu0
    %2135 = vmatprep.mubr.bf16.mxu0 %v1998
    %2136 = vmatmul.mubr.bf16.gmra.mrb[0].mxu0 %v1997
    %v2137 = vpop.f32.mrb[0].mxu0
    %v2138 = vadd.f32 0.0, %v2137
    %v2139 = vpop.f32.mrb[0].mxu0
    %v2140 = vpop.f32.mrb[0].mxu0
    %v2141 = vadd.f32 0.0, %v2140
    %v2142 = vpop.f32.mrb[0].mxu0
    %2143 = vmatprep.mubr.bf16.mxu0 %v2000
    %2144 = vmatmul.mubr.bf16.gmra.mrb[0].mxu0 %v1999
    %v2145 = vpop.f32.mrb[0].mxu0
    %v2146 = vadd.f32 0.0, %v2145
    %v2147 = vpop.f32.mrb[0].mxu0
    %v2148 = vpop.f32.mrb[0].mxu0
    %v2149 = vadd.f32 0.0, %v2148
    %v2150 = vpop.f32.mrb[0].mxu0
    %2151 = vmatprep.mubr.bf16.mxu0 %v2002
    %2152 = vmatmul.mubr.bf16.gmra.mrb[0].mxu0 %v2001
    %v2153 = vpop.f32.mrb[0].mxu0
    %v2154 = vadd.f32 0.0, %v2153
    %v2155 = vpop.f32.mrb[0].mxu0
    %v2156 = vpop.f32.mrb[0].mxu0
    %v2157 = vadd.f32 0.0, %v2156
    %v2158 = vpop.f32.mrb[0].mxu0
    %2159 = vmatprep.mubr.bf16.mxu0 %v2004
    %2160 = vmatmul.mubr.bf16.gmra.mrb[0].mxu0 %v2003
    %v2161 = vpop.f32.mrb[0].mxu0
    %v2162 = vadd.f32 0.0, %v2161
    %v2163 = vpop.f32.mrb[0].mxu0
    %v2164 = vpop.f32.mrb[0].mxu0
    %v2165 = vadd.f32 0.0, %v2164
    %v2166 = vpop.f32.mrb[0].mxu0
    %2167 = vmatprep.mubr.bf16.mxu0 %v2006
    %2168 = vmatmul.mubr.bf16.gmra.mrb[0].mxu0 %v2005
    %v2169 = vpop.f32.mrb[0].mxu0
    %v2170 = vadd.f32 0.0, %v2169
    %v2171 = vpop.f32.mrb[0].mxu0
    %v2172 = vpop.f32.mrb[0].mxu0
    %v2173 = vadd.f32 0.0, %v2172
    %v2174 = vpop.f32.mrb[0].mxu0
    %2175 = vmatprep.mubr.bf16.mxu0 %v2008
    %2176 = vmatmul.mubr.bf16.gmra.mrb[0].mxu0 %v2007
    %v2177 = vpop.f32.mrb[0].mxu0
    %v2178 = vadd.f32 0.0, %v2177
    %v2179 = vpop.f32.mrb[0].mxu0
    %v2180 = vpop.f32.mrb[0].mxu0
    %v2181 = vadd.f32 0.0, %v2180
    %v2182 = vpop.f32.mrb[0].mxu0
    %2183 = vmatprep.mubr.bf16.mxu0 %v2010
    %2184 = vmatmul.mubr.bf16.gmra.mrb[0].mxu0 %v2009
    %v2185 = vpop.f32.mrb[0].mxu0
    %v2186 = vadd.f32 0.0, %v2185
    %v2187 = vpop.f32.mrb[0].mxu0
    %v2188 = vpop.f32.mrb[0].mxu0
    %v2189 = vadd.f32 0.0, %v2188
    %v2190 = vpop.f32.mrb[0].mxu0
    %2191 = vmatprep.mubr.bf16.mxu0 %v2012
    %2192 = vmatmul.mubr.bf16.gmra.mrb[0].mxu0 %v2011
    %v2193 = vpop.f32.mrb[0].mxu0
    %v2194 = vadd.f32 0.0, %v2193
    %v2195 = vpop.f32.mrb[0].mxu0
    %v2196 = vpop.f32.mrb[0].mxu0
    %v2197 = vadd.f32 0.0, %v2196
    %v2198 = vpop.f32.mrb[0].mxu0
    %2199 = vmatprep.mubr.bf16.mxu0 %v2014
    %2200 = vmatmul.mubr.bf16.gmra.mrb[0].mxu0 %v2013
    %v2201 = vpop.f32.mrb[0].mxu0
    %v2202 = vadd.f32 0.0, %v2201
    %v2203 = vpop.f32.mrb[0].mxu0
    %v2204 = vpop.f32.mrb[0].mxu0
    %v2205 = vadd.f32 0.0, %v2204
    %v2206 = vpop.f32.mrb[0].mxu0
    %2207 = vdwg.mxu0
    %2240 = vrot.lane.b32.xlu0 %v1728, 64
    %v2241 = vpop.permute.xlu0 %2240
    %2242 = vrot.lane.b32.xlu0 %v1731, 64
    %v2243 = vpop.permute.xlu0 %2242
    %2244 = vrot.lane.b32.xlu0 %v1736, 64
    %v2245 = vpop.permute.xlu0 %2244
    %2246 = vrot.lane.b32.xlu0 %v1739, 64
    %v2247 = vpop.permute.xlu0 %2246
    %2248 = vrot.lane.b32.xlu0 %v1744, 64
    %v2249 = vpop.permute.xlu0 %2248
    %2250 = vrot.lane.b32.xlu0 %v1747, 64
    %v2251 = vpop.permute.xlu0 %2250
    %2252 = vrot.lane.b32.xlu0 %v1752, 64
    %v2253 = vpop.permute.xlu0 %2252
    %2254 = vrot.lane.b32.xlu0 %v1755, 64
    %v2255 = vpop.permute.xlu0 %2254
    %2256 = vrot.lane.b32.xlu0 %v1760, 64
    %v2257 = vpop.permute.xlu0 %2256
    %2258 = vrot.lane.b32.xlu0 %v1763, 64
    %v2259 = vpop.permute.xlu0 %2258
    %2260 = vrot.lane.b32.xlu0 %v1768, 64
    %v2261 = vpop.permute.xlu0 %2260
    %2262 = vrot.lane.b32.xlu0 %v1771, 64
    %v2263 = vpop.permute.xlu0 %2262
    %2264 = vrot.lane.b32.xlu0 %v1776, 64
    %v2265 = vpop.permute.xlu0 %2264
    %2266 = vrot.lane.b32.xlu0 %v1779, 64
    %v2267 = vpop.permute.xlu0 %2266
    %2268 = vrot.lane.b32.xlu0 %v1784, 64
    %v2269 = vpop.permute.xlu0 %2268
    %2270 = vrot.lane.b32.xlu0 %v1787, 64
    %v2271 = vpop.permute.xlu0 %2270
    %2272 = vrot.lane.b32.xlu0 %v1792, 64
    %v2273 = vpop.permute.xlu0 %2272
    %2274 = vrot.lane.b32.xlu0 %v1795, 64
    %v2275 = vpop.permute.xlu0 %2274
    %2276 = vrot.lane.b32.xlu0 %v1800, 64
    %v2277 = vpop.permute.xlu0 %2276
    %2278 = vrot.lane.b32.xlu0 %v1803, 64
    %v2279 = vpop.permute.xlu0 %2278
    %2280 = vrot.lane.b32.xlu0 %v1808, 64
    %v2281 = vpop.permute.xlu0 %2280
    %2282 = vrot.lane.b32.xlu0 %v1811, 64
    %v2283 = vpop.permute.xlu0 %2282
    %2284 = vrot.lane.b32.xlu0 %v1816, 64
    %v2285 = vpop.permute.xlu0 %2284
    %2286 = vrot.lane.b32.xlu0 %v1819, 64
    %v2287 = vpop.permute.xlu0 %2286
    %2288 = vrot.lane.b32.xlu0 %v1824, 64
    %v2289 = vpop.permute.xlu0 %2288
    %2290 = vrot.lane.b32.xlu0 %v1827, 64
    %v2291 = vpop.permute.xlu0 %2290
    %2292 = vrot.lane.b32.xlu0 %v1832, 64
    %v2293 = vpop.permute.xlu0 %2292
    %2294 = vrot.lane.b32.xlu0 %v1835, 64
    %v2295 = vpop.permute.xlu0 %2294
    %2296 = vrot.lane.b32.xlu0 %v1840, 64
    %v2297 = vpop.permute.xlu0 %2296
    %2298 = vrot.lane.b32.xlu0 %v1843, 64
    %v2299 = vpop.permute.xlu0 %2298
    %2300 = vrot.lane.b32.xlu0 %v1848, 64
    %v2301 = vpop.permute.xlu0 %2300
    %2302 = vrot.lane.b32.xlu0 %v1851, 64
    %v2303 = vpop.permute.xlu0 %2302
    %vm2336 = vcmask 523264
    %v2337 = vsel %vm2336, %v1310, %v2241
    %v2338 = vsel %vm2336, %v1313, %v2243
    %v2339 = vsel %vm2336, %v1318, %v2245
    %v2340 = vsel %vm2336, %v1321, %v2247
    %v2341 = vsel %vm2336, %v1326, %v2249
    %v2342 = vsel %vm2336, %v1329, %v2251
    %v2343 = vsel %vm2336, %v1334, %v2253
    %v2344 = vsel %vm2336, %v1337, %v2255
    %v2345 = vsel %vm2336, %v1342, %v2257
    %v2346 = vsel %vm2336, %v1345, %v2259
    %v2347 = vsel %vm2336, %v1350, %v2261
    %v2348 = vsel %vm2336, %v1353, %v2263
    %v2349 = vsel %vm2336, %v1358, %v2265
    %v2350 = vsel %vm2336, %v1361, %v2267
    %v2351 = vsel %vm2336, %v1366, %v2269
    %v2352 = vsel %vm2336, %v1369, %v2271
    %v2353 = vsel %vm2336, %v1374, %v2273
    %v2354 = vsel %vm2336, %v1377, %v2275
    %v2355 = vsel %vm2336, %v1382, %v2277
    %v2356 = vsel %vm2336, %v1385, %v2279
    %v2357 = vsel %vm2336, %v1390, %v2281
    %v2358 = vsel %vm2336, %v1393, %v2283
    %v2359 = vsel %vm2336, %v1398, %v2285
    %v2360 = vsel %vm2336, %v1401, %v2287
    %v2361 = vsel %vm2336, %v1406, %v2289
    %v2362 = vsel %vm2336, %v1409, %v2291
    %v2363 = vsel %vm2336, %v1414, %v2293
    %v2364 = vsel %vm2336, %v1417, %v2295
    %v2365 = vsel %vm2336, %v1422, %v2297
    %v2366 = vsel %vm2336, %v1425, %v2299
    %v2367 = vsel %vm2336, %v1430, %v2301
    %v2368 = vsel %vm2336, %v1433, %v2303
    %v2369 = vmax.f32 %v2337, 0.0
    %v2370 = vmax.f32 %v2082, 0.0
    %v2371 = vmax.f32 %v2338, 0.0
    %v2372 = vmax.f32 %v2085, 0.0
    %v2373 = vmax.f32 %v2339, 0.0
    %v2374 = vmax.f32 %v2090, 0.0
    %v2375 = vmax.f32 %v2340, 0.0
    %v2376 = vmax.f32 %v2093, 0.0
    %v2377 = vmax.f32 %v2341, 0.0
    %v2378 = vmax.f32 %v2098, 0.0
    %v2379 = vmax.f32 %v2342, 0.0
    %v2380 = vmax.f32 %v2101, 0.0
    %v2381 = vmax.f32 %v2343, 0.0
    %v2382 = vmax.f32 %v2106, 0.0
    %v2383 = vmax.f32 %v2344, 0.0
    %v2384 = vmax.f32 %v2109, 0.0
    %v2385 = vmax.f32 %v2345, 0.0
    %v2386 = vmax.f32 %v2114, 0.0
    %v2387 = vmax.f32 %v2346, 0.0
    %v2388 = vmax.f32 %v2117, 0.0
    %v2389 = vmax.f32 %v2347, 0.0
    %v2390 = vmax.f32 %v2122, 0.0
    %v2391 = vmax.f32 %v2348, 0.0
    %v2392 = vmax.f32 %v2125, 0.0
    %v2393 = vmax.f32 %v2349, 0.0
    %v2394 = vmax.f32 %v2130, 0.0
    %v2395 = vmax.f32 %v2350, 0.0
    %v2396 = vmax.f32 %v2133, 0.0
    %v2397 = vmax.f32 %v2351, 0.0
    %v2398 = vmax.f32 %v2138, 0.0
    %v2399 = vmax.f32 %v2352, 0.0
    %v2400 = vmax.f32 %v2141, 0.0
    %v2401 = vmax.f32 %v2353, 0.0
    %v2402 = vmax.f32 %v2146, 0.0
    %v2403 = vmax.f32 %v2354, 0.0
    %v2404 = vmax.f32 %v2149, 0.0
    %v2405 = vmax.f32 %v2355, 0.0
    %v2406 = vmax.f32 %v2154, 0.0
    %v2407 = vmax.f32 %v2356, 0.0
    %v2408 = vmax.f32 %v2157, 0.0
    %v2409 = vmax.f32 %v2357, 0.0
    %v2410 = vmax.f32 %v2162, 0.0
    %v2411 = vmax.f32 %v2358, 0.0
    %v2412 = vmax.f32 %v2165, 0.0
    %v2413 = vmax.f32 %v2359, 0.0
    %v2414 = vmax.f32 %v2170, 0.0
    %v2415 = vmax.f32 %v2360, 0.0
    %v2416 = vmax.f32 %v2173, 0.0
    %v2417 = vmax.f32 %v2361, 0.0
    %v2418 = vmax.f32 %v2178, 0.0
    %v2419 = vmax.f32 %v2362, 0.0
    %v2420 = vmax.f32 %v2181, 0.0
    %v2421 = vmax.f32 %v2363, 0.0
    %v2422 = vmax.f32 %v2186, 0.0
    %v2423 = vmax.f32 %v2364, 0.0
    %v2424 = vmax.f32 %v2189, 0.0
    %v2425 = vmax.f32 %v2365, 0.0
    %v2426 = vmax.f32 %v2194, 0.0
    %v2427 = vmax.f32 %v2366, 0.0
    %v2428 = vmax.f32 %v2197, 0.0
    %v2429 = vmax.f32 %v2367, 0.0
    %v2430 = vmax.f32 %v2202, 0.0
    %v2431 = vmax.f32 %v2368, 0.0
    %v2432 = vmax.f32 %v2205, 0.0
    %v2433 = vpack.c.bf16 %v2371, %v2369
    %v2434 = vpack.c.bf16 %v2372, %v2370
    %v2435 = vpack.c.bf16 %v2375, %v2373
    %v2436 = vpack.c.bf16 %v2376, %v2374
    %v2437 = vpack.c.bf16 %v2379, %v2377
    %v2438 = vpack.c.bf16 %v2380, %v2378
    %v2439 = vpack.c.bf16 %v2383, %v2381
    %v2440 = vpack.c.bf16 %v2384, %v2382
    %v2441 = vpack.c.bf16 %v2387, %v2385
    %v2442 = vpack.c.bf16 %v2388, %v2386
    %v2443 = vpack.c.bf16 %v2391, %v2389
    %v2444 = vpack.c.bf16 %v2392, %v2390
    %v2445 = vpack.c.bf16 %v2395, %v2393
    %v2446 = vpack.c.bf16 %v2396, %v2394
    %v2447 = vpack.c.bf16 %v2399, %v2397
    %v2448 = vpack.c.bf16 %v2400, %v2398
    %v2449 = vpack.c.bf16 %v2403, %v2401
    %v2450 = vpack.c.bf16 %v2404, %v2402
    %v2451 = vpack.c.bf16 %v2407, %v2405
    %v2452 = vpack.c.bf16 %v2408, %v2406
    %v2453 = vpack.c.bf16 %v2411, %v2409
    %v2454 = vpack.c.bf16 %v2412, %v2410
    %v2455 = vpack.c.bf16 %v2415, %v2413
    %v2456 = vpack.c.bf16 %v2416, %v2414
    %v2457 = vpack.c.bf16 %v2419, %v2417
    %v2458 = vpack.c.bf16 %v2420, %v2418
    %v2459 = vpack.c.bf16 %v2423, %v2421
    %v2460 = vpack.c.bf16 %v2424, %v2422
    %v2461 = vpack.c.bf16 %v2427, %v2425
    %v2462 = vpack.c.bf16 %v2428, %v2426
    %v2463 = vpack.c.bf16 %v2431, %v2429
    %v2464 = vpack.c.bf16 %v2432, %v2430
    %v2465 = vld [vmem:[#allocation7] sm:$0xff]
    %v2466 = vld [vmem:[#allocation7 + $0x8] sm:$0xff]
    %v2467 = vld [vmem:[#allocation7 + $0x10] sm:$0xff]
    %v2468 = vld [vmem:[#allocation7 + $0x18] sm:$0xff]
    %v2469 = vld [vmem:[#allocation7 + $0x20] sm:$0xff]
    %v2470 = vld [vmem:[#allocation7 + $0x28] sm:$0xff]
    %v2471 = vld [vmem:[#allocation7 + $0x30] sm:$0xff]
    %v2472 = vld [vmem:[#allocation7 + $0x38] sm:$0xff]
    %v2473 = vld [vmem:[#allocation7 + $0x40] sm:$0xff]
    %v2474 = vld [vmem:[#allocation7 + $0x48] sm:$0xff]
    %v2475 = vld [vmem:[#allocation7 + $0x50] sm:$0xff]
    %v2476 = vld [vmem:[#allocation7 + $0x58] sm:$0xff]
    %v2477 = vld [vmem:[#allocation7 + $0x60] sm:$0xff]
    %v2478 = vld [vmem:[#allocation7 + $0x68] sm:$0xff]
    %v2479 = vld [vmem:[#allocation7 + $0x70] sm:$0xff]
    %v2480 = vld [vmem:[#allocation7 + $0x78] sm:$0xff]
    %v2481 = vld [vmem:[#allocation7 + $0x80] sm:$0xff]
    %v2482 = vld [vmem:[#allocation7 + $0x88] sm:$0xff]
    %v2483 = vld [vmem:[#allocation7 + $0x90] sm:$0xff]
    %v2484 = vld [vmem:[#allocation7 + $0x98] sm:$0xff]
    %v2485 = vld [vmem:[#allocation7 + $0xa0] sm:$0xff]
    %v2486 = vld [vmem:[#allocation7 + $0xa8] sm:$0xff]
    %v2487 = vld [vmem:[#allocation7 + $0xb0] sm:$0xff]
    %v2488 = vld [vmem:[#allocation7 + $0xb8] sm:$0xff]
    %v2489 = vld [vmem:[#allocation9] sm:$0x3]
    %v2491 = vlaneseq
    %v2492 = vshrl.u32 %v2491, 7
    %v2493 = vsub.s32 0, %v2492
    %v2494 = vrot.slane %v2489, %v2493
    %v2495 = vlaneseq
    %v2496 = vshrl.u32 %v2495, 7
    %v2497 = vsub.s32 1, %v2496
    %v2498 = vrot.slane %v2489, %v2497
    %v2525 = vunpack.c.l.b16 %v2465
    %v2526 = vunpack.c.h.b16 %v2465
    %v2527 = vunpack.c.l.b16 %v2466
    %v2528 = vunpack.c.h.b16 %v2466
    %v2529 = vunpack.c.l.b16 %v2467
    %v2530 = vunpack.c.h.b16 %v2467
    %v2531 = vunpack.c.l.b16 %v2468
    %v2532 = vunpack.c.h.b16 %v2468
    %v2533 = vunpack.c.l.b16 %v2469
    %v2534 = vunpack.c.h.b16 %v2469
    %v2535 = vunpack.c.l.b16 %v2470
    %v2536 = vunpack.c.h.b16 %v2470
    %v2537 = vunpack.c.l.b16 %v2471
    %v2538 = vunpack.c.h.b16 %v2471
    %v2539 = vunpack.c.l.b16 %v2472
    %v2540 = vunpack.c.h.b16 %v2472
    %v2541 = vunpack.c.l.b16 %v2473
    %v2542 = vunpack.c.h.b16 %v2473
    %v2543 = vunpack.c.l.b16 %v2474
    %v2544 = vunpack.c.h.b16 %v2474
    %v2545 = vunpack.c.l.b16 %v2475
    %v2546 = vunpack.c.h.b16 %v2475
    %v2547 = vunpack.c.l.b16 %v2476
    %v2548 = vunpack.c.h.b16 %v2476
    %v2549 = vunpack.c.l.b16 %v2477
    %v2550 = vunpack.c.h.b16 %v2477
    %v2551 = vunpack.c.l.b16 %v2478
    %v2552 = vunpack.c.h.b16 %v2478
    %v2553 = vunpack.c.l.b16 %v2479
    %v2554 = vunpack.c.h.b16 %v2479
    %v2555 = vunpack.c.l.b16 %v2480
    %v2556 = vunpack.c.h.b16 %v2480
    %v2557 = vunpack.c.l.b16 %v2481
    %v2558 = vunpack.c.h.b16 %v2481
    %v2559 = vunpack.c.l.b16 %v2482
    %v2560 = vunpack.c.h.b16 %v2482
    %v2561 = vunpack.c.l.b16 %v2483
    %v2562 = vunpack.c.h.b16 %v2483
    %v2563 = vunpack.c.l.b16 %v2484
    %v2564 = vunpack.c.h.b16 %v2484
    %v2565 = vunpack.c.l.b16 %v2485
    %v2566 = vunpack.c.h.b16 %v2485
    %v2567 = vunpack.c.l.b16 %v2486
    %v2568 = vunpack.c.h.b16 %v2486
    %v2569 = vunpack.c.l.b16 %v2487
    %v2570 = vunpack.c.h.b16 %v2487
    %v2571 = vunpack.c.l.b16 %v2488
    %v2572 = vunpack.c.h.b16 %v2488
    %v2573 = vpack.c.b16 %v2527, %v2525
    %v2574 = vpack.c.b16 %v2528, %v2526
    %v2575 = vpack.c.b16 %v2531, %v2529
    %v2576 = vpack.c.b16 %v2532, %v2530
    %v2577 = vpack.c.b16 %v2535, %v2533
    %v2578 = vpack.c.b16 %v2536, %v2534
    %v2579 = vpack.c.b16 %v2539, %v2537
    %v2580 = vpack.c.b16 %v2540, %v2538
    %v2581 = vpack.c.b16 %v2543, %v2541
    %v2582 = vpack.c.b16 %v2544, %v2542
    %v2583 = vpack.c.b16 %v2547, %v2545
    %v2584 = vpack.c.b16 %v2548, %v2546
    %v2585 = vpack.c.b16 %v2551, %v2549
    %v2586 = vpack.c.b16 %v2552, %v2550
    %v2587 = vpack.c.b16 %v2555, %v2553
    %v2588 = vpack.c.b16 %v2556, %v2554
    %v2589 = vpack.c.b16 %v2559, %v2557
    %v2590 = vpack.c.b16 %v2560, %v2558
    %v2591 = vpack.c.b16 %v2563, %v2561
    %v2592 = vpack.c.b16 %v2564, %v2562
    %v2593 = vpack.c.b16 %v2567, %v2565
    %v2594 = vpack.c.b16 %v2568, %v2566
    %v2595 = vpack.c.b16 %v2571, %v2569
    %v2596 = vpack.c.b16 %v2572, %v2570
    %v2622 = vsel %vm2336, %v2434, 0
    %v2625 = vsel %vm2336, %v2436, 0
    %v2628 = vsel %vm2336, %v2438, 0
    %v2631 = vsel %vm2336, %v2440, 0
    %v2634 = vsel %vm2336, %v2442, 0
    %v2637 = vsel %vm2336, %v2444, 0
    %v2640 = vsel %vm2336, %v2446, 0
    %v2643 = vsel %vm2336, %v2448, 0
    %v2646 = vsel %vm2336, %v2450, 0
    %v2649 = vsel %vm2336, %v2452, 0
    %v2652 = vsel %vm2336, %v2454, 0
    %v2655 = vsel %vm2336, %v2456, 0
    %v2658 = vsel %vm2336, %v2458, 0
    %v2661 = vsel %vm2336, %v2460, 0
    %v2664 = vsel %vm2336, %v2462, 0
    %v2667 = vsel %vm2336, %v2464, 0
    %2669 = vmatprep.subr.bf16.mxu0 %v2574
    %2670 = vmatpush1.bf16.msra.mxu0 %v2573
    %2671 = vmatprep.subr.bf16.mxu0 %v2576
    %2672 = vmatpush1.bf16.msra.mxu0 %v2575
    %2673 = vmatprep.subr.bf16.mxu0 %v2578
    %2674 = vmatpush1.bf16.msra.mxu0 %v2577
    %2675 = vmatprep.subr.bf16.mxu0 %v2580
    %2676 = vmatpush1.bf16.msra.mxu0 %v2579
    %2677 = vmatprep.subr.bf16.mxu0 %v2582
    %2678 = vmatpush1.bf16.msra.mxu0 %v2581
    %2679 = vmatprep.subr.bf16.mxu0 %v2584
    %2680 = vmatpush1.bf16.msra.mxu0 %v2583
    %2681 = vmatprep.subr.bf16.mxu0 %v2586
    %2682 = vmatpush1.bf16.msra.mxu0 %v2585
    %2683 = vmatprep.subr.bf16.mxu0 %v2588
    %2684 = vmatpush1.bf16.msra.mxu0 %v2587
    %2685 = vmatprep.subr.bf16.mxu0 %v2590
    %2686 = vmatpush1.bf16.msra.mxu0 %v2589
    %2687 = vmatprep.subr.bf16.mxu0 %v2592
    %2688 = vmatpush1.bf16.msra.mxu0 %v2591
    %2689 = vmatprep.subr.bf16.mxu0 %v2594
    %2690 = vmatpush1.bf16.msra.mxu0 %v2593
    %2691 = vmatprep.subr.bf16.mxu0 %v2596
    %2692 = vmatpush1.bf16.msra.mxu0 %v2595
    %2693 = vmatprep.subr.bf16.mxu0 0
    %2694 = vmatpush1.bf16.msra.mxu0 0
    %2695 = vmatprep.subr.bf16.mxu0 0
    %2696 = vmatpush1.bf16.msra.mxu0 0
    %2697 = vmatprep.subr.bf16.mxu0 0
    %2698 = vmatpush1.bf16.msra.mxu0 0
    %2699 = vmatprep.subr.bf16.mxu0 0
    %2700 = vmatpush1.bf16.msra.mxu0 0
    %2701 = vmatprep.mubr.bf16.mxu0 %v2622
    %2702 = vmatmul.mubr.bf16.gmra.mrb[0].mxu0 %v2433
    %v2703 = vpop.f32.mrb[0].mxu0
    %v2704 = vadd.f32 %v2494, %v2703
    %v2705 = vpop.f32.mrb[0].mxu0
    %v2706 = vadd.f32 %v2498, %v2705
    %v2707 = vpop.f32.mrb[0].mxu0
    %v2708 = vadd.f32 %v2494, %v2707
    %v2709 = vpop.f32.mrb[0].mxu0
    %v2710 = vadd.f32 %v2498, %v2709
    %2711 = vmatprep.mubr.bf16.mxu0 %v2625
    %2712 = vmatmul.mubr.bf16.gmra.mrb[0].mxu0 %v2435
    %v2713 = vpop.f32.mrb[0].mxu0
    %v2714 = vadd.f32 %v2494, %v2713
    %v2715 = vpop.f32.mrb[0].mxu0
    %v2716 = vadd.f32 %v2498, %v2715
    %v2717 = vpop.f32.mrb[0].mxu0
    %v2718 = vadd.f32 %v2494, %v2717
    %v2719 = vpop.f32.mrb[0].mxu0
    %v2720 = vadd.f32 %v2498, %v2719
    %2721 = vmatprep.mubr.bf16.mxu0 %v2628
    %2722 = vmatmul.mubr.bf16.gmra.mrb[0].mxu0 %v2437
    %v2723 = vpop.f32.mrb[0].mxu0
    %v2724 = vadd.f32 %v2494, %v2723
    %v2725 = vpop.f32.mrb[0].mxu0
    %v2726 = vadd.f32 %v2498, %v2725
    %v2727 = vpop.f32.mrb[0].mxu0
    %v2728 = vadd.f32 %v2494, %v2727
    %v2729 = vpop.f32.mrb[0].mxu0
    %v2730 = vadd.f32 %v2498, %v2729
    %2731 = vmatprep.mubr.bf16.mxu0 %v2631
    %2732 = vmatmul.mubr.bf16.gmra.mrb[0].mxu0 %v2439
    %v2733 = vpop.f32.mrb[0].mxu0
    %v2734 = vadd.f32 %v2494, %v2733
    %v2735 = vpop.f32.mrb[0].mxu0
    %v2736 = vadd.f32 %v2498, %v2735
    %v2737 = vpop.f32.mrb[0].mxu0
    %v2738 = vadd.f32 %v2494, %v2737
    %v2739 = vpop.f32.mrb[0].mxu0
    %v2740 = vadd.f32 %v2498, %v2739
    %2741 = vmatprep.mubr.bf16.mxu0 %v2634
    %2742 = vmatmul.mubr.bf16.gmra.mrb[0].mxu0 %v2441
    %v2743 = vpop.f32.mrb[0].mxu0
    %v2744 = vadd.f32 %v2494, %v2743
    %v2745 = vpop.f32.mrb[0].mxu0
    %v2746 = vadd.f32 %v2498, %v2745
    %v2747 = vpop.f32.mrb[0].mxu0
    %v2748 = vadd.f32 %v2494, %v2747
    %v2749 = vpop.f32.mrb[0].mxu0
    %v2750 = vadd.f32 %v2498, %v2749
    %2751 = vmatprep.mubr.bf16.mxu0 %v2637
    %2752 = vmatmul.mubr.bf16.gmra.mrb[0].mxu0 %v2443
    %v2753 = vpop.f32.mrb[0].mxu0
    %v2754 = vadd.f32 %v2494, %v2753
    %v2755 = vpop.f32.mrb[0].mxu0
    %v2756 = vadd.f32 %v2498, %v2755
    %v2757 = vpop.f32.mrb[0].mxu0
    %v2758 = vadd.f32 %v2494, %v2757
    %v2759 = vpop.f32.mrb[0].mxu0
    %v2760 = vadd.f32 %v2498, %v2759
    %2761 = vmatprep.mubr.bf16.mxu0 %v2640
    %2762 = vmatmul.mubr.bf16.gmra.mrb[0].mxu0 %v2445
    %v2763 = vpop.f32.mrb[0].mxu0
    %v2764 = vadd.f32 %v2494, %v2763
    %v2765 = vpop.f32.mrb[0].mxu0
    %v2766 = vadd.f32 %v2498, %v2765
    %v2767 = vpop.f32.mrb[0].mxu0
    %v2768 = vadd.f32 %v2494, %v2767
    %v2769 = vpop.f32.mrb[0].mxu0
    %v2770 = vadd.f32 %v2498, %v2769
    %2771 = vmatprep.mubr.bf16.mxu0 %v2643
    %2772 = vmatmul.mubr.bf16.gmra.mrb[0].mxu0 %v2447
    %v2773 = vpop.f32.mrb[0].mxu0
    %v2774 = vadd.f32 %v2494, %v2773
    %v2775 = vpop.f32.mrb[0].mxu0
    %v2776 = vadd.f32 %v2498, %v2775
    %v2777 = vpop.f32.mrb[0].mxu0
    %v2778 = vadd.f32 %v2494, %v2777
    %v2779 = vpop.f32.mrb[0].mxu0
    %v2780 = vadd.f32 %v2498, %v2779
    %2781 = vmatprep.mubr.bf16.mxu0 %v2646
    %2782 = vmatmul.mubr.bf16.gmra.mrb[0].mxu0 %v2449
    %v2783 = vpop.f32.mrb[0].mxu0
    %v2784 = vadd.f32 %v2494, %v2783
    %v2785 = vpop.f32.mrb[0].mxu0
    %v2786 = vadd.f32 %v2498, %v2785
    %v2787 = vpop.f32.mrb[0].mxu0
    %v2788 = vadd.f32 %v2494, %v2787
    %v2789 = vpop.f32.mrb[0].mxu0
    %v2790 = vadd.f32 %v2498, %v2789
    %2791 = vmatprep.mubr.bf16.mxu0 %v2649
    %2792 = vmatmul.mubr.bf16.gmra.mrb[0].mxu0 %v2451
    %v2793 = vpop.f32.mrb[0].mxu0
    %v2794 = vadd.f32 %v2494, %v2793
    %v2795 = vpop.f32.mrb[0].mxu0
    %v2796 = vadd.f32 %v2498, %v2795
    %v2797 = vpop.f32.mrb[0].mxu0
    %v2798 = vadd.f32 %v2494, %v2797
    %v2799 = vpop.f32.mrb[0].mxu0
    %v2800 = vadd.f32 %v2498, %v2799
    %2801 = vmatprep.mubr.bf16.mxu0 %v2652
    %2802 = vmatmul.mubr.bf16.gmra.mrb[0].mxu0 %v2453
    %v2803 = vpop.f32.mrb[0].mxu0
    %v2804 = vadd.f32 %v2494, %v2803
    %v2805 = vpop.f32.mrb[0].mxu0
    %v2806 = vadd.f32 %v2498, %v2805
    %v2807 = vpop.f32.mrb[0].mxu0
    %v2808 = vadd.f32 %v2494, %v2807
    %v2809 = vpop.f32.mrb[0].mxu0
    %v2810 = vadd.f32 %v2498, %v2809
    %2811 = vmatprep.mubr.bf16.mxu0 %v2655
    %2812 = vmatmul.mubr.bf16.gmra.mrb[0].mxu0 %v2455
    %v2813 = vpop.f32.mrb[0].mxu0
    %v2814 = vadd.f32 %v2494, %v2813
    %v2815 = vpop.f32.mrb[0].mxu0
    %v2816 = vadd.f32 %v2498, %v2815
    %v2817 = vpop.f32.mrb[0].mxu0
    %v2818 = vadd.f32 %v2494, %v2817
    %v2819 = vpop.f32.mrb[0].mxu0
    %v2820 = vadd.f32 %v2498, %v2819
    %2821 = vmatprep.mubr.bf16.mxu0 %v2658
    %2822 = vmatmul.mubr.bf16.gmra.mrb[0].mxu0 %v2457
    %v2823 = vpop.f32.mrb[0].mxu0
    %v2824 = vadd.f32 %v2494, %v2823
    %v2825 = vpop.f32.mrb[0].mxu0
    %v2826 = vadd.f32 %v2498, %v2825
    %v2827 = vpop.f32.mrb[0].mxu0
    %v2828 = vadd.f32 %v2494, %v2827
    %v2829 = vpop.f32.mrb[0].mxu0
    %v2830 = vadd.f32 %v2498, %v2829
    %2831 = vmatprep.mubr.bf16.mxu0 %v2661
    %2832 = vmatmul.mubr.bf16.gmra.mrb[0].mxu0 %v2459
    %v2833 = vpop.f32.mrb[0].mxu0
    %v2834 = vadd.f32 %v2494, %v2833
    %v2835 = vpop.f32.mrb[0].mxu0
    %v2836 = vadd.f32 %v2498, %v2835
    %v2837 = vpop.f32.mrb[0].mxu0
    %v2838 = vadd.f32 %v2494, %v2837
    %v2839 = vpop.f32.mrb[0].mxu0
    %v2840 = vadd.f32 %v2498, %v2839
    %2841 = vmatprep.mubr.bf16.mxu0 %v2664
    %2842 = vmatmul.mubr.bf16.gmra.mrb[0].mxu0 %v2461
    %v2843 = vpop.f32.mrb[0].mxu0
    %v2844 = vadd.f32 %v2494, %v2843
    %v2845 = vpop.f32.mrb[0].mxu0
    %v2846 = vadd.f32 %v2498, %v2845
    %v2847 = vpop.f32.mrb[0].mxu0
    %v2848 = vadd.f32 %v2494, %v2847
    %v2849 = vpop.f32.mrb[0].mxu0
    %v2850 = vadd.f32 %v2498, %v2849
    %2851 = vmatprep.mubr.bf16.mxu0 %v2667
    %2852 = vmatmul.mubr.bf16.gmra.mrb[0].mxu0 %v2463
    %v2853 = vpop.f32.mrb[0].mxu0
    %v2854 = vadd.f32 %v2494, %v2853
    %v2855 = vpop.f32.mrb[0].mxu0
    %v2856 = vadd.f32 %v2498, %v2855
    %v2857 = vpop.f32.mrb[0].mxu0
    %v2858 = vadd.f32 %v2494, %v2857
    %v2859 = vpop.f32.mrb[0].mxu0
    %v2860 = vadd.f32 %v2498, %v2859
    %2861 = vdwg.mxu0
    %v2862 = vpack.c.bf16 %v2708, %v2704
    %v2863 = vpack.c.bf16 %v2710, %v2706
    %v2864 = vpack.c.bf16 %v2718, %v2714
    %v2865 = vpack.c.bf16 %v2720, %v2716
    %v2866 = vpack.c.bf16 %v2728, %v2724
    %v2867 = vpack.c.bf16 %v2730, %v2726
    %v2868 = vpack.c.bf16 %v2738, %v2734
    %v2869 = vpack.c.bf16 %v2740, %v2736
    %v2870 = vpack.c.bf16 %v2748, %v2744
    %v2871 = vpack.c.bf16 %v2750, %v2746
    %v2872 = vpack.c.bf16 %v2758, %v2754
    %v2873 = vpack.c.bf16 %v2760, %v2756
    %v2874 = vpack.c.bf16 %v2768, %v2764
    %v2875 = vpack.c.bf16 %v2770, %v2766
    %v2876 = vpack.c.bf16 %v2778, %v2774
    %v2877 = vpack.c.bf16 %v2780, %v2776
    %v2878 = vpack.c.bf16 %v2788, %v2784
    %v2879 = vpack.c.bf16 %v2790, %v2786
    %v2880 = vpack.c.bf16 %v2798, %v2794
    %v2881 = vpack.c.bf16 %v2800, %v2796
    %v2882 = vpack.c.bf16 %v2808, %v2804
    %v2883 = vpack.c.bf16 %v2810, %v2806
    %v2884 = vpack.c.bf16 %v2818, %v2814
    %v2885 = vpack.c.bf16 %v2820, %v2816
    %v2886 = vpack.c.bf16 %v2828, %v2824
    %v2887 = vpack.c.bf16 %v2830, %v2826
    %v2888 = vpack.c.bf16 %v2838, %v2834
    %v2889 = vpack.c.bf16 %v2840, %v2836
    %v2890 = vpack.c.bf16 %v2848, %v2844
    %v2891 = vpack.c.bf16 %v2850, %v2846
    %v2892 = vpack.c.bf16 %v2858, %v2854
    %v2893 = vpack.c.bf16 %v2860, %v2856
    %s2894 = scalar_lea.vmem [#allocation6], 768
    %v2895 = vld [vmem:[%s2894] sm:$0xff]
    %v2896 = vld [vmem:[%s2894 + $0x8] sm:$0xff]
    %v2897 = vld [vmem:[%s2894 + $0x10] sm:$0xff]
    %v2898 = vld [vmem:[%s2894 + $0x18] sm:$0xff]
    %v2899 = vld [vmem:[%s2894 + $0x20] sm:$0xff]
    %v2900 = vld [vmem:[%s2894 + $0x28] sm:$0xff]
    %v2901 = vld [vmem:[%s2894 + $0x30] sm:$0xff]
    %v2902 = vld [vmem:[%s2894 + $0x38] sm:$0xff]
    %v2903 = vld [vmem:[%s2894 + $0x40] sm:$0xff]
    %v2904 = vld [vmem:[%s2894 + $0x48] sm:$0xff]
    %v2905 = vld [vmem:[%s2894 + $0x50] sm:$0xff]
    %v2906 = vld [vmem:[%s2894 + $0x58] sm:$0xff]
    %v2907 = vld [vmem:[%s2894 + $0x60] sm:$0xff]
    %v2908 = vld [vmem:[%s2894 + $0x68] sm:$0xff]
    %v2909 = vld [vmem:[%s2894 + $0x70] sm:$0xff]
    %v2910 = vld [vmem:[%s2894 + $0x78] sm:$0xff]
    %v2911 = vld [vmem:[%s2894 + $0x80] sm:$0xff]
    %v2912 = vld [vmem:[%s2894 + $0x88] sm:$0xff]
    %v2913 = vld [vmem:[%s2894 + $0x90] sm:$0xff]
    %v2914 = vld [vmem:[%s2894 + $0x98] sm:$0xff]
    %v2915 = vld [vmem:[%s2894 + $0xa0] sm:$0xff]
    %v2916 = vld [vmem:[%s2894 + $0xa8] sm:$0xff]
    %v2917 = vld [vmem:[%s2894 + $0xb0] sm:$0xff]
    %v2918 = vld [vmem:[%s2894 + $0xb8] sm:$0xff]
    %v2919 = vld [vmem:[%s2894 + $0xc0] sm:$0xff]
    %v2920 = vld [vmem:[%s2894 + $0xc8] sm:$0xff]
    %v2921 = vld [vmem:[%s2894 + $0xd0] sm:$0xff]
    %v2922 = vld [vmem:[%s2894 + $0xd8] sm:$0xff]
    %v2923 = vld [vmem:[%s2894 + $0xe0] sm:$0xff]
    %v2924 = vld [vmem:[%s2894 + $0xe8] sm:$0xff]
    %v2925 = vld [vmem:[%s2894 + $0xf0] sm:$0xff]
    %v2926 = vld [vmem:[%s2894 + $0xf8] sm:$0xff]
    %v2959 = vunpack.c.l.b16 %v2895
    %v2960 = vunpack.c.h.b16 %v2895
    %v2961 = vunpack.c.l.b16 %v2896
    %v2962 = vunpack.c.h.b16 %v2896
    %v2963 = vunpack.c.l.b16 %v2897
    %v2964 = vunpack.c.h.b16 %v2897
    %v2965 = vunpack.c.l.b16 %v2898
    %v2966 = vunpack.c.h.b16 %v2898
    %v2967 = vunpack.c.l.b16 %v2899
    %v2968 = vunpack.c.h.b16 %v2899
    %v2969 = vunpack.c.l.b16 %v2900
    %v2970 = vunpack.c.h.b16 %v2900
    %v2971 = vunpack.c.l.b16 %v2901
    %v2972 = vunpack.c.h.b16 %v2901
    %v2973 = vunpack.c.l.b16 %v2902
    %v2974 = vunpack.c.h.b16 %v2902
    %v2975 = vunpack.c.l.b16 %v2903
    %v2976 = vunpack.c.h.b16 %v2903
    %v2977 = vunpack.c.l.b16 %v2904
    %v2978 = vunpack.c.h.b16 %v2904
    %v2979 = vunpack.c.l.b16 %v2905
    %v2980 = vunpack.c.h.b16 %v2905
    %v2981 = vunpack.c.l.b16 %v2906
    %v2982 = vunpack.c.h.b16 %v2906
    %v2983 = vunpack.c.l.b16 %v2907
    %v2984 = vunpack.c.h.b16 %v2907
    %v2985 = vunpack.c.l.b16 %v2908
    %v2986 = vunpack.c.h.b16 %v2908
    %v2987 = vunpack.c.l.b16 %v2909
    %v2988 = vunpack.c.h.b16 %v2909
    %v2989 = vunpack.c.l.b16 %v2910
    %v2990 = vunpack.c.h.b16 %v2910
    %v2991 = vunpack.c.l.b16 %v2911
    %v2992 = vunpack.c.h.b16 %v2911
    %v2993 = vunpack.c.l.b16 %v2912
    %v2994 = vunpack.c.h.b16 %v2912
    %v2995 = vunpack.c.l.b16 %v2913
    %v2996 = vunpack.c.h.b16 %v2913
    %v2997 = vunpack.c.l.b16 %v2914
    %v2998 = vunpack.c.h.b16 %v2914
    %v2999 = vunpack.c.l.b16 %v2915
    %v3000 = vunpack.c.h.b16 %v2915
    %v3001 = vunpack.c.l.b16 %v2916
    %v3002 = vunpack.c.h.b16 %v2916
    %v3003 = vunpack.c.l.b16 %v2917
    %v3004 = vunpack.c.h.b16 %v2917
    %v3005 = vunpack.c.l.b16 %v2918
    %v3006 = vunpack.c.h.b16 %v2918
    %v3007 = vunpack.c.l.b16 %v2919
    %v3008 = vunpack.c.h.b16 %v2919
    %v3009 = vunpack.c.l.b16 %v2920
    %v3010 = vunpack.c.h.b16 %v2920
    %v3011 = vunpack.c.l.b16 %v2921
    %v3012 = vunpack.c.h.b16 %v2921
    %v3013 = vunpack.c.l.b16 %v2922
    %v3014 = vunpack.c.h.b16 %v2922
    %v3015 = vunpack.c.l.b16 %v2923
    %v3016 = vunpack.c.h.b16 %v2923
    %v3017 = vunpack.c.l.b16 %v2924
    %v3018 = vunpack.c.h.b16 %v2924
    %v3019 = vunpack.c.l.b16 %v2925
    %v3020 = vunpack.c.h.b16 %v2925
    %v3021 = vunpack.c.l.b16 %v2926
    %v3022 = vunpack.c.h.b16 %v2926
    %v3023 = vpack.c.b16 %v2961, %v2959
    %v3024 = vpack.c.b16 %v2962, %v2960
    %v3025 = vpack.c.b16 %v2965, %v2963
    %v3026 = vpack.c.b16 %v2966, %v2964
    %v3027 = vpack.c.b16 %v2969, %v2967
    %v3028 = vpack.c.b16 %v2970, %v2968
    %v3029 = vpack.c.b16 %v2973, %v2971
    %v3030 = vpack.c.b16 %v2974, %v2972
    %v3031 = vpack.c.b16 %v2977, %v2975
    %v3032 = vpack.c.b16 %v2978, %v2976
    %v3033 = vpack.c.b16 %v2981, %v2979
    %v3034 = vpack.c.b16 %v2982, %v2980
    %v3035 = vpack.c.b16 %v2985, %v2983
    %v3036 = vpack.c.b16 %v2986, %v2984
    %v3037 = vpack.c.b16 %v2989, %v2987
    %v3038 = vpack.c.b16 %v2990, %v2988
    %v3039 = vpack.c.b16 %v2993, %v2991
    %v3040 = vpack.c.b16 %v2994, %v2992
    %v3041 = vpack.c.b16 %v2997, %v2995
    %v3042 = vpack.c.b16 %v2998, %v2996
    %v3043 = vpack.c.b16 %v3001, %v2999
    %v3044 = vpack.c.b16 %v3002, %v3000
    %v3045 = vpack.c.b16 %v3005, %v3003
    %v3046 = vpack.c.b16 %v3006, %v3004
    %v3047 = vpack.c.b16 %v3009, %v3007
    %v3048 = vpack.c.b16 %v3010, %v3008
    %v3049 = vpack.c.b16 %v3013, %v3011
    %v3050 = vpack.c.b16 %v3014, %v3012
    %v3051 = vpack.c.b16 %v3017, %v3015
    %v3052 = vpack.c.b16 %v3018, %v3016
    %v3053 = vpack.c.b16 %v3021, %v3019
    %v3054 = vpack.c.b16 %v3022, %v3020
    %3087 = vmatprep.subr.bf16.mxu0 0
    %3088 = vmatpush1.bf16.msra.mxu0 %v2862
    %3089 = vmatprep.subr.bf16.mxu0 0
    %3090 = vmatpush1.bf16.msra.mxu0 %v2864
    %3091 = vmatprep.subr.bf16.mxu0 0
    %3092 = vmatpush1.bf16.msra.mxu0 %v2866
    %3093 = vmatprep.subr.bf16.mxu0 0
    %3094 = vmatpush1.bf16.msra.mxu0 %v2868
    %3095 = vmatprep.subr.bf16.mxu0 0
    %3096 = vmatpush1.bf16.msra.mxu0 %v2870
    %3097 = vmatprep.subr.bf16.mxu0 0
    %3098 = vmatpush1.bf16.msra.mxu0 %v2872
    %3099 = vmatprep.subr.bf16.mxu0 0
    %3100 = vmatpush1.bf16.msra.mxu0 %v2874
    %3101 = vmatprep.subr.bf16.mxu0 0
    %3102 = vmatpush1.bf16.msra.mxu0 %v2876
    %3103 = vmatprep.subr.bf16.mxu0 0
    %3104 = vmatpush1.bf16.msra.mxu0 %v2878
    %3105 = vmatprep.subr.bf16.mxu0 0
    %3106 = vmatpush1.bf16.msra.mxu0 %v2880
    %3107 = vmatprep.subr.bf16.mxu0 0
    %3108 = vmatpush1.bf16.msra.mxu0 %v2882
    %3109 = vmatprep.subr.bf16.mxu0 0
    %3110 = vmatpush1.bf16.msra.mxu0 %v2884
    %3111 = vmatprep.subr.bf16.mxu0 0
    %3112 = vmatpush1.bf16.msra.mxu0 %v2886
    %3113 = vmatprep.subr.bf16.mxu0 0
    %3114 = vmatpush1.bf16.msra.mxu0 %v2888
    %3115 = vmatprep.subr.bf16.mxu0 0
    %3116 = vmatpush1.bf16.msra.mxu0 %v2890
    %3117 = vmatprep.subr.bf16.mxu0 0
    %3118 = vmatpush1.bf16.msra.mxu0 %v2892
    %3119 = vmatprep.mubr.bf16.mxu0 %v3024
    %3120 = vmatmul.mubr.bf16.gmra.mrb[0].mxu0 %v3023
    %v3121 = vpop.f32.mrb[0].mxu0
    %v3122 = vadd.f32 0.0, %v3121
    %v3123 = vpop.f32.mrb[0].mxu0
    %v3124 = vpop.f32.mrb[0].mxu0
    %v3125 = vadd.f32 0.0, %v3124
    %v3126 = vpop.f32.mrb[0].mxu0
    %3127 = vmatprep.mubr.bf16.mxu0 %v3026
    %3128 = vmatmul.mubr.bf16.gmra.mrb[0].mxu0 %v3025
    %v3129 = vpop.f32.mrb[0].mxu0
    %v3130 = vadd.f32 0.0, %v3129
    %v3131 = vpop.f32.mrb[0].mxu0
    %v3132 = vpop.f32.mrb[0].mxu0
    %v3133 = vadd.f32 0.0, %v3132
    %v3134 = vpop.f32.mrb[0].mxu0
    %3135 = vmatprep.mubr.bf16.mxu0 %v3028
    %3136 = vmatmul.mubr.bf16.gmra.mrb[0].mxu0 %v3027
    %v3137 = vpop.f32.mrb[0].mxu0
    %v3138 = vadd.f32 0.0, %v3137
    %v3139 = vpop.f32.mrb[0].mxu0
    %v3140 = vpop.f32.mrb[0].mxu0
    %v3141 = vadd.f32 0.0, %v3140
    %v3142 = vpop.f32.mrb[0].mxu0
    %3143 = vmatprep.mubr.bf16.mxu0 %v3030
    %3144 = vmatmul.mubr.bf16.gmra.mrb[0].mxu0 %v3029
    %v3145 = vpop.f32.mrb[0].mxu0
    %v3146 = vadd.f32 0.0, %v3145
    %v3147 = vpop.f32.mrb[0].mxu0
    %v3148 = vpop.f32.mrb[0].mxu0
    %v3149 = vadd.f32 0.0, %v3148
    %v3150 = vpop.f32.mrb[0].mxu0
    %3151 = vmatprep.mubr.bf16.mxu0 %v3032
    %3152 = vmatmul.mubr.bf16.gmra.mrb[0].mxu0 %v3031
    %v3153 = vpop.f32.mrb[0].mxu0
    %v3154 = vadd.f32 0.0, %v3153
    %v3155 = vpop.f32.mrb[0].mxu0
    %v3156 = vpop.f32.mrb[0].mxu0
    %v3157 = vadd.f32 0.0, %v3156
    %v3158 = vpop.f32.mrb[0].mxu0
    %3159 = vmatprep.mubr.bf16.mxu0 %v3034
    %3160 = vmatmul.mubr.bf16.gmra.mrb[0].mxu0 %v3033
    %v3161 = vpop.f32.mrb[0].mxu0
    %v3162 = vadd.f32 0.0, %v3161
    %v3163 = vpop.f32.mrb[0].mxu0
    %v3164 = vpop.f32.mrb[0].mxu0
    %v3165 = vadd.f32 0.0, %v3164
    %v3166 = vpop.f32.mrb[0].mxu0
    %3167 = vmatprep.mubr.bf16.mxu0 %v3036
    %3168 = vmatmul.mubr.bf16.gmra.mrb[0].mxu0 %v3035
    %v3169 = vpop.f32.mrb[0].mxu0
    %v3170 = vadd.f32 0.0, %v3169
    %v3171 = vpop.f32.mrb[0].mxu0
    %v3172 = vpop.f32.mrb[0].mxu0
    %v3173 = vadd.f32 0.0, %v3172
    %v3174 = vpop.f32.mrb[0].mxu0
    %3175 = vmatprep.mubr.bf16.mxu0 %v3038
    %3176 = vmatmul.mubr.bf16.gmra.mrb[0].mxu0 %v3037
    %v3177 = vpop.f32.mrb[0].mxu0
    %v3178 = vadd.f32 0.0, %v3177
    %v3179 = vpop.f32.mrb[0].mxu0
    %v3180 = vpop.f32.mrb[0].mxu0
    %v3181 = vadd.f32 0.0, %v3180
    %v3182 = vpop.f32.mrb[0].mxu0
    %3183 = vmatprep.mubr.bf16.mxu0 %v3040
    %3184 = vmatmul.mubr.bf16.gmra.mrb[0].mxu0 %v3039
    %v3185 = vpop.f32.mrb[0].mxu0
    %v3186 = vadd.f32 0.0, %v3185
    %v3187 = vpop.f32.mrb[0].mxu0
    %v3188 = vpop.f32.mrb[0].mxu0
    %v3189 = vadd.f32 0.0, %v3188
    %v3190 = vpop.f32.mrb[0].mxu0
    %3191 = vmatprep.mubr.bf16.mxu0 %v3042
    %3192 = vmatmul.mubr.bf16.gmra.mrb[0].mxu0 %v3041
    %v3193 = vpop.f32.mrb[0].mxu0
    %v3194 = vadd.f32 0.0, %v3193
    %v3195 = vpop.f32.mrb[0].mxu0
    %v3196 = vpop.f32.mrb[0].mxu0
    %v3197 = vadd.f32 0.0, %v3196
    %v3198 = vpop.f32.mrb[0].mxu0
    %3199 = vmatprep.mubr.bf16.mxu0 %v3044
    %3200 = vmatmul.mubr.bf16.gmra.mrb[0].mxu0 %v3043
    %v3201 = vpop.f32.mrb[0].mxu0
    %v3202 = vadd.f32 0.0, %v3201
    %v3203 = vpop.f32.mrb[0].mxu0
    %v3204 = vpop.f32.mrb[0].mxu0
    %v3205 = vadd.f32 0.0, %v3204
    %v3206 = vpop.f32.mrb[0].mxu0
    %3207 = vmatprep.mubr.bf16.mxu0 %v3046
    %3208 = vmatmul.mubr.bf16.gmra.mrb[0].mxu0 %v3045
    %v3209 = vpop.f32.mrb[0].mxu0
    %v3210 = vadd.f32 0.0, %v3209
    %v3211 = vpop.f32.mrb[0].mxu0
    %v3212 = vpop.f32.mrb[0].mxu0
    %v3213 = vadd.f32 0.0, %v3212
    %v3214 = vpop.f32.mrb[0].mxu0
    %3215 = vmatprep.mubr.bf16.mxu0 %v3048
    %3216 = vmatmul.mubr.bf16.gmra.mrb[0].mxu0 %v3047
    %v3217 = vpop.f32.mrb[0].mxu0
    %v3218 = vadd.f32 0.0, %v3217
    %v3219 = vpop.f32.mrb[0].mxu0
    %v3220 = vpop.f32.mrb[0].mxu0
    %v3221 = vadd.f32 0.0, %v3220
    %v3222 = vpop.f32.mrb[0].mxu0
    %3223 = vmatprep.mubr.bf16.mxu0 %v3050
    %3224 = vmatmul.mubr.bf16.gmra.mrb[0].mxu0 %v3049
    %v3225 = vpop.f32.mrb[0].mxu0
    %v3226 = vadd.f32 0.0, %v3225
    %v3227 = vpop.f32.mrb[0].mxu0
    %v3228 = vpop.f32.mrb[0].mxu0
    %v3229 = vadd.f32 0.0, %v3228
    %v3230 = vpop.f32.mrb[0].mxu0
    %3231 = vmatprep.mubr.bf16.mxu0 %v3052
    %3232 = vmatmul.mubr.bf16.gmra.mrb[0].mxu0 %v3051
    %v3233 = vpop.f32.mrb[0].mxu0
    %v3234 = vadd.f32 0.0, %v3233
    %v3235 = vpop.f32.mrb[0].mxu0
    %v3236 = vpop.f32.mrb[0].mxu0
    %v3237 = vadd.f32 0.0, %v3236
    %v3238 = vpop.f32.mrb[0].mxu0
    %3239 = vmatprep.mubr.bf16.mxu0 %v3054
    %3240 = vmatmul.mubr.bf16.gmra.mrb[0].mxu0 %v3053
    %v3241 = vpop.f32.mrb[0].mxu0
    %v3242 = vadd.f32 0.0, %v3241
    %v3243 = vpop.f32.mrb[0].mxu0
    %v3244 = vpop.f32.mrb[0].mxu0
    %v3245 = vadd.f32 0.0, %v3244
    %v3246 = vpop.f32.mrb[0].mxu0
    %3247 = vdwg.mxu0
    %s3248 = scalar_lea.vmem [#allocation6], 1024
    %v3249 = vld [vmem:[%s3248] sm:$0xff]
    %v3250 = vld [vmem:[%s3248 + $0x8] sm:$0xff]
    %v3251 = vld [vmem:[%s3248 + $0x10] sm:$0xff]
    %v3252 = vld [vmem:[%s3248 + $0x18] sm:$0xff]
    %v3253 = vld [vmem:[%s3248 + $0x20] sm:$0xff]
    %v3254 = vld [vmem:[%s3248 + $0x28] sm:$0xff]
    %v3255 = vld [vmem:[%s3248 + $0x30] sm:$0xff]
    %v3256 = vld [vmem:[%s3248 + $0x38] sm:$0xff]
    %v3257 = vld [vmem:[%s3248 + $0x40] sm:$0xff]
    %v3258 = vld [vmem:[%s3248 + $0x48] sm:$0xff]
    %v3259 = vld [vmem:[%s3248 + $0x50] sm:$0xff]
    %v3260 = vld [vmem:[%s3248 + $0x58] sm:$0xff]
    %v3261 = vld [vmem:[%s3248 + $0x60] sm:$0xff]
    %v3262 = vld [vmem:[%s3248 + $0x68] sm:$0xff]
    %v3263 = vld [vmem:[%s3248 + $0x70] sm:$0xff]
    %v3264 = vld [vmem:[%s3248 + $0x78] sm:$0xff]
    %v3265 = vld [vmem:[%s3248 + $0x80] sm:$0xff]
    %v3266 = vld [vmem:[%s3248 + $0x88] sm:$0xff]
    %v3267 = vld [vmem:[%s3248 + $0x90] sm:$0xff]
    %v3268 = vld [vmem:[%s3248 + $0x98] sm:$0xff]
    %v3269 = vld [vmem:[%s3248 + $0xa0] sm:$0xff]
    %v3270 = vld [vmem:[%s3248 + $0xa8] sm:$0xff]
    %v3271 = vld [vmem:[%s3248 + $0xb0] sm:$0xff]
    %v3272 = vld [vmem:[%s3248 + $0xb8] sm:$0xff]
    %v3273 = vld [vmem:[%s3248 + $0xc0] sm:$0xff]
    %v3274 = vld [vmem:[%s3248 + $0xc8] sm:$0xff]
    %v3275 = vld [vmem:[%s3248 + $0xd0] sm:$0xff]
    %v3276 = vld [vmem:[%s3248 + $0xd8] sm:$0xff]
    %v3277 = vld [vmem:[%s3248 + $0xe0] sm:$0xff]
    %v3278 = vld [vmem:[%s3248 + $0xe8] sm:$0xff]
    %v3279 = vld [vmem:[%s3248 + $0xf0] sm:$0xff]
    %v3280 = vld [vmem:[%s3248 + $0xf8] sm:$0xff]
    %v3313 = vunpack.c.l.b16 %v3249
    %v3314 = vunpack.c.h.b16 %v3249
    %v3315 = vunpack.c.l.b16 %v3250
    %v3316 = vunpack.c.h.b16 %v3250
    %v3317 = vunpack.c.l.b16 %v3251
    %v3318 = vunpack.c.h.b16 %v3251
    %v3319 = vunpack.c.l.b16 %v3252
    %v3320 = vunpack.c.h.b16 %v3252
    %v3321 = vunpack.c.l.b16 %v3253
    %v3322 = vunpack.c.h.b16 %v3253
    %v3323 = vunpack.c.l.b16 %v3254
    %v3324 = vunpack.c.h.b16 %v3254
    %v3325 = vunpack.c.l.b16 %v3255
    %v3326 = vunpack.c.h.b16 %v3255
    %v3327 = vunpack.c.l.b16 %v3256
    %v3328 = vunpack.c.h.b16 %v3256
    %v3329 = vunpack.c.l.b16 %v3257
    %v3330 = vunpack.c.h.b16 %v3257
    %v3331 = vunpack.c.l.b16 %v3258
    %v3332 = vunpack.c.h.b16 %v3258
    %v3333 = vunpack.c.l.b16 %v3259
    %v3334 = vunpack.c.h.b16 %v3259
    %v3335 = vunpack.c.l.b16 %v3260
    %v3336 = vunpack.c.h.b16 %v3260
    %v3337 = vunpack.c.l.b16 %v3261
    %v3338 = vunpack.c.h.b16 %v3261
    %v3339 = vunpack.c.l.b16 %v3262
    %v3340 = vunpack.c.h.b16 %v3262
    %v3341 = vunpack.c.l.b16 %v3263
    %v3342 = vunpack.c.h.b16 %v3263
    %v3343 = vunpack.c.l.b16 %v3264
    %v3344 = vunpack.c.h.b16 %v3264
    %v3345 = vunpack.c.l.b16 %v3265
    %v3346 = vunpack.c.h.b16 %v3265
    %v3347 = vunpack.c.l.b16 %v3266
    %v3348 = vunpack.c.h.b16 %v3266
    %v3349 = vunpack.c.l.b16 %v3267
    %v3350 = vunpack.c.h.b16 %v3267
    %v3351 = vunpack.c.l.b16 %v3268
    %v3352 = vunpack.c.h.b16 %v3268
    %v3353 = vunpack.c.l.b16 %v3269
    %v3354 = vunpack.c.h.b16 %v3269
    %v3355 = vunpack.c.l.b16 %v3270
    %v3356 = vunpack.c.h.b16 %v3270
    %v3357 = vunpack.c.l.b16 %v3271
    %v3358 = vunpack.c.h.b16 %v3271
    %v3359 = vunpack.c.l.b16 %v3272
    %v3360 = vunpack.c.h.b16 %v3272
    %v3361 = vunpack.c.l.b16 %v3273
    %v3362 = vunpack.c.h.b16 %v3273
    %v3363 = vunpack.c.l.b16 %v3274
    %v3364 = vunpack.c.h.b16 %v3274
    %v3365 = vunpack.c.l.b16 %v3275
    %v3366 = vunpack.c.h.b16 %v3275
    %v3367 = vunpack.c.l.b16 %v3276
    %v3368 = vunpack.c.h.b16 %v3276
    %v3369 = vunpack.c.l.b16 %v3277
    %v3370 = vunpack.c.h.b16 %v3277
    %v3371 = vunpack.c.l.b16 %v3278
    %v3372 = vunpack.c.h.b16 %v3278
    %v3373 = vunpack.c.l.b16 %v3279
    %v3374 = vunpack.c.h.b16 %v3279
    %v3375 = vunpack.c.l.b16 %v3280
    %v3376 = vunpack.c.h.b16 %v3280
    %v3377 = vpack.c.b16 %v3315, %v3313
    %v3378 = vpack.c.b16 %v3316, %v3314
    %v3379 = vpack.c.b16 %v3319, %v3317
    %v3380 = vpack.c.b16 %v3320, %v3318
    %v3381 = vpack.c.b16 %v3323, %v3321
    %v3382 = vpack.c.b16 %v3324, %v3322
    %v3383 = vpack.c.b16 %v3327, %v3325
    %v3384 = vpack.c.b16 %v3328, %v3326
    %v3385 = vpack.c.b16 %v3331, %v3329
    %v3386 = vpack.c.b16 %v3332, %v3330
    %v3387 = vpack.c.b16 %v3335, %v3333
    %v3388 = vpack.c.b16 %v3336, %v3334
    %v3389 = vpack.c.b16 %v3339, %v3337
    %v3390 = vpack.c.b16 %v3340, %v3338
    %v3391 = vpack.c.b16 %v3343, %v3341
    %v3392 = vpack.c.b16 %v3344, %v3342
    %v3393 = vpack.c.b16 %v3347, %v3345
    %v3394 = vpack.c.b16 %v3348, %v3346
    %v3395 = vpack.c.b16 %v3351, %v3349
    %v3396 = vpack.c.b16 %v3352, %v3350
    %v3397 = vpack.c.b16 %v3355, %v3353
    %v3398 = vpack.c.b16 %v3356, %v3354
    %v3399 = vpack.c.b16 %v3359, %v3357
    %v3400 = vpack.c.b16 %v3360, %v3358
    %v3401 = vpack.c.b16 %v3363, %v3361
    %v3402 = vpack.c.b16 %v3364, %v3362
    %v3403 = vpack.c.b16 %v3367, %v3365
    %v3404 = vpack.c.b16 %v3368, %v3366
    %v3405 = vpack.c.b16 %v3371, %v3369
    %v3406 = vpack.c.b16 %v3372, %v3370
    %v3407 = vpack.c.b16 %v3375, %v3373
    %v3408 = vpack.c.b16 %v3376, %v3374
    %3457 = vrot.lane.b32.xlu0 %v2862, 64
    %v3458 = vpop.permute.xlu0 %3457
    %3459 = vrot.lane.b32.xlu0 %v2864, 64
    %v3460 = vpop.permute.xlu0 %3459
    %3461 = vrot.lane.b32.xlu0 %v2866, 64
    %v3462 = vpop.permute.xlu0 %3461
    %3463 = vrot.lane.b32.xlu0 %v2868, 64
    %v3464 = vpop.permute.xlu0 %3463
    %3465 = vrot.lane.b32.xlu0 %v2870, 64
    %v3466 = vpop.permute.xlu0 %3465
    %3467 = vrot.lane.b32.xlu0 %v2872, 64
    %v3468 = vpop.permute.xlu0 %3467
    %3469 = vrot.lane.b32.xlu0 %v2874, 64
    %v3470 = vpop.permute.xlu0 %3469
    %3471 = vrot.lane.b32.xlu0 %v2876, 64
    %v3472 = vpop.permute.xlu0 %3471
    %3473 = vrot.lane.b32.xlu0 %v2878, 64
    %v3474 = vpop.permute.xlu0 %3473
    %3475 = vrot.lane.b32.xlu0 %v2880, 64
    %v3476 = vpop.permute.xlu0 %3475
    %3477 = vrot.lane.b32.xlu0 %v2882, 64
    %v3478 = vpop.permute.xlu0 %3477
    %3479 = vrot.lane.b32.xlu0 %v2884, 64
    %v3480 = vpop.permute.xlu0 %3479
    %3481 = vrot.lane.b32.xlu0 %v2886, 64
    %v3482 = vpop.permute.xlu0 %3481
    %3483 = vrot.lane.b32.xlu0 %v2888, 64
    %v3484 = vpop.permute.xlu0 %3483
    %3485 = vrot.lane.b32.xlu0 %v2890, 64
    %v3486 = vpop.permute.xlu0 %3485
    %3487 = vrot.lane.b32.xlu0 %v2892, 64
    %v3488 = vpop.permute.xlu0 %3487
    %3505 = vmatprep.subr.bf16.mxu0 0
    %3506 = vmatpush1.bf16.msra.mxu0 %v3458
    %3507 = vmatprep.subr.bf16.mxu0 0
    %3508 = vmatpush1.bf16.msra.mxu0 %v3460
    %3509 = vmatprep.subr.bf16.mxu0 0
    %3510 = vmatpush1.bf16.msra.mxu0 %v3462
    %3511 = vmatprep.subr.bf16.mxu0 0
    %3512 = vmatpush1.bf16.msra.mxu0 %v3464
    %3513 = vmatprep.subr.bf16.mxu0 0
    %3514 = vmatpush1.bf16.msra.mxu0 %v3466
    %3515 = vmatprep.subr.bf16.mxu0 0
    %3516 = vmatpush1.bf16.msra.mxu0 %v3468
    %3517 = vmatprep.subr.bf16.mxu0 0
    %3518 = vmatpush1.bf16.msra.mxu0 %v3470
    %3519 = vmatprep.subr.bf16.mxu0 0
    %3520 = vmatpush1.bf16.msra.mxu0 %v3472
    %3521 = vmatprep.subr.bf16.mxu0 0
    %3522 = vmatpush1.bf16.msra.mxu0 %v3474
    %3523 = vmatprep.subr.bf16.mxu0 0
    %3524 = vmatpush1.bf16.msra.mxu0 %v3476
    %3525 = vmatprep.subr.bf16.mxu0 0
    %3526 = vmatpush1.bf16.msra.mxu0 %v3478
    %3527 = vmatprep.subr.bf16.mxu0 0
    %3528 = vmatpush1.bf16.msra.mxu0 %v3480
    %3529 = vmatprep.subr.bf16.mxu0 0
    %3530 = vmatpush1.bf16.msra.mxu0 %v3482
    %3531 = vmatprep.subr.bf16.mxu0 0
    %3532 = vmatpush1.bf16.msra.mxu0 %v3484
    %3533 = vmatprep.subr.bf16.mxu0 0
    %3534 = vmatpush1.bf16.msra.mxu0 %v3486
    %3535 = vmatprep.subr.bf16.mxu0 0
    %3536 = vmatpush1.bf16.msra.mxu0 %v3488
    %3537 = vmatprep.mubr.bf16.mxu0 %v3378
    %3538 = vmatmul.mubr.bf16.gmra.mrb[0].mxu0 %v3377
    %v3539 = vpop.f32.mrb[0].mxu0
    %v3540 = vadd.f32 0.0, %v3539
    %v3541 = vpop.f32.mrb[0].mxu0
    %v3542 = vpop.f32.mrb[0].mxu0
    %v3543 = vadd.f32 0.0, %v3542
    %v3544 = vpop.f32.mrb[0].mxu0
    %3545 = vmatprep.mubr.bf16.mxu0 %v3380
    %3546 = vmatmul.mubr.bf16.gmra.mrb[0].mxu0 %v3379
    %v3547 = vpop.f32.mrb[0].mxu0
    %v3548 = vadd.f32 0.0, %v3547
    %v3549 = vpop.f32.mrb[0].mxu0
    %v3550 = vpop.f32.mrb[0].mxu0
    %v3551 = vadd.f32 0.0, %v3550
    %v3552 = vpop.f32.mrb[0].mxu0
    %3553 = vmatprep.mubr.bf16.mxu0 %v3382
    %3554 = vmatmul.mubr.bf16.gmra.mrb[0].mxu0 %v3381
    %v3555 = vpop.f32.mrb[0].mxu0
    %v3556 = vadd.f32 0.0, %v3555
    %v3557 = vpop.f32.mrb[0].mxu0
    %v3558 = vpop.f32.mrb[0].mxu0
    %v3559 = vadd.f32 0.0, %v3558
    %v3560 = vpop.f32.mrb[0].mxu0
    %3561 = vmatprep.mubr.bf16.mxu0 %v3384
    %3562 = vmatmul.mubr.bf16.gmra.mrb[0].mxu0 %v3383
    %v3563 = vpop.f32.mrb[0].mxu0
    %v3564 = vadd.f32 0.0, %v3563
    %v3565 = vpop.f32.mrb[0].mxu0
    %v3566 = vpop.f32.mrb[0].mxu0
    %v3567 = vadd.f32 0.0, %v3566
    %v3568 = vpop.f32.mrb[0].mxu0
    %3569 = vmatprep.mubr.bf16.mxu0 %v3386
    %3570 = vmatmul.mubr.bf16.gmra.mrb[0].mxu0 %v3385
    %v3571 = vpop.f32.mrb[0].mxu0
    %v3572 = vadd.f32 0.0, %v3571
    %v3573 = vpop.f32.mrb[0].mxu0
    %v3574 = vpop.f32.mrb[0].mxu0
    %v3575 = vadd.f32 0.0, %v3574
    %v3576 = vpop.f32.mrb[0].mxu0
    %3577 = vmatprep.mubr.bf16.mxu0 %v3388
    %3578 = vmatmul.mubr.bf16.gmra.mrb[0].mxu0 %v3387
    %v3579 = vpop.f32.mrb[0].mxu0
    %v3580 = vadd.f32 0.0, %v3579
    %v3581 = vpop.f32.mrb[0].mxu0
    %v3582 = vpop.f32.mrb[0].mxu0
    %v3583 = vadd.f32 0.0, %v3582
    %v3584 = vpop.f32.mrb[0].mxu0
    %3585 = vmatprep.mubr.bf16.mxu0 %v3390
    %3586 = vmatmul.mubr.bf16.gmra.mrb[0].mxu0 %v3389
    %v3587 = vpop.f32.mrb[0].mxu0
    %v3588 = vadd.f32 0.0, %v3587
    %v3589 = vpop.f32.mrb[0].mxu0
    %v3590 = vpop.f32.mrb[0].mxu0
    %v3591 = vadd.f32 0.0, %v3590
    %v3592 = vpop.f32.mrb[0].mxu0
    %3593 = vmatprep.mubr.bf16.mxu0 %v3392
    %3594 = vmatmul.mubr.bf16.gmra.mrb[0].mxu0 %v3391
    %v3595 = vpop.f32.mrb[0].mxu0
    %v3596 = vadd.f32 0.0, %v3595
    %v3597 = vpop.f32.mrb[0].mxu0
    %v3598 = vpop.f32.mrb[0].mxu0
    %v3599 = vadd.f32 0.0, %v3598
    %v3600 = vpop.f32.mrb[0].mxu0
    %3601 = vmatprep.mubr.bf16.mxu0 %v3394
    %3602 = vmatmul.mubr.bf16.gmra.mrb[0].mxu0 %v3393
    %v3603 = vpop.f32.mrb[0].mxu0
    %v3604 = vadd.f32 0.0, %v3603
    %v3605 = vpop.f32.mrb[0].mxu0
    %v3606 = vpop.f32.mrb[0].mxu0
    %v3607 = vadd.f32 0.0, %v3606
    %v3608 = vpop.f32.mrb[0].mxu0
    %3609 = vmatprep.mubr.bf16.mxu0 %v3396
    %3610 = vmatmul.mubr.bf16.gmra.mrb[0].mxu0 %v3395
    %v3611 = vpop.f32.mrb[0].mxu0
    %v3612 = vadd.f32 0.0, %v3611
    %v3613 = vpop.f32.mrb[0].mxu0
    %v3614 = vpop.f32.mrb[0].mxu0
    %v3615 = vadd.f32 0.0, %v3614
    %v3616 = vpop.f32.mrb[0].mxu0
    %3617 = vmatprep.mubr.bf16.mxu0 %v3398
    %3618 = vmatmul.mubr.bf16.gmra.mrb[0].mxu0 %v3397
    %v3619 = vpop.f32.mrb[0].mxu0
    %v3620 = vadd.f32 0.0, %v3619
    %v3621 = vpop.f32.mrb[0].mxu0
    %v3622 = vpop.f32.mrb[0].mxu0
    %v3623 = vadd.f32 0.0, %v3622
    %v3624 = vpop.f32.mrb[0].mxu0
    %3625 = vmatprep.mubr.bf16.mxu0 %v3400
    %3626 = vmatmul.mubr.bf16.gmra.mrb[0].mxu0 %v3399
    %v3627 = vpop.f32.mrb[0].mxu0
    %v3628 = vadd.f32 0.0, %v3627
    %v3629 = vpop.f32.mrb[0].mxu0
    %v3630 = vpop.f32.mrb[0].mxu0
    %v3631 = vadd.f32 0.0, %v3630
    %v3632 = vpop.f32.mrb[0].mxu0
    %3633 = vmatprep.mubr.bf16.mxu0 %v3402
    %3634 = vmatmul.mubr.bf16.gmra.mrb[0].mxu0 %v3401
    %v3635 = vpop.f32.mrb[0].mxu0
    %v3636 = vadd.f32 0.0, %v3635
    %v3637 = vpop.f32.mrb[0].mxu0
    %v3638 = vpop.f32.mrb[0].mxu0
    %v3639 = vadd.f32 0.0, %v3638
    %v3640 = vpop.f32.mrb[0].mxu0
    %3641 = vmatprep.mubr.bf16.mxu0 %v3404
    %3642 = vmatmul.mubr.bf16.gmra.mrb[0].mxu0 %v3403
    %v3643 = vpop.f32.mrb[0].mxu0
    %v3644 = vadd.f32 0.0, %v3643
    %v3645 = vpop.f32.mrb[0].mxu0
    %v3646 = vpop.f32.mrb[0].mxu0
    %v3647 = vadd.f32 0.0, %v3646
    %v3648 = vpop.f32.mrb[0].mxu0
    %3649 = vmatprep.mubr.bf16.mxu0 %v3406
    %3650 = vmatmul.mubr.bf16.gmra.mrb[0].mxu0 %v3405
    %v3651 = vpop.f32.mrb[0].mxu0
    %v3652 = vadd.f32 0.0, %v3651
    %v3653 = vpop.f32.mrb[0].mxu0
    %v3654 = vpop.f32.mrb[0].mxu0
    %v3655 = vadd.f32 0.0, %v3654
    %v3656 = vpop.f32.mrb[0].mxu0
    %3657 = vmatprep.mubr.bf16.mxu0 %v3408
    %3658 = vmatmul.mubr.bf16.gmra.mrb[0].mxu0 %v3407
    %v3659 = vpop.f32.mrb[0].mxu0
    %v3660 = vadd.f32 0.0, %v3659
    %v3661 = vpop.f32.mrb[0].mxu0
    %v3662 = vpop.f32.mrb[0].mxu0
    %v3663 = vadd.f32 0.0, %v3662
    %v3664 = vpop.f32.mrb[0].mxu0
    %3665 = vdwg.mxu0
    %s3666 = scalar_lea.vmem [#allocation6], 1280
    %v3667 = vld [vmem:[%s3666] sm:$0xff]
    %v3668 = vld [vmem:[%s3666 + $0x8] sm:$0xff]
    %v3669 = vld [vmem:[%s3666 + $0x10] sm:$0xff]
    %v3670 = vld [vmem:[%s3666 + $0x18] sm:$0xff]
    %v3671 = vld [vmem:[%s3666 + $0x20] sm:$0xff]
    %v3672 = vld [vmem:[%s3666 + $0x28] sm:$0xff]
    %v3673 = vld [vmem:[%s3666 + $0x30] sm:$0xff]
    %v3674 = vld [vmem:[%s3666 + $0x38] sm:$0xff]
    %v3675 = vld [vmem:[%s3666 + $0x40] sm:$0xff]
    %v3676 = vld [vmem:[%s3666 + $0x48] sm:$0xff]
    %v3677 = vld [vmem:[%s3666 + $0x50] sm:$0xff]
    %v3678 = vld [vmem:[%s3666 + $0x58] sm:$0xff]
    %v3679 = vld [vmem:[%s3666 + $0x60] sm:$0xff]
    %v3680 = vld [vmem:[%s3666 + $0x68] sm:$0xff]
    %v3681 = vld [vmem:[%s3666 + $0x70] sm:$0xff]
    %v3682 = vld [vmem:[%s3666 + $0x78] sm:$0xff]
    %v3683 = vld [vmem:[%s3666 + $0x80] sm:$0xff]
    %v3684 = vld [vmem:[%s3666 + $0x88] sm:$0xff]
    %v3685 = vld [vmem:[%s3666 + $0x90] sm:$0xff]
    %v3686 = vld [vmem:[%s3666 + $0x98] sm:$0xff]
    %v3687 = vld [vmem:[%s3666 + $0xa0] sm:$0xff]
    %v3688 = vld [vmem:[%s3666 + $0xa8] sm:$0xff]
    %v3689 = vld [vmem:[%s3666 + $0xb0] sm:$0xff]
    %v3690 = vld [vmem:[%s3666 + $0xb8] sm:$0xff]
    %v3691 = vld [vmem:[%s3666 + $0xc0] sm:$0xff]
    %v3692 = vld [vmem:[%s3666 + $0xc8] sm:$0xff]
    %v3693 = vld [vmem:[%s3666 + $0xd0] sm:$0xff]
    %v3694 = vld [vmem:[%s3666 + $0xd8] sm:$0xff]
    %v3695 = vld [vmem:[%s3666 + $0xe0] sm:$0xff]
    %v3696 = vld [vmem:[%s3666 + $0xe8] sm:$0xff]
    %v3697 = vld [vmem:[%s3666 + $0xf0] sm:$0xff]
    %v3698 = vld [vmem:[%s3666 + $0xf8] sm:$0xff]
    %v3731 = vunpack.c.l.b16 %v3667
    %v3732 = vunpack.c.h.b16 %v3667
    %v3733 = vunpack.c.l.b16 %v3668
    %v3734 = vunpack.c.h.b16 %v3668
    %v3735 = vunpack.c.l.b16 %v3669
    %v3736 = vunpack.c.h.b16 %v3669
    %v3737 = vunpack.c.l.b16 %v3670
    %v3738 = vunpack.c.h.b16 %v3670
    %v3739 = vunpack.c.l.b16 %v3671
    %v3740 = vunpack.c.h.b16 %v3671
    %v3741 = vunpack.c.l.b16 %v3672
    %v3742 = vunpack.c.h.b16 %v3672
    %v3743 = vunpack.c.l.b16 %v3673
    %v3744 = vunpack.c.h.b16 %v3673
    %v3745 = vunpack.c.l.b16 %v3674
    %v3746 = vunpack.c.h.b16 %v3674
    %v3747 = vunpack.c.l.b16 %v3675
    %v3748 = vunpack.c.h.b16 %v3675
    %v3749 = vunpack.c.l.b16 %v3676
    %v3750 = vunpack.c.h.b16 %v3676
    %v3751 = vunpack.c.l.b16 %v3677
    %v3752 = vunpack.c.h.b16 %v3677
    %v3753 = vunpack.c.l.b16 %v3678
    %v3754 = vunpack.c.h.b16 %v3678
    %v3755 = vunpack.c.l.b16 %v3679
    %v3756 = vunpack.c.h.b16 %v3679
    %v3757 = vunpack.c.l.b16 %v3680
    %v3758 = vunpack.c.h.b16 %v3680
    %v3759 = vunpack.c.l.b16 %v3681
    %v3760 = vunpack.c.h.b16 %v3681
    %v3761 = vunpack.c.l.b16 %v3682
    %v3762 = vunpack.c.h.b16 %v3682
    %v3763 = vunpack.c.l.b16 %v3683
    %v3764 = vunpack.c.h.b16 %v3683
    %v3765 = vunpack.c.l.b16 %v3684
    %v3766 = vunpack.c.h.b16 %v3684
    %v3767 = vunpack.c.l.b16 %v3685
    %v3768 = vunpack.c.h.b16 %v3685
    %v3769 = vunpack.c.l.b16 %v3686
    %v3770 = vunpack.c.h.b16 %v3686
    %v3771 = vunpack.c.l.b16 %v3687
    %v3772 = vunpack.c.h.b16 %v3687
    %v3773 = vunpack.c.l.b16 %v3688
    %v3774 = vunpack.c.h.b16 %v3688
    %v3775 = vunpack.c.l.b16 %v3689
    %v3776 = vunpack.c.h.b16 %v3689
    %v3777 = vunpack.c.l.b16 %v3690
    %v3778 = vunpack.c.h.b16 %v3690
    %v3779 = vunpack.c.l.b16 %v3691
    %v3780 = vunpack.c.h.b16 %v3691
    %v3781 = vunpack.c.l.b16 %v3692
    %v3782 = vunpack.c.h.b16 %v3692
    %v3783 = vunpack.c.l.b16 %v3693
    %v3784 = vunpack.c.h.b16 %v3693
    %v3785 = vunpack.c.l.b16 %v3694
    %v3786 = vunpack.c.h.b16 %v3694
    %v3787 = vunpack.c.l.b16 %v3695
    %v3788 = vunpack.c.h.b16 %v3695
    %v3789 = vunpack.c.l.b16 %v3696
    %v3790 = vunpack.c.h.b16 %v3696
    %v3791 = vunpack.c.l.b16 %v3697
    %v3792 = vunpack.c.h.b16 %v3697
    %v3793 = vunpack.c.l.b16 %v3698
    %v3794 = vunpack.c.h.b16 %v3698
    %v3795 = vpack.c.b16 %v3733, %v3731
    %v3796 = vpack.c.b16 %v3734, %v3732
    %v3797 = vpack.c.b16 %v3737, %v3735
    %v3798 = vpack.c.b16 %v3738, %v3736
    %v3799 = vpack.c.b16 %v3741, %v3739
    %v3800 = vpack.c.b16 %v3742, %v3740
    %v3801 = vpack.c.b16 %v3745, %v3743
    %v3802 = vpack.c.b16 %v3746, %v3744
    %v3803 = vpack.c.b16 %v3749, %v3747
    %v3804 = vpack.c.b16 %v3750, %v3748
    %v3805 = vpack.c.b16 %v3753, %v3751
    %v3806 = vpack.c.b16 %v3754, %v3752
    %v3807 = vpack.c.b16 %v3757, %v3755
    %v3808 = vpack.c.b16 %v3758, %v3756
    %v3809 = vpack.c.b16 %v3761, %v3759
    %v3810 = vpack.c.b16 %v3762, %v3760
    %v3811 = vpack.c.b16 %v3765, %v3763
    %v3812 = vpack.c.b16 %v3766, %v3764
    %v3813 = vpack.c.b16 %v3769, %v3767
    %v3814 = vpack.c.b16 %v3770, %v3768
    %v3815 = vpack.c.b16 %v3773, %v3771
    %v3816 = vpack.c.b16 %v3774, %v3772
    %v3817 = vpack.c.b16 %v3777, %v3775
    %v3818 = vpack.c.b16 %v3778, %v3776
    %v3819 = vpack.c.b16 %v3781, %v3779
    %v3820 = vpack.c.b16 %v3782, %v3780
    %v3821 = vpack.c.b16 %v3785, %v3783
    %v3822 = vpack.c.b16 %v3786, %v3784
    %v3823 = vpack.c.b16 %v3789, %v3787
    %v3824 = vpack.c.b16 %v3790, %v3788
    %v3825 = vpack.c.b16 %v3793, %v3791
    %v3826 = vpack.c.b16 %v3794, %v3792
    %3859 = vmatprep.subr.bf16.mxu0 0
    %3860 = vmatpush1.bf16.msra.mxu0 %v2863
    %3861 = vmatprep.subr.bf16.mxu0 0
    %3862 = vmatpush1.bf16.msra.mxu0 %v2865
    %3863 = vmatprep.subr.bf16.mxu0 0
    %3864 = vmatpush1.bf16.msra.mxu0 %v2867
    %3865 = vmatprep.subr.bf16.mxu0 0
    %3866 = vmatpush1.bf16.msra.mxu0 %v2869
    %3867 = vmatprep.subr.bf16.mxu0 0
    %3868 = vmatpush1.bf16.msra.mxu0 %v2871
    %3869 = vmatprep.subr.bf16.mxu0 0
    %3870 = vmatpush1.bf16.msra.mxu0 %v2873
    %3871 = vmatprep.subr.bf16.mxu0 0
    %3872 = vmatpush1.bf16.msra.mxu0 %v2875
    %3873 = vmatprep.subr.bf16.mxu0 0
    %3874 = vmatpush1.bf16.msra.mxu0 %v2877
    %3875 = vmatprep.subr.bf16.mxu0 0
    %3876 = vmatpush1.bf16.msra.mxu0 %v2879
    %3877 = vmatprep.subr.bf16.mxu0 0
    %3878 = vmatpush1.bf16.msra.mxu0 %v2881
    %3879 = vmatprep.subr.bf16.mxu0 0
    %3880 = vmatpush1.bf16.msra.mxu0 %v2883
    %3881 = vmatprep.subr.bf16.mxu0 0
    %3882 = vmatpush1.bf16.msra.mxu0 %v2885
    %3883 = vmatprep.subr.bf16.mxu0 0
    %3884 = vmatpush1.bf16.msra.mxu0 %v2887
    %3885 = vmatprep.subr.bf16.mxu0 0
    %3886 = vmatpush1.bf16.msra.mxu0 %v2889
    %3887 = vmatprep.subr.bf16.mxu0 0
    %3888 = vmatpush1.bf16.msra.mxu0 %v2891
    %3889 = vmatprep.subr.bf16.mxu0 0
    %3890 = vmatpush1.bf16.msra.mxu0 %v2893
    %3891 = vmatprep.mubr.bf16.mxu0 %v3796
    %3892 = vmatmul.mubr.bf16.gmra.mrb[0].mxu0 %v3795
    %v3893 = vpop.f32.mrb[0].mxu0
    %v3894 = vadd.f32 0.0, %v3893
    %v3895 = vpop.f32.mrb[0].mxu0
    %v3896 = vpop.f32.mrb[0].mxu0
    %v3897 = vadd.f32 0.0, %v3896
    %v3898 = vpop.f32.mrb[0].mxu0
    %3899 = vmatprep.mubr.bf16.mxu0 %v3798
    %3900 = vmatmul.mubr.bf16.gmra.mrb[0].mxu0 %v3797
    %v3901 = vpop.f32.mrb[0].mxu0
    %v3902 = vadd.f32 0.0, %v3901
    %v3903 = vpop.f32.mrb[0].mxu0
    %v3904 = vpop.f32.mrb[0].mxu0
    %v3905 = vadd.f32 0.0, %v3904
    %v3906 = vpop.f32.mrb[0].mxu0
    %3907 = vmatprep.mubr.bf16.mxu0 %v3800
    %3908 = vmatmul.mubr.bf16.gmra.mrb[0].mxu0 %v3799
    %v3909 = vpop.f32.mrb[0].mxu0
    %v3910 = vadd.f32 0.0, %v3909
    %v3911 = vpop.f32.mrb[0].mxu0
    %v3912 = vpop.f32.mrb[0].mxu0
    %v3913 = vadd.f32 0.0, %v3912
    %v3914 = vpop.f32.mrb[0].mxu0
    %3915 = vmatprep.mubr.bf16.mxu0 %v3802
    %3916 = vmatmul.mubr.bf16.gmra.mrb[0].mxu0 %v3801
    %v3917 = vpop.f32.mrb[0].mxu0
    %v3918 = vadd.f32 0.0, %v3917
    %v3919 = vpop.f32.mrb[0].mxu0
    %v3920 = vpop.f32.mrb[0].mxu0
    %v3921 = vadd.f32 0.0, %v3920
    %v3922 = vpop.f32.mrb[0].mxu0
    %3923 = vmatprep.mubr.bf16.mxu0 %v3804
    %3924 = vmatmul.mubr.bf16.gmra.mrb[0].mxu0 %v3803
    %v3925 = vpop.f32.mrb[0].mxu0
    %v3926 = vadd.f32 0.0, %v3925
    %v3927 = vpop.f32.mrb[0].mxu0
    %v3928 = vpop.f32.mrb[0].mxu0
    %v3929 = vadd.f32 0.0, %v3928
    %v3930 = vpop.f32.mrb[0].mxu0
    %3931 = vmatprep.mubr.bf16.mxu0 %v3806
    %3932 = vmatmul.mubr.bf16.gmra.mrb[0].mxu0 %v3805
    %v3933 = vpop.f32.mrb[0].mxu0
    %v3934 = vadd.f32 0.0, %v3933
    %v3935 = vpop.f32.mrb[0].mxu0
    %v3936 = vpop.f32.mrb[0].mxu0
    %v3937 = vadd.f32 0.0, %v3936
    %v3938 = vpop.f32.mrb[0].mxu0
    %3939 = vmatprep.mubr.bf16.mxu0 %v3808
    %3940 = vmatmul.mubr.bf16.gmra.mrb[0].mxu0 %v3807
    %v3941 = vpop.f32.mrb[0].mxu0
    %v3942 = vadd.f32 0.0, %v3941
    %v3943 = vpop.f32.mrb[0].mxu0
    %v3944 = vpop.f32.mrb[0].mxu0
    %v3945 = vadd.f32 0.0, %v3944
    %v3946 = vpop.f32.mrb[0].mxu0
    %3947 = vmatprep.mubr.bf16.mxu0 %v3810
    %3948 = vmatmul.mubr.bf16.gmra.mrb[0].mxu0 %v3809
    %v3949 = vpop.f32.mrb[0].mxu0
    %v3950 = vadd.f32 0.0, %v3949
    %v3951 = vpop.f32.mrb[0].mxu0
    %v3952 = vpop.f32.mrb[0].mxu0
    %v3953 = vadd.f32 0.0, %v3952
    %v3954 = vpop.f32.mrb[0].mxu0
    %3955 = vmatprep.mubr.bf16.mxu0 %v3812
    %3956 = vmatmul.mubr.bf16.gmra.mrb[0].mxu0 %v3811
    %v3957 = vpop.f32.mrb[0].mxu0
    %v3958 = vadd.f32 0.0, %v3957
    %v3959 = vpop.f32.mrb[0].mxu0
    %v3960 = vpop.f32.mrb[0].mxu0
    %v3961 = vadd.f32 0.0, %v3960
    %v3962 = vpop.f32.mrb[0].mxu0
    %3963 = vmatprep.mubr.bf16.mxu0 %v3814
    %3964 = vmatmul.mubr.bf16.gmra.mrb[0].mxu0 %v3813
    %v3965 = vpop.f32.mrb[0].mxu0
    %v3966 = vadd.f32 0.0, %v3965
    %v3967 = vpop.f32.mrb[0].mxu0
    %v3968 = vpop.f32.mrb[0].mxu0
    %v3969 = vadd.f32 0.0, %v3968
    %v3970 = vpop.f32.mrb[0].mxu0
    %3971 = vmatprep.mubr.bf16.mxu0 %v3816
    %3972 = vmatmul.mubr.bf16.gmra.mrb[0].mxu0 %v3815
    %v3973 = vpop.f32.mrb[0].mxu0
    %v3974 = vadd.f32 0.0, %v3973
    %v3975 = vpop.f32.mrb[0].mxu0
    %v3976 = vpop.f32.mrb[0].mxu0
    %v3977 = vadd.f32 0.0, %v3976
    %v3978 = vpop.f32.mrb[0].mxu0
    %3979 = vmatprep.mubr.bf16.mxu0 %v3818
    %3980 = vmatmul.mubr.bf16.gmra.mrb[0].mxu0 %v3817
    %v3981 = vpop.f32.mrb[0].mxu0
    %v3982 = vadd.f32 0.0, %v3981
    %v3983 = vpop.f32.mrb[0].mxu0
    %v3984 = vpop.f32.mrb[0].mxu0
    %v3985 = vadd.f32 0.0, %v3984
    %v3986 = vpop.f32.mrb[0].mxu0
    %3987 = vmatprep.mubr.bf16.mxu0 %v3820
    %3988 = vmatmul.mubr.bf16.gmra.mrb[0].mxu0 %v3819
    %v3989 = vpop.f32.mrb[0].mxu0
    %v3990 = vadd.f32 0.0, %v3989
    %v3991 = vpop.f32.mrb[0].mxu0
    %v3992 = vpop.f32.mrb[0].mxu0
    %v3993 = vadd.f32 0.0, %v3992
    %v3994 = vpop.f32.mrb[0].mxu0
    %3995 = vmatprep.mubr.bf16.mxu0 %v3822
    %3996 = vmatmul.mubr.bf16.gmra.mrb[0].mxu0 %v3821
    %v3997 = vpop.f32.mrb[0].mxu0
    %v3998 = vadd.f32 0.0, %v3997
    %v3999 = vpop.f32.mrb[0].mxu0
    %v4000 = vpop.f32.mrb[0].mxu0
    %v4001 = vadd.f32 0.0, %v4000
    %v4002 = vpop.f32.mrb[0].mxu0
    %4003 = vmatprep.mubr.bf16.mxu0 %v3824
    %4004 = vmatmul.mubr.bf16.gmra.mrb[0].mxu0 %v3823
    %v4005 = vpop.f32.mrb[0].mxu0
    %v4006 = vadd.f32 0.0, %v4005
    %v4007 = vpop.f32.mrb[0].mxu0
    %v4008 = vpop.f32.mrb[0].mxu0
    %v4009 = vadd.f32 0.0, %v4008
    %v4010 = vpop.f32.mrb[0].mxu0
    %4011 = vmatprep.mubr.bf16.mxu0 %v3826
    %4012 = vmatmul.mubr.bf16.gmra.mrb[0].mxu0 %v3825
    %v4013 = vpop.f32.mrb[0].mxu0
    %v4014 = vadd.f32 0.0, %v4013
    %v4015 = vpop.f32.mrb[0].mxu0
    %v4016 = vpop.f32.mrb[0].mxu0
    %v4017 = vadd.f32 0.0, %v4016
    %v4018 = vpop.f32.mrb[0].mxu0
    %4019 = vdwg.mxu0
    %4052 = vrot.lane.b32.xlu0 %v3540, 64
    %v4053 = vpop.permute.xlu0 %4052
    %4054 = vrot.lane.b32.xlu0 %v3543, 64
    %v4055 = vpop.permute.xlu0 %4054
    %4056 = vrot.lane.b32.xlu0 %v3548, 64
    %v4057 = vpop.permute.xlu0 %4056
    %4058 = vrot.lane.b32.xlu0 %v3551, 64
    %v4059 = vpop.permute.xlu0 %4058
    %4060 = vrot.lane.b32.xlu0 %v3556, 64
    %v4061 = vpop.permute.xlu0 %4060
    %4062 = vrot.lane.b32.xlu0 %v3559, 64
    %v4063 = vpop.permute.xlu0 %4062
    %4064 = vrot.lane.b32.xlu0 %v3564, 64
    %v4065 = vpop.permute.xlu0 %4064
    %4066 = vrot.lane.b32.xlu0 %v3567, 64
    %v4067 = vpop.permute.xlu0 %4066
    %4068 = vrot.lane.b32.xlu0 %v3572, 64
    %v4069 = vpop.permute.xlu0 %4068
    %4070 = vrot.lane.b32.xlu0 %v3575, 64
    %v4071 = vpop.permute.xlu0 %4070
    %4072 = vrot.lane.b32.xlu0 %v3580, 64
    %v4073 = vpop.permute.xlu0 %4072
    %4074 = vrot.lane.b32.xlu0 %v3583, 64
    %v4075 = vpop.permute.xlu0 %4074
    %4076 = vrot.lane.b32.xlu0 %v3588, 64
    %v4077 = vpop.permute.xlu0 %4076
    %4078 = vrot.lane.b32.xlu0 %v3591, 64
    %v4079 = vpop.permute.xlu0 %4078
    %4080 = vrot.lane.b32.xlu0 %v3596, 64
    %v4081 = vpop.permute.xlu0 %4080
    %4082 = vrot.lane.b32.xlu0 %v3599, 64
    %v4083 = vpop.permute.xlu0 %4082
    %4084 = vrot.lane.b32.xlu0 %v3604, 64
    %v4085 = vpop.permute.xlu0 %4084
    %4086 = vrot.lane.b32.xlu0 %v3607, 64
    %v4087 = vpop.permute.xlu0 %4086
    %4088 = vrot.lane.b32.xlu0 %v3612, 64
    %v4089 = vpop.permute.xlu0 %4088
    %4090 = vrot.lane.b32.xlu0 %v3615, 64
    %v4091 = vpop.permute.xlu0 %4090
    %4092 = vrot.lane.b32.xlu0 %v3620, 64
    %v4093 = vpop.permute.xlu0 %4092
    %4094 = vrot.lane.b32.xlu0 %v3623, 64
    %v4095 = vpop.permute.xlu0 %4094
    %4096 = vrot.lane.b32.xlu0 %v3628, 64
    %v4097 = vpop.permute.xlu0 %4096
    %4098 = vrot.lane.b32.xlu0 %v3631, 64
    %v4099 = vpop.permute.xlu0 %4098
    %4100 = vrot.lane.b32.xlu0 %v3636, 64
    %v4101 = vpop.permute.xlu0 %4100
    %4102 = vrot.lane.b32.xlu0 %v3639, 64
    %v4103 = vpop.permute.xlu0 %4102
    %4104 = vrot.lane.b32.xlu0 %v3644, 64
    %v4105 = vpop.permute.xlu0 %4104
    %4106 = vrot.lane.b32.xlu0 %v3647, 64
    %v4107 = vpop.permute.xlu0 %4106
    %4108 = vrot.lane.b32.xlu0 %v3652, 64
    %v4109 = vpop.permute.xlu0 %4108
    %4110 = vrot.lane.b32.xlu0 %v3655, 64
    %v4111 = vpop.permute.xlu0 %4110
    %4112 = vrot.lane.b32.xlu0 %v3660, 64
    %v4113 = vpop.permute.xlu0 %4112
    %4114 = vrot.lane.b32.xlu0 %v3663, 64
    %v4115 = vpop.permute.xlu0 %4114
    %v4148 = vsel %vm2336, %v3122, %v4053
    %v4149 = vsel %vm2336, %v3125, %v4055
    %v4150 = vsel %vm2336, %v3130, %v4057
    %v4151 = vsel %vm2336, %v3133, %v4059
    %v4152 = vsel %vm2336, %v3138, %v4061
    %v4153 = vsel %vm2336, %v3141, %v4063
    %v4154 = vsel %vm2336, %v3146, %v4065
    %v4155 = vsel %vm2336, %v3149, %v4067
    %v4156 = vsel %vm2336, %v3154, %v4069
    %v4157 = vsel %vm2336, %v3157, %v4071
    %v4158 = vsel %vm2336, %v3162, %v4073
    %v4159 = vsel %vm2336, %v3165, %v4075
    %v4160 = vsel %vm2336, %v3170, %v4077
    %v4161 = vsel %vm2336, %v3173, %v4079
    %v4162 = vsel %vm2336, %v3178, %v4081
    %v4163 = vsel %vm2336, %v3181, %v4083
    %v4164 = vsel %vm2336, %v3186, %v4085
    %v4165 = vsel %vm2336, %v3189, %v4087
    %v4166 = vsel %vm2336, %v3194, %v4089
    %v4167 = vsel %vm2336, %v3197, %v4091
    %v4168 = vsel %vm2336, %v3202, %v4093
    %v4169 = vsel %vm2336, %v3205, %v4095
    %v4170 = vsel %vm2336, %v3210, %v4097
    %v4171 = vsel %vm2336, %v3213, %v4099
    %v4172 = vsel %vm2336, %v3218, %v4101
    %v4173 = vsel %vm2336, %v3221, %v4103
    %v4174 = vsel %vm2336, %v3226, %v4105
    %v4175 = vsel %vm2336, %v3229, %v4107
    %v4176 = vsel %vm2336, %v3234, %v4109
    %v4177 = vsel %vm2336, %v3237, %v4111
    %v4178 = vsel %vm2336, %v3242, %v4113
    %v4179 = vsel %vm2336, %v3245, %v4115
    %v4180 = vld [vmem:[#allocation10] sm:$0xff]
    %v4181 = vld [vmem:[#allocation10 + $0x8] sm:$0xff]
    %v4182 = vld [vmem:[#allocation10 + $0x10] sm:$0xff]
    %v4183 = vld [vmem:[#allocation10 + $0x18] sm:$0xff]
    %v4184 = vld [vmem:[#allocation10 + $0x20] sm:$0xff]
    %v4185 = vld [vmem:[#allocation10 + $0x28] sm:$0xff]
    %v4186 = vld [vmem:[#allocation10 + $0x30] sm:$0xff]
    %v4187 = vld [vmem:[#allocation10 + $0x38] sm:$0xff]
    %v4188 = vld [vmem:[#allocation10 + $0x40] sm:$0xff]
    %v4189 = vld [vmem:[#allocation10 + $0x48] sm:$0xff]
    %v4190 = vld [vmem:[#allocation10 + $0x50] sm:$0xff]
    %v4191 = vld [vmem:[#allocation10 + $0x58] sm:$0xff]
    %v4192 = vld [vmem:[#allocation10 + $0x60] sm:$0xff]
    %v4193 = vld [vmem:[#allocation10 + $0x68] sm:$0xff]
    %v4194 = vld [vmem:[#allocation10 + $0x70] sm:$0xff]
    %v4195 = vld [vmem:[#allocation10 + $0x78] sm:$0xff]
    %v4196 = vld [vmem:[#allocation10 + $0x80] sm:$0xff]
    %v4197 = vld [vmem:[#allocation10 + $0x88] sm:$0xff]
    %v4198 = vld [vmem:[#allocation10 + $0x90] sm:$0xff]
    %v4199 = vld [vmem:[#allocation10 + $0x98] sm:$0xff]
    %v4200 = vld [vmem:[#allocation10 + $0xa0] sm:$0xff]
    %v4201 = vld [vmem:[#allocation10 + $0xa8] sm:$0xff]
    %v4202 = vld [vmem:[#allocation10 + $0xb0] sm:$0xff]
    %v4203 = vld [vmem:[#allocation10 + $0xb8] sm:$0xff]
    %v4204 = vld [vmem:[#allocation12] sm:$0x3]
    %v4206 = vlaneseq
    %v4207 = vshrl.u32 %v4206, 7
    %v4208 = vsub.s32 0, %v4207
    %v4209 = vrot.slane %v4204, %v4208
    %v4210 = vlaneseq
    %v4211 = vshrl.u32 %v4210, 7
    %v4212 = vsub.s32 1, %v4211
    %v4213 = vrot.slane %v4204, %v4212
    %v4240 = vunpack.c.l.b16 %v4180
    %v4241 = vunpack.c.h.b16 %v4180
    %v4242 = vunpack.c.l.b16 %v4181
    %v4243 = vunpack.c.h.b16 %v4181
    %v4244 = vunpack.c.l.b16 %v4182
    %v4245 = vunpack.c.h.b16 %v4182
    %v4246 = vunpack.c.l.b16 %v4183
    %v4247 = vunpack.c.h.b16 %v4183
    %v4248 = vunpack.c.l.b16 %v4184
    %v4249 = vunpack.c.h.b16 %v4184
    %v4250 = vunpack.c.l.b16 %v4185
    %v4251 = vunpack.c.h.b16 %v4185
    %v4252 = vunpack.c.l.b16 %v4186
    %v4253 = vunpack.c.h.b16 %v4186
    %v4254 = vunpack.c.l.b16 %v4187
    %v4255 = vunpack.c.h.b16 %v4187
    %v4256 = vunpack.c.l.b16 %v4188
    %v4257 = vunpack.c.h.b16 %v4188
    %v4258 = vunpack.c.l.b16 %v4189
    %v4259 = vunpack.c.h.b16 %v4189
    %v4260 = vunpack.c.l.b16 %v4190
    %v4261 = vunpack.c.h.b16 %v4190
    %v4262 = vunpack.c.l.b16 %v4191
    %v4263 = vunpack.c.h.b16 %v4191
    %v4264 = vunpack.c.l.b16 %v4192
    %v4265 = vunpack.c.h.b16 %v4192
    %v4266 = vunpack.c.l.b16 %v4193
    %v4267 = vunpack.c.h.b16 %v4193
    %v4268 = vunpack.c.l.b16 %v4194
    %v4269 = vunpack.c.h.b16 %v4194
    %v4270 = vunpack.c.l.b16 %v4195
    %v4271 = vunpack.c.h.b16 %v4195
    %v4272 = vunpack.c.l.b16 %v4196
    %v4273 = vunpack.c.h.b16 %v4196
    %v4274 = vunpack.c.l.b16 %v4197
    %v4275 = vunpack.c.h.b16 %v4197
    %v4276 = vunpack.c.l.b16 %v4198
    %v4277 = vunpack.c.h.b16 %v4198
    %v4278 = vunpack.c.l.b16 %v4199
    %v4279 = vunpack.c.h.b16 %v4199
    %v4280 = vunpack.c.l.b16 %v4200
    %v4281 = vunpack.c.h.b16 %v4200
    %v4282 = vunpack.c.l.b16 %v4201
    %v4283 = vunpack.c.h.b16 %v4201
    %v4284 = vunpack.c.l.b16 %v4202
    %v4285 = vunpack.c.h.b16 %v4202
    %v4286 = vunpack.c.l.b16 %v4203
    %v4287 = vunpack.c.h.b16 %v4203
    %v4288 = vpack.c.b16 %v4242, %v4240
    %v4289 = vpack.c.b16 %v4243, %v4241
    %v4290 = vpack.c.b16 %v4246, %v4244
    %v4291 = vpack.c.b16 %v4247, %v4245
    %v4292 = vpack.c.b16 %v4250, %v4248
    %v4293 = vpack.c.b16 %v4251, %v4249
    %v4294 = vpack.c.b16 %v4254, %v4252
    %v4295 = vpack.c.b16 %v4255, %v4253
    %v4296 = vpack.c.b16 %v4258, %v4256
    %v4297 = vpack.c.b16 %v4259, %v4257
    %v4298 = vpack.c.b16 %v4262, %v4260
    %v4299 = vpack.c.b16 %v4263, %v4261
    %v4300 = vpack.c.b16 %v4266, %v4264
    %v4301 = vpack.c.b16 %v4267, %v4265
    %v4302 = vpack.c.b16 %v4270, %v4268
    %v4303 = vpack.c.b16 %v4271, %v4269
    %v4304 = vpack.c.b16 %v4274, %v4272
    %v4305 = vpack.c.b16 %v4275, %v4273
    %v4306 = vpack.c.b16 %v4278, %v4276
    %v4307 = vpack.c.b16 %v4279, %v4277
    %v4308 = vpack.c.b16 %v4282, %v4280
    %v4309 = vpack.c.b16 %v4283, %v4281
    %v4310 = vpack.c.b16 %v4286, %v4284
    %v4311 = vpack.c.b16 %v4287, %v4285
    %4336 = vmatprep.subr.bf16.mxu0 %v4289
    %4337 = vmatpush1.bf16.msra.mxu0 %v4288
    %4338 = vmatprep.subr.bf16.mxu0 %v4291
    %4339 = vmatpush1.bf16.msra.mxu0 %v4290
    %4340 = vmatprep.subr.bf16.mxu0 %v4293
    %4341 = vmatpush1.bf16.msra.mxu0 %v4292
    %4342 = vmatprep.subr.bf16.mxu0 %v4295
    %4343 = vmatpush1.bf16.msra.mxu0 %v4294
    %4344 = vmatprep.subr.bf16.mxu0 %v4297
    %4345 = vmatpush1.bf16.msra.mxu0 %v4296
    %4346 = vmatprep.subr.bf16.mxu0 %v4299
    %4347 = vmatpush1.bf16.msra.mxu0 %v4298
    %4348 = vmatprep.subr.bf16.mxu0 %v4301
    %4349 = vmatpush1.bf16.msra.mxu0 %v4300
    %4350 = vmatprep.subr.bf16.mxu0 %v4303
    %4351 = vmatpush1.bf16.msra.mxu0 %v4302
    %4352 = vmatprep.subr.bf16.mxu0 %v4305
    %4353 = vmatpush1.bf16.msra.mxu0 %v4304
    %4354 = vmatprep.subr.bf16.mxu0 %v4307
    %4355 = vmatpush1.bf16.msra.mxu0 %v4306
    %4356 = vmatprep.subr.bf16.mxu0 %v4309
    %4357 = vmatpush1.bf16.msra.mxu0 %v4308
    %4358 = vmatprep.subr.bf16.mxu0 %v4311
    %4359 = vmatpush1.bf16.msra.mxu0 %v4310
    %4360 = vmatprep.subr.bf16.mxu0 0
    %4361 = vmatpush1.bf16.msra.mxu0 0
    %4362 = vmatprep.subr.bf16.mxu0 0
    %4363 = vmatpush1.bf16.msra.mxu0 0
    %4364 = vmatprep.subr.bf16.mxu0 0
    %4365 = vmatpush1.bf16.msra.mxu0 0
    %4366 = vmatprep.subr.bf16.mxu0 0
    %4367 = vmatpush1.bf16.msra.mxu0 0
    %4368 = vmatprep.mubr.bf16.mxu0 %v2622
    %4369 = vmatmul.mubr.bf16.gmra.mrb[0].mxu0 %v2433
    %v4370 = vpop.f32.mrb[0].mxu0
    %v4371 = vadd.f32 %v4209, %v4370
    %v4372 = vpop.f32.mrb[0].mxu0
    %v4373 = vadd.f32 %v4213, %v4372
    %v4374 = vpop.f32.mrb[0].mxu0
    %v4375 = vadd.f32 %v4209, %v4374
    %v4376 = vpop.f32.mrb[0].mxu0
    %v4377 = vadd.f32 %v4213, %v4376
    %4378 = vmatprep.mubr.bf16.mxu0 %v2625
    %4379 = vmatmul.mubr.bf16.gmra.mrb[0].mxu0 %v2435
    %v4380 = vpop.f32.mrb[0].mxu0
    %v4381 = vadd.f32 %v4209, %v4380
    %v4382 = vpop.f32.mrb[0].mxu0
    %v4383 = vadd.f32 %v4213, %v4382
    %v4384 = vpop.f32.mrb[0].mxu0
    %v4385 = vadd.f32 %v4209, %v4384
    %v4386 = vpop.f32.mrb[0].mxu0
    %v4387 = vadd.f32 %v4213, %v4386
    %4388 = vmatprep.mubr.bf16.mxu0 %v2628
    %4389 = vmatmul.mubr.bf16.gmra.mrb[0].mxu0 %v2437
    %v4390 = vpop.f32.mrb[0].mxu0
    %v4391 = vadd.f32 %v4209, %v4390
    %v4392 = vpop.f32.mrb[0].mxu0
    %v4393 = vadd.f32 %v4213, %v4392
    %v4394 = vpop.f32.mrb[0].mxu0
    %v4395 = vadd.f32 %v4209, %v4394
    %v4396 = vpop.f32.mrb[0].mxu0
    %v4397 = vadd.f32 %v4213, %v4396
    %4398 = vmatprep.mubr.bf16.mxu0 %v2631
    %4399 = vmatmul.mubr.bf16.gmra.mrb[0].mxu0 %v2439
    %v4400 = vpop.f32.mrb[0].mxu0
    %v4401 = vadd.f32 %v4209, %v4400
    %v4402 = vpop.f32.mrb[0].mxu0
    %v4403 = vadd.f32 %v4213, %v4402
    %v4404 = vpop.f32.mrb[0].mxu0
    %v4405 = vadd.f32 %v4209, %v4404
    %v4406 = vpop.f32.mrb[0].mxu0
    %v4407 = vadd.f32 %v4213, %v4406
    %4408 = vmatprep.mubr.bf16.mxu0 %v2634
    %4409 = vmatmul.mubr.bf16.gmra.mrb[0].mxu0 %v2441
    %v4410 = vpop.f32.mrb[0].mxu0
    %v4411 = vadd.f32 %v4209, %v4410
    %v4412 = vpop.f32.mrb[0].mxu0
    %v4413 = vadd.f32 %v4213, %v4412
    %v4414 = vpop.f32.mrb[0].mxu0
    %v4415 = vadd.f32 %v4209, %v4414
    %v4416 = vpop.f32.mrb[0].mxu0
    %v4417 = vadd.f32 %v4213, %v4416
    %4418 = vmatprep.mubr.bf16.mxu0 %v2637
    %4419 = vmatmul.mubr.bf16.gmra.mrb[0].mxu0 %v2443
    %v4420 = vpop.f32.mrb[0].mxu0
    %v4421 = vadd.f32 %v4209, %v4420
    %v4422 = vpop.f32.mrb[0].mxu0
    %v4423 = vadd.f32 %v4213, %v4422
    %v4424 = vpop.f32.mrb[0].mxu0
    %v4425 = vadd.f32 %v4209, %v4424
    %v4426 = vpop.f32.mrb[0].mxu0
    %v4427 = vadd.f32 %v4213, %v4426
    %4428 = vmatprep.mubr.bf16.mxu0 %v2640
    %4429 = vmatmul.mubr.bf16.gmra.mrb[0].mxu0 %v2445
    %v4430 = vpop.f32.mrb[0].mxu0
    %v4431 = vadd.f32 %v4209, %v4430
    %v4432 = vpop.f32.mrb[0].mxu0
    %v4433 = vadd.f32 %v4213, %v4432
    %v4434 = vpop.f32.mrb[0].mxu0
    %v4435 = vadd.f32 %v4209, %v4434
    %v4436 = vpop.f32.mrb[0].mxu0
    %v4437 = vadd.f32 %v4213, %v4436
    %4438 = vmatprep.mubr.bf16.mxu0 %v2643
    %4439 = vmatmul.mubr.bf16.gmra.mrb[0].mxu0 %v2447
    %v4440 = vpop.f32.mrb[0].mxu0
    %v4441 = vadd.f32 %v4209, %v4440
    %v4442 = vpop.f32.mrb[0].mxu0
    %v4443 = vadd.f32 %v4213, %v4442
    %v4444 = vpop.f32.mrb[0].mxu0
    %v4445 = vadd.f32 %v4209, %v4444
    %v4446 = vpop.f32.mrb[0].mxu0
    %v4447 = vadd.f32 %v4213, %v4446
    %4448 = vmatprep.mubr.bf16.mxu0 %v2646
    %4449 = vmatmul.mubr.bf16.gmra.mrb[0].mxu0 %v2449
    %v4450 = vpop.f32.mrb[0].mxu0
    %v4451 = vadd.f32 %v4209, %v4450
    %v4452 = vpop.f32.mrb[0].mxu0
    %v4453 = vadd.f32 %v4213, %v4452
    %v4454 = vpop.f32.mrb[0].mxu0
    %v4455 = vadd.f32 %v4209, %v4454
    %v4456 = vpop.f32.mrb[0].mxu0
    %v4457 = vadd.f32 %v4213, %v4456
    %4458 = vmatprep.mubr.bf16.mxu0 %v2649
    %4459 = vmatmul.mubr.bf16.gmra.mrb[0].mxu0 %v2451
    %v4460 = vpop.f32.mrb[0].mxu0
    %v4461 = vadd.f32 %v4209, %v4460
    %v4462 = vpop.f32.mrb[0].mxu0
    %v4463 = vadd.f32 %v4213, %v4462
    %v4464 = vpop.f32.mrb[0].mxu0
    %v4465 = vadd.f32 %v4209, %v4464
    %v4466 = vpop.f32.mrb[0].mxu0
    %v4467 = vadd.f32 %v4213, %v4466
    %4468 = vmatprep.mubr.bf16.mxu0 %v2652
    %4469 = vmatmul.mubr.bf16.gmra.mrb[0].mxu0 %v2453
    %v4470 = vpop.f32.mrb[0].mxu0
    %v4471 = vadd.f32 %v4209, %v4470
    %v4472 = vpop.f32.mrb[0].mxu0
    %v4473 = vadd.f32 %v4213, %v4472
    %v4474 = vpop.f32.mrb[0].mxu0
    %v4475 = vadd.f32 %v4209, %v4474
    %v4476 = vpop.f32.mrb[0].mxu0
    %v4477 = vadd.f32 %v4213, %v4476
    %4478 = vmatprep.mubr.bf16.mxu0 %v2655
    %4479 = vmatmul.mubr.bf16.gmra.mrb[0].mxu0 %v2455
    %v4480 = vpop.f32.mrb[0].mxu0
    %v4481 = vadd.f32 %v4209, %v4480
    %v4482 = vpop.f32.mrb[0].mxu0
    %v4483 = vadd.f32 %v4213, %v4482
    %v4484 = vpop.f32.mrb[0].mxu0
    %v4485 = vadd.f32 %v4209, %v4484
    %v4486 = vpop.f32.mrb[0].mxu0
    %v4487 = vadd.f32 %v4213, %v4486
    %4488 = vmatprep.mubr.bf16.mxu0 %v2658
    %4489 = vmatmul.mubr.bf16.gmra.mrb[0].mxu0 %v2457
    %v4490 = vpop.f32.mrb[0].mxu0
    %v4491 = vadd.f32 %v4209, %v4490
    %v4492 = vpop.f32.mrb[0].mxu0
    %v4493 = vadd.f32 %v4213, %v4492
    %v4494 = vpop.f32.mrb[0].mxu0
    %v4495 = vadd.f32 %v4209, %v4494
    %v4496 = vpop.f32.mrb[0].mxu0
    %v4497 = vadd.f32 %v4213, %v4496
    %4498 = vmatprep.mubr.bf16.mxu0 %v2661
    %4499 = vmatmul.mubr.bf16.gmra.mrb[0].mxu0 %v2459
    %v4500 = vpop.f32.mrb[0].mxu0
    %v4501 = vadd.f32 %v4209, %v4500
    %v4502 = vpop.f32.mrb[0].mxu0
    %v4503 = vadd.f32 %v4213, %v4502
    %v4504 = vpop.f32.mrb[0].mxu0
    %v4505 = vadd.f32 %v4209, %v4504
    %v4506 = vpop.f32.mrb[0].mxu0
    %v4507 = vadd.f32 %v4213, %v4506
    %4508 = vmatprep.mubr.bf16.mxu0 %v2664
    %4509 = vmatmul.mubr.bf16.gmra.mrb[0].mxu0 %v2461
    %v4510 = vpop.f32.mrb[0].mxu0
    %v4511 = vadd.f32 %v4209, %v4510
    %v4512 = vpop.f32.mrb[0].mxu0
    %v4513 = vadd.f32 %v4213, %v4512
    %v4514 = vpop.f32.mrb[0].mxu0
    %v4515 = vadd.f32 %v4209, %v4514
    %v4516 = vpop.f32.mrb[0].mxu0
    %v4517 = vadd.f32 %v4213, %v4516
    %4518 = vmatprep.mubr.bf16.mxu0 %v2667
    %4519 = vmatmul.mubr.bf16.gmra.mrb[0].mxu0 %v2463
    %v4520 = vpop.f32.mrb[0].mxu0
    %v4521 = vadd.f32 %v4209, %v4520
    %v4522 = vpop.f32.mrb[0].mxu0
    %v4523 = vadd.f32 %v4213, %v4522
    %v4524 = vpop.f32.mrb[0].mxu0
    %v4525 = vadd.f32 %v4209, %v4524
    %v4526 = vpop.f32.mrb[0].mxu0
    %v4527 = vadd.f32 %v4213, %v4526
    %4528 = vdwg.mxu0
    %v4529 = vadd.f32 %v4148, %v4371
    %v4530 = vadd.f32 %v3894, %v4373
    %v4531 = vadd.f32 %v4149, %v4375
    %v4532 = vadd.f32 %v3897, %v4377
    %v4533 = vadd.f32 %v4150, %v4381
    %v4534 = vadd.f32 %v3902, %v4383
    %v4535 = vadd.f32 %v4151, %v4385
    %v4536 = vadd.f32 %v3905, %v4387
    %v4537 = vadd.f32 %v4152, %v4391
    %v4538 = vadd.f32 %v3910, %v4393
    %v4539 = vadd.f32 %v4153, %v4395
    %v4540 = vadd.f32 %v3913, %v4397
    %v4541 = vadd.f32 %v4154, %v4401
    %v4542 = vadd.f32 %v3918, %v4403
    %v4543 = vadd.f32 %v4155, %v4405
    %v4544 = vadd.f32 %v3921, %v4407
    %v4545 = vadd.f32 %v4156, %v4411
    %v4546 = vadd.f32 %v3926, %v4413
    %v4547 = vadd.f32 %v4157, %v4415
    %v4548 = vadd.f32 %v3929, %v4417
    %v4549 = vadd.f32 %v4158, %v4421
    %v4550 = vadd.f32 %v3934, %v4423
    %v4551 = vadd.f32 %v4159, %v4425
    %v4552 = vadd.f32 %v3937, %v4427
    %v4553 = vadd.f32 %v4160, %v4431
    %v4554 = vadd.f32 %v3942, %v4433
    %v4555 = vadd.f32 %v4161, %v4435
    %v4556 = vadd.f32 %v3945, %v4437
    %v4557 = vadd.f32 %v4162, %v4441
    %v4558 = vadd.f32 %v3950, %v4443
    %v4559 = vadd.f32 %v4163, %v4445
    %v4560 = vadd.f32 %v3953, %v4447
    %v4561 = vadd.f32 %v4164, %v4451
    %v4562 = vadd.f32 %v3958, %v4453
    %v4563 = vadd.f32 %v4165, %v4455
    %v4564 = vadd.f32 %v3961, %v4457
    %v4565 = vadd.f32 %v4166, %v4461
    %v4566 = vadd.f32 %v3966, %v4463
    %v4567 = vadd.f32 %v4167, %v4465
    %v4568 = vadd.f32 %v3969, %v4467
    %v4569 = vadd.f32 %v4168, %v4471
    %v4570 = vadd.f32 %v3974, %v4473
    %v4571 = vadd.f32 %v4169, %v4475
    %v4572 = vadd.f32 %v3977, %v4477
    %v4573 = vadd.f32 %v4170, %v4481
    %v4574 = vadd.f32 %v3982, %v4483
    %v4575 = vadd.f32 %v4171, %v4485
    %v4576 = vadd.f32 %v3985, %v4487
    %v4577 = vadd.f32 %v4172, %v4491
    %v4578 = vadd.f32 %v3990, %v4493
    %v4579 = vadd.f32 %v4173, %v4495
    %v4580 = vadd.f32 %v3993, %v4497
    %v4581 = vadd.f32 %v4174, %v4501
    %v4582 = vadd.f32 %v3998, %v4503
    %v4583 = vadd.f32 %v4175, %v4505
    %v4584 = vadd.f32 %v4001, %v4507
    %v4585 = vadd.f32 %v4176, %v4511
    %v4586 = vadd.f32 %v4006, %v4513
    %v4587 = vadd.f32 %v4177, %v4515
    %v4588 = vadd.f32 %v4009, %v4517
    %v4589 = vadd.f32 %v4178, %v4521
    %v4590 = vadd.f32 %v4014, %v4523
    %v4591 = vadd.f32 %v4179, %v4525
    %v4592 = vadd.f32 %v4017, %v4527
    %v4593 = vmax.f32 %v4529, 0.0
    %v4594 = vmax.f32 %v4530, 0.0
    %v4595 = vmax.f32 %v4531, 0.0
    %v4596 = vmax.f32 %v4532, 0.0
    %v4597 = vmax.f32 %v4533, 0.0
    %v4598 = vmax.f32 %v4534, 0.0
    %v4599 = vmax.f32 %v4535, 0.0
    %v4600 = vmax.f32 %v4536, 0.0
    %v4601 = vmax.f32 %v4537, 0.0
    %v4602 = vmax.f32 %v4538, 0.0
    %v4603 = vmax.f32 %v4539, 0.0
    %v4604 = vmax.f32 %v4540, 0.0
    %v4605 = vmax.f32 %v4541, 0.0
    %v4606 = vmax.f32 %v4542, 0.0
    %v4607 = vmax.f32 %v4543, 0.0
    %v4608 = vmax.f32 %v4544, 0.0
    %v4609 = vmax.f32 %v4545, 0.0
    %v4610 = vmax.f32 %v4546, 0.0
    %v4611 = vmax.f32 %v4547, 0.0
    %v4612 = vmax.f32 %v4548, 0.0
    %v4613 = vmax.f32 %v4549, 0.0
    %v4614 = vmax.f32 %v4550, 0.0
    %v4615 = vmax.f32 %v4551, 0.0
    %v4616 = vmax.f32 %v4552, 0.0
    %v4617 = vmax.f32 %v4553, 0.0
    %v4618 = vmax.f32 %v4554, 0.0
    %v4619 = vmax.f32 %v4555, 0.0
    %v4620 = vmax.f32 %v4556, 0.0
    %v4621 = vmax.f32 %v4557, 0.0
    %v4622 = vmax.f32 %v4558, 0.0
    %v4623 = vmax.f32 %v4559, 0.0
    %v4624 = vmax.f32 %v4560, 0.0
    %v4625 = vmax.f32 %v4561, 0.0
    %v4626 = vmax.f32 %v4562, 0.0
    %v4627 = vmax.f32 %v4563, 0.0
    %v4628 = vmax.f32 %v4564, 0.0
    %v4629 = vmax.f32 %v4565, 0.0
    %v4630 = vmax.f32 %v4566, 0.0
    %v4631 = vmax.f32 %v4567, 0.0
    %v4632 = vmax.f32 %v4568, 0.0
    %v4633 = vmax.f32 %v4569, 0.0
    %v4634 = vmax.f32 %v4570, 0.0
    %v4635 = vmax.f32 %v4571, 0.0
    %v4636 = vmax.f32 %v4572, 0.0
    %v4637 = vmax.f32 %v4573, 0.0
    %v4638 = vmax.f32 %v4574, 0.0
    %v4639 = vmax.f32 %v4575, 0.0
    %v4640 = vmax.f32 %v4576, 0.0
    %v4641 = vmax.f32 %v4577, 0.0
    %v4642 = vmax.f32 %v4578, 0.0
    %v4643 = vmax.f32 %v4579, 0.0
    %v4644 = vmax.f32 %v4580, 0.0
    %v4645 = vmax.f32 %v4581, 0.0
    %v4646 = vmax.f32 %v4582, 0.0
    %v4647 = vmax.f32 %v4583, 0.0
    %v4648 = vmax.f32 %v4584, 0.0
    %v4649 = vmax.f32 %v4585, 0.0
    %v4650 = vmax.f32 %v4586, 0.0
    %v4651 = vmax.f32 %v4587, 0.0
    %v4652 = vmax.f32 %v4588, 0.0
    %v4653 = vmax.f32 %v4589, 0.0
    %v4654 = vmax.f32 %v4590, 0.0
    %v4655 = vmax.f32 %v4591, 0.0
    %v4656 = vmax.f32 %v4592, 0.0
    %v4657 = vpack.c.bf16 %v4595, %v4593
    %v4658 = vpack.c.bf16 %v4596, %v4594
    %v4659 = vpack.c.bf16 %v4599, %v4597
    %v4660 = vpack.c.bf16 %v4600, %v4598
    %v4661 = vpack.c.bf16 %v4603, %v4601
    %v4662 = vpack.c.bf16 %v4604, %v4602
    %v4663 = vpack.c.bf16 %v4607, %v4605
    %v4664 = vpack.c.bf16 %v4608, %v4606
    %v4665 = vpack.c.bf16 %v4611, %v4609
    %v4666 = vpack.c.bf16 %v4612, %v4610
    %v4667 = vpack.c.bf16 %v4615, %v4613
    %v4668 = vpack.c.bf16 %v4616, %v4614
    %v4669 = vpack.c.bf16 %v4619, %v4617
    %v4670 = vpack.c.bf16 %v4620, %v4618
    %v4671 = vpack.c.bf16 %v4623, %v4621
    %v4672 = vpack.c.bf16 %v4624, %v4622
    %v4673 = vpack.c.bf16 %v4627, %v4625
    %v4674 = vpack.c.bf16 %v4628, %v4626
    %v4675 = vpack.c.bf16 %v4631, %v4629
    %v4676 = vpack.c.bf16 %v4632, %v4630
    %v4677 = vpack.c.bf16 %v4635, %v4633
    %v4678 = vpack.c.bf16 %v4636, %v4634
    %v4679 = vpack.c.bf16 %v4639, %v4637
    %v4680 = vpack.c.bf16 %v4640, %v4638
    %v4681 = vpack.c.bf16 %v4643, %v4641
    %v4682 = vpack.c.bf16 %v4644, %v4642
    %v4683 = vpack.c.bf16 %v4647, %v4645
    %v4684 = vpack.c.bf16 %v4648, %v4646
    %v4685 = vpack.c.bf16 %v4651, %v4649
    %v4686 = vpack.c.bf16 %v4652, %v4650
    %v4687 = vpack.c.bf16 %v4655, %v4653
    %v4688 = vpack.c.bf16 %v4656, %v4654
    %s4689 = scalar_lea.vmem [#allocation7], 192
    %v4690 = vld [vmem:[%s4689] sm:$0xff]
    %v4691 = vld [vmem:[%s4689 + $0x8] sm:$0xff]
    %v4692 = vld [vmem:[%s4689 + $0x10] sm:$0xff]
    %v4693 = vld [vmem:[%s4689 + $0x18] sm:$0xff]
    %v4694 = vld [vmem:[%s4689 + $0x20] sm:$0xff]
    %v4695 = vld [vmem:[%s4689 + $0x28] sm:$0xff]
    %v4696 = vld [vmem:[%s4689 + $0x30] sm:$0xff]
    %v4697 = vld [vmem:[%s4689 + $0x38] sm:$0xff]
    %v4698 = vld [vmem:[%s4689 + $0x40] sm:$0xff]
    %v4699 = vld [vmem:[%s4689 + $0x48] sm:$0xff]
    %v4700 = vld [vmem:[%s4689 + $0x50] sm:$0xff]
    %v4701 = vld [vmem:[%s4689 + $0x58] sm:$0xff]
    %v4702 = vld [vmem:[%s4689 + $0x60] sm:$0xff]
    %v4703 = vld [vmem:[%s4689 + $0x68] sm:$0xff]
    %v4704 = vld [vmem:[%s4689 + $0x70] sm:$0xff]
    %v4705 = vld [vmem:[%s4689 + $0x78] sm:$0xff]
    %v4706 = vld [vmem:[%s4689 + $0x80] sm:$0xff]
    %v4707 = vld [vmem:[%s4689 + $0x88] sm:$0xff]
    %v4708 = vld [vmem:[%s4689 + $0x90] sm:$0xff]
    %v4709 = vld [vmem:[%s4689 + $0x98] sm:$0xff]
    %v4710 = vld [vmem:[%s4689 + $0xa0] sm:$0xff]
    %v4711 = vld [vmem:[%s4689 + $0xa8] sm:$0xff]
    %v4712 = vld [vmem:[%s4689 + $0xb0] sm:$0xff]
    %v4713 = vld [vmem:[%s4689 + $0xb8] sm:$0xff]
    %s4714 = scalar_lea.vmem [#allocation9], 2
    %v4715 = vld [vmem:[%s4714] sm:$0x3]
    %v4717 = vlaneseq
    %v4718 = vshrl.u32 %v4717, 7
    %v4719 = vsub.s32 0, %v4718
    %v4720 = vrot.slane %v4715, %v4719
    %v4721 = vlaneseq
    %v4722 = vshrl.u32 %v4721, 7
    %v4723 = vsub.s32 1, %v4722
    %v4724 = vrot.slane %v4715, %v4723
    %v4751 = vunpack.c.l.b16 %v4690
    %v4752 = vunpack.c.h.b16 %v4690
    %v4753 = vunpack.c.l.b16 %v4691
    %v4754 = vunpack.c.h.b16 %v4691
    %v4755 = vunpack.c.l.b16 %v4692
    %v4756 = vunpack.c.h.b16 %v4692
    %v4757 = vunpack.c.l.b16 %v4693
    %v4758 = vunpack.c.h.b16 %v4693
    %v4759 = vunpack.c.l.b16 %v4694
    %v4760 = vunpack.c.h.b16 %v4694
    %v4761 = vunpack.c.l.b16 %v4695
    %v4762 = vunpack.c.h.b16 %v4695
    %v4763 = vunpack.c.l.b16 %v4696
    %v4764 = vunpack.c.h.b16 %v4696
    %v4765 = vunpack.c.l.b16 %v4697
    %v4766 = vunpack.c.h.b16 %v4697
    %v4767 = vunpack.c.l.b16 %v4698
    %v4768 = vunpack.c.h.b16 %v4698
    %v4769 = vunpack.c.l.b16 %v4699
    %v4770 = vunpack.c.h.b16 %v4699
    %v4771 = vunpack.c.l.b16 %v4700
    %v4772 = vunpack.c.h.b16 %v4700
    %v4773 = vunpack.c.l.b16 %v4701
    %v4774 = vunpack.c.h.b16 %v4701
    %v4775 = vunpack.c.l.b16 %v4702
    %v4776 = vunpack.c.h.b16 %v4702
    %v4777 = vunpack.c.l.b16 %v4703
    %v4778 = vunpack.c.h.b16 %v4703
    %v4779 = vunpack.c.l.b16 %v4704
    %v4780 = vunpack.c.h.b16 %v4704
    %v4781 = vunpack.c.l.b16 %v4705
    %v4782 = vunpack.c.h.b16 %v4705
    %v4783 = vunpack.c.l.b16 %v4706
    %v4784 = vunpack.c.h.b16 %v4706
    %v4785 = vunpack.c.l.b16 %v4707
    %v4786 = vunpack.c.h.b16 %v4707
    %v4787 = vunpack.c.l.b16 %v4708
    %v4788 = vunpack.c.h.b16 %v4708
    %v4789 = vunpack.c.l.b16 %v4709
    %v4790 = vunpack.c.h.b16 %v4709
    %v4791 = vunpack.c.l.b16 %v4710
    %v4792 = vunpack.c.h.b16 %v4710
    %v4793 = vunpack.c.l.b16 %v4711
    %v4794 = vunpack.c.h.b16 %v4711
    %v4795 = vunpack.c.l.b16 %v4712
    %v4796 = vunpack.c.h.b16 %v4712
    %v4797 = vunpack.c.l.b16 %v4713
    %v4798 = vunpack.c.h.b16 %v4713
    %v4799 = vpack.c.b16 %v4753, %v4751
    %v4800 = vpack.c.b16 %v4754, %v4752
    %v4801 = vpack.c.b16 %v4757, %v4755
    %v4802 = vpack.c.b16 %v4758, %v4756
    %v4803 = vpack.c.b16 %v4761, %v4759
    %v4804 = vpack.c.b16 %v4762, %v4760
    %v4805 = vpack.c.b16 %v4765, %v4763
    %v4806 = vpack.c.b16 %v4766, %v4764
    %v4807 = vpack.c.b16 %v4769, %v4767
    %v4808 = vpack.c.b16 %v4770, %v4768
    %v4809 = vpack.c.b16 %v4773, %v4771
    %v4810 = vpack.c.b16 %v4774, %v4772
    %v4811 = vpack.c.b16 %v4777, %v4775
    %v4812 = vpack.c.b16 %v4778, %v4776
    %v4813 = vpack.c.b16 %v4781, %v4779
    %v4814 = vpack.c.b16 %v4782, %v4780
    %v4815 = vpack.c.b16 %v4785, %v4783
    %v4816 = vpack.c.b16 %v4786, %v4784
    %v4817 = vpack.c.b16 %v4789, %v4787
    %v4818 = vpack.c.b16 %v4790, %v4788
    %v4819 = vpack.c.b16 %v4793, %v4791
    %v4820 = vpack.c.b16 %v4794, %v4792
    %v4821 = vpack.c.b16 %v4797, %v4795
    %v4822 = vpack.c.b16 %v4798, %v4796
    %v4848 = vsel %vm2336, %v4658, 0
    %v4851 = vsel %vm2336, %v4660, 0
    %v4854 = vsel %vm2336, %v4662, 0
    %v4857 = vsel %vm2336, %v4664, 0
    %v4860 = vsel %vm2336, %v4666, 0
    %v4863 = vsel %vm2336, %v4668, 0
    %v4866 = vsel %vm2336, %v4670, 0
    %v4869 = vsel %vm2336, %v4672, 0
    %v4872 = vsel %vm2336, %v4674, 0
    %v4875 = vsel %vm2336, %v4676, 0
    %v4878 = vsel %vm2336, %v4678, 0
    %v4881 = vsel %vm2336, %v4680, 0
    %v4884 = vsel %vm2336, %v4682, 0
    %v4887 = vsel %vm2336, %v4684, 0
    %v4890 = vsel %vm2336, %v4686, 0
    %v4893 = vsel %vm2336, %v4688, 0
    %4895 = vmatprep.subr.bf16.mxu0 %v4800
    %4896 = vmatpush1.bf16.msra.mxu0 %v4799
    %4897 = vmatprep.subr.bf16.mxu0 %v4802
    %4898 = vmatpush1.bf16.msra.mxu0 %v4801
    %4899 = vmatprep.subr.bf16.mxu0 %v4804
    %4900 = vmatpush1.bf16.msra.mxu0 %v4803
    %4901 = vmatprep.subr.bf16.mxu0 %v4806
    %4902 = vmatpush1.bf16.msra.mxu0 %v4805
    %4903 = vmatprep.subr.bf16.mxu0 %v4808
    %4904 = vmatpush1.bf16.msra.mxu0 %v4807
    %4905 = vmatprep.subr.bf16.mxu0 %v4810
    %4906 = vmatpush1.bf16.msra.mxu0 %v4809
    %4907 = vmatprep.subr.bf16.mxu0 %v4812
    %4908 = vmatpush1.bf16.msra.mxu0 %v4811
    %4909 = vmatprep.subr.bf16.mxu0 %v4814
    %4910 = vmatpush1.bf16.msra.mxu0 %v4813
    %4911 = vmatprep.subr.bf16.mxu0 %v4816
    %4912 = vmatpush1.bf16.msra.mxu0 %v4815
    %4913 = vmatprep.subr.bf16.mxu0 %v4818
    %4914 = vmatpush1.bf16.msra.mxu0 %v4817
    %4915 = vmatprep.subr.bf16.mxu0 %v4820
    %4916 = vmatpush1.bf16.msra.mxu0 %v4819
    %4917 = vmatprep.subr.bf16.mxu0 %v4822
    %4918 = vmatpush1.bf16.msra.mxu0 %v4821
    %4919 = vmatprep.subr.bf16.mxu0 0
    %4920 = vmatpush1.bf16.msra.mxu0 0
    %4921 = vmatprep.subr.bf16.mxu0 0
    %4922 = vmatpush1.bf16.msra.mxu0 0
    %4923 = vmatprep.subr.bf16.mxu0 0
    %4924 = vmatpush1.bf16.msra.mxu0 0
    %4925 = vmatprep.subr.bf16.mxu0 0
    %4926 = vmatpush1.bf16.msra.mxu0 0
    %4927 = vmatprep.mubr.bf16.mxu0 %v4848
    %4928 = vmatmul.mubr.bf16.gmra.mrb[0].mxu0 %v4657
    %v4929 = vpop.f32.mrb[0].mxu0
    %v4930 = vadd.f32 %v4720, %v4929
    %v4931 = vpop.f32.mrb[0].mxu0
    %v4932 = vadd.f32 %v4724, %v4931
    %v4933 = vpop.f32.mrb[0].mxu0
    %v4934 = vadd.f32 %v4720, %v4933
    %v4935 = vpop.f32.mrb[0].mxu0
    %v4936 = vadd.f32 %v4724, %v4935
    %4937 = vmatprep.mubr.bf16.mxu0 %v4851
    %4938 = vmatmul.mubr.bf16.gmra.mrb[0].mxu0 %v4659
    %v4939 = vpop.f32.mrb[0].mxu0
    %v4940 = vadd.f32 %v4720, %v4939
    %v4941 = vpop.f32.mrb[0].mxu0
    %v4942 = vadd.f32 %v4724, %v4941
    %v4943 = vpop.f32.mrb[0].mxu0
    %v4944 = vadd.f32 %v4720, %v4943
    %v4945 = vpop.f32.mrb[0].mxu0
    %v4946 = vadd.f32 %v4724, %v4945
    %4947 = vmatprep.mubr.bf16.mxu0 %v4854
    %4948 = vmatmul.mubr.bf16.gmra.mrb[0].mxu0 %v4661
    %v4949 = vpop.f32.mrb[0].mxu0
    %v4950 = vadd.f32 %v4720, %v4949
    %v4951 = vpop.f32.mrb[0].mxu0
    %v4952 = vadd.f32 %v4724, %v4951
    %v4953 = vpop.f32.mrb[0].mxu0
    %v4954 = vadd.f32 %v4720, %v4953
    %v4955 = vpop.f32.mrb[0].mxu0
    %v4956 = vadd.f32 %v4724, %v4955
    %4957 = vmatprep.mubr.bf16.mxu0 %v4857
    %4958 = vmatmul.mubr.bf16.gmra.mrb[0].mxu0 %v4663
    %v4959 = vpop.f32.mrb[0].mxu0
    %v4960 = vadd.f32 %v4720, %v4959
    %v4961 = vpop.f32.mrb[0].mxu0
    %v4962 = vadd.f32 %v4724, %v4961
    %v4963 = vpop.f32.mrb[0].mxu0
    %v4964 = vadd.f32 %v4720, %v4963
    %v4965 = vpop.f32.mrb[0].mxu0
    %v4966 = vadd.f32 %v4724, %v4965
    %4967 = vmatprep.mubr.bf16.mxu0 %v4860
    %4968 = vmatmul.mubr.bf16.gmra.mrb[0].mxu0 %v4665
    %v4969 = vpop.f32.mrb[0].mxu0
    %v4970 = vadd.f32 %v4720, %v4969
    %v4971 = vpop.f32.mrb[0].mxu0
    %v4972 = vadd.f32 %v4724, %v4971
    %v4973 = vpop.f32.mrb[0].mxu0
    %v4974 = vadd.f32 %v4720, %v4973
    %v4975 = vpop.f32.mrb[0].mxu0
    %v4976 = vadd.f32 %v4724, %v4975
    %4977 = vmatprep.mubr.bf16.mxu0 %v4863
    %4978 = vmatmul.mubr.bf16.gmra.mrb[0].mxu0 %v4667
    %v4979 = vpop.f32.mrb[0].mxu0
    %v4980 = vadd.f32 %v4720, %v4979
    %v4981 = vpop.f32.mrb[0].mxu0
    %v4982 = vadd.f32 %v4724, %v4981
    %v4983 = vpop.f32.mrb[0].mxu0
    %v4984 = vadd.f32 %v4720, %v4983
    %v4985 = vpop.f32.mrb[0].mxu0
    %v4986 = vadd.f32 %v4724, %v4985
    %4987 = vmatprep.mubr.bf16.mxu0 %v4866
    %4988 = vmatmul.mubr.bf16.gmra.mrb[0].mxu0 %v4669
    %v4989 = vpop.f32.mrb[0].mxu0
    %v4990 = vadd.f32 %v4720, %v4989
    %v4991 = vpop.f32.mrb[0].mxu0
    %v4992 = vadd.f32 %v4724, %v4991
    %v4993 = vpop.f32.mrb[0].mxu0
    %v4994 = vadd.f32 %v4720, %v4993
    %v4995 = vpop.f32.mrb[0].mxu0
    %v4996 = vadd.f32 %v4724, %v4995
    %4997 = vmatprep.mubr.bf16.mxu0 %v4869
    %4998 = vmatmul.mubr.bf16.gmra.mrb[0].mxu0 %v4671
    %v4999 = vpop.f32.mrb[0].mxu0
    %v5000 = vadd.f32 %v4720, %v4999
    %v5001 = vpop.f32.mrb[0].mxu0
    %v5002 = vadd.f32 %v4724, %v5001
    %v5003 = vpop.f32.mrb[0].mxu0
    %v5004 = vadd.f32 %v4720, %v5003
    %v5005 = vpop.f32.mrb[0].mxu0
    %v5006 = vadd.f32 %v4724, %v5005
    %5007 = vmatprep.mubr.bf16.mxu0 %v4872
    %5008 = vmatmul.mubr.bf16.gmra.mrb[0].mxu0 %v4673
    %v5009 = vpop.f32.mrb[0].mxu0
    %v5010 = vadd.f32 %v4720, %v5009
    %v5011 = vpop.f32.mrb[0].mxu0
    %v5012 = vadd.f32 %v4724, %v5011
    %v5013 = vpop.f32.mrb[0].mxu0
    %v5014 = vadd.f32 %v4720, %v5013
    %v5015 = vpop.f32.mrb[0].mxu0
    %v5016 = vadd.f32 %v4724, %v5015
    %5017 = vmatprep.mubr.bf16.mxu0 %v4875
    %5018 = vmatmul.mubr.bf16.gmra.mrb[0].mxu0 %v4675
    %v5019 = vpop.f32.mrb[0].mxu0
    %v5020 = vadd.f32 %v4720, %v5019
    %v5021 = vpop.f32.mrb[0].mxu0
    %v5022 = vadd.f32 %v4724, %v5021
    %v5023 = vpop.f32.mrb[0].mxu0
    %v5024 = vadd.f32 %v4720, %v5023
    %v5025 = vpop.f32.mrb[0].mxu0
    %v5026 = vadd.f32 %v4724, %v5025
    %5027 = vmatprep.mubr.bf16.mxu0 %v4878
    %5028 = vmatmul.mubr.bf16.gmra.mrb[0].mxu0 %v4677
    %v5029 = vpop.f32.mrb[0].mxu0
    %v5030 = vadd.f32 %v4720, %v5029
    %v5031 = vpop.f32.mrb[0].mxu0
    %v5032 = vadd.f32 %v4724, %v5031
    %v5033 = vpop.f32.mrb[0].mxu0
    %v5034 = vadd.f32 %v4720, %v5033
    %v5035 = vpop.f32.mrb[0].mxu0
    %v5036 = vadd.f32 %v4724, %v5035
    %5037 = vmatprep.mubr.bf16.mxu0 %v4881
    %5038 = vmatmul.mubr.bf16.gmra.mrb[0].mxu0 %v4679
    %v5039 = vpop.f32.mrb[0].mxu0
    %v5040 = vadd.f32 %v4720, %v5039
    %v5041 = vpop.f32.mrb[0].mxu0
    %v5042 = vadd.f32 %v4724, %v5041
    %v5043 = vpop.f32.mrb[0].mxu0
    %v5044 = vadd.f32 %v4720, %v5043
    %v5045 = vpop.f32.mrb[0].mxu0
    %v5046 = vadd.f32 %v4724, %v5045
    %5047 = vmatprep.mubr.bf16.mxu0 %v4884
    %5048 = vmatmul.mubr.bf16.gmra.mrb[0].mxu0 %v4681
    %v5049 = vpop.f32.mrb[0].mxu0
    %v5050 = vadd.f32 %v4720, %v5049
    %v5051 = vpop.f32.mrb[0].mxu0
    %v5052 = vadd.f32 %v4724, %v5051
    %v5053 = vpop.f32.mrb[0].mxu0
    %v5054 = vadd.f32 %v4720, %v5053
    %v5055 = vpop.f32.mrb[0].mxu0
    %v5056 = vadd.f32 %v4724, %v5055
    %5057 = vmatprep.mubr.bf16.mxu0 %v4887
    %5058 = vmatmul.mubr.bf16.gmra.mrb[0].mxu0 %v4683
    %v5059 = vpop.f32.mrb[0].mxu0
    %v5060 = vadd.f32 %v4720, %v5059
    %v5061 = vpop.f32.mrb[0].mxu0
    %v5062 = vadd.f32 %v4724, %v5061
    %v5063 = vpop.f32.mrb[0].mxu0
    %v5064 = vadd.f32 %v4720, %v5063
    %v5065 = vpop.f32.mrb[0].mxu0
    %v5066 = vadd.f32 %v4724, %v5065
    %5067 = vmatprep.mubr.bf16.mxu0 %v4890
    %5068 = vmatmul.mubr.bf16.gmra.mrb[0].mxu0 %v4685
    %v5069 = vpop.f32.mrb[0].mxu0
    %v5070 = vadd.f32 %v4720, %v5069
    %v5071 = vpop.f32.mrb[0].mxu0
    %v5072 = vadd.f32 %v4724, %v5071
    %v5073 = vpop.f32.mrb[0].mxu0
    %v5074 = vadd.f32 %v4720, %v5073
    %v5075 = vpop.f32.mrb[0].mxu0
    %v5076 = vadd.f32 %v4724, %v5075
    %5077 = vmatprep.mubr.bf16.mxu0 %v4893
    %5078 = vmatmul.mubr.bf16.gmra.mrb[0].mxu0 %v4687
    %v5079 = vpop.f32.mrb[0].mxu0
    %v5080 = vadd.f32 %v4720, %v5079
    %v5081 = vpop.f32.mrb[0].mxu0
    %v5082 = vadd.f32 %v4724, %v5081
    %v5083 = vpop.f32.mrb[0].mxu0
    %v5084 = vadd.f32 %v4720, %v5083
    %v5085 = vpop.f32.mrb[0].mxu0
    %v5086 = vadd.f32 %v4724, %v5085
    %5087 = vdwg.mxu0
    %v5088 = vpack.c.bf16 %v4934, %v4930
    %v5089 = vpack.c.bf16 %v4936, %v4932
    %v5090 = vpack.c.bf16 %v4944, %v4940
    %v5091 = vpack.c.bf16 %v4946, %v4942
    %v5092 = vpack.c.bf16 %v4954, %v4950
    %v5093 = vpack.c.bf16 %v4956, %v4952
    %v5094 = vpack.c.bf16 %v4964, %v4960
    %v5095 = vpack.c.bf16 %v4966, %v4962
    %v5096 = vpack.c.bf16 %v4974, %v4970
    %v5097 = vpack.c.bf16 %v4976, %v4972
    %v5098 = vpack.c.bf16 %v4984, %v4980
    %v5099 = vpack.c.bf16 %v4986, %v4982
    %v5100 = vpack.c.bf16 %v4994, %v4990
    %v5101 = vpack.c.bf16 %v4996, %v4992
    %v5102 = vpack.c.bf16 %v5004, %v5000
    %v5103 = vpack.c.bf16 %v5006, %v5002
    %v5104 = vpack.c.bf16 %v5014, %v5010
    %v5105 = vpack.c.bf16 %v5016, %v5012
    %v5106 = vpack.c.bf16 %v5024, %v5020
    %v5107 = vpack.c.bf16 %v5026, %v5022
    %v5108 = vpack.c.bf16 %v5034, %v5030
    %v5109 = vpack.c.bf16 %v5036, %v5032
    %v5110 = vpack.c.bf16 %v5044, %v5040
    %v5111 = vpack.c.bf16 %v5046, %v5042
    %v5112 = vpack.c.bf16 %v5054, %v5050
    %v5113 = vpack.c.bf16 %v5056, %v5052
    %v5114 = vpack.c.bf16 %v5064, %v5060
    %v5115 = vpack.c.bf16 %v5066, %v5062
    %v5116 = vpack.c.bf16 %v5074, %v5070
    %v5117 = vpack.c.bf16 %v5076, %v5072
    %v5118 = vpack.c.bf16 %v5084, %v5080
    %v5119 = vpack.c.bf16 %v5086, %v5082
    %s5120 = scalar_lea.vmem [#allocation6], 1536
    %v5121 = vld [vmem:[%s5120] sm:$0xff]
    %v5122 = vld [vmem:[%s5120 + $0x8] sm:$0xff]
    %v5123 = vld [vmem:[%s5120 + $0x10] sm:$0xff]
    %v5124 = vld [vmem:[%s5120 + $0x18] sm:$0xff]
    %v5125 = vld [vmem:[%s5120 + $0x20] sm:$0xff]
    %v5126 = vld [vmem:[%s5120 + $0x28] sm:$0xff]
    %v5127 = vld [vmem:[%s5120 + $0x30] sm:$0xff]
    %v5128 = vld [vmem:[%s5120 + $0x38] sm:$0xff]
    %v5129 = vld [vmem:[%s5120 + $0x40] sm:$0xff]
    %v5130 = vld [vmem:[%s5120 + $0x48] sm:$0xff]
    %v5131 = vld [vmem:[%s5120 + $0x50] sm:$0xff]
    %v5132 = vld [vmem:[%s5120 + $0x58] sm:$0xff]
    %v5133 = vld [vmem:[%s5120 + $0x60] sm:$0xff]
    %v5134 = vld [vmem:[%s5120 + $0x68] sm:$0xff]
    %v5135 = vld [vmem:[%s5120 + $0x70] sm:$0xff]
    %v5136 = vld [vmem:[%s5120 + $0x78] sm:$0xff]
    %v5137 = vld [vmem:[%s5120 + $0x80] sm:$0xff]
    %v5138 = vld [vmem:[%s5120 + $0x88] sm:$0xff]
    %v5139 = vld [vmem:[%s5120 + $0x90] sm:$0xff]
    %v5140 = vld [vmem:[%s5120 + $0x98] sm:$0xff]
    %v5141 = vld [vmem:[%s5120 + $0xa0] sm:$0xff]
    %v5142 = vld [vmem:[%s5120 + $0xa8] sm:$0xff]
    %v5143 = vld [vmem:[%s5120 + $0xb0] sm:$0xff]
    %v5144 = vld [vmem:[%s5120 + $0xb8] sm:$0xff]
    %v5145 = vld [vmem:[%s5120 + $0xc0] sm:$0xff]
    %v5146 = vld [vmem:[%s5120 + $0xc8] sm:$0xff]
    %v5147 = vld [vmem:[%s5120 + $0xd0] sm:$0xff]
    %v5148 = vld [vmem:[%s5120 + $0xd8] sm:$0xff]
    %v5149 = vld [vmem:[%s5120 + $0xe0] sm:$0xff]
    %v5150 = vld [vmem:[%s5120 + $0xe8] sm:$0xff]
    %v5151 = vld [vmem:[%s5120 + $0xf0] sm:$0xff]
    %v5152 = vld [vmem:[%s5120 + $0xf8] sm:$0xff]
    %v5185 = vunpack.c.l.b16 %v5121
    %v5186 = vunpack.c.h.b16 %v5121
    %v5187 = vunpack.c.l.b16 %v5122
    %v5188 = vunpack.c.h.b16 %v5122
    %v5189 = vunpack.c.l.b16 %v5123
    %v5190 = vunpack.c.h.b16 %v5123
    %v5191 = vunpack.c.l.b16 %v5124
    %v5192 = vunpack.c.h.b16 %v5124
    %v5193 = vunpack.c.l.b16 %v5125
    %v5194 = vunpack.c.h.b16 %v5125
    %v5195 = vunpack.c.l.b16 %v5126
    %v5196 = vunpack.c.h.b16 %v5126
    %v5197 = vunpack.c.l.b16 %v5127
    %v5198 = vunpack.c.h.b16 %v5127
    %v5199 = vunpack.c.l.b16 %v5128
    %v5200 = vunpack.c.h.b16 %v5128
    %v5201 = vunpack.c.l.b16 %v5129
    %v5202 = vunpack.c.h.b16 %v5129
    %v5203 = vunpack.c.l.b16 %v5130
    %v5204 = vunpack.c.h.b16 %v5130
    %v5205 = vunpack.c.l.b16 %v5131
    %v5206 = vunpack.c.h.b16 %v5131
    %v5207 = vunpack.c.l.b16 %v5132
    %v5208 = vunpack.c.h.b16 %v5132
    %v5209 = vunpack.c.l.b16 %v5133
    %v5210 = vunpack.c.h.b16 %v5133
    %v5211 = vunpack.c.l.b16 %v5134
    %v5212 = vunpack.c.h.b16 %v5134
    %v5213 = vunpack.c.l.b16 %v5135
    %v5214 = vunpack.c.h.b16 %v5135
    %v5215 = vunpack.c.l.b16 %v5136
    %v5216 = vunpack.c.h.b16 %v5136
    %v5217 = vunpack.c.l.b16 %v5137
    %v5218 = vunpack.c.h.b16 %v5137
    %v5219 = vunpack.c.l.b16 %v5138
    %v5220 = vunpack.c.h.b16 %v5138
    %v5221 = vunpack.c.l.b16 %v5139
    %v5222 = vunpack.c.h.b16 %v5139
    %v5223 = vunpack.c.l.b16 %v5140
    %v5224 = vunpack.c.h.b16 %v5140
    %v5225 = vunpack.c.l.b16 %v5141
    %v5226 = vunpack.c.h.b16 %v5141
    %v5227 = vunpack.c.l.b16 %v5142
    %v5228 = vunpack.c.h.b16 %v5142
    %v5229 = vunpack.c.l.b16 %v5143
    %v5230 = vunpack.c.h.b16 %v5143
    %v5231 = vunpack.c.l.b16 %v5144
    %v5232 = vunpack.c.h.b16 %v5144
    %v5233 = vunpack.c.l.b16 %v5145
    %v5234 = vunpack.c.h.b16 %v5145
    %v5235 = vunpack.c.l.b16 %v5146
    %v5236 = vunpack.c.h.b16 %v5146
    %v5237 = vunpack.c.l.b16 %v5147
    %v5238 = vunpack.c.h.b16 %v5147
    %v5239 = vunpack.c.l.b16 %v5148
    %v5240 = vunpack.c.h.b16 %v5148
    %v5241 = vunpack.c.l.b16 %v5149
    %v5242 = vunpack.c.h.b16 %v5149
    %v5243 = vunpack.c.l.b16 %v5150
    %v5244 = vunpack.c.h.b16 %v5150
    %v5245 = vunpack.c.l.b16 %v5151
    %v5246 = vunpack.c.h.b16 %v5151
    %v5247 = vunpack.c.l.b16 %v5152
    %v5248 = vunpack.c.h.b16 %v5152
    %v5249 = vpack.c.b16 %v5187, %v5185
    %v5250 = vpack.c.b16 %v5188, %v5186
    %v5251 = vpack.c.b16 %v5191, %v5189
    %v5252 = vpack.c.b16 %v5192, %v5190
    %v5253 = vpack.c.b16 %v5195, %v5193
    %v5254 = vpack.c.b16 %v5196, %v5194
    %v5255 = vpack.c.b16 %v5199, %v5197
    %v5256 = vpack.c.b16 %v5200, %v5198
    %v5257 = vpack.c.b16 %v5203, %v5201
    %v5258 = vpack.c.b16 %v5204, %v5202
    %v5259 = vpack.c.b16 %v5207, %v5205
    %v5260 = vpack.c.b16 %v5208, %v5206
    %v5261 = vpack.c.b16 %v5211, %v5209
    %v5262 = vpack.c.b16 %v5212, %v5210
    %v5263 = vpack.c.b16 %v5215, %v5213
    %v5264 = vpack.c.b16 %v5216, %v5214
    %v5265 = vpack.c.b16 %v5219, %v5217
    %v5266 = vpack.c.b16 %v5220, %v5218
    %v5267 = vpack.c.b16 %v5223, %v5221
    %v5268 = vpack.c.b16 %v5224, %v5222
    %v5269 = vpack.c.b16 %v5227, %v5225
    %v5270 = vpack.c.b16 %v5228, %v5226
    %v5271 = vpack.c.b16 %v5231, %v5229
    %v5272 = vpack.c.b16 %v5232, %v5230
    %v5273 = vpack.c.b16 %v5235, %v5233
    %v5274 = vpack.c.b16 %v5236, %v5234
    %v5275 = vpack.c.b16 %v5239, %v5237
    %v5276 = vpack.c.b16 %v5240, %v5238
    %v5277 = vpack.c.b16 %v5243, %v5241
    %v5278 = vpack.c.b16 %v5244, %v5242
    %v5279 = vpack.c.b16 %v5247, %v5245
    %v5280 = vpack.c.b16 %v5248, %v5246
    %5313 = vmatprep.subr.bf16.mxu0 0
    %5314 = vmatpush1.bf16.msra.mxu0 %v5088
    %5315 = vmatprep.subr.bf16.mxu0 0
    %5316 = vmatpush1.bf16.msra.mxu0 %v5090
    %5317 = vmatprep.subr.bf16.mxu0 0
    %5318 = vmatpush1.bf16.msra.mxu0 %v5092
    %5319 = vmatprep.subr.bf16.mxu0 0
    %5320 = vmatpush1.bf16.msra.mxu0 %v5094
    %5321 = vmatprep.subr.bf16.mxu0 0
    %5322 = vmatpush1.bf16.msra.mxu0 %v5096
    %5323 = vmatprep.subr.bf16.mxu0 0
    %5324 = vmatpush1.bf16.msra.mxu0 %v5098
    %5325 = vmatprep.subr.bf16.mxu0 0
    %5326 = vmatpush1.bf16.msra.mxu0 %v5100
    %5327 = vmatprep.subr.bf16.mxu0 0
    %5328 = vmatpush1.bf16.msra.mxu0 %v5102
    %5329 = vmatprep.subr.bf16.mxu0 0
    %5330 = vmatpush1.bf16.msra.mxu0 %v5104
    %5331 = vmatprep.subr.bf16.mxu0 0
    %5332 = vmatpush1.bf16.msra.mxu0 %v5106
    %5333 = vmatprep.subr.bf16.mxu0 0
    %5334 = vmatpush1.bf16.msra.mxu0 %v5108
    %5335 = vmatprep.subr.bf16.mxu0 0
    %5336 = vmatpush1.bf16.msra.mxu0 %v5110
    %5337 = vmatprep.subr.bf16.mxu0 0
    %5338 = vmatpush1.bf16.msra.mxu0 %v5112
    %5339 = vmatprep.subr.bf16.mxu0 0
    %5340 = vmatpush1.bf16.msra.mxu0 %v5114
    %5341 = vmatprep.subr.bf16.mxu0 0
    %5342 = vmatpush1.bf16.msra.mxu0 %v5116
    %5343 = vmatprep.subr.bf16.mxu0 0
    %5344 = vmatpush1.bf16.msra.mxu0 %v5118
    %5345 = vmatprep.mubr.bf16.mxu0 %v5250
    %5346 = vmatmul.mubr.bf16.gmra.mrb[0].mxu0 %v5249
    %v5347 = vpop.f32.mrb[0].mxu0
    %v5348 = vadd.f32 0.0, %v5347
    %v5349 = vpop.f32.mrb[0].mxu0
    %v5350 = vpop.f32.mrb[0].mxu0
    %v5351 = vadd.f32 0.0, %v5350
    %v5352 = vpop.f32.mrb[0].mxu0
    %5353 = vmatprep.mubr.bf16.mxu0 %v5252
    %5354 = vmatmul.mubr.bf16.gmra.mrb[0].mxu0 %v5251
    %v5355 = vpop.f32.mrb[0].mxu0
    %v5356 = vadd.f32 0.0, %v5355
    %v5357 = vpop.f32.mrb[0].mxu0
    %v5358 = vpop.f32.mrb[0].mxu0
    %v5359 = vadd.f32 0.0, %v5358
    %v5360 = vpop.f32.mrb[0].mxu0
    %5361 = vmatprep.mubr.bf16.mxu0 %v5254
    %5362 = vmatmul.mubr.bf16.gmra.mrb[0].mxu0 %v5253
    %v5363 = vpop.f32.mrb[0].mxu0
    %v5364 = vadd.f32 0.0, %v5363
    %v5365 = vpop.f32.mrb[0].mxu0
    %v5366 = vpop.f32.mrb[0].mxu0
    %v5367 = vadd.f32 0.0, %v5366
    %v5368 = vpop.f32.mrb[0].mxu0
    %5369 = vmatprep.mubr.bf16.mxu0 %v5256
    %5370 = vmatmul.mubr.bf16.gmra.mrb[0].mxu0 %v5255
    %v5371 = vpop.f32.mrb[0].mxu0
    %v5372 = vadd.f32 0.0, %v5371
    %v5373 = vpop.f32.mrb[0].mxu0
    %v5374 = vpop.f32.mrb[0].mxu0
    %v5375 = vadd.f32 0.0, %v5374
    %v5376 = vpop.f32.mrb[0].mxu0
    %5377 = vmatprep.mubr.bf16.mxu0 %v5258
    %5378 = vmatmul.mubr.bf16.gmra.mrb[0].mxu0 %v5257
    %v5379 = vpop.f32.mrb[0].mxu0
    %v5380 = vadd.f32 0.0, %v5379
    %v5381 = vpop.f32.mrb[0].mxu0
    %v5382 = vpop.f32.mrb[0].mxu0
    %v5383 = vadd.f32 0.0, %v5382
    %v5384 = vpop.f32.mrb[0].mxu0
    %5385 = vmatprep.mubr.bf16.mxu0 %v5260
    %5386 = vmatmul.mubr.bf16.gmra.mrb[0].mxu0 %v5259
    %v5387 = vpop.f32.mrb[0].mxu0
    %v5388 = vadd.f32 0.0, %v5387
    %v5389 = vpop.f32.mrb[0].mxu0
    %v5390 = vpop.f32.mrb[0].mxu0
    %v5391 = vadd.f32 0.0, %v5390
    %v5392 = vpop.f32.mrb[0].mxu0
    %5393 = vmatprep.mubr.bf16.mxu0 %v5262
    %5394 = vmatmul.mubr.bf16.gmra.mrb[0].mxu0 %v5261
    %v5395 = vpop.f32.mrb[0].mxu0
    %v5396 = vadd.f32 0.0, %v5395
    %v5397 = vpop.f32.mrb[0].mxu0
    %v5398 = vpop.f32.mrb[0].mxu0
    %v5399 = vadd.f32 0.0, %v5398
    %v5400 = vpop.f32.mrb[0].mxu0
    %5401 = vmatprep.mubr.bf16.mxu0 %v5264
    %5402 = vmatmul.mubr.bf16.gmra.mrb[0].mxu0 %v5263
    %v5403 = vpop.f32.mrb[0].mxu0
    %v5404 = vadd.f32 0.0, %v5403
    %v5405 = vpop.f32.mrb[0].mxu0
    %v5406 = vpop.f32.mrb[0].mxu0
    %v5407 = vadd.f32 0.0, %v5406
    %v5408 = vpop.f32.mrb[0].mxu0
    %5409 = vmatprep.mubr.bf16.mxu0 %v5266
    %5410 = vmatmul.mubr.bf16.gmra.mrb[0].mxu0 %v5265
    %v5411 = vpop.f32.mrb[0].mxu0
    %v5412 = vadd.f32 0.0, %v5411
    %v5413 = vpop.f32.mrb[0].mxu0
    %v5414 = vpop.f32.mrb[0].mxu0
    %v5415 = vadd.f32 0.0, %v5414
    %v5416 = vpop.f32.mrb[0].mxu0
    %5417 = vmatprep.mubr.bf16.mxu0 %v5268
    %5418 = vmatmul.mubr.bf16.gmra.mrb[0].mxu0 %v5267
    %v5419 = vpop.f32.mrb[0].mxu0
    %v5420 = vadd.f32 0.0, %v5419
    %v5421 = vpop.f32.mrb[0].mxu0
    %v5422 = vpop.f32.mrb[0].mxu0
    %v5423 = vadd.f32 0.0, %v5422
    %v5424 = vpop.f32.mrb[0].mxu0
    %5425 = vmatprep.mubr.bf16.mxu0 %v5270
    %5426 = vmatmul.mubr.bf16.gmra.mrb[0].mxu0 %v5269
    %v5427 = vpop.f32.mrb[0].mxu0
    %v5428 = vadd.f32 0.0, %v5427
    %v5429 = vpop.f32.mrb[0].mxu0
    %v5430 = vpop.f32.mrb[0].mxu0
    %v5431 = vadd.f32 0.0, %v5430
    %v5432 = vpop.f32.mrb[0].mxu0
    %5433 = vmatprep.mubr.bf16.mxu0 %v5272
    %5434 = vmatmul.mubr.bf16.gmra.mrb[0].mxu0 %v5271
    %v5435 = vpop.f32.mrb[0].mxu0
    %v5436 = vadd.f32 0.0, %v5435
    %v5437 = vpop.f32.mrb[0].mxu0
    %v5438 = vpop.f32.mrb[0].mxu0
    %v5439 = vadd.f32 0.0, %v5438
    %v5440 = vpop.f32.mrb[0].mxu0
    %5441 = vmatprep.mubr.bf16.mxu0 %v5274
    %5442 = vmatmul.mubr.bf16.gmra.mrb[0].mxu0 %v5273
    %v5443 = vpop.f32.mrb[0].mxu0
    %v5444 = vadd.f32 0.0, %v5443
    %v5445 = vpop.f32.mrb[0].mxu0
    %v5446 = vpop.f32.mrb[0].mxu0
    %v5447 = vadd.f32 0.0, %v5446
    %v5448 = vpop.f32.mrb[0].mxu0
    %5449 = vmatprep.mubr.bf16.mxu0 %v5276
    %5450 = vmatmul.mubr.bf16.gmra.mrb[0].mxu0 %v5275
    %v5451 = vpop.f32.mrb[0].mxu0
    %v5452 = vadd.f32 0.0, %v5451
    %v5453 = vpop.f32.mrb[0].mxu0
    %v5454 = vpop.f32.mrb[0].mxu0
    %v5455 = vadd.f32 0.0, %v5454
    %v5456 = vpop.f32.mrb[0].mxu0
    %5457 = vmatprep.mubr.bf16.mxu0 %v5278
    %5458 = vmatmul.mubr.bf16.gmra.mrb[0].mxu0 %v5277
    %v5459 = vpop.f32.mrb[0].mxu0
    %v5460 = vadd.f32 0.0, %v5459
    %v5461 = vpop.f32.mrb[0].mxu0
    %v5462 = vpop.f32.mrb[0].mxu0
    %v5463 = vadd.f32 0.0, %v5462
    %v5464 = vpop.f32.mrb[0].mxu0
    %5465 = vmatprep.mubr.bf16.mxu0 %v5280
    %5466 = vmatmul.mubr.bf16.gmra.mrb[0].mxu0 %v5279
    %v5467 = vpop.f32.mrb[0].mxu0
    %v5468 = vadd.f32 0.0, %v5467
    %v5469 = vpop.f32.mrb[0].mxu0
    %v5470 = vpop.f32.mrb[0].mxu0
    %v5471 = vadd.f32 0.0, %v5470
    %v5472 = vpop.f32.mrb[0].mxu0
    %5473 = vdwg.mxu0
    %s5474 = scalar_lea.vmem [#allocation6], 1792
    %v5475 = vld [vmem:[%s5474] sm:$0xff]
    %v5476 = vld [vmem:[%s5474 + $0x8] sm:$0xff]
    %v5477 = vld [vmem:[%s5474 + $0x10] sm:$0xff]
    %v5478 = vld [vmem:[%s5474 + $0x18] sm:$0xff]
    %v5479 = vld [vmem:[%s5474 + $0x20] sm:$0xff]
    %v5480 = vld [vmem:[%s5474 + $0x28] sm:$0xff]
    %v5481 = vld [vmem:[%s5474 + $0x30] sm:$0xff]
    %v5482 = vld [vmem:[%s5474 + $0x38] sm:$0xff]
    %v5483 = vld [vmem:[%s5474 + $0x40] sm:$0xff]
    %v5484 = vld [vmem:[%s5474 + $0x48] sm:$0xff]
    %v5485 = vld [vmem:[%s5474 + $0x50] sm:$0xff]
    %v5486 = vld [vmem:[%s5474 + $0x58] sm:$0xff]
    %v5487 = vld [vmem:[%s5474 + $0x60] sm:$0xff]
    %v5488 = vld [vmem:[%s5474 + $0x68] sm:$0xff]
    %v5489 = vld [vmem:[%s5474 + $0x70] sm:$0xff]
    %v5490 = vld [vmem:[%s5474 + $0x78] sm:$0xff]
    %v5491 = vld [vmem:[%s5474 + $0x80] sm:$0xff]
    %v5492 = vld [vmem:[%s5474 + $0x88] sm:$0xff]
    %v5493 = vld [vmem:[%s5474 + $0x90] sm:$0xff]
    %v5494 = vld [vmem:[%s5474 + $0x98] sm:$0xff]
    %v5495 = vld [vmem:[%s5474 + $0xa0] sm:$0xff]
    %v5496 = vld [vmem:[%s5474 + $0xa8] sm:$0xff]
    %v5497 = vld [vmem:[%s5474 + $0xb0] sm:$0xff]
    %v5498 = vld [vmem:[%s5474 + $0xb8] sm:$0xff]
    %v5499 = vld [vmem:[%s5474 + $0xc0] sm:$0xff]
    %v5500 = vld [vmem:[%s5474 + $0xc8] sm:$0xff]
    %v5501 = vld [vmem:[%s5474 + $0xd0] sm:$0xff]
    %v5502 = vld [vmem:[%s5474 + $0xd8] sm:$0xff]
    %v5503 = vld [vmem:[%s5474 + $0xe0] sm:$0xff]
    %v5504 = vld [vmem:[%s5474 + $0xe8] sm:$0xff]
    %v5505 = vld [vmem:[%s5474 + $0xf0] sm:$0xff]
    %v5506 = vld [vmem:[%s5474 + $0xf8] sm:$0xff]
    %v5539 = vunpack.c.l.b16 %v5475
    %v5540 = vunpack.c.h.b16 %v5475
    %v5541 = vunpack.c.l.b16 %v5476
    %v5542 = vunpack.c.h.b16 %v5476
    %v5543 = vunpack.c.l.b16 %v5477
    %v5544 = vunpack.c.h.b16 %v5477
    %v5545 = vunpack.c.l.b16 %v5478
    %v5546 = vunpack.c.h.b16 %v5478
    %v5547 = vunpack.c.l.b16 %v5479
    %v5548 = vunpack.c.h.b16 %v5479
    %v5549 = vunpack.c.l.b16 %v5480
    %v5550 = vunpack.c.h.b16 %v5480
    %v5551 = vunpack.c.l.b16 %v5481
    %v5552 = vunpack.c.h.b16 %v5481
    %v5553 = vunpack.c.l.b16 %v5482
    %v5554 = vunpack.c.h.b16 %v5482
    %v5555 = vunpack.c.l.b16 %v5483
    %v5556 = vunpack.c.h.b16 %v5483
    %v5557 = vunpack.c.l.b16 %v5484
    %v5558 = vunpack.c.h.b16 %v5484
    %v5559 = vunpack.c.l.b16 %v5485
    %v5560 = vunpack.c.h.b16 %v5485
    %v5561 = vunpack.c.l.b16 %v5486
    %v5562 = vunpack.c.h.b16 %v5486
    %v5563 = vunpack.c.l.b16 %v5487
    %v5564 = vunpack.c.h.b16 %v5487
    %v5565 = vunpack.c.l.b16 %v5488
    %v5566 = vunpack.c.h.b16 %v5488
    %v5567 = vunpack.c.l.b16 %v5489
    %v5568 = vunpack.c.h.b16 %v5489
    %v5569 = vunpack.c.l.b16 %v5490
    %v5570 = vunpack.c.h.b16 %v5490
    %v5571 = vunpack.c.l.b16 %v5491
    %v5572 = vunpack.c.h.b16 %v5491
    %v5573 = vunpack.c.l.b16 %v5492
    %v5574 = vunpack.c.h.b16 %v5492
    %v5575 = vunpack.c.l.b16 %v5493
    %v5576 = vunpack.c.h.b16 %v5493
    %v5577 = vunpack.c.l.b16 %v5494
    %v5578 = vunpack.c.h.b16 %v5494
    %v5579 = vunpack.c.l.b16 %v5495
    %v5580 = vunpack.c.h.b16 %v5495
    %v5581 = vunpack.c.l.b16 %v5496
    %v5582 = vunpack.c.h.b16 %v5496
    %v5583 = vunpack.c.l.b16 %v5497
    %v5584 = vunpack.c.h.b16 %v5497
    %v5585 = vunpack.c.l.b16 %v5498
    %v5586 = vunpack.c.h.b16 %v5498
    %v5587 = vunpack.c.l.b16 %v5499
    %v5588 = vunpack.c.h.b16 %v5499
    %v5589 = vunpack.c.l.b16 %v5500
    %v5590 = vunpack.c.h.b16 %v5500
    %v5591 = vunpack.c.l.b16 %v5501
    %v5592 = vunpack.c.h.b16 %v5501
    %v5593 = vunpack.c.l.b16 %v5502
    %v5594 = vunpack.c.h.b16 %v5502
    %v5595 = vunpack.c.l.b16 %v5503
    %v5596 = vunpack.c.h.b16 %v5503
    %v5597 = vunpack.c.l.b16 %v5504
    %v5598 = vunpack.c.h.b16 %v5504
    %v5599 = vunpack.c.l.b16 %v5505
    %v5600 = vunpack.c.h.b16 %v5505
    %v5601 = vunpack.c.l.b16 %v5506
    %v5602 = vunpack.c.h.b16 %v5506
    %v5603 = vpack.c.b16 %v5541, %v5539
    %v5604 = vpack.c.b16 %v5542, %v5540
    %v5605 = vpack.c.b16 %v5545, %v5543
    %v5606 = vpack.c.b16 %v5546, %v5544
    %v5607 = vpack.c.b16 %v5549, %v5547
    %v5608 = vpack.c.b16 %v5550, %v5548
    %v5609 = vpack.c.b16 %v5553, %v5551
    %v5610 = vpack.c.b16 %v5554, %v5552
    %v5611 = vpack.c.b16 %v5557, %v5555
    %v5612 = vpack.c.b16 %v5558, %v5556
    %v5613 = vpack.c.b16 %v5561, %v5559
    %v5614 = vpack.c.b16 %v5562, %v5560
    %v5615 = vpack.c.b16 %v5565, %v5563
    %v5616 = vpack.c.b16 %v5566, %v5564
    %v5617 = vpack.c.b16 %v5569, %v5567
    %v5618 = vpack.c.b16 %v5570, %v5568
    %v5619 = vpack.c.b16 %v5573, %v5571
    %v5620 = vpack.c.b16 %v5574, %v5572
    %v5621 = vpack.c.b16 %v5577, %v5575
    %v5622 = vpack.c.b16 %v5578, %v5576
    %v5623 = vpack.c.b16 %v5581, %v5579
    %v5624 = vpack.c.b16 %v5582, %v5580
    %v5625 = vpack.c.b16 %v5585, %v5583
    %v5626 = vpack.c.b16 %v5586, %v5584
    %v5627 = vpack.c.b16 %v5589, %v5587
    %v5628 = vpack.c.b16 %v5590, %v5588
    %v5629 = vpack.c.b16 %v5593, %v5591
    %v5630 = vpack.c.b16 %v5594, %v5592
    %v5631 = vpack.c.b16 %v5597, %v5595
    %v5632 = vpack.c.b16 %v5598, %v5596
    %v5633 = vpack.c.b16 %v5601, %v5599
    %v5634 = vpack.c.b16 %v5602, %v5600
    %5683 = vrot.lane.b32.xlu0 %v5088, 64
    %v5684 = vpop.permute.xlu0 %5683
    %5685 = vrot.lane.b32.xlu0 %v5090, 64
    %v5686 = vpop.permute.xlu0 %5685
    %5687 = vrot.lane.b32.xlu0 %v5092, 64
    %v5688 = vpop.permute.xlu0 %5687
    %5689 = vrot.lane.b32.xlu0 %v5094, 64
    %v5690 = vpop.permute.xlu0 %5689
    %5691 = vrot.lane.b32.xlu0 %v5096, 64
    %v5692 = vpop.permute.xlu0 %5691
    %5693 = vrot.lane.b32.xlu0 %v5098, 64
    %v5694 = vpop.permute.xlu0 %5693
    %5695 = vrot.lane.b32.xlu0 %v5100, 64
    %v5696 = vpop.permute.xlu0 %5695
    %5697 = vrot.lane.b32.xlu0 %v5102, 64
    %v5698 = vpop.permute.xlu0 %5697
    %5699 = vrot.lane.b32.xlu0 %v5104, 64
    %v5700 = vpop.permute.xlu0 %5699
    %5701 = vrot.lane.b32.xlu0 %v5106, 64
    %v5702 = vpop.permute.xlu0 %5701
    %5703 = vrot.lane.b32.xlu0 %v5108, 64
    %v5704 = vpop.permute.xlu0 %5703
    %5705 = vrot.lane.b32.xlu0 %v5110, 64
    %v5706 = vpop.permute.xlu0 %5705
    %5707 = vrot.lane.b32.xlu0 %v5112, 64
    %v5708 = vpop.permute.xlu0 %5707
    %5709 = vrot.lane.b32.xlu0 %v5114, 64
    %v5710 = vpop.permute.xlu0 %5709
    %5711 = vrot.lane.b32.xlu0 %v5116, 64
    %v5712 = vpop.permute.xlu0 %5711
    %5713 = vrot.lane.b32.xlu0 %v5118, 64
    %v5714 = vpop.permute.xlu0 %5713
    %5731 = vmatprep.subr.bf16.mxu0 0
    %5732 = vmatpush1.bf16.msra.mxu0 %v5684
    %5733 = vmatprep.subr.bf16.mxu0 0
    %5734 = vmatpush1.bf16.msra.mxu0 %v5686
    %5735 = vmatprep.subr.bf16.mxu0 0
    %5736 = vmatpush1.bf16.msra.mxu0 %v5688
    %5737 = vmatprep.subr.bf16.mxu0 0
    %5738 = vmatpush1.bf16.msra.mxu0 %v5690
    %5739 = vmatprep.subr.bf16.mxu0 0
    %5740 = vmatpush1.bf16.msra.mxu0 %v5692
    %5741 = vmatprep.subr.bf16.mxu0 0
    %5742 = vmatpush1.bf16.msra.mxu0 %v5694
    %5743 = vmatprep.subr.bf16.mxu0 0
    %5744 = vmatpush1.bf16.msra.mxu0 %v5696
    %5745 = vmatprep.subr.bf16.mxu0 0
    %5746 = vmatpush1.bf16.msra.mxu0 %v5698
    %5747 = vmatprep.subr.bf16.mxu0 0
    %5748 = vmatpush1.bf16.msra.mxu0 %v5700
    %5749 = vmatprep.subr.bf16.mxu0 0
    %5750 = vmatpush1.bf16.msra.mxu0 %v5702
    %5751 = vmatprep.subr.bf16.mxu0 0
    %5752 = vmatpush1.bf16.msra.mxu0 %v5704
    %5753 = vmatprep.subr.bf16.mxu0 0
    %5754 = vmatpush1.bf16.msra.mxu0 %v5706
    %5755 = vmatprep.subr.bf16.mxu0 0
    %5756 = vmatpush1.bf16.msra.mxu0 %v5708
    %5757 = vmatprep.subr.bf16.mxu0 0
    %5758 = vmatpush1.bf16.msra.mxu0 %v5710
    %5759 = vmatprep.subr.bf16.mxu0 0
    %5760 = vmatpush1.bf16.msra.mxu0 %v5712
    %5761 = vmatprep.subr.bf16.mxu0 0
    %5762 = vmatpush1.bf16.msra.mxu0 %v5714
    %5763 = vmatprep.mubr.bf16.mxu0 %v5604
    %5764 = vmatmul.mubr.bf16.gmra.mrb[0].mxu0 %v5603
    %v5765 = vpop.f32.mrb[0].mxu0
    %v5766 = vadd.f32 0.0, %v5765
    %v5767 = vpop.f32.mrb[0].mxu0
    %v5768 = vpop.f32.mrb[0].mxu0
    %v5769 = vadd.f32 0.0, %v5768
    %v5770 = vpop.f32.mrb[0].mxu0
    %5771 = vmatprep.mubr.bf16.mxu0 %v5606
    %5772 = vmatmul.mubr.bf16.gmra.mrb[0].mxu0 %v5605
    %v5773 = vpop.f32.mrb[0].mxu0
    %v5774 = vadd.f32 0.0, %v5773
    %v5775 = vpop.f32.mrb[0].mxu0
    %v5776 = vpop.f32.mrb[0].mxu0
    %v5777 = vadd.f32 0.0, %v5776
    %v5778 = vpop.f32.mrb[0].mxu0
    %5779 = vmatprep.mubr.bf16.mxu0 %v5608
    %5780 = vmatmul.mubr.bf16.gmra.mrb[0].mxu0 %v5607
    %v5781 = vpop.f32.mrb[0].mxu0
    %v5782 = vadd.f32 0.0, %v5781
    %v5783 = vpop.f32.mrb[0].mxu0
    %v5784 = vpop.f32.mrb[0].mxu0
    %v5785 = vadd.f32 0.0, %v5784
    %v5786 = vpop.f32.mrb[0].mxu0
    %5787 = vmatprep.mubr.bf16.mxu0 %v5610
    %5788 = vmatmul.mubr.bf16.gmra.mrb[0].mxu0 %v5609
    %v5789 = vpop.f32.mrb[0].mxu0
    %v5790 = vadd.f32 0.0, %v5789
    %v5791 = vpop.f32.mrb[0].mxu0
    %v5792 = vpop.f32.mrb[0].mxu0
    %v5793 = vadd.f32 0.0, %v5792
    %v5794 = vpop.f32.mrb[0].mxu0
    %5795 = vmatprep.mubr.bf16.mxu0 %v5612
    %5796 = vmatmul.mubr.bf16.gmra.mrb[0].mxu0 %v5611
    %v5797 = vpop.f32.mrb[0].mxu0
    %v5798 = vadd.f32 0.0, %v5797
    %v5799 = vpop.f32.mrb[0].mxu0
    %v5800 = vpop.f32.mrb[0].mxu0
    %v5801 = vadd.f32 0.0, %v5800
    %v5802 = vpop.f32.mrb[0].mxu0
    %5803 = vmatprep.mubr.bf16.mxu0 %v5614
    %5804 = vmatmul.mubr.bf16.gmra.mrb[0].mxu0 %v5613
    %v5805 = vpop.f32.mrb[0].mxu0
    %v5806 = vadd.f32 0.0, %v5805
    %v5807 = vpop.f32.mrb[0].mxu0
    %v5808 = vpop.f32.mrb[0].mxu0
    %v5809 = vadd.f32 0.0, %v5808
    %v5810 = vpop.f32.mrb[0].mxu0
    %5811 = vmatprep.mubr.bf16.mxu0 %v5616
    %5812 = vmatmul.mubr.bf16.gmra.mrb[0].mxu0 %v5615
    %v5813 = vpop.f32.mrb[0].mxu0
    %v5814 = vadd.f32 0.0, %v5813
    %v5815 = vpop.f32.mrb[0].mxu0
    %v5816 = vpop.f32.mrb[0].mxu0
    %v5817 = vadd.f32 0.0, %v5816
    %v5818 = vpop.f32.mrb[0].mxu0
    %5819 = vmatprep.mubr.bf16.mxu0 %v5618
    %5820 = vmatmul.mubr.bf16.gmra.mrb[0].mxu0 %v5617
    %v5821 = vpop.f32.mrb[0].mxu0
    %v5822 = vadd.f32 0.0, %v5821
    %v5823 = vpop.f32.mrb[0].mxu0
    %v5824 = vpop.f32.mrb[0].mxu0
    %v5825 = vadd.f32 0.0, %v5824
    %v5826 = vpop.f32.mrb[0].mxu0
    %5827 = vmatprep.mubr.bf16.mxu0 %v5620
    %5828 = vmatmul.mubr.bf16.gmra.mrb[0].mxu0 %v5619
    %v5829 = vpop.f32.mrb[0].mxu0
    %v5830 = vadd.f32 0.0, %v5829
    %v5831 = vpop.f32.mrb[0].mxu0
    %v5832 = vpop.f32.mrb[0].mxu0
    %v5833 = vadd.f32 0.0, %v5832
    %v5834 = vpop.f32.mrb[0].mxu0
    %5835 = vmatprep.mubr.bf16.mxu0 %v5622
    %5836 = vmatmul.mubr.bf16.gmra.mrb[0].mxu0 %v5621
    %v5837 = vpop.f32.mrb[0].mxu0
    %v5838 = vadd.f32 0.0, %v5837
    %v5839 = vpop.f32.mrb[0].mxu0
    %v5840 = vpop.f32.mrb[0].mxu0
    %v5841 = vadd.f32 0.0, %v5840
    %v5842 = vpop.f32.mrb[0].mxu0
    %5843 = vmatprep.mubr.bf16.mxu0 %v5624
    %5844 = vmatmul.mubr.bf16.gmra.mrb[0].mxu0 %v5623
    %v5845 = vpop.f32.mrb[0].mxu0
    %v5846 = vadd.f32 0.0, %v5845
    %v5847 = vpop.f32.mrb[0].mxu0
    %v5848 = vpop.f32.mrb[0].mxu0
    %v5849 = vadd.f32 0.0, %v5848
    %v5850 = vpop.f32.mrb[0].mxu0
    %5851 = vmatprep.mubr.bf16.mxu0 %v5626
    %5852 = vmatmul.mubr.bf16.gmra.mrb[0].mxu0 %v5625
    %v5853 = vpop.f32.mrb[0].mxu0
    %v5854 = vadd.f32 0.0, %v5853
    %v5855 = vpop.f32.mrb[0].mxu0
    %v5856 = vpop.f32.mrb[0].mxu0
    %v5857 = vadd.f32 0.0, %v5856
    %v5858 = vpop.f32.mrb[0].mxu0
    %5859 = vmatprep.mubr.bf16.mxu0 %v5628
    %5860 = vmatmul.mubr.bf16.gmra.mrb[0].mxu0 %v5627
    %v5861 = vpop.f32.mrb[0].mxu0
    %v5862 = vadd.f32 0.0, %v5861
    %v5863 = vpop.f32.mrb[0].mxu0
    %v5864 = vpop.f32.mrb[0].mxu0
    %v5865 = vadd.f32 0.0, %v5864
    %v5866 = vpop.f32.mrb[0].mxu0
    %5867 = vmatprep.mubr.bf16.mxu0 %v5630
    %5868 = vmatmul.mubr.bf16.gmra.mrb[0].mxu0 %v5629
    %v5869 = vpop.f32.mrb[0].mxu0
    %v5870 = vadd.f32 0.0, %v5869
    %v5871 = vpop.f32.mrb[0].mxu0
    %v5872 = vpop.f32.mrb[0].mxu0
    %v5873 = vadd.f32 0.0, %v5872
    %v5874 = vpop.f32.mrb[0].mxu0
    %5875 = vmatprep.mubr.bf16.mxu0 %v5632
    %5876 = vmatmul.mubr.bf16.gmra.mrb[0].mxu0 %v5631
    %v5877 = vpop.f32.mrb[0].mxu0
    %v5878 = vadd.f32 0.0, %v5877
    %v5879 = vpop.f32.mrb[0].mxu0
    %v5880 = vpop.f32.mrb[0].mxu0
    %v5881 = vadd.f32 0.0, %v5880
    %v5882 = vpop.f32.mrb[0].mxu0
    %5883 = vmatprep.mubr.bf16.mxu0 %v5634
    %5884 = vmatmul.mubr.bf16.gmra.mrb[0].mxu0 %v5633
    %v5885 = vpop.f32.mrb[0].mxu0
    %v5886 = vadd.f32 0.0, %v5885
    %v5887 = vpop.f32.mrb[0].mxu0
    %v5888 = vpop.f32.mrb[0].mxu0
    %v5889 = vadd.f32 0.0, %v5888
    %v5890 = vpop.f32.mrb[0].mxu0
    %5891 = vdwg.mxu0
    %s5892 = scalar_lea.vmem [#allocation6], 2048
    %v5893 = vld [vmem:[%s5892] sm:$0xff]
    %v5894 = vld [vmem:[%s5892 + $0x8] sm:$0xff]
    %v5895 = vld [vmem:[%s5892 + $0x10] sm:$0xff]
    %v5896 = vld [vmem:[%s5892 + $0x18] sm:$0xff]
    %v5897 = vld [vmem:[%s5892 + $0x20] sm:$0xff]
    %v5898 = vld [vmem:[%s5892 + $0x28] sm:$0xff]
    %v5899 = vld [vmem:[%s5892 + $0x30] sm:$0xff]
    %v5900 = vld [vmem:[%s5892 + $0x38] sm:$0xff]
    %v5901 = vld [vmem:[%s5892 + $0x40] sm:$0xff]
    %v5902 = vld [vmem:[%s5892 + $0x48] sm:$0xff]
    %v5903 = vld [vmem:[%s5892 + $0x50] sm:$0xff]
    %v5904 = vld [vmem:[%s5892 + $0x58] sm:$0xff]
    %v5905 = vld [vmem:[%s5892 + $0x60] sm:$0xff]
    %v5906 = vld [vmem:[%s5892 + $0x68] sm:$0xff]
    %v5907 = vld [vmem:[%s5892 + $0x70] sm:$0xff]
    %v5908 = vld [vmem:[%s5892 + $0x78] sm:$0xff]
    %v5909 = vld [vmem:[%s5892 + $0x80] sm:$0xff]
    %v5910 = vld [vmem:[%s5892 + $0x88] sm:$0xff]
    %v5911 = vld [vmem:[%s5892 + $0x90] sm:$0xff]
    %v5912 = vld [vmem:[%s5892 + $0x98] sm:$0xff]
    %v5913 = vld [vmem:[%s5892 + $0xa0] sm:$0xff]
    %v5914 = vld [vmem:[%s5892 + $0xa8] sm:$0xff]
    %v5915 = vld [vmem:[%s5892 + $0xb0] sm:$0xff]
    %v5916 = vld [vmem:[%s5892 + $0xb8] sm:$0xff]
    %v5917 = vld [vmem:[%s5892 + $0xc0] sm:$0xff]
    %v5918 = vld [vmem:[%s5892 + $0xc8] sm:$0xff]
    %v5919 = vld [vmem:[%s5892 + $0xd0] sm:$0xff]
    %v5920 = vld [vmem:[%s5892 + $0xd8] sm:$0xff]
    %v5921 = vld [vmem:[%s5892 + $0xe0] sm:$0xff]
    %v5922 = vld [vmem:[%s5892 + $0xe8] sm:$0xff]
    %v5923 = vld [vmem:[%s5892 + $0xf0] sm:$0xff]
    %v5924 = vld [vmem:[%s5892 + $0xf8] sm:$0xff]
    %v5957 = vunpack.c.l.b16 %v5893
    %v5958 = vunpack.c.h.b16 %v5893
    %v5959 = vunpack.c.l.b16 %v5894
    %v5960 = vunpack.c.h.b16 %v5894
    %v5961 = vunpack.c.l.b16 %v5895
    %v5962 = vunpack.c.h.b16 %v5895
    %v5963 = vunpack.c.l.b16 %v5896
    %v5964 = vunpack.c.h.b16 %v5896
    %v5965 = vunpack.c.l.b16 %v5897
    %v5966 = vunpack.c.h.b16 %v5897
    %v5967 = vunpack.c.l.b16 %v5898
    %v5968 = vunpack.c.h.b16 %v5898
    %v5969 = vunpack.c.l.b16 %v5899
    %v5970 = vunpack.c.h.b16 %v5899
    %v5971 = vunpack.c.l.b16 %v5900
    %v5972 = vunpack.c.h.b16 %v5900
    %v5973 = vunpack.c.l.b16 %v5901
    %v5974 = vunpack.c.h.b16 %v5901
    %v5975 = vunpack.c.l.b16 %v5902
    %v5976 = vunpack.c.h.b16 %v5902
    %v5977 = vunpack.c.l.b16 %v5903
    %v5978 = vunpack.c.h.b16 %v5903
    %v5979 = vunpack.c.l.b16 %v5904
    %v5980 = vunpack.c.h.b16 %v5904
    %v5981 = vunpack.c.l.b16 %v5905
    %v5982 = vunpack.c.h.b16 %v5905
    %v5983 = vunpack.c.l.b16 %v5906
    %v5984 = vunpack.c.h.b16 %v5906
    %v5985 = vunpack.c.l.b16 %v5907
    %v5986 = vunpack.c.h.b16 %v5907
    %v5987 = vunpack.c.l.b16 %v5908
    %v5988 = vunpack.c.h.b16 %v5908
    %v5989 = vunpack.c.l.b16 %v5909
    %v5990 = vunpack.c.h.b16 %v5909
    %v5991 = vunpack.c.l.b16 %v5910
    %v5992 = vunpack.c.h.b16 %v5910
    %v5993 = vunpack.c.l.b16 %v5911
    %v5994 = vunpack.c.h.b16 %v5911
    %v5995 = vunpack.c.l.b16 %v5912
    %v5996 = vunpack.c.h.b16 %v5912
    %v5997 = vunpack.c.l.b16 %v5913
    %v5998 = vunpack.c.h.b16 %v5913
    %v5999 = vunpack.c.l.b16 %v5914
    %v6000 = vunpack.c.h.b16 %v5914
    %v6001 = vunpack.c.l.b16 %v5915
    %v6002 = vunpack.c.h.b16 %v5915
    %v6003 = vunpack.c.l.b16 %v5916
    %v6004 = vunpack.c.h.b16 %v5916
    %v6005 = vunpack.c.l.b16 %v5917
    %v6006 = vunpack.c.h.b16 %v5917
    %v6007 = vunpack.c.l.b16 %v5918
    %v6008 = vunpack.c.h.b16 %v5918
    %v6009 = vunpack.c.l.b16 %v5919
    %v6010 = vunpack.c.h.b16 %v5919
    %v6011 = vunpack.c.l.b16 %v5920
    %v6012 = vunpack.c.h.b16 %v5920
    %v6013 = vunpack.c.l.b16 %v5921
    %v6014 = vunpack.c.h.b16 %v5921
    %v6015 = vunpack.c.l.b16 %v5922
    %v6016 = vunpack.c.h.b16 %v5922
    %v6017 = vunpack.c.l.b16 %v5923
    %v6018 = vunpack.c.h.b16 %v5923
    %v6019 = vunpack.c.l.b16 %v5924
    %v6020 = vunpack.c.h.b16 %v5924
    %v6021 = vpack.c.b16 %v5959, %v5957
    %v6022 = vpack.c.b16 %v5960, %v5958
    %v6023 = vpack.c.b16 %v5963, %v5961
    %v6024 = vpack.c.b16 %v5964, %v5962
    %v6025 = vpack.c.b16 %v5967, %v5965
    %v6026 = vpack.c.b16 %v5968, %v5966
    %v6027 = vpack.c.b16 %v5971, %v5969
    %v6028 = vpack.c.b16 %v5972, %v5970
    %v6029 = vpack.c.b16 %v5975, %v5973
    %v6030 = vpack.c.b16 %v5976, %v5974
    %v6031 = vpack.c.b16 %v5979, %v5977
    %v6032 = vpack.c.b16 %v5980, %v5978
    %v6033 = vpack.c.b16 %v5983, %v5981
    %v6034 = vpack.c.b16 %v5984, %v5982
    %v6035 = vpack.c.b16 %v5987, %v5985
    %v6036 = vpack.c.b16 %v5988, %v5986
    %v6037 = vpack.c.b16 %v5991, %v5989
    %v6038 = vpack.c.b16 %v5992, %v5990
    %v6039 = vpack.c.b16 %v5995, %v5993
    %v6040 = vpack.c.b16 %v5996, %v5994
    %v6041 = vpack.c.b16 %v5999, %v5997
    %v6042 = vpack.c.b16 %v6000, %v5998
    %v6043 = vpack.c.b16 %v6003, %v6001
    %v6044 = vpack.c.b16 %v6004, %v6002
    %v6045 = vpack.c.b16 %v6007, %v6005
    %v6046 = vpack.c.b16 %v6008, %v6006
    %v6047 = vpack.c.b16 %v6011, %v6009
    %v6048 = vpack.c.b16 %v6012, %v6010
    %v6049 = vpack.c.b16 %v6015, %v6013
    %v6050 = vpack.c.b16 %v6016, %v6014
    %v6051 = vpack.c.b16 %v6019, %v6017
    %v6052 = vpack.c.b16 %v6020, %v6018
    %6085 = vmatprep.subr.bf16.mxu0 0
    %6086 = vmatpush1.bf16.msra.mxu0 %v5089
    %6087 = vmatprep.subr.bf16.mxu0 0
    %6088 = vmatpush1.bf16.msra.mxu0 %v5091
    %6089 = vmatprep.subr.bf16.mxu0 0
    %6090 = vmatpush1.bf16.msra.mxu0 %v5093
    %6091 = vmatprep.subr.bf16.mxu0 0
    %6092 = vmatpush1.bf16.msra.mxu0 %v5095
    %6093 = vmatprep.subr.bf16.mxu0 0
    %6094 = vmatpush1.bf16.msra.mxu0 %v5097
    %6095 = vmatprep.subr.bf16.mxu0 0
    %6096 = vmatpush1.bf16.msra.mxu0 %v5099
    %6097 = vmatprep.subr.bf16.mxu0 0
    %6098 = vmatpush1.bf16.msra.mxu0 %v5101
    %6099 = vmatprep.subr.bf16.mxu0 0
    %6100 = vmatpush1.bf16.msra.mxu0 %v5103
    %6101 = vmatprep.subr.bf16.mxu0 0
    %6102 = vmatpush1.bf16.msra.mxu0 %v5105
    %6103 = vmatprep.subr.bf16.mxu0 0
    %6104 = vmatpush1.bf16.msra.mxu0 %v5107
    %6105 = vmatprep.subr.bf16.mxu0 0
    %6106 = vmatpush1.bf16.msra.mxu0 %v5109
    %6107 = vmatprep.subr.bf16.mxu0 0
    %6108 = vmatpush1.bf16.msra.mxu0 %v5111
    %6109 = vmatprep.subr.bf16.mxu0 0
    %6110 = vmatpush1.bf16.msra.mxu0 %v5113
    %6111 = vmatprep.subr.bf16.mxu0 0
    %6112 = vmatpush1.bf16.msra.mxu0 %v5115
    %6113 = vmatprep.subr.bf16.mxu0 0
    %6114 = vmatpush1.bf16.msra.mxu0 %v5117
    %6115 = vmatprep.subr.bf16.mxu0 0
    %6116 = vmatpush1.bf16.msra.mxu0 %v5119
    %6117 = vmatprep.mubr.bf16.mxu0 %v6022
    %6118 = vmatmul.mubr.bf16.gmra.mrb[0].mxu0 %v6021
    %v6119 = vpop.f32.mrb[0].mxu0
    %v6120 = vadd.f32 0.0, %v6119
    %v6121 = vpop.f32.mrb[0].mxu0
    %v6122 = vpop.f32.mrb[0].mxu0
    %v6123 = vadd.f32 0.0, %v6122
    %v6124 = vpop.f32.mrb[0].mxu0
    %6125 = vmatprep.mubr.bf16.mxu0 %v6024
    %6126 = vmatmul.mubr.bf16.gmra.mrb[0].mxu0 %v6023
    %v6127 = vpop.f32.mrb[0].mxu0
    %v6128 = vadd.f32 0.0, %v6127
    %v6129 = vpop.f32.mrb[0].mxu0
    %v6130 = vpop.f32.mrb[0].mxu0
    %v6131 = vadd.f32 0.0, %v6130
    %v6132 = vpop.f32.mrb[0].mxu0
    %6133 = vmatprep.mubr.bf16.mxu0 %v6026
    %6134 = vmatmul.mubr.bf16.gmra.mrb[0].mxu0 %v6025
    %v6135 = vpop.f32.mrb[0].mxu0
    %v6136 = vadd.f32 0.0, %v6135
    %v6137 = vpop.f32.mrb[0].mxu0
    %v6138 = vpop.f32.mrb[0].mxu0
    %v6139 = vadd.f32 0.0, %v6138
    %v6140 = vpop.f32.mrb[0].mxu0
    %6141 = vmatprep.mubr.bf16.mxu0 %v6028
    %6142 = vmatmul.mubr.bf16.gmra.mrb[0].mxu0 %v6027
    %v6143 = vpop.f32.mrb[0].mxu0
    %v6144 = vadd.f32 0.0, %v6143
    %v6145 = vpop.f32.mrb[0].mxu0
    %v6146 = vpop.f32.mrb[0].mxu0
    %v6147 = vadd.f32 0.0, %v6146
    %v6148 = vpop.f32.mrb[0].mxu0
    %6149 = vmatprep.mubr.bf16.mxu0 %v6030
    %6150 = vmatmul.mubr.bf16.gmra.mrb[0].mxu0 %v6029
    %v6151 = vpop.f32.mrb[0].mxu0
    %v6152 = vadd.f32 0.0, %v6151
    %v6153 = vpop.f32.mrb[0].mxu0
    %v6154 = vpop.f32.mrb[0].mxu0
    %v6155 = vadd.f32 0.0, %v6154
    %v6156 = vpop.f32.mrb[0].mxu0
    %6157 = vmatprep.mubr.bf16.mxu0 %v6032
    %6158 = vmatmul.mubr.bf16.gmra.mrb[0].mxu0 %v6031
    %v6159 = vpop.f32.mrb[0].mxu0
    %v6160 = vadd.f32 0.0, %v6159
    %v6161 = vpop.f32.mrb[0].mxu0
    %v6162 = vpop.f32.mrb[0].mxu0
    %v6163 = vadd.f32 0.0, %v6162
    %v6164 = vpop.f32.mrb[0].mxu0
    %6165 = vmatprep.mubr.bf16.mxu0 %v6034
    %6166 = vmatmul.mubr.bf16.gmra.mrb[0].mxu0 %v6033
    %v6167 = vpop.f32.mrb[0].mxu0
    %v6168 = vadd.f32 0.0, %v6167
    %v6169 = vpop.f32.mrb[0].mxu0
    %v6170 = vpop.f32.mrb[0].mxu0
    %v6171 = vadd.f32 0.0, %v6170
    %v6172 = vpop.f32.mrb[0].mxu0
    %6173 = vmatprep.mubr.bf16.mxu0 %v6036
    %6174 = vmatmul.mubr.bf16.gmra.mrb[0].mxu0 %v6035
    %v6175 = vpop.f32.mrb[0].mxu0
    %v6176 = vadd.f32 0.0, %v6175
    %v6177 = vpop.f32.mrb[0].mxu0
    %v6178 = vpop.f32.mrb[0].mxu0
    %v6179 = vadd.f32 0.0, %v6178
    %v6180 = vpop.f32.mrb[0].mxu0
    %6181 = vmatprep.mubr.bf16.mxu0 %v6038
    %6182 = vmatmul.mubr.bf16.gmra.mrb[0].mxu0 %v6037
    %v6183 = vpop.f32.mrb[0].mxu0
    %v6184 = vadd.f32 0.0, %v6183
    %v6185 = vpop.f32.mrb[0].mxu0
    %v6186 = vpop.f32.mrb[0].mxu0
    %v6187 = vadd.f32 0.0, %v6186
    %v6188 = vpop.f32.mrb[0].mxu0
    %6189 = vmatprep.mubr.bf16.mxu0 %v6040
    %6190 = vmatmul.mubr.bf16.gmra.mrb[0].mxu0 %v6039
    %v6191 = vpop.f32.mrb[0].mxu0
    %v6192 = vadd.f32 0.0, %v6191
    %v6193 = vpop.f32.mrb[0].mxu0
    %v6194 = vpop.f32.mrb[0].mxu0
    %v6195 = vadd.f32 0.0, %v6194
    %v6196 = vpop.f32.mrb[0].mxu0
    %6197 = vmatprep.mubr.bf16.mxu0 %v6042
    %6198 = vmatmul.mubr.bf16.gmra.mrb[0].mxu0 %v6041
    %v6199 = vpop.f32.mrb[0].mxu0
    %v6200 = vadd.f32 0.0, %v6199
    %v6201 = vpop.f32.mrb[0].mxu0
    %v6202 = vpop.f32.mrb[0].mxu0
    %v6203 = vadd.f32 0.0, %v6202
    %v6204 = vpop.f32.mrb[0].mxu0
    %6205 = vmatprep.mubr.bf16.mxu0 %v6044
    %6206 = vmatmul.mubr.bf16.gmra.mrb[0].mxu0 %v6043
    %v6207 = vpop.f32.mrb[0].mxu0
    %v6208 = vadd.f32 0.0, %v6207
    %v6209 = vpop.f32.mrb[0].mxu0
    %v6210 = vpop.f32.mrb[0].mxu0
    %v6211 = vadd.f32 0.0, %v6210
    %v6212 = vpop.f32.mrb[0].mxu0
    %6213 = vmatprep.mubr.bf16.mxu0 %v6046
    %6214 = vmatmul.mubr.bf16.gmra.mrb[0].mxu0 %v6045
    %v6215 = vpop.f32.mrb[0].mxu0
    %v6216 = vadd.f32 0.0, %v6215
    %v6217 = vpop.f32.mrb[0].mxu0
    %v6218 = vpop.f32.mrb[0].mxu0
    %v6219 = vadd.f32 0.0, %v6218
    %v6220 = vpop.f32.mrb[0].mxu0
    %6221 = vmatprep.mubr.bf16.mxu0 %v6048
    %6222 = vmatmul.mubr.bf16.gmra.mrb[0].mxu0 %v6047
    %v6223 = vpop.f32.mrb[0].mxu0
    %v6224 = vadd.f32 0.0, %v6223
    %v6225 = vpop.f32.mrb[0].mxu0
    %v6226 = vpop.f32.mrb[0].mxu0
    %v6227 = vadd.f32 0.0, %v6226
    %v6228 = vpop.f32.mrb[0].mxu0
    %6229 = vmatprep.mubr.bf16.mxu0 %v6050
    %6230 = vmatmul.mubr.bf16.gmra.mrb[0].mxu0 %v6049
    %v6231 = vpop.f32.mrb[0].mxu0
    %v6232 = vadd.f32 0.0, %v6231
    %v6233 = vpop.f32.mrb[0].mxu0
    %v6234 = vpop.f32.mrb[0].mxu0
    %v6235 = vadd.f32 0.0, %v6234
    %v6236 = vpop.f32.mrb[0].mxu0
    %6237 = vmatprep.mubr.bf16.mxu0 %v6052
    %6238 = vmatmul.mubr.bf16.gmra.mrb[0].mxu0 %v6051
    %v6239 = vpop.f32.mrb[0].mxu0
    %v6240 = vadd.f32 0.0, %v6239
    %v6241 = vpop.f32.mrb[0].mxu0
    %v6242 = vpop.f32.mrb[0].mxu0
    %v6243 = vadd.f32 0.0, %v6242
    %v6244 = vpop.f32.mrb[0].mxu0
    %6245 = vdwg.mxu0
    %6278 = vrot.lane.b32.xlu0 %v5766, 64
    %v6279 = vpop.permute.xlu0 %6278
    %6280 = vrot.lane.b32.xlu0 %v5769, 64
    %v6281 = vpop.permute.xlu0 %6280
    %6282 = vrot.lane.b32.xlu0 %v5774, 64
    %v6283 = vpop.permute.xlu0 %6282
    %6284 = vrot.lane.b32.xlu0 %v5777, 64
    %v6285 = vpop.permute.xlu0 %6284
    %6286 = vrot.lane.b32.xlu0 %v5782, 64
    %v6287 = vpop.permute.xlu0 %6286
    %6288 = vrot.lane.b32.xlu0 %v5785, 64
    %v6289 = vpop.permute.xlu0 %6288
    %6290 = vrot.lane.b32.xlu0 %v5790, 64
    %v6291 = vpop.permute.xlu0 %6290
    %6292 = vrot.lane.b32.xlu0 %v5793, 64
    %v6293 = vpop.permute.xlu0 %6292
    %6294 = vrot.lane.b32.xlu0 %v5798, 64
    %v6295 = vpop.permute.xlu0 %6294
    %6296 = vrot.lane.b32.xlu0 %v5801, 64
    %v6297 = vpop.permute.xlu0 %6296
    %6298 = vrot.lane.b32.xlu0 %v5806, 64
    %v6299 = vpop.permute.xlu0 %6298
    %6300 = vrot.lane.b32.xlu0 %v5809, 64
    %v6301 = vpop.permute.xlu0 %6300
    %6302 = vrot.lane.b32.xlu0 %v5814, 64
    %v6303 = vpop.permute.xlu0 %6302
    %6304 = vrot.lane.b32.xlu0 %v5817, 64
    %v6305 = vpop.permute.xlu0 %6304
    %6306 = vrot.lane.b32.xlu0 %v5822, 64
    %v6307 = vpop.permute.xlu0 %6306
    %6308 = vrot.lane.b32.xlu0 %v5825, 64
    %v6309 = vpop.permute.xlu0 %6308
    %6310 = vrot.lane.b32.xlu0 %v5830, 64
    %v6311 = vpop.permute.xlu0 %6310
    %6312 = vrot.lane.b32.xlu0 %v5833, 64
    %v6313 = vpop.permute.xlu0 %6312
    %6314 = vrot.lane.b32.xlu0 %v5838, 64
    %v6315 = vpop.permute.xlu0 %6314
    %6316 = vrot.lane.b32.xlu0 %v5841, 64
    %v6317 = vpop.permute.xlu0 %6316
    %6318 = vrot.lane.b32.xlu0 %v5846, 64
    %v6319 = vpop.permute.xlu0 %6318
    %6320 = vrot.lane.b32.xlu0 %v5849, 64
    %v6321 = vpop.permute.xlu0 %6320
    %6322 = vrot.lane.b32.xlu0 %v5854, 64
    %v6323 = vpop.permute.xlu0 %6322
    %6324 = vrot.lane.b32.xlu0 %v5857, 64
    %v6325 = vpop.permute.xlu0 %6324
    %6326 = vrot.lane.b32.xlu0 %v5862, 64
    %v6327 = vpop.permute.xlu0 %6326
    %6328 = vrot.lane.b32.xlu0 %v5865, 64
    %v6329 = vpop.permute.xlu0 %6328
    %6330 = vrot.lane.b32.xlu0 %v5870, 64
    %v6331 = vpop.permute.xlu0 %6330
    %6332 = vrot.lane.b32.xlu0 %v5873, 64
    %v6333 = vpop.permute.xlu0 %6332
    %6334 = vrot.lane.b32.xlu0 %v5878, 64
    %v6335 = vpop.permute.xlu0 %6334
    %6336 = vrot.lane.b32.xlu0 %v5881, 64
    %v6337 = vpop.permute.xlu0 %6336
    %6338 = vrot.lane.b32.xlu0 %v5886, 64
    %v6339 = vpop.permute.xlu0 %6338
    %6340 = vrot.lane.b32.xlu0 %v5889, 64
    %v6341 = vpop.permute.xlu0 %6340
    %v6374 = vsel %vm2336, %v5348, %v6279
    %v6375 = vsel %vm2336, %v5351, %v6281
    %v6376 = vsel %vm2336, %v5356, %v6283
    %v6377 = vsel %vm2336, %v5359, %v6285
    %v6378 = vsel %vm2336, %v5364, %v6287
    %v6379 = vsel %vm2336, %v5367, %v6289
    %v6380 = vsel %vm2336, %v5372, %v6291
    %v6381 = vsel %vm2336, %v5375, %v6293
    %v6382 = vsel %vm2336, %v5380, %v6295
    %v6383 = vsel %vm2336, %v5383, %v6297
    %v6384 = vsel %vm2336, %v5388, %v6299
    %v6385 = vsel %vm2336, %v5391, %v6301
    %v6386 = vsel %vm2336, %v5396, %v6303
    %v6387 = vsel %vm2336, %v5399, %v6305
    %v6388 = vsel %vm2336, %v5404, %v6307
    %v6389 = vsel %vm2336, %v5407, %v6309
    %v6390 = vsel %vm2336, %v5412, %v6311
    %v6391 = vsel %vm2336, %v5415, %v6313
    %v6392 = vsel %vm2336, %v5420, %v6315
    %v6393 = vsel %vm2336, %v5423, %v6317
    %v6394 = vsel %vm2336, %v5428, %v6319
    %v6395 = vsel %vm2336, %v5431, %v6321
    %v6396 = vsel %vm2336, %v5436, %v6323
    %v6397 = vsel %vm2336, %v5439, %v6325
    %v6398 = vsel %vm2336, %v5444, %v6327
    %v6399 = vsel %vm2336, %v5447, %v6329
    %v6400 = vsel %vm2336, %v5452, %v6331
    %v6401 = vsel %vm2336, %v5455, %v6333
    %v6402 = vsel %vm2336, %v5460, %v6335
    %v6403 = vsel %vm2336, %v5463, %v6337
    %v6404 = vsel %vm2336, %v5468, %v6339
    %v6405 = vsel %vm2336, %v5471, %v6341
    %s6406 = scalar_lea.vmem [#allocation10], 192
    %v6407 = vld [vmem:[%s6406] sm:$0xff]
    %v6408 = vld [vmem:[%s6406 + $0x8] sm:$0xff]
    %v6409 = vld [vmem:[%s6406 + $0x10] sm:$0xff]
    %v6410 = vld [vmem:[%s6406 + $0x18] sm:$0xff]
    %v6411 = vld [vmem:[%s6406 + $0x20] sm:$0xff]
    %v6412 = vld [vmem:[%s6406 + $0x28] sm:$0xff]
    %v6413 = vld [vmem:[%s6406 + $0x30] sm:$0xff]
    %v6414 = vld [vmem:[%s6406 + $0x38] sm:$0xff]
    %v6415 = vld [vmem:[%s6406 + $0x40] sm:$0xff]
    %v6416 = vld [vmem:[%s6406 + $0x48] sm:$0xff]
    %v6417 = vld [vmem:[%s6406 + $0x50] sm:$0xff]
    %v6418 = vld [vmem:[%s6406 + $0x58] sm:$0xff]
    %v6419 = vld [vmem:[%s6406 + $0x60] sm:$0xff]
    %v6420 = vld [vmem:[%s6406 + $0x68] sm:$0xff]
    %v6421 = vld [vmem:[%s6406 + $0x70] sm:$0xff]
    %v6422 = vld [vmem:[%s6406 + $0x78] sm:$0xff]
    %v6423 = vld [vmem:[%s6406 + $0x80] sm:$0xff]
    %v6424 = vld [vmem:[%s6406 + $0x88] sm:$0xff]
    %v6425 = vld [vmem:[%s6406 + $0x90] sm:$0xff]
    %v6426 = vld [vmem:[%s6406 + $0x98] sm:$0xff]
    %v6427 = vld [vmem:[%s6406 + $0xa0] sm:$0xff]
    %v6428 = vld [vmem:[%s6406 + $0xa8] sm:$0xff]
    %v6429 = vld [vmem:[%s6406 + $0xb0] sm:$0xff]
    %v6430 = vld [vmem:[%s6406 + $0xb8] sm:$0xff]
    %s6431 = scalar_lea.vmem [#allocation12], 2
    %v6432 = vld [vmem:[%s6431] sm:$0x3]
    %v6434 = vlaneseq
    %v6435 = vshrl.u32 %v6434, 7
    %v6436 = vsub.s32 0, %v6435
    %v6437 = vrot.slane %v6432, %v6436
    %v6438 = vlaneseq
    %v6439 = vshrl.u32 %v6438, 7
    %v6440 = vsub.s32 1, %v6439
    %v6441 = vrot.slane %v6432, %v6440
    %v6468 = vunpack.c.l.b16 %v6407
    %v6469 = vunpack.c.h.b16 %v6407
    %v6470 = vunpack.c.l.b16 %v6408
    %v6471 = vunpack.c.h.b16 %v6408
    %v6472 = vunpack.c.l.b16 %v6409
    %v6473 = vunpack.c.h.b16 %v6409
    %v6474 = vunpack.c.l.b16 %v6410
    %v6475 = vunpack.c.h.b16 %v6410
    %v6476 = vunpack.c.l.b16 %v6411
    %v6477 = vunpack.c.h.b16 %v6411
    %v6478 = vunpack.c.l.b16 %v6412
    %v6479 = vunpack.c.h.b16 %v6412
    %v6480 = vunpack.c.l.b16 %v6413
    %v6481 = vunpack.c.h.b16 %v6413
    %v6482 = vunpack.c.l.b16 %v6414
    %v6483 = vunpack.c.h.b16 %v6414
    %v6484 = vunpack.c.l.b16 %v6415
    %v6485 = vunpack.c.h.b16 %v6415
    %v6486 = vunpack.c.l.b16 %v6416
    %v6487 = vunpack.c.h.b16 %v6416
    %v6488 = vunpack.c.l.b16 %v6417
    %v6489 = vunpack.c.h.b16 %v6417
    %v6490 = vunpack.c.l.b16 %v6418
    %v6491 = vunpack.c.h.b16 %v6418
    %v6492 = vunpack.c.l.b16 %v6419
    %v6493 = vunpack.c.h.b16 %v6419
    %v6494 = vunpack.c.l.b16 %v6420
    %v6495 = vunpack.c.h.b16 %v6420
    %v6496 = vunpack.c.l.b16 %v6421
    %v6497 = vunpack.c.h.b16 %v6421
    %v6498 = vunpack.c.l.b16 %v6422
    %v6499 = vunpack.c.h.b16 %v6422
    %v6500 = vunpack.c.l.b16 %v6423
    %v6501 = vunpack.c.h.b16 %v6423
    %v6502 = vunpack.c.l.b16 %v6424
    %v6503 = vunpack.c.h.b16 %v6424
    %v6504 = vunpack.c.l.b16 %v6425
    %v6505 = vunpack.c.h.b16 %v6425
    %v6506 = vunpack.c.l.b16 %v6426
    %v6507 = vunpack.c.h.b16 %v6426
    %v6508 = vunpack.c.l.b16 %v6427
    %v6509 = vunpack.c.h.b16 %v6427
    %v6510 = vunpack.c.l.b16 %v6428
    %v6511 = vunpack.c.h.b16 %v6428
    %v6512 = vunpack.c.l.b16 %v6429
    %v6513 = vunpack.c.h.b16 %v6429
    %v6514 = vunpack.c.l.b16 %v6430
    %v6515 = vunpack.c.h.b16 %v6430
    %v6516 = vpack.c.b16 %v6470, %v6468
    %v6517 = vpack.c.b16 %v6471, %v6469
    %v6518 = vpack.c.b16 %v6474, %v6472
    %v6519 = vpack.c.b16 %v6475, %v6473
    %v6520 = vpack.c.b16 %v6478, %v6476
    %v6521 = vpack.c.b16 %v6479, %v6477
    %v6522 = vpack.c.b16 %v6482, %v6480
    %v6523 = vpack.c.b16 %v6483, %v6481
    %v6524 = vpack.c.b16 %v6486, %v6484
    %v6525 = vpack.c.b16 %v6487, %v6485
    %v6526 = vpack.c.b16 %v6490, %v6488
    %v6527 = vpack.c.b16 %v6491, %v6489
    %v6528 = vpack.c.b16 %v6494, %v6492
    %v6529 = vpack.c.b16 %v6495, %v6493
    %v6530 = vpack.c.b16 %v6498, %v6496
    %v6531 = vpack.c.b16 %v6499, %v6497
    %v6532 = vpack.c.b16 %v6502, %v6500
    %v6533 = vpack.c.b16 %v6503, %v6501
    %v6534 = vpack.c.b16 %v6506, %v6504
    %v6535 = vpack.c.b16 %v6507, %v6505
    %v6536 = vpack.c.b16 %v6510, %v6508
    %v6537 = vpack.c.b16 %v6511, %v6509
    %v6538 = vpack.c.b16 %v6514, %v6512
    %v6539 = vpack.c.b16 %v6515, %v6513
    %6564 = vmatprep.subr.bf16.mxu0 %v6517
    %6565 = vmatpush1.bf16.msra.mxu0 %v6516
    %6566 = vmatprep.subr.bf16.mxu0 %v6519
    %6567 = vmatpush1.bf16.msra.mxu0 %v6518
    %6568 = vmatprep.subr.bf16.mxu0 %v6521
    %6569 = vmatpush1.bf16.msra.mxu0 %v6520
    %6570 = vmatprep.subr.bf16.mxu0 %v6523
    %6571 = vmatpush1.bf16.msra.mxu0 %v6522
    %6572 = vmatprep.subr.bf16.mxu0 %v6525
    %6573 = vmatpush1.bf16.msra.mxu0 %v6524
    %6574 = vmatprep.subr.bf16.mxu0 %v6527
    %6575 = vmatpush1.bf16.msra.mxu0 %v6526
    %6576 = vmatprep.subr.bf16.mxu0 %v6529
    %6577 = vmatpush1.bf16.msra.mxu0 %v6528
    %6578 = vmatprep.subr.bf16.mxu0 %v6531
    %6579 = vmatpush1.bf16.msra.mxu0 %v6530
    %6580 = vmatprep.subr.bf16.mxu0 %v6533
    %6581 = vmatpush1.bf16.msra.mxu0 %v6532
    %6582 = vmatprep.subr.bf16.mxu0 %v6535
    %6583 = vmatpush1.bf16.msra.mxu0 %v6534
    %6584 = vmatprep.subr.bf16.mxu0 %v6537
    %6585 = vmatpush1.bf16.msra.mxu0 %v6536
    %6586 = vmatprep.subr.bf16.mxu0 %v6539
    %6587 = vmatpush1.bf16.msra.mxu0 %v6538
    %6588 = vmatprep.subr.bf16.mxu0 0
    %6589 = vmatpush1.bf16.msra.mxu0 0
    %6590 = vmatprep.subr.bf16.mxu0 0
    %6591 = vmatpush1.bf16.msra.mxu0 0
    %6592 = vmatprep.subr.bf16.mxu0 0
    %6593 = vmatpush1.bf16.msra.mxu0 0
    %6594 = vmatprep.subr.bf16.mxu0 0
    %6595 = vmatpush1.bf16.msra.mxu0 0
    %6596 = vmatprep.mubr.bf16.mxu0 %v4848
    %6597 = vmatmul.mubr.bf16.gmra.mrb[0].mxu0 %v4657
    %v6598 = vpop.f32.mrb[0].mxu0
    %v6599 = vadd.f32 %v6437, %v6598
    %v6600 = vpop.f32.mrb[0].mxu0
    %v6601 = vadd.f32 %v6441, %v6600
    %v6602 = vpop.f32.mrb[0].mxu0
    %v6603 = vadd.f32 %v6437, %v6602
    %v6604 = vpop.f32.mrb[0].mxu0
    %v6605 = vadd.f32 %v6441, %v6604
    %6606 = vmatprep.mubr.bf16.mxu0 %v4851
    %6607 = vmatmul.mubr.bf16.gmra.mrb[0].mxu0 %v4659
    %v6608 = vpop.f32.mrb[0].mxu0
    %v6609 = vadd.f32 %v6437, %v6608
    %v6610 = vpop.f32.mrb[0].mxu0
    %v6611 = vadd.f32 %v6441, %v6610
    %v6612 = vpop.f32.mrb[0].mxu0
    %v6613 = vadd.f32 %v6437, %v6612
    %v6614 = vpop.f32.mrb[0].mxu0
    %v6615 = vadd.f32 %v6441, %v6614
    %6616 = vmatprep.mubr.bf16.mxu0 %v4854
    %6617 = vmatmul.mubr.bf16.gmra.mrb[0].mxu0 %v4661
    %v6618 = vpop.f32.mrb[0].mxu0
    %v6619 = vadd.f32 %v6437, %v6618
    %v6620 = vpop.f32.mrb[0].mxu0
    %v6621 = vadd.f32 %v6441, %v6620
    %v6622 = vpop.f32.mrb[0].mxu0
    %v6623 = vadd.f32 %v6437, %v6622
    %v6624 = vpop.f32.mrb[0].mxu0
    %v6625 = vadd.f32 %v6441, %v6624
    %6626 = vmatprep.mubr.bf16.mxu0 %v4857
    %6627 = vmatmul.mubr.bf16.gmra.mrb[0].mxu0 %v4663
    %v6628 = vpop.f32.mrb[0].mxu0
    %v6629 = vadd.f32 %v6437, %v6628
    %v6630 = vpop.f32.mrb[0].mxu0
    %v6631 = vadd.f32 %v6441, %v6630
    %v6632 = vpop.f32.mrb[0].mxu0
    %v6633 = vadd.f32 %v6437, %v6632
    %v6634 = vpop.f32.mrb[0].mxu0
    %v6635 = vadd.f32 %v6441, %v6634
    %6636 = vmatprep.mubr.bf16.mxu0 %v4860
    %6637 = vmatmul.mubr.bf16.gmra.mrb[0].mxu0 %v4665
    %v6638 = vpop.f32.mrb[0].mxu0
    %v6639 = vadd.f32 %v6437, %v6638
    %v6640 = vpop.f32.mrb[0].mxu0
    %v6641 = vadd.f32 %v6441, %v6640
    %v6642 = vpop.f32.mrb[0].mxu0
    %v6643 = vadd.f32 %v6437, %v6642
    %v6644 = vpop.f32.mrb[0].mxu0
    %v6645 = vadd.f32 %v6441, %v6644
    %6646 = vmatprep.mubr.bf16.mxu0 %v4863
    %6647 = vmatmul.mubr.bf16.gmra.mrb[0].mxu0 %v4667
    %v6648 = vpop.f32.mrb[0].mxu0
    %v6649 = vadd.f32 %v6437, %v6648
    %v6650 = vpop.f32.mrb[0].mxu0
    %v6651 = vadd.f32 %v6441, %v6650
    %v6652 = vpop.f32.mrb[0].mxu0
    %v6653 = vadd.f32 %v6437, %v6652
    %v6654 = vpop.f32.mrb[0].mxu0
    %v6655 = vadd.f32 %v6441, %v6654
    %6656 = vmatprep.mubr.bf16.mxu0 %v4866
    %6657 = vmatmul.mubr.bf16.gmra.mrb[0].mxu0 %v4669
    %v6658 = vpop.f32.mrb[0].mxu0
    %v6659 = vadd.f32 %v6437, %v6658
    %v6660 = vpop.f32.mrb[0].mxu0
    %v6661 = vadd.f32 %v6441, %v6660
    %v6662 = vpop.f32.mrb[0].mxu0
    %v6663 = vadd.f32 %v6437, %v6662
    %v6664 = vpop.f32.mrb[0].mxu0
    %v6665 = vadd.f32 %v6441, %v6664
    %6666 = vmatprep.mubr.bf16.mxu0 %v4869
    %6667 = vmatmul.mubr.bf16.gmra.mrb[0].mxu0 %v4671
    %v6668 = vpop.f32.mrb[0].mxu0
    %v6669 = vadd.f32 %v6437, %v6668
    %v6670 = vpop.f32.mrb[0].mxu0
    %v6671 = vadd.f32 %v6441, %v6670
    %v6672 = vpop.f32.mrb[0].mxu0
    %v6673 = vadd.f32 %v6437, %v6672
    %v6674 = vpop.f32.mrb[0].mxu0
    %v6675 = vadd.f32 %v6441, %v6674
    %6676 = vmatprep.mubr.bf16.mxu0 %v4872
    %6677 = vmatmul.mubr.bf16.gmra.mrb[0].mxu0 %v4673
    %v6678 = vpop.f32.mrb[0].mxu0
    %v6679 = vadd.f32 %v6437, %v6678
    %v6680 = vpop.f32.mrb[0].mxu0
    %v6681 = vadd.f32 %v6441, %v6680
    %v6682 = vpop.f32.mrb[0].mxu0
    %v6683 = vadd.f32 %v6437, %v6682
    %v6684 = vpop.f32.mrb[0].mxu0
    %v6685 = vadd.f32 %v6441, %v6684
    %6686 = vmatprep.mubr.bf16.mxu0 %v4875
    %6687 = vmatmul.mubr.bf16.gmra.mrb[0].mxu0 %v4675
    %v6688 = vpop.f32.mrb[0].mxu0
    %v6689 = vadd.f32 %v6437, %v6688
    %v6690 = vpop.f32.mrb[0].mxu0
    %v6691 = vadd.f32 %v6441, %v6690
    %v6692 = vpop.f32.mrb[0].mxu0
    %v6693 = vadd.f32 %v6437, %v6692
    %v6694 = vpop.f32.mrb[0].mxu0
    %v6695 = vadd.f32 %v6441, %v6694
    %6696 = vmatprep.mubr.bf16.mxu0 %v4878
    %6697 = vmatmul.mubr.bf16.gmra.mrb[0].mxu0 %v4677
    %v6698 = vpop.f32.mrb[0].mxu0
    %v6699 = vadd.f32 %v6437, %v6698
    %v6700 = vpop.f32.mrb[0].mxu0
    %v6701 = vadd.f32 %v6441, %v6700
    %v6702 = vpop.f32.mrb[0].mxu0
    %v6703 = vadd.f32 %v6437, %v6702
    %v6704 = vpop.f32.mrb[0].mxu0
    %v6705 = vadd.f32 %v6441, %v6704
    %6706 = vmatprep.mubr.bf16.mxu0 %v4881
    %6707 = vmatmul.mubr.bf16.gmra.mrb[0].mxu0 %v4679
    %v6708 = vpop.f32.mrb[0].mxu0
    %v6709 = vadd.f32 %v6437, %v6708
    %v6710 = vpop.f32.mrb[0].mxu0
    %v6711 = vadd.f32 %v6441, %v6710
    %v6712 = vpop.f32.mrb[0].mxu0
    %v6713 = vadd.f32 %v6437, %v6712
    %v6714 = vpop.f32.mrb[0].mxu0
    %v6715 = vadd.f32 %v6441, %v6714
    %6716 = vmatprep.mubr.bf16.mxu0 %v4884
    %6717 = vmatmul.mubr.bf16.gmra.mrb[0].mxu0 %v4681
    %v6718 = vpop.f32.mrb[0].mxu0
    %v6719 = vadd.f32 %v6437, %v6718
    %v6720 = vpop.f32.mrb[0].mxu0
    %v6721 = vadd.f32 %v6441, %v6720
    %v6722 = vpop.f32.mrb[0].mxu0
    %v6723 = vadd.f32 %v6437, %v6722
    %v6724 = vpop.f32.mrb[0].mxu0
    %v6725 = vadd.f32 %v6441, %v6724
    %6726 = vmatprep.mubr.bf16.mxu0 %v4887
    %6727 = vmatmul.mubr.bf16.gmra.mrb[0].mxu0 %v4683
    %v6728 = vpop.f32.mrb[0].mxu0
    %v6729 = vadd.f32 %v6437, %v6728
    %v6730 = vpop.f32.mrb[0].mxu0
    %v6731 = vadd.f32 %v6441, %v6730
    %v6732 = vpop.f32.mrb[0].mxu0
    %v6733 = vadd.f32 %v6437, %v6732
    %v6734 = vpop.f32.mrb[0].mxu0
    %v6735 = vadd.f32 %v6441, %v6734
    %6736 = vmatprep.mubr.bf16.mxu0 %v4890
    %6737 = vmatmul.mubr.bf16.gmra.mrb[0].mxu0 %v4685
    %v6738 = vpop.f32.mrb[0].mxu0
    %v6739 = vadd.f32 %v6437, %v6738
    %v6740 = vpop.f32.mrb[0].mxu0
    %v6741 = vadd.f32 %v6441, %v6740
    %v6742 = vpop.f32.mrb[0].mxu0
    %v6743 = vadd.f32 %v6437, %v6742
    %v6744 = vpop.f32.mrb[0].mxu0
    %v6745 = vadd.f32 %v6441, %v6744
    %6746 = vmatprep.mubr.bf16.mxu0 %v4893
    %6747 = vmatmul.mubr.bf16.gmra.mrb[0].mxu0 %v4687
    %v6748 = vpop.f32.mrb[0].mxu0
    %v6749 = vadd.f32 %v6437, %v6748
    %v6750 = vpop.f32.mrb[0].mxu0
    %v6751 = vadd.f32 %v6441, %v6750
    %v6752 = vpop.f32.mrb[0].mxu0
    %v6753 = vadd.f32 %v6437, %v6752
    %v6754 = vpop.f32.mrb[0].mxu0
    %v6755 = vadd.f32 %v6441, %v6754
    %6756 = vdwg.mxu0
    %v6757 = vadd.f32 %v6374, %v6599
    %v6758 = vadd.f32 %v6120, %v6601
    %v6759 = vadd.f32 %v6375, %v6603
    %v6760 = vadd.f32 %v6123, %v6605
    %v6761 = vadd.f32 %v6376, %v6609
    %v6762 = vadd.f32 %v6128, %v6611
    %v6763 = vadd.f32 %v6377, %v6613
    %v6764 = vadd.f32 %v6131, %v6615
    %v6765 = vadd.f32 %v6378, %v6619
    %v6766 = vadd.f32 %v6136, %v6621
    %v6767 = vadd.f32 %v6379, %v6623
    %v6768 = vadd.f32 %v6139, %v6625
    %v6769 = vadd.f32 %v6380, %v6629
    %v6770 = vadd.f32 %v6144, %v6631
    %v6771 = vadd.f32 %v6381, %v6633
    %v6772 = vadd.f32 %v6147, %v6635
    %v6773 = vadd.f32 %v6382, %v6639
    %v6774 = vadd.f32 %v6152, %v6641
    %v6775 = vadd.f32 %v6383, %v6643
    %v6776 = vadd.f32 %v6155, %v6645
    %v6777 = vadd.f32 %v6384, %v6649
    %v6778 = vadd.f32 %v6160, %v6651
    %v6779 = vadd.f32 %v6385, %v6653
    %v6780 = vadd.f32 %v6163, %v6655
    %v6781 = vadd.f32 %v6386, %v6659
    %v6782 = vadd.f32 %v6168, %v6661
    %v6783 = vadd.f32 %v6387, %v6663
    %v6784 = vadd.f32 %v6171, %v6665
    %v6785 = vadd.f32 %v6388, %v6669
    %v6786 = vadd.f32 %v6176, %v6671
    %v6787 = vadd.f32 %v6389, %v6673
    %v6788 = vadd.f32 %v6179, %v6675
    %v6789 = vadd.f32 %v6390, %v6679
    %v6790 = vadd.f32 %v6184, %v6681
    %v6791 = vadd.f32 %v6391, %v6683
    %v6792 = vadd.f32 %v6187, %v6685
    %v6793 = vadd.f32 %v6392, %v6689
    %v6794 = vadd.f32 %v6192, %v6691
    %v6795 = vadd.f32 %v6393, %v6693
    %v6796 = vadd.f32 %v6195, %v6695
    %v6797 = vadd.f32 %v6394, %v6699
    %v6798 = vadd.f32 %v6200, %v6701
    %v6799 = vadd.f32 %v6395, %v6703
    %v6800 = vadd.f32 %v6203, %v6705
    %v6801 = vadd.f32 %v6396, %v6709
    %v6802 = vadd.f32 %v6208, %v6711
    %v6803 = vadd.f32 %v6397, %v6713
    %v6804 = vadd.f32 %v6211, %v6715
    %v6805 = vadd.f32 %v6398, %v6719
    %v6806 = vadd.f32 %v6216, %v6721
    %v6807 = vadd.f32 %v6399, %v6723
    %v6808 = vadd.f32 %v6219, %v6725
    %v6809 = vadd.f32 %v6400, %v6729
    %v6810 = vadd.f32 %v6224, %v6731
    %v6811 = vadd.f32 %v6401, %v6733
    %v6812 = vadd.f32 %v6227, %v6735
    %v6813 = vadd.f32 %v6402, %v6739
    %v6814 = vadd.f32 %v6232, %v6741
    %v6815 = vadd.f32 %v6403, %v6743
    %v6816 = vadd.f32 %v6235, %v6745
    %v6817 = vadd.f32 %v6404, %v6749
    %v6818 = vadd.f32 %v6240, %v6751
    %v6819 = vadd.f32 %v6405, %v6753
    %v6820 = vadd.f32 %v6243, %v6755
    %v6821 = vmax.f32 %v6757, 0.0
    %v6822 = vmax.f32 %v6758, 0.0
    %v6823 = vmax.f32 %v6759, 0.0
    %v6824 = vmax.f32 %v6760, 0.0
    %v6825 = vmax.f32 %v6761, 0.0
    %v6826 = vmax.f32 %v6762, 0.0
    %v6827 = vmax.f32 %v6763, 0.0
    %v6828 = vmax.f32 %v6764, 0.0
    %v6829 = vmax.f32 %v6765, 0.0
    %v6830 = vmax.f32 %v6766, 0.0
    %v6831 = vmax.f32 %v6767, 0.0
    %v6832 = vmax.f32 %v6768, 0.0
    %v6833 = vmax.f32 %v6769, 0.0
    %v6834 = vmax.f32 %v6770, 0.0
    %v6835 = vmax.f32 %v6771, 0.0
    %v6836 = vmax.f32 %v6772, 0.0
    %v6837 = vmax.f32 %v6773, 0.0
    %v6838 = vmax.f32 %v6774, 0.0
    %v6839 = vmax.f32 %v6775, 0.0
    %v6840 = vmax.f32 %v6776, 0.0
    %v6841 = vmax.f32 %v6777, 0.0
    %v6842 = vmax.f32 %v6778, 0.0
    %v6843 = vmax.f32 %v6779, 0.0
    %v6844 = vmax.f32 %v6780, 0.0
    %v6845 = vmax.f32 %v6781, 0.0
    %v6846 = vmax.f32 %v6782, 0.0
    %v6847 = vmax.f32 %v6783, 0.0
    %v6848 = vmax.f32 %v6784, 0.0
    %v6849 = vmax.f32 %v6785, 0.0
    %v6850 = vmax.f32 %v6786, 0.0
    %v6851 = vmax.f32 %v6787, 0.0
    %v6852 = vmax.f32 %v6788, 0.0
    %v6853 = vmax.f32 %v6789, 0.0
    %v6854 = vmax.f32 %v6790, 0.0
    %v6855 = vmax.f32 %v6791, 0.0
    %v6856 = vmax.f32 %v6792, 0.0
    %v6857 = vmax.f32 %v6793, 0.0
    %v6858 = vmax.f32 %v6794, 0.0
    %v6859 = vmax.f32 %v6795, 0.0
    %v6860 = vmax.f32 %v6796, 0.0
    %v6861 = vmax.f32 %v6797, 0.0
    %v6862 = vmax.f32 %v6798, 0.0
    %v6863 = vmax.f32 %v6799, 0.0
    %v6864 = vmax.f32 %v6800, 0.0
    %v6865 = vmax.f32 %v6801, 0.0
    %v6866 = vmax.f32 %v6802, 0.0
    %v6867 = vmax.f32 %v6803, 0.0
    %v6868 = vmax.f32 %v6804, 0.0
    %v6869 = vmax.f32 %v6805, 0.0
    %v6870 = vmax.f32 %v6806, 0.0
    %v6871 = vmax.f32 %v6807, 0.0
    %v6872 = vmax.f32 %v6808, 0.0
    %v6873 = vmax.f32 %v6809, 0.0
    %v6874 = vmax.f32 %v6810, 0.0
    %v6875 = vmax.f32 %v6811, 0.0
    %v6876 = vmax.f32 %v6812, 0.0
    %v6877 = vmax.f32 %v6813, 0.0
    %v6878 = vmax.f32 %v6814, 0.0
    %v6879 = vmax.f32 %v6815, 0.0
    %v6880 = vmax.f32 %v6816, 0.0
    %v6881 = vmax.f32 %v6817, 0.0
    %v6882 = vmax.f32 %v6818, 0.0
    %v6883 = vmax.f32 %v6819, 0.0
    %v6884 = vmax.f32 %v6820, 0.0
    %v6885 = vpack.c.bf16 %v6823, %v6821
    %v6886 = vpack.c.bf16 %v6824, %v6822
    %v6887 = vpack.c.bf16 %v6827, %v6825
    %v6888 = vpack.c.bf16 %v6828, %v6826
    %v6889 = vpack.c.bf16 %v6831, %v6829
    %v6890 = vpack.c.bf16 %v6832, %v6830
    %v6891 = vpack.c.bf16 %v6835, %v6833
    %v6892 = vpack.c.bf16 %v6836, %v6834
    %v6893 = vpack.c.bf16 %v6839, %v6837
    %v6894 = vpack.c.bf16 %v6840, %v6838
    %v6895 = vpack.c.bf16 %v6843, %v6841
    %v6896 = vpack.c.bf16 %v6844, %v6842
    %v6897 = vpack.c.bf16 %v6847, %v6845
    %v6898 = vpack.c.bf16 %v6848, %v6846
    %v6899 = vpack.c.bf16 %v6851, %v6849
    %v6900 = vpack.c.bf16 %v6852, %v6850
    %v6901 = vpack.c.bf16 %v6855, %v6853
    %v6902 = vpack.c.bf16 %v6856, %v6854
    %v6903 = vpack.c.bf16 %v6859, %v6857
    %v6904 = vpack.c.bf16 %v6860, %v6858
    %v6905 = vpack.c.bf16 %v6863, %v6861
    %v6906 = vpack.c.bf16 %v6864, %v6862
    %v6907 = vpack.c.bf16 %v6867, %v6865
    %v6908 = vpack.c.bf16 %v6868, %v6866
    %v6909 = vpack.c.bf16 %v6871, %v6869
    %v6910 = vpack.c.bf16 %v6872, %v6870
    %v6911 = vpack.c.bf16 %v6875, %v6873
    %v6912 = vpack.c.bf16 %v6876, %v6874
    %v6913 = vpack.c.bf16 %v6879, %v6877
    %v6914 = vpack.c.bf16 %v6880, %v6878
    %v6915 = vpack.c.bf16 %v6883, %v6881
    %v6916 = vpack.c.bf16 %v6884, %v6882
    %s6917 = scalar_lea.vmem [#allocation7], 384
    %v6918 = vld [vmem:[%s6917] sm:$0xff]
    %v6919 = vld [vmem:[%s6917 + $0x8] sm:$0xff]
    %v6920 = vld [vmem:[%s6917 + $0x10] sm:$0xff]
    %v6921 = vld [vmem:[%s6917 + $0x18] sm:$0xff]
    %v6922 = vld [vmem:[%s6917 + $0x20] sm:$0xff]
    %v6923 = vld [vmem:[%s6917 + $0x28] sm:$0xff]
    %v6924 = vld [vmem:[%s6917 + $0x30] sm:$0xff]
    %v6925 = vld [vmem:[%s6917 + $0x38] sm:$0xff]
    %v6926 = vld [vmem:[%s6917 + $0x40] sm:$0xff]
    %v6927 = vld [vmem:[%s6917 + $0x48] sm:$0xff]
    %v6928 = vld [vmem:[%s6917 + $0x50] sm:$0xff]
    %v6929 = vld [vmem:[%s6917 + $0x58] sm:$0xff]
    %v6930 = vld [vmem:[%s6917 + $0x60] sm:$0xff]
    %v6931 = vld [vmem:[%s6917 + $0x68] sm:$0xff]
    %v6932 = vld [vmem:[%s6917 + $0x70] sm:$0xff]
    %v6933 = vld [vmem:[%s6917 + $0x78] sm:$0xff]
    %v6934 = vld [vmem:[%s6917 + $0x80] sm:$0xff]
    %v6935 = vld [vmem:[%s6917 + $0x88] sm:$0xff]
    %v6936 = vld [vmem:[%s6917 + $0x90] sm:$0xff]
    %v6937 = vld [vmem:[%s6917 + $0x98] sm:$0xff]
    %v6938 = vld [vmem:[%s6917 + $0xa0] sm:$0xff]
    %v6939 = vld [vmem:[%s6917 + $0xa8] sm:$0xff]
    %v6940 = vld [vmem:[%s6917 + $0xb0] sm:$0xff]
    %v6941 = vld [vmem:[%s6917 + $0xb8] sm:$0xff]
    %s6942 = scalar_lea.vmem [#allocation9], 4
    %v6943 = vld [vmem:[%s6942] sm:$0x3]
    %v6945 = vlaneseq
    %v6946 = vshrl.u32 %v6945, 7
    %v6947 = vsub.s32 0, %v6946
    %v6948 = vrot.slane %v6943, %v6947
    %v6949 = vlaneseq
    %v6950 = vshrl.u32 %v6949, 7
    %v6951 = vsub.s32 1, %v6950
    %v6952 = vrot.slane %v6943, %v6951
    %v6979 = vunpack.c.l.b16 %v6918
    %v6980 = vunpack.c.h.b16 %v6918
    %v6981 = vunpack.c.l.b16 %v6919
    %v6982 = vunpack.c.h.b16 %v6919
    %v6983 = vunpack.c.l.b16 %v6920
    %v6984 = vunpack.c.h.b16 %v6920
    %v6985 = vunpack.c.l.b16 %v6921
    %v6986 = vunpack.c.h.b16 %v6921
    %v6987 = vunpack.c.l.b16 %v6922
    %v6988 = vunpack.c.h.b16 %v6922
    %v6989 = vunpack.c.l.b16 %v6923
    %v6990 = vunpack.c.h.b16 %v6923
    %v6991 = vunpack.c.l.b16 %v6924
    %v6992 = vunpack.c.h.b16 %v6924
    %v6993 = vunpack.c.l.b16 %v6925
    %v6994 = vunpack.c.h.b16 %v6925
    %v6995 = vunpack.c.l.b16 %v6926
    %v6996 = vunpack.c.h.b16 %v6926
    %v6997 = vunpack.c.l.b16 %v6927
    %v6998 = vunpack.c.h.b16 %v6927
    %v6999 = vunpack.c.l.b16 %v6928
    %v7000 = vunpack.c.h.b16 %v6928
    %v7001 = vunpack.c.l.b16 %v6929
    %v7002 = vunpack.c.h.b16 %v6929
    %v7003 = vunpack.c.l.b16 %v6930
    %v7004 = vunpack.c.h.b16 %v6930
    %v7005 = vunpack.c.l.b16 %v6931
    %v7006 = vunpack.c.h.b16 %v6931
    %v7007 = vunpack.c.l.b16 %v6932
    %v7008 = vunpack.c.h.b16 %v6932
    %v7009 = vunpack.c.l.b16 %v6933
    %v7010 = vunpack.c.h.b16 %v6933
    %v7011 = vunpack.c.l.b16 %v6934
    %v7012 = vunpack.c.h.b16 %v6934
    %v7013 = vunpack.c.l.b16 %v6935
    %v7014 = vunpack.c.h.b16 %v6935
    %v7015 = vunpack.c.l.b16 %v6936
    %v7016 = vunpack.c.h.b16 %v6936
    %v7017 = vunpack.c.l.b16 %v6937
    %v7018 = vunpack.c.h.b16 %v6937
    %v7019 = vunpack.c.l.b16 %v6938
    %v7020 = vunpack.c.h.b16 %v6938
    %v7021 = vunpack.c.l.b16 %v6939
    %v7022 = vunpack.c.h.b16 %v6939
    %v7023 = vunpack.c.l.b16 %v6940
    %v7024 = vunpack.c.h.b16 %v6940
    %v7025 = vunpack.c.l.b16 %v6941
    %v7026 = vunpack.c.h.b16 %v6941
    %v7027 = vpack.c.b16 %v6981, %v6979
    %v7028 = vpack.c.b16 %v6982, %v6980
    %v7029 = vpack.c.b16 %v6985, %v6983
    %v7030 = vpack.c.b16 %v6986, %v6984
    %v7031 = vpack.c.b16 %v6989, %v6987
    %v7032 = vpack.c.b16 %v6990, %v6988
    %v7033 = vpack.c.b16 %v6993, %v6991
    %v7034 = vpack.c.b16 %v6994, %v6992
    %v7035 = vpack.c.b16 %v6997, %v6995
    %v7036 = vpack.c.b16 %v6998, %v6996
    %v7037 = vpack.c.b16 %v7001, %v6999
    %v7038 = vpack.c.b16 %v7002, %v7000
    %v7039 = vpack.c.b16 %v7005, %v7003
    %v7040 = vpack.c.b16 %v7006, %v7004
    %v7041 = vpack.c.b16 %v7009, %v7007
    %v7042 = vpack.c.b16 %v7010, %v7008
    %v7043 = vpack.c.b16 %v7013, %v7011
    %v7044 = vpack.c.b16 %v7014, %v7012
    %v7045 = vpack.c.b16 %v7017, %v7015
    %v7046 = vpack.c.b16 %v7018, %v7016
    %v7047 = vpack.c.b16 %v7021, %v7019
    %v7048 = vpack.c.b16 %v7022, %v7020
    %v7049 = vpack.c.b16 %v7025, %v7023
    %v7050 = vpack.c.b16 %v7026, %v7024
    %v7076 = vsel %vm2336, %v6886, 0
    %v7079 = vsel %vm2336, %v6888, 0
    %v7082 = vsel %vm2336, %v6890, 0
    %v7085 = vsel %vm2336, %v6892, 0
    %v7088 = vsel %vm2336, %v6894, 0
    %v7091 = vsel %vm2336, %v6896, 0
    %v7094 = vsel %vm2336, %v6898, 0
    %v7097 = vsel %vm2336, %v6900, 0
    %v7100 = vsel %vm2336, %v6902, 0
    %v7103 = vsel %vm2336, %v6904, 0
    %v7106 = vsel %vm2336, %v6906, 0
    %v7109 = vsel %vm2336, %v6908, 0
    %v7112 = vsel %vm2336, %v6910, 0
    %v7115 = vsel %vm2336, %v6912, 0
    %v7118 = vsel %vm2336, %v6914, 0
    %v7121 = vsel %vm2336, %v6916, 0
    %7123 = vmatprep.subr.bf16.mxu0 %v7028
    %7124 = vmatpush1.bf16.msra.mxu0 %v7027
    %7125 = vmatprep.subr.bf16.mxu0 %v7030
    %7126 = vmatpush1.bf16.msra.mxu0 %v7029
    %7127 = vmatprep.subr.bf16.mxu0 %v7032
    %7128 = vmatpush1.bf16.msra.mxu0 %v7031
    %7129 = vmatprep.subr.bf16.mxu0 %v7034
    %7130 = vmatpush1.bf16.msra.mxu0 %v7033
    %7131 = vmatprep.subr.bf16.mxu0 %v7036
    %7132 = vmatpush1.bf16.msra.mxu0 %v7035
    %7133 = vmatprep.subr.bf16.mxu0 %v7038
    %7134 = vmatpush1.bf16.msra.mxu0 %v7037
    %7135 = vmatprep.subr.bf16.mxu0 %v7040
    %7136 = vmatpush1.bf16.msra.mxu0 %v7039
    %7137 = vmatprep.subr.bf16.mxu0 %v7042
    %7138 = vmatpush1.bf16.msra.mxu0 %v7041
    %7139 = vmatprep.subr.bf16.mxu0 %v7044
    %7140 = vmatpush1.bf16.msra.mxu0 %v7043
    %7141 = vmatprep.subr.bf16.mxu0 %v7046
    %7142 = vmatpush1.bf16.msra.mxu0 %v7045
    %7143 = vmatprep.subr.bf16.mxu0 %v7048
    %7144 = vmatpush1.bf16.msra.mxu0 %v7047
    %7145 = vmatprep.subr.bf16.mxu0 %v7050
    %7146 = vmatpush1.bf16.msra.mxu0 %v7049
    %7147 = vmatprep.subr.bf16.mxu0 0
    %7148 = vmatpush1.bf16.msra.mxu0 0
    %7149 = vmatprep.subr.bf16.mxu0 0
    %7150 = vmatpush1.bf16.msra.mxu0 0
    %7151 = vmatprep.subr.bf16.mxu0 0
    %7152 = vmatpush1.bf16.msra.mxu0 0
    %7153 = vmatprep.subr.bf16.mxu0 0
    %7154 = vmatpush1.bf16.msra.mxu0 0
    %7155 = vmatprep.mubr.bf16.mxu0 %v7076
    %7156 = vmatmul.mubr.bf16.gmra.mrb[0].mxu0 %v6885
    %v7157 = vpop.f32.mrb[0].mxu0
    %v7158 = vadd.f32 %v6948, %v7157
    %v7159 = vpop.f32.mrb[0].mxu0
    %v7160 = vadd.f32 %v6952, %v7159
    %v7161 = vpop.f32.mrb[0].mxu0
    %v7162 = vadd.f32 %v6948, %v7161
    %v7163 = vpop.f32.mrb[0].mxu0
    %v7164 = vadd.f32 %v6952, %v7163
    %7165 = vmatprep.mubr.bf16.mxu0 %v7079
    %7166 = vmatmul.mubr.bf16.gmra.mrb[0].mxu0 %v6887
    %v7167 = vpop.f32.mrb[0].mxu0
    %v7168 = vadd.f32 %v6948, %v7167
    %v7169 = vpop.f32.mrb[0].mxu0
    %v7170 = vadd.f32 %v6952, %v7169
    %v7171 = vpop.f32.mrb[0].mxu0
    %v7172 = vadd.f32 %v6948, %v7171
    %v7173 = vpop.f32.mrb[0].mxu0
    %v7174 = vadd.f32 %v6952, %v7173
    %7175 = vmatprep.mubr.bf16.mxu0 %v7082
    %7176 = vmatmul.mubr.bf16.gmra.mrb[0].mxu0 %v6889
    %v7177 = vpop.f32.mrb[0].mxu0
    %v7178 = vadd.f32 %v6948, %v7177
    %v7179 = vpop.f32.mrb[0].mxu0
    %v7180 = vadd.f32 %v6952, %v7179
    %v7181 = vpop.f32.mrb[0].mxu0
    %v7182 = vadd.f32 %v6948, %v7181
    %v7183 = vpop.f32.mrb[0].mxu0
    %v7184 = vadd.f32 %v6952, %v7183
    %7185 = vmatprep.mubr.bf16.mxu0 %v7085
    %7186 = vmatmul.mubr.bf16.gmra.mrb[0].mxu0 %v6891
    %v7187 = vpop.f32.mrb[0].mxu0
    %v7188 = vadd.f32 %v6948, %v7187
    %v7189 = vpop.f32.mrb[0].mxu0
    %v7190 = vadd.f32 %v6952, %v7189
    %v7191 = vpop.f32.mrb[0].mxu0
    %v7192 = vadd.f32 %v6948, %v7191
    %v7193 = vpop.f32.mrb[0].mxu0
    %v7194 = vadd.f32 %v6952, %v7193
    %7195 = vmatprep.mubr.bf16.mxu0 %v7088
    %7196 = vmatmul.mubr.bf16.gmra.mrb[0].mxu0 %v6893
    %v7197 = vpop.f32.mrb[0].mxu0
    %v7198 = vadd.f32 %v6948, %v7197
    %v7199 = vpop.f32.mrb[0].mxu0
    %v7200 = vadd.f32 %v6952, %v7199
    %v7201 = vpop.f32.mrb[0].mxu0
    %v7202 = vadd.f32 %v6948, %v7201
    %v7203 = vpop.f32.mrb[0].mxu0
    %v7204 = vadd.f32 %v6952, %v7203
    %7205 = vmatprep.mubr.bf16.mxu0 %v7091
    %7206 = vmatmul.mubr.bf16.gmra.mrb[0].mxu0 %v6895
    %v7207 = vpop.f32.mrb[0].mxu0
    %v7208 = vadd.f32 %v6948, %v7207
    %v7209 = vpop.f32.mrb[0].mxu0
    %v7210 = vadd.f32 %v6952, %v7209
    %v7211 = vpop.f32.mrb[0].mxu0
    %v7212 = vadd.f32 %v6948, %v7211
    %v7213 = vpop.f32.mrb[0].mxu0
    %v7214 = vadd.f32 %v6952, %v7213
    %7215 = vmatprep.mubr.bf16.mxu0 %v7094
    %7216 = vmatmul.mubr.bf16.gmra.mrb[0].mxu0 %v6897
    %v7217 = vpop.f32.mrb[0].mxu0
    %v7218 = vadd.f32 %v6948, %v7217
    %v7219 = vpop.f32.mrb[0].mxu0
    %v7220 = vadd.f32 %v6952, %v7219
    %v7221 = vpop.f32.mrb[0].mxu0
    %v7222 = vadd.f32 %v6948, %v7221
    %v7223 = vpop.f32.mrb[0].mxu0
    %v7224 = vadd.f32 %v6952, %v7223
    %7225 = vmatprep.mubr.bf16.mxu0 %v7097
    %7226 = vmatmul.mubr.bf16.gmra.mrb[0].mxu0 %v6899
    %v7227 = vpop.f32.mrb[0].mxu0
    %v7228 = vadd.f32 %v6948, %v7227
    %v7229 = vpop.f32.mrb[0].mxu0
    %v7230 = vadd.f32 %v6952, %v7229
    %v7231 = vpop.f32.mrb[0].mxu0
    %v7232 = vadd.f32 %v6948, %v7231
    %v7233 = vpop.f32.mrb[0].mxu0
    %v7234 = vadd.f32 %v6952, %v7233
    %7235 = vmatprep.mubr.bf16.mxu0 %v7100
    %7236 = vmatmul.mubr.bf16.gmra.mrb[0].mxu0 %v6901
    %v7237 = vpop.f32.mrb[0].mxu0
    %v7238 = vadd.f32 %v6948, %v7237
    %v7239 = vpop.f32.mrb[0].mxu0
    %v7240 = vadd.f32 %v6952, %v7239
    %v7241 = vpop.f32.mrb[0].mxu0
    %v7242 = vadd.f32 %v6948, %v7241
    %v7243 = vpop.f32.mrb[0].mxu0
    %v7244 = vadd.f32 %v6952, %v7243
    %7245 = vmatprep.mubr.bf16.mxu0 %v7103
    %7246 = vmatmul.mubr.bf16.gmra.mrb[0].mxu0 %v6903
    %v7247 = vpop.f32.mrb[0].mxu0
    %v7248 = vadd.f32 %v6948, %v7247
    %v7249 = vpop.f32.mrb[0].mxu0
    %v7250 = vadd.f32 %v6952, %v7249
    %v7251 = vpop.f32.mrb[0].mxu0
    %v7252 = vadd.f32 %v6948, %v7251
    %v7253 = vpop.f32.mrb[0].mxu0
    %v7254 = vadd.f32 %v6952, %v7253
    %7255 = vmatprep.mubr.bf16.mxu0 %v7106
    %7256 = vmatmul.mubr.bf16.gmra.mrb[0].mxu0 %v6905
    %v7257 = vpop.f32.mrb[0].mxu0
    %v7258 = vadd.f32 %v6948, %v7257
    %v7259 = vpop.f32.mrb[0].mxu0
    %v7260 = vadd.f32 %v6952, %v7259
    %v7261 = vpop.f32.mrb[0].mxu0
    %v7262 = vadd.f32 %v6948, %v7261
    %v7263 = vpop.f32.mrb[0].mxu0
    %v7264 = vadd.f32 %v6952, %v7263
    %7265 = vmatprep.mubr.bf16.mxu0 %v7109
    %7266 = vmatmul.mubr.bf16.gmra.mrb[0].mxu0 %v6907
    %v7267 = vpop.f32.mrb[0].mxu0
    %v7268 = vadd.f32 %v6948, %v7267
    %v7269 = vpop.f32.mrb[0].mxu0
    %v7270 = vadd.f32 %v6952, %v7269
    %v7271 = vpop.f32.mrb[0].mxu0
    %v7272 = vadd.f32 %v6948, %v7271
    %v7273 = vpop.f32.mrb[0].mxu0
    %v7274 = vadd.f32 %v6952, %v7273
    %7275 = vmatprep.mubr.bf16.mxu0 %v7112
    %7276 = vmatmul.mubr.bf16.gmra.mrb[0].mxu0 %v6909
    %v7277 = vpop.f32.mrb[0].mxu0
    %v7278 = vadd.f32 %v6948, %v7277
    %v7279 = vpop.f32.mrb[0].mxu0
    %v7280 = vadd.f32 %v6952, %v7279
    %v7281 = vpop.f32.mrb[0].mxu0
    %v7282 = vadd.f32 %v6948, %v7281
    %v7283 = vpop.f32.mrb[0].mxu0
    %v7284 = vadd.f32 %v6952, %v7283
    %7285 = vmatprep.mubr.bf16.mxu0 %v7115
    %7286 = vmatmul.mubr.bf16.gmra.mrb[0].mxu0 %v6911
    %v7287 = vpop.f32.mrb[0].mxu0
    %v7288 = vadd.f32 %v6948, %v7287
    %v7289 = vpop.f32.mrb[0].mxu0
    %v7290 = vadd.f32 %v6952, %v7289
    %v7291 = vpop.f32.mrb[0].mxu0
    %v7292 = vadd.f32 %v6948, %v7291
    %v7293 = vpop.f32.mrb[0].mxu0
    %v7294 = vadd.f32 %v6952, %v7293
    %7295 = vmatprep.mubr.bf16.mxu0 %v7118
    %7296 = vmatmul.mubr.bf16.gmra.mrb[0].mxu0 %v6913
    %v7297 = vpop.f32.mrb[0].mxu0
    %v7298 = vadd.f32 %v6948, %v7297
    %v7299 = vpop.f32.mrb[0].mxu0
    %v7300 = vadd.f32 %v6952, %v7299
    %v7301 = vpop.f32.mrb[0].mxu0
    %v7302 = vadd.f32 %v6948, %v7301
    %v7303 = vpop.f32.mrb[0].mxu0
    %v7304 = vadd.f32 %v6952, %v7303
    %7305 = vmatprep.mubr.bf16.mxu0 %v7121
    %7306 = vmatmul.mubr.bf16.gmra.mrb[0].mxu0 %v6915
    %v7307 = vpop.f32.mrb[0].mxu0
    %v7308 = vadd.f32 %v6948, %v7307
    %v7309 = vpop.f32.mrb[0].mxu0
    %v7310 = vadd.f32 %v6952, %v7309
    %v7311 = vpop.f32.mrb[0].mxu0
    %v7312 = vadd.f32 %v6948, %v7311
    %v7313 = vpop.f32.mrb[0].mxu0
    %v7314 = vadd.f32 %v6952, %v7313
    %7315 = vdwg.mxu0
    %v7316 = vpack.c.bf16 %v7162, %v7158
    %v7317 = vpack.c.bf16 %v7164, %v7160
    %v7318 = vpack.c.bf16 %v7172, %v7168
    %v7319 = vpack.c.bf16 %v7174, %v7170
    %v7320 = vpack.c.bf16 %v7182, %v7178
    %v7321 = vpack.c.bf16 %v7184, %v7180
    %v7322 = vpack.c.bf16 %v7192, %v7188
    %v7323 = vpack.c.bf16 %v7194, %v7190
    %v7324 = vpack.c.bf16 %v7202, %v7198
    %v7325 = vpack.c.bf16 %v7204, %v7200
    %v7326 = vpack.c.bf16 %v7212, %v7208
    %v7327 = vpack.c.bf16 %v7214, %v7210
    %v7328 = vpack.c.bf16 %v7222, %v7218
    %v7329 = vpack.c.bf16 %v7224, %v7220
    %v7330 = vpack.c.bf16 %v7232, %v7228
    %v7331 = vpack.c.bf16 %v7234, %v7230
    %v7332 = vpack.c.bf16 %v7242, %v7238
    %v7333 = vpack.c.bf16 %v7244, %v7240
    %v7334 = vpack.c.bf16 %v7252, %v7248
    %v7335 = vpack.c.bf16 %v7254, %v7250
    %v7336 = vpack.c.bf16 %v7262, %v7258
    %v7337 = vpack.c.bf16 %v7264, %v7260
    %v7338 = vpack.c.bf16 %v7272, %v7268
    %v7339 = vpack.c.bf16 %v7274, %v7270
    %v7340 = vpack.c.bf16 %v7282, %v7278
    %v7341 = vpack.c.bf16 %v7284, %v7280
    %v7342 = vpack.c.bf16 %v7292, %v7288
    %v7343 = vpack.c.bf16 %v7294, %v7290
    %v7344 = vpack.c.bf16 %v7302, %v7298
    %v7345 = vpack.c.bf16 %v7304, %v7300
    %v7346 = vpack.c.bf16 %v7312, %v7308
    %v7347 = vpack.c.bf16 %v7314, %v7310
    %s7348 = scalar_lea.vmem [#allocation6], 2304
    %v7349 = vld [vmem:[%s7348] sm:$0xff]
    %v7350 = vld [vmem:[%s7348 + $0x8] sm:$0xff]
    %v7351 = vld [vmem:[%s7348 + $0x10] sm:$0xff]
    %v7352 = vld [vmem:[%s7348 + $0x18] sm:$0xff]
    %v7353 = vld [vmem:[%s7348 + $0x20] sm:$0xff]
    %v7354 = vld [vmem:[%s7348 + $0x28] sm:$0xff]
    %v7355 = vld [vmem:[%s7348 + $0x30] sm:$0xff]
    %v7356 = vld [vmem:[%s7348 + $0x38] sm:$0xff]
    %v7357 = vld [vmem:[%s7348 + $0x40] sm:$0xff]
    %v7358 = vld [vmem:[%s7348 + $0x48] sm:$0xff]
    %v7359 = vld [vmem:[%s7348 + $0x50] sm:$0xff]
    %v7360 = vld [vmem:[%s7348 + $0x58] sm:$0xff]
    %v7361 = vld [vmem:[%s7348 + $0x60] sm:$0xff]
    %v7362 = vld [vmem:[%s7348 + $0x68] sm:$0xff]
    %v7363 = vld [vmem:[%s7348 + $0x70] sm:$0xff]
    %v7364 = vld [vmem:[%s7348 + $0x78] sm:$0xff]
    %v7365 = vld [vmem:[%s7348 + $0x80] sm:$0xff]
    %v7366 = vld [vmem:[%s7348 + $0x88] sm:$0xff]
    %v7367 = vld [vmem:[%s7348 + $0x90] sm:$0xff]
    %v7368 = vld [vmem:[%s7348 + $0x98] sm:$0xff]
    %v7369 = vld [vmem:[%s7348 + $0xa0] sm:$0xff]
    %v7370 = vld [vmem:[%s7348 + $0xa8] sm:$0xff]
    %v7371 = vld [vmem:[%s7348 + $0xb0] sm:$0xff]
    %v7372 = vld [vmem:[%s7348 + $0xb8] sm:$0xff]
    %v7373 = vld [vmem:[%s7348 + $0xc0] sm:$0xff]
    %v7374 = vld [vmem:[%s7348 + $0xc8] sm:$0xff]
    %v7375 = vld [vmem:[%s7348 + $0xd0] sm:$0xff]
    %v7376 = vld [vmem:[%s7348 + $0xd8] sm:$0xff]
    %v7377 = vld [vmem:[%s7348 + $0xe0] sm:$0xff]
    %v7378 = vld [vmem:[%s7348 + $0xe8] sm:$0xff]
    %v7379 = vld [vmem:[%s7348 + $0xf0] sm:$0xff]
    %v7380 = vld [vmem:[%s7348 + $0xf8] sm:$0xff]
    %v7413 = vunpack.c.l.b16 %v7349
    %v7414 = vunpack.c.h.b16 %v7349
    %v7415 = vunpack.c.l.b16 %v7350
    %v7416 = vunpack.c.h.b16 %v7350
    %v7417 = vunpack.c.l.b16 %v7351
    %v7418 = vunpack.c.h.b16 %v7351
    %v7419 = vunpack.c.l.b16 %v7352
    %v7420 = vunpack.c.h.b16 %v7352
    %v7421 = vunpack.c.l.b16 %v7353
    %v7422 = vunpack.c.h.b16 %v7353
    %v7423 = vunpack.c.l.b16 %v7354
    %v7424 = vunpack.c.h.b16 %v7354
    %v7425 = vunpack.c.l.b16 %v7355
    %v7426 = vunpack.c.h.b16 %v7355
    %v7427 = vunpack.c.l.b16 %v7356
    %v7428 = vunpack.c.h.b16 %v7356
    %v7429 = vunpack.c.l.b16 %v7357
    %v7430 = vunpack.c.h.b16 %v7357
    %v7431 = vunpack.c.l.b16 %v7358
    %v7432 = vunpack.c.h.b16 %v7358
    %v7433 = vunpack.c.l.b16 %v7359
    %v7434 = vunpack.c.h.b16 %v7359
    %v7435 = vunpack.c.l.b16 %v7360
    %v7436 = vunpack.c.h.b16 %v7360
    %v7437 = vunpack.c.l.b16 %v7361
    %v7438 = vunpack.c.h.b16 %v7361
    %v7439 = vunpack.c.l.b16 %v7362
    %v7440 = vunpack.c.h.b16 %v7362
    %v7441 = vunpack.c.l.b16 %v7363
    %v7442 = vunpack.c.h.b16 %v7363
    %v7443 = vunpack.c.l.b16 %v7364
    %v7444 = vunpack.c.h.b16 %v7364
    %v7445 = vunpack.c.l.b16 %v7365
    %v7446 = vunpack.c.h.b16 %v7365
    %v7447 = vunpack.c.l.b16 %v7366
    %v7448 = vunpack.c.h.b16 %v7366
    %v7449 = vunpack.c.l.b16 %v7367
    %v7450 = vunpack.c.h.b16 %v7367
    %v7451 = vunpack.c.l.b16 %v7368
    %v7452 = vunpack.c.h.b16 %v7368
    %v7453 = vunpack.c.l.b16 %v7369
    %v7454 = vunpack.c.h.b16 %v7369
    %v7455 = vunpack.c.l.b16 %v7370
    %v7456 = vunpack.c.h.b16 %v7370
    %v7457 = vunpack.c.l.b16 %v7371
    %v7458 = vunpack.c.h.b16 %v7371
    %v7459 = vunpack.c.l.b16 %v7372
    %v7460 = vunpack.c.h.b16 %v7372
    %v7461 = vunpack.c.l.b16 %v7373
    %v7462 = vunpack.c.h.b16 %v7373
    %v7463 = vunpack.c.l.b16 %v7374
    %v7464 = vunpack.c.h.b16 %v7374
    %v7465 = vunpack.c.l.b16 %v7375
    %v7466 = vunpack.c.h.b16 %v7375
    %v7467 = vunpack.c.l.b16 %v7376
    %v7468 = vunpack.c.h.b16 %v7376
    %v7469 = vunpack.c.l.b16 %v7377
    %v7470 = vunpack.c.h.b16 %v7377
    %v7471 = vunpack.c.l.b16 %v7378
    %v7472 = vunpack.c.h.b16 %v7378
    %v7473 = vunpack.c.l.b16 %v7379
    %v7474 = vunpack.c.h.b16 %v7379
    %v7475 = vunpack.c.l.b16 %v7380
    %v7476 = vunpack.c.h.b16 %v7380
    %v7477 = vpack.c.b16 %v7415, %v7413
    %v7478 = vpack.c.b16 %v7416, %v7414
    %v7479 = vpack.c.b16 %v7419, %v7417
    %v7480 = vpack.c.b16 %v7420, %v7418
    %v7481 = vpack.c.b16 %v7423, %v7421
    %v7482 = vpack.c.b16 %v7424, %v7422
    %v7483 = vpack.c.b16 %v7427, %v7425
    %v7484 = vpack.c.b16 %v7428, %v7426
    %v7485 = vpack.c.b16 %v7431, %v7429
    %v7486 = vpack.c.b16 %v7432, %v7430
    %v7487 = vpack.c.b16 %v7435, %v7433
    %v7488 = vpack.c.b16 %v7436, %v7434
    %v7489 = vpack.c.b16 %v7439, %v7437
    %v7490 = vpack.c.b16 %v7440, %v7438
    %v7491 = vpack.c.b16 %v7443, %v7441
    %v7492 = vpack.c.b16 %v7444, %v7442
    %v7493 = vpack.c.b16 %v7447, %v7445
    %v7494 = vpack.c.b16 %v7448, %v7446
    %v7495 = vpack.c.b16 %v7451, %v7449
    %v7496 = vpack.c.b16 %v7452, %v7450
    %v7497 = vpack.c.b16 %v7455, %v7453
    %v7498 = vpack.c.b16 %v7456, %v7454
    %v7499 = vpack.c.b16 %v7459, %v7457
    %v7500 = vpack.c.b16 %v7460, %v7458
    %v7501 = vpack.c.b16 %v7463, %v7461
    %v7502 = vpack.c.b16 %v7464, %v7462
    %v7503 = vpack.c.b16 %v7467, %v7465
    %v7504 = vpack.c.b16 %v7468, %v7466
    %v7505 = vpack.c.b16 %v7471, %v7469
    %v7506 = vpack.c.b16 %v7472, %v7470
    %v7507 = vpack.c.b16 %v7475, %v7473
    %v7508 = vpack.c.b16 %v7476, %v7474
    %7541 = vmatprep.subr.bf16.mxu0 0
    %7542 = vmatpush1.bf16.msra.mxu0 %v7316
    %7543 = vmatprep.subr.bf16.mxu0 0
    %7544 = vmatpush1.bf16.msra.mxu0 %v7318
    %7545 = vmatprep.subr.bf16.mxu0 0
    %7546 = vmatpush1.bf16.msra.mxu0 %v7320
    %7547 = vmatprep.subr.bf16.mxu0 0
    %7548 = vmatpush1.bf16.msra.mxu0 %v7322
    %7549 = vmatprep.subr.bf16.mxu0 0
    %7550 = vmatpush1.bf16.msra.mxu0 %v7324
    %7551 = vmatprep.subr.bf16.mxu0 0
    %7552 = vmatpush1.bf16.msra.mxu0 %v7326
    %7553 = vmatprep.subr.bf16.mxu0 0
    %7554 = vmatpush1.bf16.msra.mxu0 %v7328
    %7555 = vmatprep.subr.bf16.mxu0 0
    %7556 = vmatpush1.bf16.msra.mxu0 %v7330
    %7557 = vmatprep.subr.bf16.mxu0 0
    %7558 = vmatpush1.bf16.msra.mxu0 %v7332
    %7559 = vmatprep.subr.bf16.mxu0 0
    %7560 = vmatpush1.bf16.msra.mxu0 %v7334
    %7561 = vmatprep.subr.bf16.mxu0 0
    %7562 = vmatpush1.bf16.msra.mxu0 %v7336
    %7563 = vmatprep.subr.bf16.mxu0 0
    %7564 = vmatpush1.bf16.msra.mxu0 %v7338
    %7565 = vmatprep.subr.bf16.mxu0 0
    %7566 = vmatpush1.bf16.msra.mxu0 %v7340
    %7567 = vmatprep.subr.bf16.mxu0 0
    %7568 = vmatpush1.bf16.msra.mxu0 %v7342
    %7569 = vmatprep.subr.bf16.mxu0 0
    %7570 = vmatpush1.bf16.msra.mxu0 %v7344
    %7571 = vmatprep.subr.bf16.mxu0 0
    %7572 = vmatpush1.bf16.msra.mxu0 %v7346
    %7573 = vmatprep.mubr.bf16.mxu0 %v7478
    %7574 = vmatmul.mubr.bf16.gmra.mrb[0].mxu0 %v7477
    %v7575 = vpop.f32.mrb[0].mxu0
    %v7576 = vadd.f32 0.0, %v7575
    %v7577 = vpop.f32.mrb[0].mxu0
    %v7578 = vpop.f32.mrb[0].mxu0
    %v7579 = vadd.f32 0.0, %v7578
    %v7580 = vpop.f32.mrb[0].mxu0
    %7581 = vmatprep.mubr.bf16.mxu0 %v7480
    %7582 = vmatmul.mubr.bf16.gmra.mrb[0].mxu0 %v7479
    %v7583 = vpop.f32.mrb[0].mxu0
    %v7584 = vadd.f32 0.0, %v7583
    %v7585 = vpop.f32.mrb[0].mxu0
    %v7586 = vpop.f32.mrb[0].mxu0
    %v7587 = vadd.f32 0.0, %v7586
    %v7588 = vpop.f32.mrb[0].mxu0
    %7589 = vmatprep.mubr.bf16.mxu0 %v7482
    %7590 = vmatmul.mubr.bf16.gmra.mrb[0].mxu0 %v7481
    %v7591 = vpop.f32.mrb[0].mxu0
    %v7592 = vadd.f32 0.0, %v7591
    %v7593 = vpop.f32.mrb[0].mxu0
    %v7594 = vpop.f32.mrb[0].mxu0
    %v7595 = vadd.f32 0.0, %v7594
    %v7596 = vpop.f32.mrb[0].mxu0
    %7597 = vmatprep.mubr.bf16.mxu0 %v7484
    %7598 = vmatmul.mubr.bf16.gmra.mrb[0].mxu0 %v7483
    %v7599 = vpop.f32.mrb[0].mxu0
    %v7600 = vadd.f32 0.0, %v7599
    %v7601 = vpop.f32.mrb[0].mxu0
    %v7602 = vpop.f32.mrb[0].mxu0
    %v7603 = vadd.f32 0.0, %v7602
    %v7604 = vpop.f32.mrb[0].mxu0
    %7605 = vmatprep.mubr.bf16.mxu0 %v7486
    %7606 = vmatmul.mubr.bf16.gmra.mrb[0].mxu0 %v7485
    %v7607 = vpop.f32.mrb[0].mxu0
    %v7608 = vadd.f32 0.0, %v7607
    %v7609 = vpop.f32.mrb[0].mxu0
    %v7610 = vpop.f32.mrb[0].mxu0
    %v7611 = vadd.f32 0.0, %v7610
    %v7612 = vpop.f32.mrb[0].mxu0
    %7613 = vmatprep.mubr.bf16.mxu0 %v7488
    %7614 = vmatmul.mubr.bf16.gmra.mrb[0].mxu0 %v7487
    %v7615 = vpop.f32.mrb[0].mxu0
    %v7616 = vadd.f32 0.0, %v7615
    %v7617 = vpop.f32.mrb[0].mxu0
    %v7618 = vpop.f32.mrb[0].mxu0
    %v7619 = vadd.f32 0.0, %v7618
    %v7620 = vpop.f32.mrb[0].mxu0
    %7621 = vmatprep.mubr.bf16.mxu0 %v7490
    %7622 = vmatmul.mubr.bf16.gmra.mrb[0].mxu0 %v7489
    %v7623 = vpop.f32.mrb[0].mxu0
    %v7624 = vadd.f32 0.0, %v7623
    %v7625 = vpop.f32.mrb[0].mxu0
    %v7626 = vpop.f32.mrb[0].mxu0
    %v7627 = vadd.f32 0.0, %v7626
    %v7628 = vpop.f32.mrb[0].mxu0
    %7629 = vmatprep.mubr.bf16.mxu0 %v7492
    %7630 = vmatmul.mubr.bf16.gmra.mrb[0].mxu0 %v7491
    %v7631 = vpop.f32.mrb[0].mxu0
    %v7632 = vadd.f32 0.0, %v7631
    %v7633 = vpop.f32.mrb[0].mxu0
    %v7634 = vpop.f32.mrb[0].mxu0
    %v7635 = vadd.f32 0.0, %v7634
    %v7636 = vpop.f32.mrb[0].mxu0
    %7637 = vmatprep.mubr.bf16.mxu0 %v7494
    %7638 = vmatmul.mubr.bf16.gmra.mrb[0].mxu0 %v7493
    %v7639 = vpop.f32.mrb[0].mxu0
    %v7640 = vadd.f32 0.0, %v7639
    %v7641 = vpop.f32.mrb[0].mxu0
    %v7642 = vpop.f32.mrb[0].mxu0
    %v7643 = vadd.f32 0.0, %v7642
    %v7644 = vpop.f32.mrb[0].mxu0
    %7645 = vmatprep.mubr.bf16.mxu0 %v7496
    %7646 = vmatmul.mubr.bf16.gmra.mrb[0].mxu0 %v7495
    %v7647 = vpop.f32.mrb[0].mxu0
    %v7648 = vadd.f32 0.0, %v7647
    %v7649 = vpop.f32.mrb[0].mxu0
    %v7650 = vpop.f32.mrb[0].mxu0
    %v7651 = vadd.f32 0.0, %v7650
    %v7652 = vpop.f32.mrb[0].mxu0
    %7653 = vmatprep.mubr.bf16.mxu0 %v7498
    %7654 = vmatmul.mubr.bf16.gmra.mrb[0].mxu0 %v7497
    %v7655 = vpop.f32.mrb[0].mxu0
    %v7656 = vadd.f32 0.0, %v7655
    %v7657 = vpop.f32.mrb[0].mxu0
    %v7658 = vpop.f32.mrb[0].mxu0
    %v7659 = vadd.f32 0.0, %v7658
    %v7660 = vpop.f32.mrb[0].mxu0
    %7661 = vmatprep.mubr.bf16.mxu0 %v7500
    %7662 = vmatmul.mubr.bf16.gmra.mrb[0].mxu0 %v7499
    %v7663 = vpop.f32.mrb[0].mxu0
    %v7664 = vadd.f32 0.0, %v7663
    %v7665 = vpop.f32.mrb[0].mxu0
    %v7666 = vpop.f32.mrb[0].mxu0
    %v7667 = vadd.f32 0.0, %v7666
    %v7668 = vpop.f32.mrb[0].mxu0
    %7669 = vmatprep.mubr.bf16.mxu0 %v7502
    %7670 = vmatmul.mubr.bf16.gmra.mrb[0].mxu0 %v7501
    %v7671 = vpop.f32.mrb[0].mxu0
    %v7672 = vadd.f32 0.0, %v7671
    %v7673 = vpop.f32.mrb[0].mxu0
    %v7674 = vpop.f32.mrb[0].mxu0
    %v7675 = vadd.f32 0.0, %v7674
    %v7676 = vpop.f32.mrb[0].mxu0
    %7677 = vmatprep.mubr.bf16.mxu0 %v7504
    %7678 = vmatmul.mubr.bf16.gmra.mrb[0].mxu0 %v7503
    %v7679 = vpop.f32.mrb[0].mxu0
    %v7680 = vadd.f32 0.0, %v7679
    %v7681 = vpop.f32.mrb[0].mxu0
    %v7682 = vpop.f32.mrb[0].mxu0
    %v7683 = vadd.f32 0.0, %v7682
    %v7684 = vpop.f32.mrb[0].mxu0
    %7685 = vmatprep.mubr.bf16.mxu0 %v7506
    %7686 = vmatmul.mubr.bf16.gmra.mrb[0].mxu0 %v7505
    %v7687 = vpop.f32.mrb[0].mxu0
    %v7688 = vadd.f32 0.0, %v7687
    %v7689 = vpop.f32.mrb[0].mxu0
    %v7690 = vpop.f32.mrb[0].mxu0
    %v7691 = vadd.f32 0.0, %v7690
    %v7692 = vpop.f32.mrb[0].mxu0
    %7693 = vmatprep.mubr.bf16.mxu0 %v7508
    %7694 = vmatmul.mubr.bf16.gmra.mrb[0].mxu0 %v7507
    %v7695 = vpop.f32.mrb[0].mxu0
    %v7696 = vadd.f32 0.0, %v7695
    %v7697 = vpop.f32.mrb[0].mxu0
    %v7698 = vpop.f32.mrb[0].mxu0
    %v7699 = vadd.f32 0.0, %v7698
    %v7700 = vpop.f32.mrb[0].mxu0
    %7701 = vdwg.mxu0
    %s7702 = scalar_lea.vmem [#allocation6], 2560
    %v7703 = vld [vmem:[%s7702] sm:$0xff]
    %v7704 = vld [vmem:[%s7702 + $0x8] sm:$0xff]
    %v7705 = vld [vmem:[%s7702 + $0x10] sm:$0xff]
    %v7706 = vld [vmem:[%s7702 + $0x18] sm:$0xff]
    %v7707 = vld [vmem:[%s7702 + $0x20] sm:$0xff]
    %v7708 = vld [vmem:[%s7702 + $0x28] sm:$0xff]
    %v7709 = vld [vmem:[%s7702 + $0x30] sm:$0xff]
    %v7710 = vld [vmem:[%s7702 + $0x38] sm:$0xff]
    %v7711 = vld [vmem:[%s7702 + $0x40] sm:$0xff]
    %v7712 = vld [vmem:[%s7702 + $0x48] sm:$0xff]
    %v7713 = vld [vmem:[%s7702 + $0x50] sm:$0xff]
    %v7714 = vld [vmem:[%s7702 + $0x58] sm:$0xff]
    %v7715 = vld [vmem:[%s7702 + $0x60] sm:$0xff]
    %v7716 = vld [vmem:[%s7702 + $0x68] sm:$0xff]
    %v7717 = vld [vmem:[%s7702 + $0x70] sm:$0xff]
    %v7718 = vld [vmem:[%s7702 + $0x78] sm:$0xff]
    %v7719 = vld [vmem:[%s7702 + $0x80] sm:$0xff]
    %v7720 = vld [vmem:[%s7702 + $0x88] sm:$0xff]
    %v7721 = vld [vmem:[%s7702 + $0x90] sm:$0xff]
    %v7722 = vld [vmem:[%s7702 + $0x98] sm:$0xff]
    %v7723 = vld [vmem:[%s7702 + $0xa0] sm:$0xff]
    %v7724 = vld [vmem:[%s7702 + $0xa8] sm:$0xff]
    %v7725 = vld [vmem:[%s7702 + $0xb0] sm:$0xff]
    %v7726 = vld [vmem:[%s7702 + $0xb8] sm:$0xff]
    %v7727 = vld [vmem:[%s7702 + $0xc0] sm:$0xff]
    %v7728 = vld [vmem:[%s7702 + $0xc8] sm:$0xff]
    %v7729 = vld [vmem:[%s7702 + $0xd0] sm:$0xff]
    %v7730 = vld [vmem:[%s7702 + $0xd8] sm:$0xff]
    %v7731 = vld [vmem:[%s7702 + $0xe0] sm:$0xff]
    %v7732 = vld [vmem:[%s7702 + $0xe8] sm:$0xff]
    %v7733 = vld [vmem:[%s7702 + $0xf0] sm:$0xff]
    %v7734 = vld [vmem:[%s7702 + $0xf8] sm:$0xff]
    %v7767 = vunpack.c.l.b16 %v7703
    %v7768 = vunpack.c.h.b16 %v7703
    %v7769 = vunpack.c.l.b16 %v7704
    %v7770 = vunpack.c.h.b16 %v7704
    %v7771 = vunpack.c.l.b16 %v7705
    %v7772 = vunpack.c.h.b16 %v7705
    %v7773 = vunpack.c.l.b16 %v7706
    %v7774 = vunpack.c.h.b16 %v7706
    %v7775 = vunpack.c.l.b16 %v7707
    %v7776 = vunpack.c.h.b16 %v7707
    %v7777 = vunpack.c.l.b16 %v7708
    %v7778 = vunpack.c.h.b16 %v7708
    %v7779 = vunpack.c.l.b16 %v7709
    %v7780 = vunpack.c.h.b16 %v7709
    %v7781 = vunpack.c.l.b16 %v7710
    %v7782 = vunpack.c.h.b16 %v7710
    %v7783 = vunpack.c.l.b16 %v7711
    %v7784 = vunpack.c.h.b16 %v7711
    %v7785 = vunpack.c.l.b16 %v7712
    %v7786 = vunpack.c.h.b16 %v7712
    %v7787 = vunpack.c.l.b16 %v7713
    %v7788 = vunpack.c.h.b16 %v7713
    %v7789 = vunpack.c.l.b16 %v7714
    %v7790 = vunpack.c.h.b16 %v7714
    %v7791 = vunpack.c.l.b16 %v7715
    %v7792 = vunpack.c.h.b16 %v7715
    %v7793 = vunpack.c.l.b16 %v7716
    %v7794 = vunpack.c.h.b16 %v7716
    %v7795 = vunpack.c.l.b16 %v7717
    %v7796 = vunpack.c.h.b16 %v7717
    %v7797 = vunpack.c.l.b16 %v7718
    %v7798 = vunpack.c.h.b16 %v7718
    %v7799 = vunpack.c.l.b16 %v7719
    %v7800 = vunpack.c.h.b16 %v7719
    %v7801 = vunpack.c.l.b16 %v7720
    %v7802 = vunpack.c.h.b16 %v7720
    %v7803 = vunpack.c.l.b16 %v7721
    %v7804 = vunpack.c.h.b16 %v7721
    %v7805 = vunpack.c.l.b16 %v7722
    %v7806 = vunpack.c.h.b16 %v7722
    %v7807 = vunpack.c.l.b16 %v7723
    %v7808 = vunpack.c.h.b16 %v7723
    %v7809 = vunpack.c.l.b16 %v7724
    %v7810 = vunpack.c.h.b16 %v7724
    %v7811 = vunpack.c.l.b16 %v7725
    %v7812 = vunpack.c.h.b16 %v7725
    %v7813 = vunpack.c.l.b16 %v7726
    %v7814 = vunpack.c.h.b16 %v7726
    %v7815 = vunpack.c.l.b16 %v7727
    %v7816 = vunpack.c.h.b16 %v7727
    %v7817 = vunpack.c.l.b16 %v7728
    %v7818 = vunpack.c.h.b16 %v7728
    %v7819 = vunpack.c.l.b16 %v7729
    %v7820 = vunpack.c.h.b16 %v7729
    %v7821 = vunpack.c.l.b16 %v7730
    %v7822 = vunpack.c.h.b16 %v7730
    %v7823 = vunpack.c.l.b16 %v7731
    %v7824 = vunpack.c.h.b16 %v7731
    %v7825 = vunpack.c.l.b16 %v7732
    %v7826 = vunpack.c.h.b16 %v7732
    %v7827 = vunpack.c.l.b16 %v7733
    %v7828 = vunpack.c.h.b16 %v7733
    %v7829 = vunpack.c.l.b16 %v7734
    %v7830 = vunpack.c.h.b16 %v7734
    %v7831 = vpack.c.b16 %v7769, %v7767
    %v7832 = vpack.c.b16 %v7770, %v7768
    %v7833 = vpack.c.b16 %v7773, %v7771
    %v7834 = vpack.c.b16 %v7774, %v7772
    %v7835 = vpack.c.b16 %v7777, %v7775
    %v7836 = vpack.c.b16 %v7778, %v7776
    %v7837 = vpack.c.b16 %v7781, %v7779
    %v7838 = vpack.c.b16 %v7782, %v7780
    %v7839 = vpack.c.b16 %v7785, %v7783
    %v7840 = vpack.c.b16 %v7786, %v7784
    %v7841 = vpack.c.b16 %v7789, %v7787
    %v7842 = vpack.c.b16 %v7790, %v7788
    %v7843 = vpack.c.b16 %v7793, %v7791
    %v7844 = vpack.c.b16 %v7794, %v7792
    %v7845 = vpack.c.b16 %v7797, %v7795
    %v7846 = vpack.c.b16 %v7798, %v7796
    %v7847 = vpack.c.b16 %v7801, %v7799
    %v7848 = vpack.c.b16 %v7802, %v7800
    %v7849 = vpack.c.b16 %v7805, %v7803
    %v7850 = vpack.c.b16 %v7806, %v7804
    %v7851 = vpack.c.b16 %v7809, %v7807
    %v7852 = vpack.c.b16 %v7810, %v7808
    %v7853 = vpack.c.b16 %v7813, %v7811
    %v7854 = vpack.c.b16 %v7814, %v7812
    %v7855 = vpack.c.b16 %v7817, %v7815
    %v7856 = vpack.c.b16 %v7818, %v7816
    %v7857 = vpack.c.b16 %v7821, %v7819
    %v7858 = vpack.c.b16 %v7822, %v7820
    %v7859 = vpack.c.b16 %v7825, %v7823
    %v7860 = vpack.c.b16 %v7826, %v7824
    %v7861 = vpack.c.b16 %v7829, %v7827
    %v7862 = vpack.c.b16 %v7830, %v7828
    %7911 = vrot.lane.b32.xlu0 %v7316, 64
    %v7912 = vpop.permute.xlu0 %7911
    %7913 = vrot.lane.b32.xlu0 %v7318, 64
    %v7914 = vpop.permute.xlu0 %7913
    %7915 = vrot.lane.b32.xlu0 %v7320, 64
    %v7916 = vpop.permute.xlu0 %7915
    %7917 = vrot.lane.b32.xlu0 %v7322, 64
    %v7918 = vpop.permute.xlu0 %7917
    %7919 = vrot.lane.b32.xlu0 %v7324, 64
    %v7920 = vpop.permute.xlu0 %7919
    %7921 = vrot.lane.b32.xlu0 %v7326, 64
    %v7922 = vpop.permute.xlu0 %7921
    %7923 = vrot.lane.b32.xlu0 %v7328, 64
    %v7924 = vpop.permute.xlu0 %7923
    %7925 = vrot.lane.b32.xlu0 %v7330, 64
    %v7926 = vpop.permute.xlu0 %7925
    %7927 = vrot.lane.b32.xlu0 %v7332, 64
    %v7928 = vpop.permute.xlu0 %7927
    %7929 = vrot.lane.b32.xlu0 %v7334, 64
    %v7930 = vpop.permute.xlu0 %7929
    %7931 = vrot.lane.b32.xlu0 %v7336, 64
    %v7932 = vpop.permute.xlu0 %7931
    %7933 = vrot.lane.b32.xlu0 %v7338, 64
    %v7934 = vpop.permute.xlu0 %7933
    %7935 = vrot.lane.b32.xlu0 %v7340, 64
    %v7936 = vpop.permute.xlu0 %7935
    %7937 = vrot.lane.b32.xlu0 %v7342, 64
    %v7938 = vpop.permute.xlu0 %7937
    %7939 = vrot.lane.b32.xlu0 %v7344, 64
    %v7940 = vpop.permute.xlu0 %7939
    %7941 = vrot.lane.b32.xlu0 %v7346, 64
    %v7942 = vpop.permute.xlu0 %7941
    %7959 = vmatprep.subr.bf16.mxu0 0
    %7960 = vmatpush1.bf16.msra.mxu0 %v7912
    %7961 = vmatprep.subr.bf16.mxu0 0
    %7962 = vmatpush1.bf16.msra.mxu0 %v7914
    %7963 = vmatprep.subr.bf16.mxu0 0
    %7964 = vmatpush1.bf16.msra.mxu0 %v7916
    %7965 = vmatprep.subr.bf16.mxu0 0
    %7966 = vmatpush1.bf16.msra.mxu0 %v7918
    %7967 = vmatprep.subr.bf16.mxu0 0
    %7968 = vmatpush1.bf16.msra.mxu0 %v7920
    %7969 = vmatprep.subr.bf16.mxu0 0
    %7970 = vmatpush1.bf16.msra.mxu0 %v7922
    %7971 = vmatprep.subr.bf16.mxu0 0
    %7972 = vmatpush1.bf16.msra.mxu0 %v7924
    %7973 = vmatprep.subr.bf16.mxu0 0
    %7974 = vmatpush1.bf16.msra.mxu0 %v7926
    %7975 = vmatprep.subr.bf16.mxu0 0
    %7976 = vmatpush1.bf16.msra.mxu0 %v7928
    %7977 = vmatprep.subr.bf16.mxu0 0
    %7978 = vmatpush1.bf16.msra.mxu0 %v7930
    %7979 = vmatprep.subr.bf16.mxu0 0
    %7980 = vmatpush1.bf16.msra.mxu0 %v7932
    %7981 = vmatprep.subr.bf16.mxu0 0
    %7982 = vmatpush1.bf16.msra.mxu0 %v7934
    %7983 = vmatprep.subr.bf16.mxu0 0
    %7984 = vmatpush1.bf16.msra.mxu0 %v7936
    %7985 = vmatprep.subr.bf16.mxu0 0
    %7986 = vmatpush1.bf16.msra.mxu0 %v7938
    %7987 = vmatprep.subr.bf16.mxu0 0
    %7988 = vmatpush1.bf16.msra.mxu0 %v7940
    %7989 = vmatprep.subr.bf16.mxu0 0
    %7990 = vmatpush1.bf16.msra.mxu0 %v7942
    %7991 = vmatprep.mubr.bf16.mxu0 %v7832
    %7992 = vmatmul.mubr.bf16.gmra.mrb[0].mxu0 %v7831
    %v7993 = vpop.f32.mrb[0].mxu0
    %v7994 = vadd.f32 0.0, %v7993
    %v7995 = vpop.f32.mrb[0].mxu0
    %v7996 = vpop.f32.mrb[0].mxu0
    %v7997 = vadd.f32 0.0, %v7996
    %v7998 = vpop.f32.mrb[0].mxu0
    %7999 = vmatprep.mubr.bf16.mxu0 %v7834
    %8000 = vmatmul.mubr.bf16.gmra.mrb[0].mxu0 %v7833
    %v8001 = vpop.f32.mrb[0].mxu0
    %v8002 = vadd.f32 0.0, %v8001
    %v8003 = vpop.f32.mrb[0].mxu0
    %v8004 = vpop.f32.mrb[0].mxu0
    %v8005 = vadd.f32 0.0, %v8004
    %v8006 = vpop.f32.mrb[0].mxu0
    %8007 = vmatprep.mubr.bf16.mxu0 %v7836
    %8008 = vmatmul.mubr.bf16.gmra.mrb[0].mxu0 %v7835
    %v8009 = vpop.f32.mrb[0].mxu0
    %v8010 = vadd.f32 0.0, %v8009
    %v8011 = vpop.f32.mrb[0].mxu0
    %v8012 = vpop.f32.mrb[0].mxu0
    %v8013 = vadd.f32 0.0, %v8012
    %v8014 = vpop.f32.mrb[0].mxu0
    %8015 = vmatprep.mubr.bf16.mxu0 %v7838
    %8016 = vmatmul.mubr.bf16.gmra.mrb[0].mxu0 %v7837
    %v8017 = vpop.f32.mrb[0].mxu0
    %v8018 = vadd.f32 0.0, %v8017
    %v8019 = vpop.f32.mrb[0].mxu0
    %v8020 = vpop.f32.mrb[0].mxu0
    %v8021 = vadd.f32 0.0, %v8020
    %v8022 = vpop.f32.mrb[0].mxu0
    %8023 = vmatprep.mubr.bf16.mxu0 %v7840
    %8024 = vmatmul.mubr.bf16.gmra.mrb[0].mxu0 %v7839
    %v8025 = vpop.f32.mrb[0].mxu0
    %v8026 = vadd.f32 0.0, %v8025
    %v8027 = vpop.f32.mrb[0].mxu0
    %v8028 = vpop.f32.mrb[0].mxu0
    %v8029 = vadd.f32 0.0, %v8028
    %v8030 = vpop.f32.mrb[0].mxu0
    %8031 = vmatprep.mubr.bf16.mxu0 %v7842
    %8032 = vmatmul.mubr.bf16.gmra.mrb[0].mxu0 %v7841
    %v8033 = vpop.f32.mrb[0].mxu0
    %v8034 = vadd.f32 0.0, %v8033
    %v8035 = vpop.f32.mrb[0].mxu0
    %v8036 = vpop.f32.mrb[0].mxu0
    %v8037 = vadd.f32 0.0, %v8036
    %v8038 = vpop.f32.mrb[0].mxu0
    %8039 = vmatprep.mubr.bf16.mxu0 %v7844
    %8040 = vmatmul.mubr.bf16.gmra.mrb[0].mxu0 %v7843
    %v8041 = vpop.f32.mrb[0].mxu0
    %v8042 = vadd.f32 0.0, %v8041
    %v8043 = vpop.f32.mrb[0].mxu0
    %v8044 = vpop.f32.mrb[0].mxu0
    %v8045 = vadd.f32 0.0, %v8044
    %v8046 = vpop.f32.mrb[0].mxu0
    %8047 = vmatprep.mubr.bf16.mxu0 %v7846
    %8048 = vmatmul.mubr.bf16.gmra.mrb[0].mxu0 %v7845
    %v8049 = vpop.f32.mrb[0].mxu0
    %v8050 = vadd.f32 0.0, %v8049
    %v8051 = vpop.f32.mrb[0].mxu0
    %v8052 = vpop.f32.mrb[0].mxu0
    %v8053 = vadd.f32 0.0, %v8052
    %v8054 = vpop.f32.mrb[0].mxu0
    %8055 = vmatprep.mubr.bf16.mxu0 %v7848
    %8056 = vmatmul.mubr.bf16.gmra.mrb[0].mxu0 %v7847
    %v8057 = vpop.f32.mrb[0].mxu0
    %v8058 = vadd.f32 0.0, %v8057
    %v8059 = vpop.f32.mrb[0].mxu0
    %v8060 = vpop.f32.mrb[0].mxu0
    %v8061 = vadd.f32 0.0, %v8060
    %v8062 = vpop.f32.mrb[0].mxu0
    %8063 = vmatprep.mubr.bf16.mxu0 %v7850
    %8064 = vmatmul.mubr.bf16.gmra.mrb[0].mxu0 %v7849
    %v8065 = vpop.f32.mrb[0].mxu0
    %v8066 = vadd.f32 0.0, %v8065
    %v8067 = vpop.f32.mrb[0].mxu0
    %v8068 = vpop.f32.mrb[0].mxu0
    %v8069 = vadd.f32 0.0, %v8068
    %v8070 = vpop.f32.mrb[0].mxu0
    %8071 = vmatprep.mubr.bf16.mxu0 %v7852
    %8072 = vmatmul.mubr.bf16.gmra.mrb[0].mxu0 %v7851
    %v8073 = vpop.f32.mrb[0].mxu0
    %v8074 = vadd.f32 0.0, %v8073
    %v8075 = vpop.f32.mrb[0].mxu0
    %v8076 = vpop.f32.mrb[0].mxu0
    %v8077 = vadd.f32 0.0, %v8076
    %v8078 = vpop.f32.mrb[0].mxu0
    %8079 = vmatprep.mubr.bf16.mxu0 %v7854
    %8080 = vmatmul.mubr.bf16.gmra.mrb[0].mxu0 %v7853
    %v8081 = vpop.f32.mrb[0].mxu0
    %v8082 = vadd.f32 0.0, %v8081
    %v8083 = vpop.f32.mrb[0].mxu0
    %v8084 = vpop.f32.mrb[0].mxu0
    %v8085 = vadd.f32 0.0, %v8084
    %v8086 = vpop.f32.mrb[0].mxu0
    %8087 = vmatprep.mubr.bf16.mxu0 %v7856
    %8088 = vmatmul.mubr.bf16.gmra.mrb[0].mxu0 %v7855
    %v8089 = vpop.f32.mrb[0].mxu0
    %v8090 = vadd.f32 0.0, %v8089
    %v8091 = vpop.f32.mrb[0].mxu0
    %v8092 = vpop.f32.mrb[0].mxu0
    %v8093 = vadd.f32 0.0, %v8092
    %v8094 = vpop.f32.mrb[0].mxu0
    %8095 = vmatprep.mubr.bf16.mxu0 %v7858
    %8096 = vmatmul.mubr.bf16.gmra.mrb[0].mxu0 %v7857
    %v8097 = vpop.f32.mrb[0].mxu0
    %v8098 = vadd.f32 0.0, %v8097
    %v8099 = vpop.f32.mrb[0].mxu0
    %v8100 = vpop.f32.mrb[0].mxu0
    %v8101 = vadd.f32 0.0, %v8100
    %v8102 = vpop.f32.mrb[0].mxu0
    %8103 = vmatprep.mubr.bf16.mxu0 %v7860
    %8104 = vmatmul.mubr.bf16.gmra.mrb[0].mxu0 %v7859
    %v8105 = vpop.f32.mrb[0].mxu0
    %v8106 = vadd.f32 0.0, %v8105
    %v8107 = vpop.f32.mrb[0].mxu0
    %v8108 = vpop.f32.mrb[0].mxu0
    %v8109 = vadd.f32 0.0, %v8108
    %v8110 = vpop.f32.mrb[0].mxu0
    %8111 = vmatprep.mubr.bf16.mxu0 %v7862
    %8112 = vmatmul.mubr.bf16.gmra.mrb[0].mxu0 %v7861
    %v8113 = vpop.f32.mrb[0].mxu0
    %v8114 = vadd.f32 0.0, %v8113
    %v8115 = vpop.f32.mrb[0].mxu0
    %v8116 = vpop.f32.mrb[0].mxu0
    %v8117 = vadd.f32 0.0, %v8116
    %v8118 = vpop.f32.mrb[0].mxu0
    %8119 = vdwg.mxu0
    %s8120 = scalar_lea.vmem [#allocation6], 2816
    %v8121 = vld [vmem:[%s8120] sm:$0xff]
    %v8122 = vld [vmem:[%s8120 + $0x8] sm:$0xff]
    %v8123 = vld [vmem:[%s8120 + $0x10] sm:$0xff]
    %v8124 = vld [vmem:[%s8120 + $0x18] sm:$0xff]
    %v8125 = vld [vmem:[%s8120 + $0x20] sm:$0xff]
    %v8126 = vld [vmem:[%s8120 + $0x28] sm:$0xff]
    %v8127 = vld [vmem:[%s8120 + $0x30] sm:$0xff]
    %v8128 = vld [vmem:[%s8120 + $0x38] sm:$0xff]
    %v8129 = vld [vmem:[%s8120 + $0x40] sm:$0xff]
    %v8130 = vld [vmem:[%s8120 + $0x48] sm:$0xff]
    %v8131 = vld [vmem:[%s8120 + $0x50] sm:$0xff]
    %v8132 = vld [vmem:[%s8120 + $0x58] sm:$0xff]
    %v8133 = vld [vmem:[%s8120 + $0x60] sm:$0xff]
    %v8134 = vld [vmem:[%s8120 + $0x68] sm:$0xff]
    %v8135 = vld [vmem:[%s8120 + $0x70] sm:$0xff]
    %v8136 = vld [vmem:[%s8120 + $0x78] sm:$0xff]
    %v8137 = vld [vmem:[%s8120 + $0x80] sm:$0xff]
    %v8138 = vld [vmem:[%s8120 + $0x88] sm:$0xff]
    %v8139 = vld [vmem:[%s8120 + $0x90] sm:$0xff]
    %v8140 = vld [vmem:[%s8120 + $0x98] sm:$0xff]
    %v8141 = vld [vmem:[%s8120 + $0xa0] sm:$0xff]
    %v8142 = vld [vmem:[%s8120 + $0xa8] sm:$0xff]
    %v8143 = vld [vmem:[%s8120 + $0xb0] sm:$0xff]
    %v8144 = vld [vmem:[%s8120 + $0xb8] sm:$0xff]
    %v8145 = vld [vmem:[%s8120 + $0xc0] sm:$0xff]
    %v8146 = vld [vmem:[%s8120 + $0xc8] sm:$0xff]
    %v8147 = vld [vmem:[%s8120 + $0xd0] sm:$0xff]
    %v8148 = vld [vmem:[%s8120 + $0xd8] sm:$0xff]
    %v8149 = vld [vmem:[%s8120 + $0xe0] sm:$0xff]
    %v8150 = vld [vmem:[%s8120 + $0xe8] sm:$0xff]
    %v8151 = vld [vmem:[%s8120 + $0xf0] sm:$0xff]
    %v8152 = vld [vmem:[%s8120 + $0xf8] sm:$0xff]
    %v8185 = vunpack.c.l.b16 %v8121
    %v8186 = vunpack.c.h.b16 %v8121
    %v8187 = vunpack.c.l.b16 %v8122
    %v8188 = vunpack.c.h.b16 %v8122
    %v8189 = vunpack.c.l.b16 %v8123
    %v8190 = vunpack.c.h.b16 %v8123
    %v8191 = vunpack.c.l.b16 %v8124
    %v8192 = vunpack.c.h.b16 %v8124
    %v8193 = vunpack.c.l.b16 %v8125
    %v8194 = vunpack.c.h.b16 %v8125
    %v8195 = vunpack.c.l.b16 %v8126
    %v8196 = vunpack.c.h.b16 %v8126
    %v8197 = vunpack.c.l.b16 %v8127
    %v8198 = vunpack.c.h.b16 %v8127
    %v8199 = vunpack.c.l.b16 %v8128
    %v8200 = vunpack.c.h.b16 %v8128
    %v8201 = vunpack.c.l.b16 %v8129
    %v8202 = vunpack.c.h.b16 %v8129
    %v8203 = vunpack.c.l.b16 %v8130
    %v8204 = vunpack.c.h.b16 %v8130
    %v8205 = vunpack.c.l.b16 %v8131
    %v8206 = vunpack.c.h.b16 %v8131
    %v8207 = vunpack.c.l.b16 %v8132
    %v8208 = vunpack.c.h.b16 %v8132
    %v8209 = vunpack.c.l.b16 %v8133
    %v8210 = vunpack.c.h.b16 %v8133
    %v8211 = vunpack.c.l.b16 %v8134
    %v8212 = vunpack.c.h.b16 %v8134
    %v8213 = vunpack.c.l.b16 %v8135
    %v8214 = vunpack.c.h.b16 %v8135
    %v8215 = vunpack.c.l.b16 %v8136
    %v8216 = vunpack.c.h.b16 %v8136
    %v8217 = vunpack.c.l.b16 %v8137
    %v8218 = vunpack.c.h.b16 %v8137
    %v8219 = vunpack.c.l.b16 %v8138
    %v8220 = vunpack.c.h.b16 %v8138
    %v8221 = vunpack.c.l.b16 %v8139
    %v8222 = vunpack.c.h.b16 %v8139
    %v8223 = vunpack.c.l.b16 %v8140
    %v8224 = vunpack.c.h.b16 %v8140
    %v8225 = vunpack.c.l.b16 %v8141
    %v8226 = vunpack.c.h.b16 %v8141
    %v8227 = vunpack.c.l.b16 %v8142
    %v8228 = vunpack.c.h.b16 %v8142
    %v8229 = vunpack.c.l.b16 %v8143
    %v8230 = vunpack.c.h.b16 %v8143
    %v8231 = vunpack.c.l.b16 %v8144
    %v8232 = vunpack.c.h.b16 %v8144
    %v8233 = vunpack.c.l.b16 %v8145
    %v8234 = vunpack.c.h.b16 %v8145
    %v8235 = vunpack.c.l.b16 %v8146
    %v8236 = vunpack.c.h.b16 %v8146
    %v8237 = vunpack.c.l.b16 %v8147
    %v8238 = vunpack.c.h.b16 %v8147
    %v8239 = vunpack.c.l.b16 %v8148
    %v8240 = vunpack.c.h.b16 %v8148
    %v8241 = vunpack.c.l.b16 %v8149
    %v8242 = vunpack.c.h.b16 %v8149
    %v8243 = vunpack.c.l.b16 %v8150
    %v8244 = vunpack.c.h.b16 %v8150
    %v8245 = vunpack.c.l.b16 %v8151
    %v8246 = vunpack.c.h.b16 %v8151
    %v8247 = vunpack.c.l.b16 %v8152
    %v8248 = vunpack.c.h.b16 %v8152
    %v8249 = vpack.c.b16 %v8187, %v8185
    %v8250 = vpack.c.b16 %v8188, %v8186
    %v8251 = vpack.c.b16 %v8191, %v8189
    %v8252 = vpack.c.b16 %v8192, %v8190
    %v8253 = vpack.c.b16 %v8195, %v8193
    %v8254 = vpack.c.b16 %v8196, %v8194
    %v8255 = vpack.c.b16 %v8199, %v8197
    %v8256 = vpack.c.b16 %v8200, %v8198
    %v8257 = vpack.c.b16 %v8203, %v8201
    %v8258 = vpack.c.b16 %v8204, %v8202
    %v8259 = vpack.c.b16 %v8207, %v8205
    %v8260 = vpack.c.b16 %v8208, %v8206
    %v8261 = vpack.c.b16 %v8211, %v8209
    %v8262 = vpack.c.b16 %v8212, %v8210
    %v8263 = vpack.c.b16 %v8215, %v8213
    %v8264 = vpack.c.b16 %v8216, %v8214
    %v8265 = vpack.c.b16 %v8219, %v8217
    %v8266 = vpack.c.b16 %v8220, %v8218
    %v8267 = vpack.c.b16 %v8223, %v8221
    %v8268 = vpack.c.b16 %v8224, %v8222
    %v8269 = vpack.c.b16 %v8227, %v8225
    %v8270 = vpack.c.b16 %v8228, %v8226
    %v8271 = vpack.c.b16 %v8231, %v8229
    %v8272 = vpack.c.b16 %v8232, %v8230
    %v8273 = vpack.c.b16 %v8235, %v8233
    %v8274 = vpack.c.b16 %v8236, %v8234
    %v8275 = vpack.c.b16 %v8239, %v8237
    %v8276 = vpack.c.b16 %v8240, %v8238
    %v8277 = vpack.c.b16 %v8243, %v8241
    %v8278 = vpack.c.b16 %v8244, %v8242
    %v8279 = vpack.c.b16 %v8247, %v8245
    %v8280 = vpack.c.b16 %v8248, %v8246
    %8313 = vmatprep.subr.bf16.mxu0 0
    %8314 = vmatpush1.bf16.msra.mxu0 %v7317
    %8315 = vmatprep.subr.bf16.mxu0 0
    %8316 = vmatpush1.bf16.msra.mxu0 %v7319
    %8317 = vmatprep.subr.bf16.mxu0 0
    %8318 = vmatpush1.bf16.msra.mxu0 %v7321
    %8319 = vmatprep.subr.bf16.mxu0 0
    %8320 = vmatpush1.bf16.msra.mxu0 %v7323
    %8321 = vmatprep.subr.bf16.mxu0 0
    %8322 = vmatpush1.bf16.msra.mxu0 %v7325
    %8323 = vmatprep.subr.bf16.mxu0 0
    %8324 = vmatpush1.bf16.msra.mxu0 %v7327
    %8325 = vmatprep.subr.bf16.mxu0 0
    %8326 = vmatpush1.bf16.msra.mxu0 %v7329
    %8327 = vmatprep.subr.bf16.mxu0 0
    %8328 = vmatpush1.bf16.msra.mxu0 %v7331
    %8329 = vmatprep.subr.bf16.mxu0 0
    %8330 = vmatpush1.bf16.msra.mxu0 %v7333
    %8331 = vmatprep.subr.bf16.mxu0 0
    %8332 = vmatpush1.bf16.msra.mxu0 %v7335
    %8333 = vmatprep.subr.bf16.mxu0 0
    %8334 = vmatpush1.bf16.msra.mxu0 %v7337
    %8335 = vmatprep.subr.bf16.mxu0 0
    %8336 = vmatpush1.bf16.msra.mxu0 %v7339
    %8337 = vmatprep.subr.bf16.mxu0 0
    %8338 = vmatpush1.bf16.msra.mxu0 %v7341
    %8339 = vmatprep.subr.bf16.mxu0 0
    %8340 = vmatpush1.bf16.msra.mxu0 %v7343
    %8341 = vmatprep.subr.bf16.mxu0 0
    %8342 = vmatpush1.bf16.msra.mxu0 %v7345
    %8343 = vmatprep.subr.bf16.mxu0 0
    %8344 = vmatpush1.bf16.msra.mxu0 %v7347
    %8345 = vmatprep.mubr.bf16.mxu0 %v8250
    %8346 = vmatmul.mubr.bf16.gmra.mrb[0].mxu0 %v8249
    %v8347 = vpop.f32.mrb[0].mxu0
    %v8348 = vadd.f32 0.0, %v8347
    %v8349 = vpop.f32.mrb[0].mxu0
    %v8350 = vpop.f32.mrb[0].mxu0
    %v8351 = vadd.f32 0.0, %v8350
    %v8352 = vpop.f32.mrb[0].mxu0
    %8353 = vmatprep.mubr.bf16.mxu0 %v8252
    %8354 = vmatmul.mubr.bf16.gmra.mrb[0].mxu0 %v8251
    %v8355 = vpop.f32.mrb[0].mxu0
    %v8356 = vadd.f32 0.0, %v8355
    %v8357 = vpop.f32.mrb[0].mxu0
    %v8358 = vpop.f32.mrb[0].mxu0
    %v8359 = vadd.f32 0.0, %v8358
    %v8360 = vpop.f32.mrb[0].mxu0
    %8361 = vmatprep.mubr.bf16.mxu0 %v8254
    %8362 = vmatmul.mubr.bf16.gmra.mrb[0].mxu0 %v8253
    %v8363 = vpop.f32.mrb[0].mxu0
    %v8364 = vadd.f32 0.0, %v8363
    %v8365 = vpop.f32.mrb[0].mxu0
    %v8366 = vpop.f32.mrb[0].mxu0
    %v8367 = vadd.f32 0.0, %v8366
    %v8368 = vpop.f32.mrb[0].mxu0
    %8369 = vmatprep.mubr.bf16.mxu0 %v8256
    %8370 = vmatmul.mubr.bf16.gmra.mrb[0].mxu0 %v8255
    %v8371 = vpop.f32.mrb[0].mxu0
    %v8372 = vadd.f32 0.0, %v8371
    %v8373 = vpop.f32.mrb[0].mxu0
    %v8374 = vpop.f32.mrb[0].mxu0
    %v8375 = vadd.f32 0.0, %v8374
    %v8376 = vpop.f32.mrb[0].mxu0
    %8377 = vmatprep.mubr.bf16.mxu0 %v8258
    %8378 = vmatmul.mubr.bf16.gmra.mrb[0].mxu0 %v8257
    %v8379 = vpop.f32.mrb[0].mxu0
    %v8380 = vadd.f32 0.0, %v8379
    %v8381 = vpop.f32.mrb[0].mxu0
    %v8382 = vpop.f32.mrb[0].mxu0
    %v8383 = vadd.f32 0.0, %v8382
    %v8384 = vpop.f32.mrb[0].mxu0
    %8385 = vmatprep.mubr.bf16.mxu0 %v8260
    %8386 = vmatmul.mubr.bf16.gmra.mrb[0].mxu0 %v8259
    %v8387 = vpop.f32.mrb[0].mxu0
    %v8388 = vadd.f32 0.0, %v8387
    %v8389 = vpop.f32.mrb[0].mxu0
    %v8390 = vpop.f32.mrb[0].mxu0
    %v8391 = vadd.f32 0.0, %v8390
    %v8392 = vpop.f32.mrb[0].mxu0
    %8393 = vmatprep.mubr.bf16.mxu0 %v8262
    %8394 = vmatmul.mubr.bf16.gmra.mrb[0].mxu0 %v8261
    %v8395 = vpop.f32.mrb[0].mxu0
    %v8396 = vadd.f32 0.0, %v8395
    %v8397 = vpop.f32.mrb[0].mxu0
    %v8398 = vpop.f32.mrb[0].mxu0
    %v8399 = vadd.f32 0.0, %v8398
    %v8400 = vpop.f32.mrb[0].mxu0
    %8401 = vmatprep.mubr.bf16.mxu0 %v8264
    %8402 = vmatmul.mubr.bf16.gmra.mrb[0].mxu0 %v8263
    %v8403 = vpop.f32.mrb[0].mxu0
    %v8404 = vadd.f32 0.0, %v8403
    %v8405 = vpop.f32.mrb[0].mxu0
    %v8406 = vpop.f32.mrb[0].mxu0
    %v8407 = vadd.f32 0.0, %v8406
    %v8408 = vpop.f32.mrb[0].mxu0
    %8409 = vmatprep.mubr.bf16.mxu0 %v8266
    %8410 = vmatmul.mubr.bf16.gmra.mrb[0].mxu0 %v8265
    %v8411 = vpop.f32.mrb[0].mxu0
    %v8412 = vadd.f32 0.0, %v8411
    %v8413 = vpop.f32.mrb[0].mxu0
    %v8414 = vpop.f32.mrb[0].mxu0
    %v8415 = vadd.f32 0.0, %v8414
    %v8416 = vpop.f32.mrb[0].mxu0
    %8417 = vmatprep.mubr.bf16.mxu0 %v8268
    %8418 = vmatmul.mubr.bf16.gmra.mrb[0].mxu0 %v8267
    %v8419 = vpop.f32.mrb[0].mxu0
    %v8420 = vadd.f32 0.0, %v8419
    %v8421 = vpop.f32.mrb[0].mxu0
    %v8422 = vpop.f32.mrb[0].mxu0
    %v8423 = vadd.f32 0.0, %v8422
    %v8424 = vpop.f32.mrb[0].mxu0
    %8425 = vmatprep.mubr.bf16.mxu0 %v8270
    %8426 = vmatmul.mubr.bf16.gmra.mrb[0].mxu0 %v8269
    %v8427 = vpop.f32.mrb[0].mxu0
    %v8428 = vadd.f32 0.0, %v8427
    %v8429 = vpop.f32.mrb[0].mxu0
    %v8430 = vpop.f32.mrb[0].mxu0
    %v8431 = vadd.f32 0.0, %v8430
    %v8432 = vpop.f32.mrb[0].mxu0
    %8433 = vmatprep.mubr.bf16.mxu0 %v8272
    %8434 = vmatmul.mubr.bf16.gmra.mrb[0].mxu0 %v8271
    %v8435 = vpop.f32.mrb[0].mxu0
    %v8436 = vadd.f32 0.0, %v8435
    %v8437 = vpop.f32.mrb[0].mxu0
    %v8438 = vpop.f32.mrb[0].mxu0
    %v8439 = vadd.f32 0.0, %v8438
    %v8440 = vpop.f32.mrb[0].mxu0
    %8441 = vmatprep.mubr.bf16.mxu0 %v8274
    %8442 = vmatmul.mubr.bf16.gmra.mrb[0].mxu0 %v8273
    %v8443 = vpop.f32.mrb[0].mxu0
    %v8444 = vadd.f32 0.0, %v8443
    %v8445 = vpop.f32.mrb[0].mxu0
    %v8446 = vpop.f32.mrb[0].mxu0
    %v8447 = vadd.f32 0.0, %v8446
    %v8448 = vpop.f32.mrb[0].mxu0
    %8449 = vmatprep.mubr.bf16.mxu0 %v8276
    %8450 = vmatmul.mubr.bf16.gmra.mrb[0].mxu0 %v8275
    %v8451 = vpop.f32.mrb[0].mxu0
    %v8452 = vadd.f32 0.0, %v8451
    %v8453 = vpop.f32.mrb[0].mxu0
    %v8454 = vpop.f32.mrb[0].mxu0
    %v8455 = vadd.f32 0.0, %v8454
    %v8456 = vpop.f32.mrb[0].mxu0
    %8457 = vmatprep.mubr.bf16.mxu0 %v8278
    %8458 = vmatmul.mubr.bf16.gmra.mrb[0].mxu0 %v8277
    %v8459 = vpop.f32.mrb[0].mxu0
    %v8460 = vadd.f32 0.0, %v8459
    %v8461 = vpop.f32.mrb[0].mxu0
    %v8462 = vpop.f32.mrb[0].mxu0
    %v8463 = vadd.f32 0.0, %v8462
    %v8464 = vpop.f32.mrb[0].mxu0
    %8465 = vmatprep.mubr.bf16.mxu0 %v8280
    %8466 = vmatmul.mubr.bf16.gmra.mrb[0].mxu0 %v8279
    %v8467 = vpop.f32.mrb[0].mxu0
    %v8468 = vadd.f32 0.0, %v8467
    %v8469 = vpop.f32.mrb[0].mxu0
    %v8470 = vpop.f32.mrb[0].mxu0
    %v8471 = vadd.f32 0.0, %v8470
    %v8472 = vpop.f32.mrb[0].mxu0
    %8473 = vdwg.mxu0
    %8506 = vrot.lane.b32.xlu0 %v7994, 64
    %v8507 = vpop.permute.xlu0 %8506
    %8508 = vrot.lane.b32.xlu0 %v7997, 64
    %v8509 = vpop.permute.xlu0 %8508
    %8510 = vrot.lane.b32.xlu0 %v8002, 64
    %v8511 = vpop.permute.xlu0 %8510
    %8512 = vrot.lane.b32.xlu0 %v8005, 64
    %v8513 = vpop.permute.xlu0 %8512
    %8514 = vrot.lane.b32.xlu0 %v8010, 64
    %v8515 = vpop.permute.xlu0 %8514
    %8516 = vrot.lane.b32.xlu0 %v8013, 64
    %v8517 = vpop.permute.xlu0 %8516
    %8518 = vrot.lane.b32.xlu0 %v8018, 64
    %v8519 = vpop.permute.xlu0 %8518
    %8520 = vrot.lane.b32.xlu0 %v8021, 64
    %v8521 = vpop.permute.xlu0 %8520
    %8522 = vrot.lane.b32.xlu0 %v8026, 64
    %v8523 = vpop.permute.xlu0 %8522
    %8524 = vrot.lane.b32.xlu0 %v8029, 64
    %v8525 = vpop.permute.xlu0 %8524
    %8526 = vrot.lane.b32.xlu0 %v8034, 64
    %v8527 = vpop.permute.xlu0 %8526
    %8528 = vrot.lane.b32.xlu0 %v8037, 64
    %v8529 = vpop.permute.xlu0 %8528
    %8530 = vrot.lane.b32.xlu0 %v8042, 64
    %v8531 = vpop.permute.xlu0 %8530
    %8532 = vrot.lane.b32.xlu0 %v8045, 64
    %v8533 = vpop.permute.xlu0 %8532
    %8534 = vrot.lane.b32.xlu0 %v8050, 64
    %v8535 = vpop.permute.xlu0 %8534
    %8536 = vrot.lane.b32.xlu0 %v8053, 64
    %v8537 = vpop.permute.xlu0 %8536
    %8538 = vrot.lane.b32.xlu0 %v8058, 64
    %v8539 = vpop.permute.xlu0 %8538
    %8540 = vrot.lane.b32.xlu0 %v8061, 64
    %v8541 = vpop.permute.xlu0 %8540
    %8542 = vrot.lane.b32.xlu0 %v8066, 64
    %v8543 = vpop.permute.xlu0 %8542
    %8544 = vrot.lane.b32.xlu0 %v8069, 64
    %v8545 = vpop.permute.xlu0 %8544
    %8546 = vrot.lane.b32.xlu0 %v8074, 64
    %v8547 = vpop.permute.xlu0 %8546
    %8548 = vrot.lane.b32.xlu0 %v8077, 64
    %v8549 = vpop.permute.xlu0 %8548
    %8550 = vrot.lane.b32.xlu0 %v8082, 64
    %v8551 = vpop.permute.xlu0 %8550
    %8552 = vrot.lane.b32.xlu0 %v8085, 64
    %v8553 = vpop.permute.xlu0 %8552
    %8554 = vrot.lane.b32.xlu0 %v8090, 64
    %v8555 = vpop.permute.xlu0 %8554
    %8556 = vrot.lane.b32.xlu0 %v8093, 64
    %v8557 = vpop.permute.xlu0 %8556
    %8558 = vrot.lane.b32.xlu0 %v8098, 64
    %v8559 = vpop.permute.xlu0 %8558
    %8560 = vrot.lane.b32.xlu0 %v8101, 64
    %v8561 = vpop.permute.xlu0 %8560
    %8562 = vrot.lane.b32.xlu0 %v8106, 64
    %v8563 = vpop.permute.xlu0 %8562
    %8564 = vrot.lane.b32.xlu0 %v8109, 64
    %v8565 = vpop.permute.xlu0 %8564
    %8566 = vrot.lane.b32.xlu0 %v8114, 64
    %v8567 = vpop.permute.xlu0 %8566
    %8568 = vrot.lane.b32.xlu0 %v8117, 64
    %v8569 = vpop.permute.xlu0 %8568
    %v8602 = vsel %vm2336, %v7576, %v8507
    %v8603 = vsel %vm2336, %v7579, %v8509
    %v8604 = vsel %vm2336, %v7584, %v8511
    %v8605 = vsel %vm2336, %v7587, %v8513
    %v8606 = vsel %vm2336, %v7592, %v8515
    %v8607 = vsel %vm2336, %v7595, %v8517
    %v8608 = vsel %vm2336, %v7600, %v8519
    %v8609 = vsel %vm2336, %v7603, %v8521
    %v8610 = vsel %vm2336, %v7608, %v8523
    %v8611 = vsel %vm2336, %v7611, %v8525
    %v8612 = vsel %vm2336, %v7616, %v8527
    %v8613 = vsel %vm2336, %v7619, %v8529
    %v8614 = vsel %vm2336, %v7624, %v8531
    %v8615 = vsel %vm2336, %v7627, %v8533
    %v8616 = vsel %vm2336, %v7632, %v8535
    %v8617 = vsel %vm2336, %v7635, %v8537
    %v8618 = vsel %vm2336, %v7640, %v8539
    %v8619 = vsel %vm2336, %v7643, %v8541
    %v8620 = vsel %vm2336, %v7648, %v8543
    %v8621 = vsel %vm2336, %v7651, %v8545
    %v8622 = vsel %vm2336, %v7656, %v8547
    %v8623 = vsel %vm2336, %v7659, %v8549
    %v8624 = vsel %vm2336, %v7664, %v8551
    %v8625 = vsel %vm2336, %v7667, %v8553
    %v8626 = vsel %vm2336, %v7672, %v8555
    %v8627 = vsel %vm2336, %v7675, %v8557
    %v8628 = vsel %vm2336, %v7680, %v8559
    %v8629 = vsel %vm2336, %v7683, %v8561
    %v8630 = vsel %vm2336, %v7688, %v8563
    %v8631 = vsel %vm2336, %v7691, %v8565
    %v8632 = vsel %vm2336, %v7696, %v8567
    %v8633 = vsel %vm2336, %v7699, %v8569
    %s8634 = scalar_lea.vmem [#allocation10], 384
    %v8635 = vld [vmem:[%s8634] sm:$0xff]
    %v8636 = vld [vmem:[%s8634 + $0x8] sm:$0xff]
    %v8637 = vld [vmem:[%s8634 + $0x10] sm:$0xff]
    %v8638 = vld [vmem:[%s8634 + $0x18] sm:$0xff]
    %v8639 = vld [vmem:[%s8634 + $0x20] sm:$0xff]
    %v8640 = vld [vmem:[%s8634 + $0x28] sm:$0xff]
    %v8641 = vld [vmem:[%s8634 + $0x30] sm:$0xff]
    %v8642 = vld [vmem:[%s8634 + $0x38] sm:$0xff]
    %v8643 = vld [vmem:[%s8634 + $0x40] sm:$0xff]
    %v8644 = vld [vmem:[%s8634 + $0x48] sm:$0xff]
    %v8645 = vld [vmem:[%s8634 + $0x50] sm:$0xff]
    %v8646 = vld [vmem:[%s8634 + $0x58] sm:$0xff]
    %v8647 = vld [vmem:[%s8634 + $0x60] sm:$0xff]
    %v8648 = vld [vmem:[%s8634 + $0x68] sm:$0xff]
    %v8649 = vld [vmem:[%s8634 + $0x70] sm:$0xff]
    %v8650 = vld [vmem:[%s8634 + $0x78] sm:$0xff]
    %v8651 = vld [vmem:[%s8634 + $0x80] sm:$0xff]
    %v8652 = vld [vmem:[%s8634 + $0x88] sm:$0xff]
    %v8653 = vld [vmem:[%s8634 + $0x90] sm:$0xff]
    %v8654 = vld [vmem:[%s8634 + $0x98] sm:$0xff]
    %v8655 = vld [vmem:[%s8634 + $0xa0] sm:$0xff]
    %v8656 = vld [vmem:[%s8634 + $0xa8] sm:$0xff]
    %v8657 = vld [vmem:[%s8634 + $0xb0] sm:$0xff]
    %v8658 = vld [vmem:[%s8634 + $0xb8] sm:$0xff]
    %s8659 = scalar_lea.vmem [#allocation12], 4
    %v8660 = vld [vmem:[%s8659] sm:$0x3]
    %v8662 = vlaneseq
    %v8663 = vshrl.u32 %v8662, 7
    %v8664 = vsub.s32 0, %v8663
    %v8665 = vrot.slane %v8660, %v8664
    %v8666 = vlaneseq
    %v8667 = vshrl.u32 %v8666, 7
    %v8668 = vsub.s32 1, %v8667
    %v8669 = vrot.slane %v8660, %v8668
    %v8696 = vunpack.c.l.b16 %v8635
    %v8697 = vunpack.c.h.b16 %v8635
    %v8698 = vunpack.c.l.b16 %v8636
    %v8699 = vunpack.c.h.b16 %v8636
    %v8700 = vunpack.c.l.b16 %v8637
    %v8701 = vunpack.c.h.b16 %v8637
    %v8702 = vunpack.c.l.b16 %v8638
    %v8703 = vunpack.c.h.b16 %v8638
    %v8704 = vunpack.c.l.b16 %v8639
    %v8705 = vunpack.c.h.b16 %v8639
    %v8706 = vunpack.c.l.b16 %v8640
    %v8707 = vunpack.c.h.b16 %v8640
    %v8708 = vunpack.c.l.b16 %v8641
    %v8709 = vunpack.c.h.b16 %v8641
    %v8710 = vunpack.c.l.b16 %v8642
    %v8711 = vunpack.c.h.b16 %v8642
    %v8712 = vunpack.c.l.b16 %v8643
    %v8713 = vunpack.c.h.b16 %v8643
    %v8714 = vunpack.c.l.b16 %v8644
    %v8715 = vunpack.c.h.b16 %v8644
    %v8716 = vunpack.c.l.b16 %v8645
    %v8717 = vunpack.c.h.b16 %v8645
    %v8718 = vunpack.c.l.b16 %v8646
    %v8719 = vunpack.c.h.b16 %v8646
    %v8720 = vunpack.c.l.b16 %v8647
    %v8721 = vunpack.c.h.b16 %v8647
    %v8722 = vunpack.c.l.b16 %v8648
    %v8723 = vunpack.c.h.b16 %v8648
    %v8724 = vunpack.c.l.b16 %v8649
    %v8725 = vunpack.c.h.b16 %v8649
    %v8726 = vunpack.c.l.b16 %v8650
    %v8727 = vunpack.c.h.b16 %v8650
    %v8728 = vunpack.c.l.b16 %v8651
    %v8729 = vunpack.c.h.b16 %v8651
    %v8730 = vunpack.c.l.b16 %v8652
    %v8731 = vunpack.c.h.b16 %v8652
    %v8732 = vunpack.c.l.b16 %v8653
    %v8733 = vunpack.c.h.b16 %v8653
    %v8734 = vunpack.c.l.b16 %v8654
    %v8735 = vunpack.c.h.b16 %v8654
    %v8736 = vunpack.c.l.b16 %v8655
    %v8737 = vunpack.c.h.b16 %v8655
    %v8738 = vunpack.c.l.b16 %v8656
    %v8739 = vunpack.c.h.b16 %v8656
    %v8740 = vunpack.c.l.b16 %v8657
    %v8741 = vunpack.c.h.b16 %v8657
    %v8742 = vunpack.c.l.b16 %v8658
    %v8743 = vunpack.c.h.b16 %v8658
    %v8744 = vpack.c.b16 %v8698, %v8696
    %v8745 = vpack.c.b16 %v8699, %v8697
    %v8746 = vpack.c.b16 %v8702, %v8700
    %v8747 = vpack.c.b16 %v8703, %v8701
    %v8748 = vpack.c.b16 %v8706, %v8704
    %v8749 = vpack.c.b16 %v8707, %v8705
    %v8750 = vpack.c.b16 %v8710, %v8708
    %v8751 = vpack.c.b16 %v8711, %v8709
    %v8752 = vpack.c.b16 %v8714, %v8712
    %v8753 = vpack.c.b16 %v8715, %v8713
    %v8754 = vpack.c.b16 %v8718, %v8716
    %v8755 = vpack.c.b16 %v8719, %v8717
    %v8756 = vpack.c.b16 %v8722, %v8720
    %v8757 = vpack.c.b16 %v8723, %v8721
    %v8758 = vpack.c.b16 %v8726, %v8724
    %v8759 = vpack.c.b16 %v8727, %v8725
    %v8760 = vpack.c.b16 %v8730, %v8728
    %v8761 = vpack.c.b16 %v8731, %v8729
    %v8762 = vpack.c.b16 %v8734, %v8732
    %v8763 = vpack.c.b16 %v8735, %v8733
    %v8764 = vpack.c.b16 %v8738, %v8736
    %v8765 = vpack.c.b16 %v8739, %v8737
    %v8766 = vpack.c.b16 %v8742, %v8740
    %v8767 = vpack.c.b16 %v8743, %v8741
    %8792 = vmatprep.subr.bf16.mxu0 %v8745
    %8793 = vmatpush1.bf16.msra.mxu0 %v8744
    %8794 = vmatprep.subr.bf16.mxu0 %v8747
    %8795 = vmatpush1.bf16.msra.mxu0 %v8746
    %8796 = vmatprep.subr.bf16.mxu0 %v8749
    %8797 = vmatpush1.bf16.msra.mxu0 %v8748
    %8798 = vmatprep.subr.bf16.mxu0 %v8751
    %8799 = vmatpush1.bf16.msra.mxu0 %v8750
    %8800 = vmatprep.subr.bf16.mxu0 %v8753
    %8801 = vmatpush1.bf16.msra.mxu0 %v8752
    %8802 = vmatprep.subr.bf16.mxu0 %v8755
    %8803 = vmatpush1.bf16.msra.mxu0 %v8754
    %8804 = vmatprep.subr.bf16.mxu0 %v8757
    %8805 = vmatpush1.bf16.msra.mxu0 %v8756
    %8806 = vmatprep.subr.bf16.mxu0 %v8759
    %8807 = vmatpush1.bf16.msra.mxu0 %v8758
    %8808 = vmatprep.subr.bf16.mxu0 %v8761
    %8809 = vmatpush1.bf16.msra.mxu0 %v8760
    %8810 = vmatprep.subr.bf16.mxu0 %v8763
    %8811 = vmatpush1.bf16.msra.mxu0 %v8762
    %8812 = vmatprep.subr.bf16.mxu0 %v8765
    %8813 = vmatpush1.bf16.msra.mxu0 %v8764
    %8814 = vmatprep.subr.bf16.mxu0 %v8767
    %8815 = vmatpush1.bf16.msra.mxu0 %v8766
    %8816 = vmatprep.subr.bf16.mxu0 0
    %8817 = vmatpush1.bf16.msra.mxu0 0
    %8818 = vmatprep.subr.bf16.mxu0 0
    %8819 = vmatpush1.bf16.msra.mxu0 0
    %8820 = vmatprep.subr.bf16.mxu0 0
    %8821 = vmatpush1.bf16.msra.mxu0 0
    %8822 = vmatprep.subr.bf16.mxu0 0
    %8823 = vmatpush1.bf16.msra.mxu0 0
    %8824 = vmatprep.mubr.bf16.mxu0 %v7076
    %8825 = vmatmul.mubr.bf16.gmra.mrb[0].mxu0 %v6885
    %v8826 = vpop.f32.mrb[0].mxu0
    %v8827 = vadd.f32 %v8665, %v8826
    %v8828 = vpop.f32.mrb[0].mxu0
    %v8829 = vadd.f32 %v8669, %v8828
    %v8830 = vpop.f32.mrb[0].mxu0
    %v8831 = vadd.f32 %v8665, %v8830
    %v8832 = vpop.f32.mrb[0].mxu0
    %v8833 = vadd.f32 %v8669, %v8832
    %8834 = vmatprep.mubr.bf16.mxu0 %v7079
    %8835 = vmatmul.mubr.bf16.gmra.mrb[0].mxu0 %v6887
    %v8836 = vpop.f32.mrb[0].mxu0
    %v8837 = vadd.f32 %v8665, %v8836
    %v8838 = vpop.f32.mrb[0].mxu0
    %v8839 = vadd.f32 %v8669, %v8838
    %v8840 = vpop.f32.mrb[0].mxu0
    %v8841 = vadd.f32 %v8665, %v8840
    %v8842 = vpop.f32.mrb[0].mxu0
    %v8843 = vadd.f32 %v8669, %v8842
    %8844 = vmatprep.mubr.bf16.mxu0 %v7082
    %8845 = vmatmul.mubr.bf16.gmra.mrb[0].mxu0 %v6889
    %v8846 = vpop.f32.mrb[0].mxu0
    %v8847 = vadd.f32 %v8665, %v8846
    %v8848 = vpop.f32.mrb[0].mxu0
    %v8849 = vadd.f32 %v8669, %v8848
    %v8850 = vpop.f32.mrb[0].mxu0
    %v8851 = vadd.f32 %v8665, %v8850
    %v8852 = vpop.f32.mrb[0].mxu0
    %v8853 = vadd.f32 %v8669, %v8852
    %8854 = vmatprep.mubr.bf16.mxu0 %v7085
    %8855 = vmatmul.mubr.bf16.gmra.mrb[0].mxu0 %v6891
    %v8856 = vpop.f32.mrb[0].mxu0
    %v8857 = vadd.f32 %v8665, %v8856
    %v8858 = vpop.f32.mrb[0].mxu0
    %v8859 = vadd.f32 %v8669, %v8858
    %v8860 = vpop.f32.mrb[0].mxu0
    %v8861 = vadd.f32 %v8665, %v8860
    %v8862 = vpop.f32.mrb[0].mxu0
    %v8863 = vadd.f32 %v8669, %v8862
    %8864 = vmatprep.mubr.bf16.mxu0 %v7088
    %8865 = vmatmul.mubr.bf16.gmra.mrb[0].mxu0 %v6893
    %v8866 = vpop.f32.mrb[0].mxu0
    %v8867 = vadd.f32 %v8665, %v8866
    %v8868 = vpop.f32.mrb[0].mxu0
    %v8869 = vadd.f32 %v8669, %v8868
    %v8870 = vpop.f32.mrb[0].mxu0
    %v8871 = vadd.f32 %v8665, %v8870
    %v8872 = vpop.f32.mrb[0].mxu0
    %v8873 = vadd.f32 %v8669, %v8872
    %8874 = vmatprep.mubr.bf16.mxu0 %v7091
    %8875 = vmatmul.mubr.bf16.gmra.mrb[0].mxu0 %v6895
    %v8876 = vpop.f32.mrb[0].mxu0
    %v8877 = vadd.f32 %v8665, %v8876
    %v8878 = vpop.f32.mrb[0].mxu0
    %v8879 = vadd.f32 %v8669, %v8878
    %v8880 = vpop.f32.mrb[0].mxu0
    %v8881 = vadd.f32 %v8665, %v8880
    %v8882 = vpop.f32.mrb[0].mxu0
    %v8883 = vadd.f32 %v8669, %v8882
    %8884 = vmatprep.mubr.bf16.mxu0 %v7094
    %8885 = vmatmul.mubr.bf16.gmra.mrb[0].mxu0 %v6897
    %v8886 = vpop.f32.mrb[0].mxu0
    %v8887 = vadd.f32 %v8665, %v8886
    %v8888 = vpop.f32.mrb[0].mxu0
    %v8889 = vadd.f32 %v8669, %v8888
    %v8890 = vpop.f32.mrb[0].mxu0
    %v8891 = vadd.f32 %v8665, %v8890
    %v8892 = vpop.f32.mrb[0].mxu0
    %v8893 = vadd.f32 %v8669, %v8892
    %8894 = vmatprep.mubr.bf16.mxu0 %v7097
    %8895 = vmatmul.mubr.bf16.gmra.mrb[0].mxu0 %v6899
    %v8896 = vpop.f32.mrb[0].mxu0
    %v8897 = vadd.f32 %v8665, %v8896
    %v8898 = vpop.f32.mrb[0].mxu0
    %v8899 = vadd.f32 %v8669, %v8898
    %v8900 = vpop.f32.mrb[0].mxu0
    %v8901 = vadd.f32 %v8665, %v8900
    %v8902 = vpop.f32.mrb[0].mxu0
    %v8903 = vadd.f32 %v8669, %v8902
    %8904 = vmatprep.mubr.bf16.mxu0 %v7100
    %8905 = vmatmul.mubr.bf16.gmra.mrb[0].mxu0 %v6901
    %v8906 = vpop.f32.mrb[0].mxu0
    %v8907 = vadd.f32 %v8665, %v8906
    %v8908 = vpop.f32.mrb[0].mxu0
    %v8909 = vadd.f32 %v8669, %v8908
    %v8910 = vpop.f32.mrb[0].mxu0
    %v8911 = vadd.f32 %v8665, %v8910
    %v8912 = vpop.f32.mrb[0].mxu0
    %v8913 = vadd.f32 %v8669, %v8912
    %8914 = vmatprep.mubr.bf16.mxu0 %v7103
    %8915 = vmatmul.mubr.bf16.gmra.mrb[0].mxu0 %v6903
    %v8916 = vpop.f32.mrb[0].mxu0
    %v8917 = vadd.f32 %v8665, %v8916
    %v8918 = vpop.f32.mrb[0].mxu0
    %v8919 = vadd.f32 %v8669, %v8918
    %v8920 = vpop.f32.mrb[0].mxu0
    %v8921 = vadd.f32 %v8665, %v8920
    %v8922 = vpop.f32.mrb[0].mxu0
    %v8923 = vadd.f32 %v8669, %v8922
    %8924 = vmatprep.mubr.bf16.mxu0 %v7106
    %8925 = vmatmul.mubr.bf16.gmra.mrb[0].mxu0 %v6905
    %v8926 = vpop.f32.mrb[0].mxu0
    %v8927 = vadd.f32 %v8665, %v8926
    %v8928 = vpop.f32.mrb[0].mxu0
    %v8929 = vadd.f32 %v8669, %v8928
    %v8930 = vpop.f32.mrb[0].mxu0
    %v8931 = vadd.f32 %v8665, %v8930
    %v8932 = vpop.f32.mrb[0].mxu0
    %v8933 = vadd.f32 %v8669, %v8932
    %8934 = vmatprep.mubr.bf16.mxu0 %v7109
    %8935 = vmatmul.mubr.bf16.gmra.mrb[0].mxu0 %v6907
    %v8936 = vpop.f32.mrb[0].mxu0
    %v8937 = vadd.f32 %v8665, %v8936
    %v8938 = vpop.f32.mrb[0].mxu0
    %v8939 = vadd.f32 %v8669, %v8938
    %v8940 = vpop.f32.mrb[0].mxu0
    %v8941 = vadd.f32 %v8665, %v8940
    %v8942 = vpop.f32.mrb[0].mxu0
    %v8943 = vadd.f32 %v8669, %v8942
    %8944 = vmatprep.mubr.bf16.mxu0 %v7112
    %8945 = vmatmul.mubr.bf16.gmra.mrb[0].mxu0 %v6909
    %v8946 = vpop.f32.mrb[0].mxu0
    %v8947 = vadd.f32 %v8665, %v8946
    %v8948 = vpop.f32.mrb[0].mxu0
    %v8949 = vadd.f32 %v8669, %v8948
    %v8950 = vpop.f32.mrb[0].mxu0
    %v8951 = vadd.f32 %v8665, %v8950
    %v8952 = vpop.f32.mrb[0].mxu0
    %v8953 = vadd.f32 %v8669, %v8952
    %8954 = vmatprep.mubr.bf16.mxu0 %v7115
    %8955 = vmatmul.mubr.bf16.gmra.mrb[0].mxu0 %v6911
    %v8956 = vpop.f32.mrb[0].mxu0
    %v8957 = vadd.f32 %v8665, %v8956
    %v8958 = vpop.f32.mrb[0].mxu0
    %v8959 = vadd.f32 %v8669, %v8958
    %v8960 = vpop.f32.mrb[0].mxu0
    %v8961 = vadd.f32 %v8665, %v8960
    %v8962 = vpop.f32.mrb[0].mxu0
    %v8963 = vadd.f32 %v8669, %v8962
    %8964 = vmatprep.mubr.bf16.mxu0 %v7118
    %8965 = vmatmul.mubr.bf16.gmra.mrb[0].mxu0 %v6913
    %v8966 = vpop.f32.mrb[0].mxu0
    %v8967 = vadd.f32 %v8665, %v8966
    %v8968 = vpop.f32.mrb[0].mxu0
    %v8969 = vadd.f32 %v8669, %v8968
    %v8970 = vpop.f32.mrb[0].mxu0
    %v8971 = vadd.f32 %v8665, %v8970
    %v8972 = vpop.f32.mrb[0].mxu0
    %v8973 = vadd.f32 %v8669, %v8972
    %8974 = vmatprep.mubr.bf16.mxu0 %v7121
    %8975 = vmatmul.mubr.bf16.gmra.mrb[0].mxu0 %v6915
    %v8976 = vpop.f32.mrb[0].mxu0
    %v8977 = vadd.f32 %v8665, %v8976
    %v8978 = vpop.f32.mrb[0].mxu0
    %v8979 = vadd.f32 %v8669, %v8978
    %v8980 = vpop.f32.mrb[0].mxu0
    %v8981 = vadd.f32 %v8665, %v8980
    %v8982 = vpop.f32.mrb[0].mxu0
    %v8983 = vadd.f32 %v8669, %v8982
    %8984 = vdwg.mxu0
    %v8985 = vadd.f32 %v8602, %v8827
    %v8986 = vadd.f32 %v8348, %v8829
    %v8987 = vadd.f32 %v8603, %v8831
    %v8988 = vadd.f32 %v8351, %v8833
    %v8989 = vadd.f32 %v8604, %v8837
    %v8990 = vadd.f32 %v8356, %v8839
    %v8991 = vadd.f32 %v8605, %v8841
    %v8992 = vadd.f32 %v8359, %v8843
    %v8993 = vadd.f32 %v8606, %v8847
    %v8994 = vadd.f32 %v8364, %v8849
    %v8995 = vadd.f32 %v8607, %v8851
    %v8996 = vadd.f32 %v8367, %v8853
    %v8997 = vadd.f32 %v8608, %v8857
    %v8998 = vadd.f32 %v8372, %v8859
    %v8999 = vadd.f32 %v8609, %v8861
    %v9000 = vadd.f32 %v8375, %v8863
    %v9001 = vadd.f32 %v8610, %v8867
    %v9002 = vadd.f32 %v8380, %v8869
    %v9003 = vadd.f32 %v8611, %v8871
    %v9004 = vadd.f32 %v8383, %v8873
    %v9005 = vadd.f32 %v8612, %v8877
    %v9006 = vadd.f32 %v8388, %v8879
    %v9007 = vadd.f32 %v8613, %v8881
    %v9008 = vadd.f32 %v8391, %v8883
    %v9009 = vadd.f32 %v8614, %v8887
    %v9010 = vadd.f32 %v8396, %v8889
    %v9011 = vadd.f32 %v8615, %v8891
    %v9012 = vadd.f32 %v8399, %v8893
    %v9013 = vadd.f32 %v8616, %v8897
    %v9014 = vadd.f32 %v8404, %v8899
    %v9015 = vadd.f32 %v8617, %v8901
    %v9016 = vadd.f32 %v8407, %v8903
    %v9017 = vadd.f32 %v8618, %v8907
    %v9018 = vadd.f32 %v8412, %v8909
    %v9019 = vadd.f32 %v8619, %v8911
    %v9020 = vadd.f32 %v8415, %v8913
    %v9021 = vadd.f32 %v8620, %v8917
    %v9022 = vadd.f32 %v8420, %v8919
    %v9023 = vadd.f32 %v8621, %v8921
    %v9024 = vadd.f32 %v8423, %v8923
    %v9025 = vadd.f32 %v8622, %v8927
    %v9026 = vadd.f32 %v8428, %v8929
    %v9027 = vadd.f32 %v8623, %v8931
    %v9028 = vadd.f32 %v8431, %v8933
    %v9029 = vadd.f32 %v8624, %v8937
    %v9030 = vadd.f32 %v8436, %v8939
    %v9031 = vadd.f32 %v8625, %v8941
    %v9032 = vadd.f32 %v8439, %v8943
    %v9033 = vadd.f32 %v8626, %v8947
    %v9034 = vadd.f32 %v8444, %v8949
    %v9035 = vadd.f32 %v8627, %v8951
    %v9036 = vadd.f32 %v8447, %v8953
    %v9037 = vadd.f32 %v8628, %v8957
    %v9038 = vadd.f32 %v8452, %v8959
    %v9039 = vadd.f32 %v8629, %v8961
    %v9040 = vadd.f32 %v8455, %v8963
    %v9041 = vadd.f32 %v8630, %v8967
    %v9042 = vadd.f32 %v8460, %v8969
    %v9043 = vadd.f32 %v8631, %v8971
    %v9044 = vadd.f32 %v8463, %v8973
    %v9045 = vadd.f32 %v8632, %v8977
    %v9046 = vadd.f32 %v8468, %v8979
    %v9047 = vadd.f32 %v8633, %v8981
    %v9048 = vadd.f32 %v8471, %v8983
    %v9049 = vmax.f32 %v8985, 0.0
    %v9050 = vmax.f32 %v8986, 0.0
    %v9051 = vmax.f32 %v8987, 0.0
    %v9052 = vmax.f32 %v8988, 0.0
    %v9053 = vmax.f32 %v8989, 0.0
    %v9054 = vmax.f32 %v8990, 0.0
    %v9055 = vmax.f32 %v8991, 0.0
    %v9056 = vmax.f32 %v8992, 0.0
    %v9057 = vmax.f32 %v8993, 0.0
    %v9058 = vmax.f32 %v8994, 0.0
    %v9059 = vmax.f32 %v8995, 0.0
    %v9060 = vmax.f32 %v8996, 0.0
    %v9061 = vmax.f32 %v8997, 0.0
    %v9062 = vmax.f32 %v8998, 0.0
    %v9063 = vmax.f32 %v8999, 0.0
    %v9064 = vmax.f32 %v9000, 0.0
    %v9065 = vmax.f32 %v9001, 0.0
    %v9066 = vmax.f32 %v9002, 0.0
    %v9067 = vmax.f32 %v9003, 0.0
    %v9068 = vmax.f32 %v9004, 0.0
    %v9069 = vmax.f32 %v9005, 0.0
    %v9070 = vmax.f32 %v9006, 0.0
    %v9071 = vmax.f32 %v9007, 0.0
    %v9072 = vmax.f32 %v9008, 0.0
    %v9073 = vmax.f32 %v9009, 0.0
    %v9074 = vmax.f32 %v9010, 0.0
    %v9075 = vmax.f32 %v9011, 0.0
    %v9076 = vmax.f32 %v9012, 0.0
    %v9077 = vmax.f32 %v9013, 0.0
    %v9078 = vmax.f32 %v9014, 0.0
    %v9079 = vmax.f32 %v9015, 0.0
    %v9080 = vmax.f32 %v9016, 0.0
    %v9081 = vmax.f32 %v9017, 0.0
    %v9082 = vmax.f32 %v9018, 0.0
    %v9083 = vmax.f32 %v9019, 0.0
    %v9084 = vmax.f32 %v9020, 0.0
    %v9085 = vmax.f32 %v9021, 0.0
    %v9086 = vmax.f32 %v9022, 0.0
    %v9087 = vmax.f32 %v9023, 0.0
    %v9088 = vmax.f32 %v9024, 0.0
    %v9089 = vmax.f32 %v9025, 0.0
    %v9090 = vmax.f32 %v9026, 0.0
    %v9091 = vmax.f32 %v9027, 0.0
    %v9092 = vmax.f32 %v9028, 0.0
    %v9093 = vmax.f32 %v9029, 0.0
    %v9094 = vmax.f32 %v9030, 0.0
    %v9095 = vmax.f32 %v9031, 0.0
    %v9096 = vmax.f32 %v9032, 0.0
    %v9097 = vmax.f32 %v9033, 0.0
    %v9098 = vmax.f32 %v9034, 0.0
    %v9099 = vmax.f32 %v9035, 0.0
    %v9100 = vmax.f32 %v9036, 0.0
    %v9101 = vmax.f32 %v9037, 0.0
    %v9102 = vmax.f32 %v9038, 0.0
    %v9103 = vmax.f32 %v9039, 0.0
    %v9104 = vmax.f32 %v9040, 0.0
    %v9105 = vmax.f32 %v9041, 0.0
    %v9106 = vmax.f32 %v9042, 0.0
    %v9107 = vmax.f32 %v9043, 0.0
    %v9108 = vmax.f32 %v9044, 0.0
    %v9109 = vmax.f32 %v9045, 0.0
    %v9110 = vmax.f32 %v9046, 0.0
    %v9111 = vmax.f32 %v9047, 0.0
    %v9112 = vmax.f32 %v9048, 0.0
    %v9113 = vpack.c.bf16 %v9051, %v9049
    %v9114 = vpack.c.bf16 %v9052, %v9050
    %v9115 = vpack.c.bf16 %v9055, %v9053
    %v9116 = vpack.c.bf16 %v9056, %v9054
    %v9117 = vpack.c.bf16 %v9059, %v9057
    %v9118 = vpack.c.bf16 %v9060, %v9058
    %v9119 = vpack.c.bf16 %v9063, %v9061
    %v9120 = vpack.c.bf16 %v9064, %v9062
    %v9121 = vpack.c.bf16 %v9067, %v9065
    %v9122 = vpack.c.bf16 %v9068, %v9066
    %v9123 = vpack.c.bf16 %v9071, %v9069
    %v9124 = vpack.c.bf16 %v9072, %v9070
    %v9125 = vpack.c.bf16 %v9075, %v9073
    %v9126 = vpack.c.bf16 %v9076, %v9074
    %v9127 = vpack.c.bf16 %v9079, %v9077
    %v9128 = vpack.c.bf16 %v9080, %v9078
    %v9129 = vpack.c.bf16 %v9083, %v9081
    %v9130 = vpack.c.bf16 %v9084, %v9082
    %v9131 = vpack.c.bf16 %v9087, %v9085
    %v9132 = vpack.c.bf16 %v9088, %v9086
    %v9133 = vpack.c.bf16 %v9091, %v9089
    %v9134 = vpack.c.bf16 %v9092, %v9090
    %v9135 = vpack.c.bf16 %v9095, %v9093
    %v9136 = vpack.c.bf16 %v9096, %v9094
    %v9137 = vpack.c.bf16 %v9099, %v9097
    %v9138 = vpack.c.bf16 %v9100, %v9098
    %v9139 = vpack.c.bf16 %v9103, %v9101
    %v9140 = vpack.c.bf16 %v9104, %v9102
    %v9141 = vpack.c.bf16 %v9107, %v9105
    %v9142 = vpack.c.bf16 %v9108, %v9106
    %v9143 = vpack.c.bf16 %v9111, %v9109
    %v9144 = vpack.c.bf16 %v9112, %v9110
    %s9145 = scalar_lea.vmem [#allocation7], 576
    %v9146 = vld [vmem:[%s9145] sm:$0xff]
    %v9147 = vld [vmem:[%s9145 + $0x8] sm:$0xff]
    %v9148 = vld [vmem:[%s9145 + $0x10] sm:$0xff]
    %v9149 = vld [vmem:[%s9145 + $0x18] sm:$0xff]
    %v9150 = vld [vmem:[%s9145 + $0x20] sm:$0xff]
    %v9151 = vld [vmem:[%s9145 + $0x28] sm:$0xff]
    %v9152 = vld [vmem:[%s9145 + $0x30] sm:$0xff]
    %v9153 = vld [vmem:[%s9145 + $0x38] sm:$0xff]
    %v9154 = vld [vmem:[%s9145 + $0x40] sm:$0xff]
    %v9155 = vld [vmem:[%s9145 + $0x48] sm:$0xff]
    %v9156 = vld [vmem:[%s9145 + $0x50] sm:$0xff]
    %v9157 = vld [vmem:[%s9145 + $0x58] sm:$0xff]
    %v9158 = vld [vmem:[%s9145 + $0x60] sm:$0xff]
    %v9159 = vld [vmem:[%s9145 + $0x68] sm:$0xff]
    %v9160 = vld [vmem:[%s9145 + $0x70] sm:$0xff]
    %v9161 = vld [vmem:[%s9145 + $0x78] sm:$0xff]
    %v9162 = vld [vmem:[%s9145 + $0x80] sm:$0xff]
    %v9163 = vld [vmem:[%s9145 + $0x88] sm:$0xff]
    %v9164 = vld [vmem:[%s9145 + $0x90] sm:$0xff]
    %v9165 = vld [vmem:[%s9145 + $0x98] sm:$0xff]
    %v9166 = vld [vmem:[%s9145 + $0xa0] sm:$0xff]
    %v9167 = vld [vmem:[%s9145 + $0xa8] sm:$0xff]
    %v9168 = vld [vmem:[%s9145 + $0xb0] sm:$0xff]
    %v9169 = vld [vmem:[%s9145 + $0xb8] sm:$0xff]
    %s9170 = scalar_lea.vmem [#allocation9], 6
    %v9171 = vld [vmem:[%s9170] sm:$0x3]
    %v9173 = vlaneseq
    %v9174 = vshrl.u32 %v9173, 7
    %v9175 = vsub.s32 0, %v9174
    %v9176 = vrot.slane %v9171, %v9175
    %v9177 = vlaneseq
    %v9178 = vshrl.u32 %v9177, 7
    %v9179 = vsub.s32 1, %v9178
    %v9180 = vrot.slane %v9171, %v9179
    %v9207 = vunpack.c.l.b16 %v9146
    %v9208 = vunpack.c.h.b16 %v9146
    %v9209 = vunpack.c.l.b16 %v9147
    %v9210 = vunpack.c.h.b16 %v9147
    %v9211 = vunpack.c.l.b16 %v9148
    %v9212 = vunpack.c.h.b16 %v9148
    %v9213 = vunpack.c.l.b16 %v9149
    %v9214 = vunpack.c.h.b16 %v9149
    %v9215 = vunpack.c.l.b16 %v9150
    %v9216 = vunpack.c.h.b16 %v9150
    %v9217 = vunpack.c.l.b16 %v9151
    %v9218 = vunpack.c.h.b16 %v9151
    %v9219 = vunpack.c.l.b16 %v9152
    %v9220 = vunpack.c.h.b16 %v9152
    %v9221 = vunpack.c.l.b16 %v9153
    %v9222 = vunpack.c.h.b16 %v9153
    %v9223 = vunpack.c.l.b16 %v9154
    %v9224 = vunpack.c.h.b16 %v9154
    %v9225 = vunpack.c.l.b16 %v9155
    %v9226 = vunpack.c.h.b16 %v9155
    %v9227 = vunpack.c.l.b16 %v9156
    %v9228 = vunpack.c.h.b16 %v9156
    %v9229 = vunpack.c.l.b16 %v9157
    %v9230 = vunpack.c.h.b16 %v9157
    %v9231 = vunpack.c.l.b16 %v9158
    %v9232 = vunpack.c.h.b16 %v9158
    %v9233 = vunpack.c.l.b16 %v9159
    %v9234 = vunpack.c.h.b16 %v9159
    %v9235 = vunpack.c.l.b16 %v9160
    %v9236 = vunpack.c.h.b16 %v9160
    %v9237 = vunpack.c.l.b16 %v9161
    %v9238 = vunpack.c.h.b16 %v9161
    %v9239 = vunpack.c.l.b16 %v9162
    %v9240 = vunpack.c.h.b16 %v9162
    %v9241 = vunpack.c.l.b16 %v9163
    %v9242 = vunpack.c.h.b16 %v9163
    %v9243 = vunpack.c.l.b16 %v9164
    %v9244 = vunpack.c.h.b16 %v9164
    %v9245 = vunpack.c.l.b16 %v9165
    %v9246 = vunpack.c.h.b16 %v9165
    %v9247 = vunpack.c.l.b16 %v9166
    %v9248 = vunpack.c.h.b16 %v9166
    %v9249 = vunpack.c.l.b16 %v9167
    %v9250 = vunpack.c.h.b16 %v9167
    %v9251 = vunpack.c.l.b16 %v9168
    %v9252 = vunpack.c.h.b16 %v9168
    %v9253 = vunpack.c.l.b16 %v9169
    %v9254 = vunpack.c.h.b16 %v9169
    %v9255 = vpack.c.b16 %v9209, %v9207
    %v9256 = vpack.c.b16 %v9210, %v9208
    %v9257 = vpack.c.b16 %v9213, %v9211
    %v9258 = vpack.c.b16 %v9214, %v9212
    %v9259 = vpack.c.b16 %v9217, %v9215
    %v9260 = vpack.c.b16 %v9218, %v9216
    %v9261 = vpack.c.b16 %v9221, %v9219
    %v9262 = vpack.c.b16 %v9222, %v9220
    %v9263 = vpack.c.b16 %v9225, %v9223
    %v9264 = vpack.c.b16 %v9226, %v9224
    %v9265 = vpack.c.b16 %v9229, %v9227
    %v9266 = vpack.c.b16 %v9230, %v9228
    %v9267 = vpack.c.b16 %v9233, %v9231
    %v9268 = vpack.c.b16 %v9234, %v9232
    %v9269 = vpack.c.b16 %v9237, %v9235
    %v9270 = vpack.c.b16 %v9238, %v9236
    %v9271 = vpack.c.b16 %v9241, %v9239
    %v9272 = vpack.c.b16 %v9242, %v9240
    %v9273 = vpack.c.b16 %v9245, %v9243
    %v9274 = vpack.c.b16 %v9246, %v9244
    %v9275 = vpack.c.b16 %v9249, %v9247
    %v9276 = vpack.c.b16 %v9250, %v9248
    %v9277 = vpack.c.b16 %v9253, %v9251
    %v9278 = vpack.c.b16 %v9254, %v9252
    %v9304 = vsel %vm2336, %v9114, 0
    %v9307 = vsel %vm2336, %v9116, 0
    %v9310 = vsel %vm2336, %v9118, 0
    %v9313 = vsel %vm2336, %v9120, 0
    %v9316 = vsel %vm2336, %v9122, 0
    %v9319 = vsel %vm2336, %v9124, 0
    %v9322 = vsel %vm2336, %v9126, 0
    %v9325 = vsel %vm2336, %v9128, 0
    %v9328 = vsel %vm2336, %v9130, 0
    %v9331 = vsel %vm2336, %v9132, 0
    %v9334 = vsel %vm2336, %v9134, 0
    %v9337 = vsel %vm2336, %v9136, 0
    %v9340 = vsel %vm2336, %v9138, 0
    %v9343 = vsel %vm2336, %v9140, 0
    %v9346 = vsel %vm2336, %v9142, 0
    %v9349 = vsel %vm2336, %v9144, 0
    %9351 = vmatprep.subr.bf16.mxu0 %v9256
    %9352 = vmatpush1.bf16.msra.mxu0 %v9255
    %9353 = vmatprep.subr.bf16.mxu0 %v9258
    %9354 = vmatpush1.bf16.msra.mxu0 %v9257
    %9355 = vmatprep.subr.bf16.mxu0 %v9260
    %9356 = vmatpush1.bf16.msra.mxu0 %v9259
    %9357 = vmatprep.subr.bf16.mxu0 %v9262
    %9358 = vmatpush1.bf16.msra.mxu0 %v9261
    %9359 = vmatprep.subr.bf16.mxu0 %v9264
    %9360 = vmatpush1.bf16.msra.mxu0 %v9263
    %9361 = vmatprep.subr.bf16.mxu0 %v9266
    %9362 = vmatpush1.bf16.msra.mxu0 %v9265
    %9363 = vmatprep.subr.bf16.mxu0 %v9268
    %9364 = vmatpush1.bf16.msra.mxu0 %v9267
    %9365 = vmatprep.subr.bf16.mxu0 %v9270
    %9366 = vmatpush1.bf16.msra.mxu0 %v9269
    %9367 = vmatprep.subr.bf16.mxu0 %v9272
    %9368 = vmatpush1.bf16.msra.mxu0 %v9271
    %9369 = vmatprep.subr.bf16.mxu0 %v9274
    %9370 = vmatpush1.bf16.msra.mxu0 %v9273
    %9371 = vmatprep.subr.bf16.mxu0 %v9276
    %9372 = vmatpush1.bf16.msra.mxu0 %v9275
    %9373 = vmatprep.subr.bf16.mxu0 %v9278
    %9374 = vmatpush1.bf16.msra.mxu0 %v9277
    %9375 = vmatprep.subr.bf16.mxu0 0
    %9376 = vmatpush1.bf16.msra.mxu0 0
    %9377 = vmatprep.subr.bf16.mxu0 0
    %9378 = vmatpush1.bf16.msra.mxu0 0
    %9379 = vmatprep.subr.bf16.mxu0 0
    %9380 = vmatpush1.bf16.msra.mxu0 0
    %9381 = vmatprep.subr.bf16.mxu0 0
    %9382 = vmatpush1.bf16.msra.mxu0 0
    %9383 = vmatprep.mubr.bf16.mxu0 %v9304
    %9384 = vmatmul.mubr.bf16.gmra.mrb[0].mxu0 %v9113
    %v9385 = vpop.f32.mrb[0].mxu0
    %v9386 = vadd.f32 %v9176, %v9385
    %v9387 = vpop.f32.mrb[0].mxu0
    %v9388 = vadd.f32 %v9180, %v9387
    %v9389 = vpop.f32.mrb[0].mxu0
    %v9390 = vadd.f32 %v9176, %v9389
    %v9391 = vpop.f32.mrb[0].mxu0
    %v9392 = vadd.f32 %v9180, %v9391
    %9393 = vmatprep.mubr.bf16.mxu0 %v9307
    %9394 = vmatmul.mubr.bf16.gmra.mrb[0].mxu0 %v9115
    %v9395 = vpop.f32.mrb[0].mxu0
    %v9396 = vadd.f32 %v9176, %v9395
    %v9397 = vpop.f32.mrb[0].mxu0
    %v9398 = vadd.f32 %v9180, %v9397
    %v9399 = vpop.f32.mrb[0].mxu0
    %v9400 = vadd.f32 %v9176, %v9399
    %v9401 = vpop.f32.mrb[0].mxu0
    %v9402 = vadd.f32 %v9180, %v9401
    %9403 = vmatprep.mubr.bf16.mxu0 %v9310
    %9404 = vmatmul.mubr.bf16.gmra.mrb[0].mxu0 %v9117
    %v9405 = vpop.f32.mrb[0].mxu0
    %v9406 = vadd.f32 %v9176, %v9405
    %v9407 = vpop.f32.mrb[0].mxu0
    %v9408 = vadd.f32 %v9180, %v9407
    %v9409 = vpop.f32.mrb[0].mxu0
    %v9410 = vadd.f32 %v9176, %v9409
    %v9411 = vpop.f32.mrb[0].mxu0
    %v9412 = vadd.f32 %v9180, %v9411
    %9413 = vmatprep.mubr.bf16.mxu0 %v9313
    %9414 = vmatmul.mubr.bf16.gmra.mrb[0].mxu0 %v9119
    %v9415 = vpop.f32.mrb[0].mxu0
    %v9416 = vadd.f32 %v9176, %v9415
    %v9417 = vpop.f32.mrb[0].mxu0
    %v9418 = vadd.f32 %v9180, %v9417
    %v9419 = vpop.f32.mrb[0].mxu0
    %v9420 = vadd.f32 %v9176, %v9419
    %v9421 = vpop.f32.mrb[0].mxu0
    %v9422 = vadd.f32 %v9180, %v9421
    %9423 = vmatprep.mubr.bf16.mxu0 %v9316
    %9424 = vmatmul.mubr.bf16.gmra.mrb[0].mxu0 %v9121
    %v9425 = vpop.f32.mrb[0].mxu0
    %v9426 = vadd.f32 %v9176, %v9425
    %v9427 = vpop.f32.mrb[0].mxu0
    %v9428 = vadd.f32 %v9180, %v9427
    %v9429 = vpop.f32.mrb[0].mxu0
    %v9430 = vadd.f32 %v9176, %v9429
    %v9431 = vpop.f32.mrb[0].mxu0
    %v9432 = vadd.f32 %v9180, %v9431
    %9433 = vmatprep.mubr.bf16.mxu0 %v9319
    %9434 = vmatmul.mubr.bf16.gmra.mrb[0].mxu0 %v9123
    %v9435 = vpop.f32.mrb[0].mxu0
    %v9436 = vadd.f32 %v9176, %v9435
    %v9437 = vpop.f32.mrb[0].mxu0
    %v9438 = vadd.f32 %v9180, %v9437
    %v9439 = vpop.f32.mrb[0].mxu0
    %v9440 = vadd.f32 %v9176, %v9439
    %v9441 = vpop.f32.mrb[0].mxu0
    %v9442 = vadd.f32 %v9180, %v9441
    %9443 = vmatprep.mubr.bf16.mxu0 %v9322
    %9444 = vmatmul.mubr.bf16.gmra.mrb[0].mxu0 %v9125
    %v9445 = vpop.f32.mrb[0].mxu0
    %v9446 = vadd.f32 %v9176, %v9445
    %v9447 = vpop.f32.mrb[0].mxu0
    %v9448 = vadd.f32 %v9180, %v9447
    %v9449 = vpop.f32.mrb[0].mxu0
    %v9450 = vadd.f32 %v9176, %v9449
    %v9451 = vpop.f32.mrb[0].mxu0
    %v9452 = vadd.f32 %v9180, %v9451
    %9453 = vmatprep.mubr.bf16.mxu0 %v9325
    %9454 = vmatmul.mubr.bf16.gmra.mrb[0].mxu0 %v9127
    %v9455 = vpop.f32.mrb[0].mxu0
    %v9456 = vadd.f32 %v9176, %v9455
    %v9457 = vpop.f32.mrb[0].mxu0
    %v9458 = vadd.f32 %v9180, %v9457
    %v9459 = vpop.f32.mrb[0].mxu0
    %v9460 = vadd.f32 %v9176, %v9459
    %v9461 = vpop.f32.mrb[0].mxu0
    %v9462 = vadd.f32 %v9180, %v9461
    %9463 = vmatprep.mubr.bf16.mxu0 %v9328
    %9464 = vmatmul.mubr.bf16.gmra.mrb[0].mxu0 %v9129
    %v9465 = vpop.f32.mrb[0].mxu0
    %v9466 = vadd.f32 %v9176, %v9465
    %v9467 = vpop.f32.mrb[0].mxu0
    %v9468 = vadd.f32 %v9180, %v9467
    %v9469 = vpop.f32.mrb[0].mxu0
    %v9470 = vadd.f32 %v9176, %v9469
    %v9471 = vpop.f32.mrb[0].mxu0
    %v9472 = vadd.f32 %v9180, %v9471
    %9473 = vmatprep.mubr.bf16.mxu0 %v9331
    %9474 = vmatmul.mubr.bf16.gmra.mrb[0].mxu0 %v9131
    %v9475 = vpop.f32.mrb[0].mxu0
    %v9476 = vadd.f32 %v9176, %v9475
    %v9477 = vpop.f32.mrb[0].mxu0
    %v9478 = vadd.f32 %v9180, %v9477
    %v9479 = vpop.f32.mrb[0].mxu0
    %v9480 = vadd.f32 %v9176, %v9479
    %v9481 = vpop.f32.mrb[0].mxu0
    %v9482 = vadd.f32 %v9180, %v9481
    %9483 = vmatprep.mubr.bf16.mxu0 %v9334
    %9484 = vmatmul.mubr.bf16.gmra.mrb[0].mxu0 %v9133
    %v9485 = vpop.f32.mrb[0].mxu0
    %v9486 = vadd.f32 %v9176, %v9485
    %v9487 = vpop.f32.mrb[0].mxu0
    %v9488 = vadd.f32 %v9180, %v9487
    %v9489 = vpop.f32.mrb[0].mxu0
    %v9490 = vadd.f32 %v9176, %v9489
    %v9491 = vpop.f32.mrb[0].mxu0
    %v9492 = vadd.f32 %v9180, %v9491
    %9493 = vmatprep.mubr.bf16.mxu0 %v9337
    %9494 = vmatmul.mubr.bf16.gmra.mrb[0].mxu0 %v9135
    %v9495 = vpop.f32.mrb[0].mxu0
    %v9496 = vadd.f32 %v9176, %v9495
    %v9497 = vpop.f32.mrb[0].mxu0
    %v9498 = vadd.f32 %v9180, %v9497
    %v9499 = vpop.f32.mrb[0].mxu0
    %v9500 = vadd.f32 %v9176, %v9499
    %v9501 = vpop.f32.mrb[0].mxu0
    %v9502 = vadd.f32 %v9180, %v9501
    %9503 = vmatprep.mubr.bf16.mxu0 %v9340
    %9504 = vmatmul.mubr.bf16.gmra.mrb[0].mxu0 %v9137
    %v9505 = vpop.f32.mrb[0].mxu0
    %v9506 = vadd.f32 %v9176, %v9505
    %v9507 = vpop.f32.mrb[0].mxu0
    %v9508 = vadd.f32 %v9180, %v9507
    %v9509 = vpop.f32.mrb[0].mxu0
    %v9510 = vadd.f32 %v9176, %v9509
    %v9511 = vpop.f32.mrb[0].mxu0
    %v9512 = vadd.f32 %v9180, %v9511
    %9513 = vmatprep.mubr.bf16.mxu0 %v9343
    %9514 = vmatmul.mubr.bf16.gmra.mrb[0].mxu0 %v9139
    %v9515 = vpop.f32.mrb[0].mxu0
    %v9516 = vadd.f32 %v9176, %v9515
    %v9517 = vpop.f32.mrb[0].mxu0
    %v9518 = vadd.f32 %v9180, %v9517
    %v9519 = vpop.f32.mrb[0].mxu0
    %v9520 = vadd.f32 %v9176, %v9519
    %v9521 = vpop.f32.mrb[0].mxu0
    %v9522 = vadd.f32 %v9180, %v9521
    %9523 = vmatprep.mubr.bf16.mxu0 %v9346
    %9524 = vmatmul.mubr.bf16.gmra.mrb[0].mxu0 %v9141
    %v9525 = vpop.f32.mrb[0].mxu0
    %v9526 = vadd.f32 %v9176, %v9525
    %v9527 = vpop.f32.mrb[0].mxu0
    %v9528 = vadd.f32 %v9180, %v9527
    %v9529 = vpop.f32.mrb[0].mxu0
    %v9530 = vadd.f32 %v9176, %v9529
    %v9531 = vpop.f32.mrb[0].mxu0
    %v9532 = vadd.f32 %v9180, %v9531
    %9533 = vmatprep.mubr.bf16.mxu0 %v9349
    %9534 = vmatmul.mubr.bf16.gmra.mrb[0].mxu0 %v9143
    %v9535 = vpop.f32.mrb[0].mxu0
    %v9536 = vadd.f32 %v9176, %v9535
    %v9537 = vpop.f32.mrb[0].mxu0
    %v9538 = vadd.f32 %v9180, %v9537
    %v9539 = vpop.f32.mrb[0].mxu0
    %v9540 = vadd.f32 %v9176, %v9539
    %v9541 = vpop.f32.mrb[0].mxu0
    %v9542 = vadd.f32 %v9180, %v9541
    %9543 = vdwg.mxu0
    %v9544 = vpack.c.bf16 %v9390, %v9386
    %v9545 = vpack.c.bf16 %v9392, %v9388
    %v9546 = vpack.c.bf16 %v9400, %v9396
    %v9547 = vpack.c.bf16 %v9402, %v9398
    %v9548 = vpack.c.bf16 %v9410, %v9406
    %v9549 = vpack.c.bf16 %v9412, %v9408
    %v9550 = vpack.c.bf16 %v9420, %v9416
    %v9551 = vpack.c.bf16 %v9422, %v9418
    %v9552 = vpack.c.bf16 %v9430, %v9426
    %v9553 = vpack.c.bf16 %v9432, %v9428
    %v9554 = vpack.c.bf16 %v9440, %v9436
    %v9555 = vpack.c.bf16 %v9442, %v9438
    %v9556 = vpack.c.bf16 %v9450, %v9446
    %v9557 = vpack.c.bf16 %v9452, %v9448
    %v9558 = vpack.c.bf16 %v9460, %v9456
    %v9559 = vpack.c.bf16 %v9462, %v9458
    %v9560 = vpack.c.bf16 %v9470, %v9466
    %v9561 = vpack.c.bf16 %v9472, %v9468
    %v9562 = vpack.c.bf16 %v9480, %v9476
    %v9563 = vpack.c.bf16 %v9482, %v9478
    %v9564 = vpack.c.bf16 %v9490, %v9486
    %v9565 = vpack.c.bf16 %v9492, %v9488
    %v9566 = vpack.c.bf16 %v9500, %v9496
    %v9567 = vpack.c.bf16 %v9502, %v9498
    %v9568 = vpack.c.bf16 %v9510, %v9506
    %v9569 = vpack.c.bf16 %v9512, %v9508
    %v9570 = vpack.c.bf16 %v9520, %v9516
    %v9571 = vpack.c.bf16 %v9522, %v9518
    %v9572 = vpack.c.bf16 %v9530, %v9526
    %v9573 = vpack.c.bf16 %v9532, %v9528
    %v9574 = vpack.c.bf16 %v9540, %v9536
    %v9575 = vpack.c.bf16 %v9542, %v9538
    %s9576 = scalar_lea.vmem [#allocation6], 3072
    %v9577 = vld [vmem:[%s9576] sm:$0xff]
    %v9578 = vld [vmem:[%s9576 + $0x8] sm:$0xff]
    %v9579 = vld [vmem:[%s9576 + $0x10] sm:$0xff]
    %v9580 = vld [vmem:[%s9576 + $0x18] sm:$0xff]
    %v9581 = vld [vmem:[%s9576 + $0x20] sm:$0xff]
    %v9582 = vld [vmem:[%s9576 + $0x28] sm:$0xff]
    %v9583 = vld [vmem:[%s9576 + $0x30] sm:$0xff]
    %v9584 = vld [vmem:[%s9576 + $0x38] sm:$0xff]
    %v9585 = vld [vmem:[%s9576 + $0x40] sm:$0xff]
    %v9586 = vld [vmem:[%s9576 + $0x48] sm:$0xff]
    %v9587 = vld [vmem:[%s9576 + $0x50] sm:$0xff]
    %v9588 = vld [vmem:[%s9576 + $0x58] sm:$0xff]
    %v9589 = vld [vmem:[%s9576 + $0x60] sm:$0xff]
    %v9590 = vld [vmem:[%s9576 + $0x68] sm:$0xff]
    %v9591 = vld [vmem:[%s9576 + $0x70] sm:$0xff]
    %v9592 = vld [vmem:[%s9576 + $0x78] sm:$0xff]
    %v9593 = vld [vmem:[%s9576 + $0x80] sm:$0xff]
    %v9594 = vld [vmem:[%s9576 + $0x88] sm:$0xff]
    %v9595 = vld [vmem:[%s9576 + $0x90] sm:$0xff]
    %v9596 = vld [vmem:[%s9576 + $0x98] sm:$0xff]
    %v9597 = vld [vmem:[%s9576 + $0xa0] sm:$0xff]
    %v9598 = vld [vmem:[%s9576 + $0xa8] sm:$0xff]
    %v9599 = vld [vmem:[%s9576 + $0xb0] sm:$0xff]
    %v9600 = vld [vmem:[%s9576 + $0xb8] sm:$0xff]
    %v9601 = vld [vmem:[%s9576 + $0xc0] sm:$0xff]
    %v9602 = vld [vmem:[%s9576 + $0xc8] sm:$0xff]
    %v9603 = vld [vmem:[%s9576 + $0xd0] sm:$0xff]
    %v9604 = vld [vmem:[%s9576 + $0xd8] sm:$0xff]
    %v9605 = vld [vmem:[%s9576 + $0xe0] sm:$0xff]
    %v9606 = vld [vmem:[%s9576 + $0xe8] sm:$0xff]
    %v9607 = vld [vmem:[%s9576 + $0xf0] sm:$0xff]
    %v9608 = vld [vmem:[%s9576 + $0xf8] sm:$0xff]
    %v9641 = vunpack.c.l.b16 %v9577
    %v9642 = vunpack.c.h.b16 %v9577
    %v9643 = vunpack.c.l.b16 %v9578
    %v9644 = vunpack.c.h.b16 %v9578
    %v9645 = vunpack.c.l.b16 %v9579
    %v9646 = vunpack.c.h.b16 %v9579
    %v9647 = vunpack.c.l.b16 %v9580
    %v9648 = vunpack.c.h.b16 %v9580
    %v9649 = vunpack.c.l.b16 %v9581
    %v9650 = vunpack.c.h.b16 %v9581
    %v9651 = vunpack.c.l.b16 %v9582
    %v9652 = vunpack.c.h.b16 %v9582
    %v9653 = vunpack.c.l.b16 %v9583
    %v9654 = vunpack.c.h.b16 %v9583
    %v9655 = vunpack.c.l.b16 %v9584
    %v9656 = vunpack.c.h.b16 %v9584
    %v9657 = vunpack.c.l.b16 %v9585
    %v9658 = vunpack.c.h.b16 %v9585
    %v9659 = vunpack.c.l.b16 %v9586
    %v9660 = vunpack.c.h.b16 %v9586
    %v9661 = vunpack.c.l.b16 %v9587
    %v9662 = vunpack.c.h.b16 %v9587
    %v9663 = vunpack.c.l.b16 %v9588
    %v9664 = vunpack.c.h.b16 %v9588
    %v9665 = vunpack.c.l.b16 %v9589
    %v9666 = vunpack.c.h.b16 %v9589
    %v9667 = vunpack.c.l.b16 %v9590
    %v9668 = vunpack.c.h.b16 %v9590
    %v9669 = vunpack.c.l.b16 %v9591
    %v9670 = vunpack.c.h.b16 %v9591
    %v9671 = vunpack.c.l.b16 %v9592
    %v9672 = vunpack.c.h.b16 %v9592
    %v9673 = vunpack.c.l.b16 %v9593
    %v9674 = vunpack.c.h.b16 %v9593
    %v9675 = vunpack.c.l.b16 %v9594
    %v9676 = vunpack.c.h.b16 %v9594
    %v9677 = vunpack.c.l.b16 %v9595
    %v9678 = vunpack.c.h.b16 %v9595
    %v9679 = vunpack.c.l.b16 %v9596
    %v9680 = vunpack.c.h.b16 %v9596
    %v9681 = vunpack.c.l.b16 %v9597
    %v9682 = vunpack.c.h.b16 %v9597
    %v9683 = vunpack.c.l.b16 %v9598
    %v9684 = vunpack.c.h.b16 %v9598
    %v9685 = vunpack.c.l.b16 %v9599
    %v9686 = vunpack.c.h.b16 %v9599
    %v9687 = vunpack.c.l.b16 %v9600
    %v9688 = vunpack.c.h.b16 %v9600
    %v9689 = vunpack.c.l.b16 %v9601
    %v9690 = vunpack.c.h.b16 %v9601
    %v9691 = vunpack.c.l.b16 %v9602
    %v9692 = vunpack.c.h.b16 %v9602
    %v9693 = vunpack.c.l.b16 %v9603
    %v9694 = vunpack.c.h.b16 %v9603
    %v9695 = vunpack.c.l.b16 %v9604
    %v9696 = vunpack.c.h.b16 %v9604
    %v9697 = vunpack.c.l.b16 %v9605
    %v9698 = vunpack.c.h.b16 %v9605
    %v9699 = vunpack.c.l.b16 %v9606
    %v9700 = vunpack.c.h.b16 %v9606
    %v9701 = vunpack.c.l.b16 %v9607
    %v9702 = vunpack.c.h.b16 %v9607
    %v9703 = vunpack.c.l.b16 %v9608
    %v9704 = vunpack.c.h.b16 %v9608
    %v9705 = vpack.c.b16 %v9643, %v9641
    %v9706 = vpack.c.b16 %v9644, %v9642
    %v9707 = vpack.c.b16 %v9647, %v9645
    %v9708 = vpack.c.b16 %v9648, %v9646
    %v9709 = vpack.c.b16 %v9651, %v9649
    %v9710 = vpack.c.b16 %v9652, %v9650
    %v9711 = vpack.c.b16 %v9655, %v9653
    %v9712 = vpack.c.b16 %v9656, %v9654
    %v9713 = vpack.c.b16 %v9659, %v9657
    %v9714 = vpack.c.b16 %v9660, %v9658
    %v9715 = vpack.c.b16 %v9663, %v9661
    %v9716 = vpack.c.b16 %v9664, %v9662
    %v9717 = vpack.c.b16 %v9667, %v9665
    %v9718 = vpack.c.b16 %v9668, %v9666
    %v9719 = vpack.c.b16 %v9671, %v9669
    %v9720 = vpack.c.b16 %v9672, %v9670
    %v9721 = vpack.c.b16 %v9675, %v9673
    %v9722 = vpack.c.b16 %v9676, %v9674
    %v9723 = vpack.c.b16 %v9679, %v9677
    %v9724 = vpack.c.b16 %v9680, %v9678
    %v9725 = vpack.c.b16 %v9683, %v9681
    %v9726 = vpack.c.b16 %v9684, %v9682
    %v9727 = vpack.c.b16 %v9687, %v9685
    %v9728 = vpack.c.b16 %v9688, %v9686
    %v9729 = vpack.c.b16 %v9691, %v9689
    %v9730 = vpack.c.b16 %v9692, %v9690
    %v9731 = vpack.c.b16 %v9695, %v9693
    %v9732 = vpack.c.b16 %v9696, %v9694
    %v9733 = vpack.c.b16 %v9699, %v9697
    %v9734 = vpack.c.b16 %v9700, %v9698
    %v9735 = vpack.c.b16 %v9703, %v9701
    %v9736 = vpack.c.b16 %v9704, %v9702
    %9769 = vmatprep.subr.bf16.mxu0 0
    %9770 = vmatpush1.bf16.msra.mxu0 %v9544
    %9771 = vmatprep.subr.bf16.mxu0 0
    %9772 = vmatpush1.bf16.msra.mxu0 %v9546
    %9773 = vmatprep.subr.bf16.mxu0 0
    %9774 = vmatpush1.bf16.msra.mxu0 %v9548
    %9775 = vmatprep.subr.bf16.mxu0 0
    %9776 = vmatpush1.bf16.msra.mxu0 %v9550
    %9777 = vmatprep.subr.bf16.mxu0 0
    %9778 = vmatpush1.bf16.msra.mxu0 %v9552
    %9779 = vmatprep.subr.bf16.mxu0 0
    %9780 = vmatpush1.bf16.msra.mxu0 %v9554
    %9781 = vmatprep.subr.bf16.mxu0 0
    %9782 = vmatpush1.bf16.msra.mxu0 %v9556
    %9783 = vmatprep.subr.bf16.mxu0 0
    %9784 = vmatpush1.bf16.msra.mxu0 %v9558
    %9785 = vmatprep.subr.bf16.mxu0 0
    %9786 = vmatpush1.bf16.msra.mxu0 %v9560
    %9787 = vmatprep.subr.bf16.mxu0 0
    %9788 = vmatpush1.bf16.msra.mxu0 %v9562
    %9789 = vmatprep.subr.bf16.mxu0 0
    %9790 = vmatpush1.bf16.msra.mxu0 %v9564
    %9791 = vmatprep.subr.bf16.mxu0 0
    %9792 = vmatpush1.bf16.msra.mxu0 %v9566
    %9793 = vmatprep.subr.bf16.mxu0 0
    %9794 = vmatpush1.bf16.msra.mxu0 %v9568
    %9795 = vmatprep.subr.bf16.mxu0 0
    %9796 = vmatpush1.bf16.msra.mxu0 %v9570
    %9797 = vmatprep.subr.bf16.mxu0 0
    %9798 = vmatpush1.bf16.msra.mxu0 %v9572
    %9799 = vmatprep.subr.bf16.mxu0 0
    %9800 = vmatpush1.bf16.msra.mxu0 %v9574
    %9801 = vmatprep.mubr.bf16.mxu0 %v9706
    %9802 = vmatmul.mubr.bf16.gmra.mrb[0].mxu0 %v9705
    %v9803 = vpop.f32.mrb[0].mxu0
    %v9804 = vadd.f32 0.0, %v9803
    %v9805 = vpop.f32.mrb[0].mxu0
    %v9806 = vpop.f32.mrb[0].mxu0
    %v9807 = vadd.f32 0.0, %v9806
    %v9808 = vpop.f32.mrb[0].mxu0
    %9809 = vmatprep.mubr.bf16.mxu0 %v9708
    %9810 = vmatmul.mubr.bf16.gmra.mrb[0].mxu0 %v9707
    %v9811 = vpop.f32.mrb[0].mxu0
    %v9812 = vadd.f32 0.0, %v9811
    %v9813 = vpop.f32.mrb[0].mxu0
    %v9814 = vpop.f32.mrb[0].mxu0
    %v9815 = vadd.f32 0.0, %v9814
    %v9816 = vpop.f32.mrb[0].mxu0
    %9817 = vmatprep.mubr.bf16.mxu0 %v9710
    %9818 = vmatmul.mubr.bf16.gmra.mrb[0].mxu0 %v9709
    %v9819 = vpop.f32.mrb[0].mxu0
    %v9820 = vadd.f32 0.0, %v9819
    %v9821 = vpop.f32.mrb[0].mxu0
    %v9822 = vpop.f32.mrb[0].mxu0
    %v9823 = vadd.f32 0.0, %v9822
    %v9824 = vpop.f32.mrb[0].mxu0
    %9825 = vmatprep.mubr.bf16.mxu0 %v9712
    %9826 = vmatmul.mubr.bf16.gmra.mrb[0].mxu0 %v9711
    %v9827 = vpop.f32.mrb[0].mxu0
    %v9828 = vadd.f32 0.0, %v9827
    %v9829 = vpop.f32.mrb[0].mxu0
    %v9830 = vpop.f32.mrb[0].mxu0
    %v9831 = vadd.f32 0.0, %v9830
    %v9832 = vpop.f32.mrb[0].mxu0
    %9833 = vmatprep.mubr.bf16.mxu0 %v9714
    %9834 = vmatmul.mubr.bf16.gmra.mrb[0].mxu0 %v9713
    %v9835 = vpop.f32.mrb[0].mxu0
    %v9836 = vadd.f32 0.0, %v9835
    %v9837 = vpop.f32.mrb[0].mxu0
    %v9838 = vpop.f32.mrb[0].mxu0
    %v9839 = vadd.f32 0.0, %v9838
    %v9840 = vpop.f32.mrb[0].mxu0
    %9841 = vmatprep.mubr.bf16.mxu0 %v9716
    %9842 = vmatmul.mubr.bf16.gmra.mrb[0].mxu0 %v9715
    %v9843 = vpop.f32.mrb[0].mxu0
    %v9844 = vadd.f32 0.0, %v9843
    %v9845 = vpop.f32.mrb[0].mxu0
    %v9846 = vpop.f32.mrb[0].mxu0
    %v9847 = vadd.f32 0.0, %v9846
    %v9848 = vpop.f32.mrb[0].mxu0
    %9849 = vmatprep.mubr.bf16.mxu0 %v9718
    %9850 = vmatmul.mubr.bf16.gmra.mrb[0].mxu0 %v9717
    %v9851 = vpop.f32.mrb[0].mxu0
    %v9852 = vadd.f32 0.0, %v9851
    %v9853 = vpop.f32.mrb[0].mxu0
    %v9854 = vpop.f32.mrb[0].mxu0
    %v9855 = vadd.f32 0.0, %v9854
    %v9856 = vpop.f32.mrb[0].mxu0
    %9857 = vmatprep.mubr.bf16.mxu0 %v9720
    %9858 = vmatmul.mubr.bf16.gmra.mrb[0].mxu0 %v9719
    %v9859 = vpop.f32.mrb[0].mxu0
    %v9860 = vadd.f32 0.0, %v9859
    %v9861 = vpop.f32.mrb[0].mxu0
    %v9862 = vpop.f32.mrb[0].mxu0
    %v9863 = vadd.f32 0.0, %v9862
    %v9864 = vpop.f32.mrb[0].mxu0
    %9865 = vmatprep.mubr.bf16.mxu0 %v9722
    %9866 = vmatmul.mubr.bf16.gmra.mrb[0].mxu0 %v9721
    %v9867 = vpop.f32.mrb[0].mxu0
    %v9868 = vadd.f32 0.0, %v9867
    %v9869 = vpop.f32.mrb[0].mxu0
    %v9870 = vpop.f32.mrb[0].mxu0
    %v9871 = vadd.f32 0.0, %v9870
    %v9872 = vpop.f32.mrb[0].mxu0
    %9873 = vmatprep.mubr.bf16.mxu0 %v9724
    %9874 = vmatmul.mubr.bf16.gmra.mrb[0].mxu0 %v9723
    %v9875 = vpop.f32.mrb[0].mxu0
    %v9876 = vadd.f32 0.0, %v9875
    %v9877 = vpop.f32.mrb[0].mxu0
    %v9878 = vpop.f32.mrb[0].mxu0
    %v9879 = vadd.f32 0.0, %v9878
    %v9880 = vpop.f32.mrb[0].mxu0
    %9881 = vmatprep.mubr.bf16.mxu0 %v9726
    %9882 = vmatmul.mubr.bf16.gmra.mrb[0].mxu0 %v9725
    %v9883 = vpop.f32.mrb[0].mxu0
    %v9884 = vadd.f32 0.0, %v9883
    %v9885 = vpop.f32.mrb[0].mxu0
    %v9886 = vpop.f32.mrb[0].mxu0
    %v9887 = vadd.f32 0.0, %v9886
    %v9888 = vpop.f32.mrb[0].mxu0
    %9889 = vmatprep.mubr.bf16.mxu0 %v9728
    %9890 = vmatmul.mubr.bf16.gmra.mrb[0].mxu0 %v9727
    %v9891 = vpop.f32.mrb[0].mxu0
    %v9892 = vadd.f32 0.0, %v9891
    %v9893 = vpop.f32.mrb[0].mxu0
    %v9894 = vpop.f32.mrb[0].mxu0
    %v9895 = vadd.f32 0.0, %v9894
    %v9896 = vpop.f32.mrb[0].mxu0
    %9897 = vmatprep.mubr.bf16.mxu0 %v9730
    %9898 = vmatmul.mubr.bf16.gmra.mrb[0].mxu0 %v9729
    %v9899 = vpop.f32.mrb[0].mxu0
    %v9900 = vadd.f32 0.0, %v9899
    %v9901 = vpop.f32.mrb[0].mxu0
    %v9902 = vpop.f32.mrb[0].mxu0
    %v9903 = vadd.f32 0.0, %v9902
    %v9904 = vpop.f32.mrb[0].mxu0
    %9905 = vmatprep.mubr.bf16.mxu0 %v9732
    %9906 = vmatmul.mubr.bf16.gmra.mrb[0].mxu0 %v9731
    %v9907 = vpop.f32.mrb[0].mxu0
    %v9908 = vadd.f32 0.0, %v9907
    %v9909 = vpop.f32.mrb[0].mxu0
    %v9910 = vpop.f32.mrb[0].mxu0
    %v9911 = vadd.f32 0.0, %v9910
    %v9912 = vpop.f32.mrb[0].mxu0
    %9913 = vmatprep.mubr.bf16.mxu0 %v9734
    %9914 = vmatmul.mubr.bf16.gmra.mrb[0].mxu0 %v9733
    %v9915 = vpop.f32.mrb[0].mxu0
    %v9916 = vadd.f32 0.0, %v9915
    %v9917 = vpop.f32.mrb[0].mxu0
    %v9918 = vpop.f32.mrb[0].mxu0
    %v9919 = vadd.f32 0.0, %v9918
    %v9920 = vpop.f32.mrb[0].mxu0
    %9921 = vmatprep.mubr.bf16.mxu0 %v9736
    %9922 = vmatmul.mubr.bf16.gmra.mrb[0].mxu0 %v9735
    %v9923 = vpop.f32.mrb[0].mxu0
    %v9924 = vadd.f32 0.0, %v9923
    %v9925 = vpop.f32.mrb[0].mxu0
    %v9926 = vpop.f32.mrb[0].mxu0
    %v9927 = vadd.f32 0.0, %v9926
    %v9928 = vpop.f32.mrb[0].mxu0
    %9929 = vdwg.mxu0
    %s9930 = scalar_lea.vmem [#allocation6], 3328
    %v9931 = vld [vmem:[%s9930] sm:$0xff]
    %v9932 = vld [vmem:[%s9930 + $0x8] sm:$0xff]
    %v9933 = vld [vmem:[%s9930 + $0x10] sm:$0xff]
    %v9934 = vld [vmem:[%s9930 + $0x18] sm:$0xff]
    %v9935 = vld [vmem:[%s9930 + $0x20] sm:$0xff]
    %v9936 = vld [vmem:[%s9930 + $0x28] sm:$0xff]
    %v9937 = vld [vmem:[%s9930 + $0x30] sm:$0xff]
    %v9938 = vld [vmem:[%s9930 + $0x38] sm:$0xff]
    %v9939 = vld [vmem:[%s9930 + $0x40] sm:$0xff]
    %v9940 = vld [vmem:[%s9930 + $0x48] sm:$0xff]
    %v9941 = vld [vmem:[%s9930 + $0x50] sm:$0xff]
    %v9942 = vld [vmem:[%s9930 + $0x58] sm:$0xff]
    %v9943 = vld [vmem:[%s9930 + $0x60] sm:$0xff]
    %v9944 = vld [vmem:[%s9930 + $0x68] sm:$0xff]
    %v9945 = vld [vmem:[%s9930 + $0x70] sm:$0xff]
    %v9946 = vld [vmem:[%s9930 + $0x78] sm:$0xff]
    %v9947 = vld [vmem:[%s9930 + $0x80] sm:$0xff]
    %v9948 = vld [vmem:[%s9930 + $0x88] sm:$0xff]
    %v9949 = vld [vmem:[%s9930 + $0x90] sm:$0xff]
    %v9950 = vld [vmem:[%s9930 + $0x98] sm:$0xff]
    %v9951 = vld [vmem:[%s9930 + $0xa0] sm:$0xff]
    %v9952 = vld [vmem:[%s9930 + $0xa8] sm:$0xff]
    %v9953 = vld [vmem:[%s9930 + $0xb0] sm:$0xff]
    %v9954 = vld [vmem:[%s9930 + $0xb8] sm:$0xff]
    %v9955 = vld [vmem:[%s9930 + $0xc0] sm:$0xff]
    %v9956 = vld [vmem:[%s9930 + $0xc8] sm:$0xff]
    %v9957 = vld [vmem:[%s9930 + $0xd0] sm:$0xff]
    %v9958 = vld [vmem:[%s9930 + $0xd8] sm:$0xff]
    %v9959 = vld [vmem:[%s9930 + $0xe0] sm:$0xff]
    %v9960 = vld [vmem:[%s9930 + $0xe8] sm:$0xff]
    %v9961 = vld [vmem:[%s9930 + $0xf0] sm:$0xff]
    %v9962 = vld [vmem:[%s9930 + $0xf8] sm:$0xff]
    %v9995 = vunpack.c.l.b16 %v9931
    %v9996 = vunpack.c.h.b16 %v9931
    %v9997 = vunpack.c.l.b16 %v9932
    %v9998 = vunpack.c.h.b16 %v9932
    %v9999 = vunpack.c.l.b16 %v9933
    %v10000 = vunpack.c.h.b16 %v9933
    %v10001 = vunpack.c.l.b16 %v9934
    %v10002 = vunpack.c.h.b16 %v9934
    %v10003 = vunpack.c.l.b16 %v9935
    %v10004 = vunpack.c.h.b16 %v9935
    %v10005 = vunpack.c.l.b16 %v9936
    %v10006 = vunpack.c.h.b16 %v9936
    %v10007 = vunpack.c.l.b16 %v9937
    %v10008 = vunpack.c.h.b16 %v9937
    %v10009 = vunpack.c.l.b16 %v9938
    %v10010 = vunpack.c.h.b16 %v9938
    %v10011 = vunpack.c.l.b16 %v9939
    %v10012 = vunpack.c.h.b16 %v9939
    %v10013 = vunpack.c.l.b16 %v9940
    %v10014 = vunpack.c.h.b16 %v9940
    %v10015 = vunpack.c.l.b16 %v9941
    %v10016 = vunpack.c.h.b16 %v9941
    %v10017 = vunpack.c.l.b16 %v9942
    %v10018 = vunpack.c.h.b16 %v9942
    %v10019 = vunpack.c.l.b16 %v9943
    %v10020 = vunpack.c.h.b16 %v9943
    %v10021 = vunpack.c.l.b16 %v9944
    %v10022 = vunpack.c.h.b16 %v9944
    %v10023 = vunpack.c.l.b16 %v9945
    %v10024 = vunpack.c.h.b16 %v9945
    %v10025 = vunpack.c.l.b16 %v9946
    %v10026 = vunpack.c.h.b16 %v9946
    %v10027 = vunpack.c.l.b16 %v9947
    %v10028 = vunpack.c.h.b16 %v9947
    %v10029 = vunpack.c.l.b16 %v9948
    %v10030 = vunpack.c.h.b16 %v9948
    %v10031 = vunpack.c.l.b16 %v9949
    %v10032 = vunpack.c.h.b16 %v9949
    %v10033 = vunpack.c.l.b16 %v9950
    %v10034 = vunpack.c.h.b16 %v9950
    %v10035 = vunpack.c.l.b16 %v9951
    %v10036 = vunpack.c.h.b16 %v9951
    %v10037 = vunpack.c.l.b16 %v9952
    %v10038 = vunpack.c.h.b16 %v9952
    %v10039 = vunpack.c.l.b16 %v9953
    %v10040 = vunpack.c.h.b16 %v9953
    %v10041 = vunpack.c.l.b16 %v9954
    %v10042 = vunpack.c.h.b16 %v9954
    %v10043 = vunpack.c.l.b16 %v9955
    %v10044 = vunpack.c.h.b16 %v9955
    %v10045 = vunpack.c.l.b16 %v9956
    %v10046 = vunpack.c.h.b16 %v9956
    %v10047 = vunpack.c.l.b16 %v9957
    %v10048 = vunpack.c.h.b16 %v9957
    %v10049 = vunpack.c.l.b16 %v9958
    %v10050 = vunpack.c.h.b16 %v9958
    %v10051 = vunpack.c.l.b16 %v9959
    %v10052 = vunpack.c.h.b16 %v9959
    %v10053 = vunpack.c.l.b16 %v9960
    %v10054 = vunpack.c.h.b16 %v9960
    %v10055 = vunpack.c.l.b16 %v9961
    %v10056 = vunpack.c.h.b16 %v9961
    %v10057 = vunpack.c.l.b16 %v9962
    %v10058 = vunpack.c.h.b16 %v9962
    %v10059 = vpack.c.b16 %v9997, %v9995
    %v10060 = vpack.c.b16 %v9998, %v9996
    %v10061 = vpack.c.b16 %v10001, %v9999
    %v10062 = vpack.c.b16 %v10002, %v10000
    %v10063 = vpack.c.b16 %v10005, %v10003
    %v10064 = vpack.c.b16 %v10006, %v10004
    %v10065 = vpack.c.b16 %v10009, %v10007
    %v10066 = vpack.c.b16 %v10010, %v10008
    %v10067 = vpack.c.b16 %v10013, %v10011
    %v10068 = vpack.c.b16 %v10014, %v10012
    %v10069 = vpack.c.b16 %v10017, %v10015
    %v10070 = vpack.c.b16 %v10018, %v10016
    %v10071 = vpack.c.b16 %v10021, %v10019
    %v10072 = vpack.c.b16 %v10022, %v10020
    %v10073 = vpack.c.b16 %v10025, %v10023
    %v10074 = vpack.c.b16 %v10026, %v10024
    %v10075 = vpack.c.b16 %v10029, %v10027
    %v10076 = vpack.c.b16 %v10030, %v10028
    %v10077 = vpack.c.b16 %v10033, %v10031
    %v10078 = vpack.c.b16 %v10034, %v10032
    %v10079 = vpack.c.b16 %v10037, %v10035
    %v10080 = vpack.c.b16 %v10038, %v10036
    %v10081 = vpack.c.b16 %v10041, %v10039
    %v10082 = vpack.c.b16 %v10042, %v10040
    %v10083 = vpack.c.b16 %v10045, %v10043
    %v10084 = vpack.c.b16 %v10046, %v10044
    %v10085 = vpack.c.b16 %v10049, %v10047
    %v10086 = vpack.c.b16 %v10050, %v10048
    %v10087 = vpack.c.b16 %v10053, %v10051
    %v10088 = vpack.c.b16 %v10054, %v10052
    %v10089 = vpack.c.b16 %v10057, %v10055
    %v10090 = vpack.c.b16 %v10058, %v10056
    %10139 = vrot.lane.b32.xlu0 %v9544, 64
    %v10140 = vpop.permute.xlu0 %10139
    %10141 = vrot.lane.b32.xlu0 %v9546, 64
    %v10142 = vpop.permute.xlu0 %10141
    %10143 = vrot.lane.b32.xlu0 %v9548, 64
    %v10144 = vpop.permute.xlu0 %10143
    %10145 = vrot.lane.b32.xlu0 %v9550, 64
    %v10146 = vpop.permute.xlu0 %10145
    %10147 = vrot.lane.b32.xlu0 %v9552, 64
    %v10148 = vpop.permute.xlu0 %10147
    %10149 = vrot.lane.b32.xlu0 %v9554, 64
    %v10150 = vpop.permute.xlu0 %10149
    %10151 = vrot.lane.b32.xlu0 %v9556, 64
    %v10152 = vpop.permute.xlu0 %10151
    %10153 = vrot.lane.b32.xlu0 %v9558, 64
    %v10154 = vpop.permute.xlu0 %10153
    %10155 = vrot.lane.b32.xlu0 %v9560, 64
    %v10156 = vpop.permute.xlu0 %10155
    %10157 = vrot.lane.b32.xlu0 %v9562, 64
    %v10158 = vpop.permute.xlu0 %10157
    %10159 = vrot.lane.b32.xlu0 %v9564, 64
    %v10160 = vpop.permute.xlu0 %10159
    %10161 = vrot.lane.b32.xlu0 %v9566, 64
    %v10162 = vpop.permute.xlu0 %10161
    %10163 = vrot.lane.b32.xlu0 %v9568, 64
    %v10164 = vpop.permute.xlu0 %10163
    %10165 = vrot.lane.b32.xlu0 %v9570, 64
    %v10166 = vpop.permute.xlu0 %10165
    %10167 = vrot.lane.b32.xlu0 %v9572, 64
    %v10168 = vpop.permute.xlu0 %10167
    %10169 = vrot.lane.b32.xlu0 %v9574, 64
    %v10170 = vpop.permute.xlu0 %10169
    %10187 = vmatprep.subr.bf16.mxu0 0
    %10188 = vmatpush1.bf16.msra.mxu0 %v10140
    %10189 = vmatprep.subr.bf16.mxu0 0
    %10190 = vmatpush1.bf16.msra.mxu0 %v10142
    %10191 = vmatprep.subr.bf16.mxu0 0
    %10192 = vmatpush1.bf16.msra.mxu0 %v10144
    %10193 = vmatprep.subr.bf16.mxu0 0
    %10194 = vmatpush1.bf16.msra.mxu0 %v10146
    %10195 = vmatprep.subr.bf16.mxu0 0
    %10196 = vmatpush1.bf16.msra.mxu0 %v10148
    %10197 = vmatprep.subr.bf16.mxu0 0
    %10198 = vmatpush1.bf16.msra.mxu0 %v10150
    %10199 = vmatprep.subr.bf16.mxu0 0
    %10200 = vmatpush1.bf16.msra.mxu0 %v10152
    %10201 = vmatprep.subr.bf16.mxu0 0
    %10202 = vmatpush1.bf16.msra.mxu0 %v10154
    %10203 = vmatprep.subr.bf16.mxu0 0
    %10204 = vmatpush1.bf16.msra.mxu0 %v10156
    %10205 = vmatprep.subr.bf16.mxu0 0
    %10206 = vmatpush1.bf16.msra.mxu0 %v10158
    %10207 = vmatprep.subr.bf16.mxu0 0
    %10208 = vmatpush1.bf16.msra.mxu0 %v10160
    %10209 = vmatprep.subr.bf16.mxu0 0
    %10210 = vmatpush1.bf16.msra.mxu0 %v10162
    %10211 = vmatprep.subr.bf16.mxu0 0
    %10212 = vmatpush1.bf16.msra.mxu0 %v10164
    %10213 = vmatprep.subr.bf16.mxu0 0
    %10214 = vmatpush1.bf16.msra.mxu0 %v10166
    %10215 = vmatprep.subr.bf16.mxu0 0
    %10216 = vmatpush1.bf16.msra.mxu0 %v10168
    %10217 = vmatprep.subr.bf16.mxu0 0
    %10218 = vmatpush1.bf16.msra.mxu0 %v10170
    %10219 = vmatprep.mubr.bf16.mxu0 %v10060
    %10220 = vmatmul.mubr.bf16.gmra.mrb[0].mxu0 %v10059
    %v10221 = vpop.f32.mrb[0].mxu0
    %v10222 = vadd.f32 0.0, %v10221
    %v10223 = vpop.f32.mrb[0].mxu0
    %v10224 = vpop.f32.mrb[0].mxu0
    %v10225 = vadd.f32 0.0, %v10224
    %v10226 = vpop.f32.mrb[0].mxu0
    %10227 = vmatprep.mubr.bf16.mxu0 %v10062
    %10228 = vmatmul.mubr.bf16.gmra.mrb[0].mxu0 %v10061
    %v10229 = vpop.f32.mrb[0].mxu0
    %v10230 = vadd.f32 0.0, %v10229
    %v10231 = vpop.f32.mrb[0].mxu0
    %v10232 = vpop.f32.mrb[0].mxu0
    %v10233 = vadd.f32 0.0, %v10232
    %v10234 = vpop.f32.mrb[0].mxu0
    %10235 = vmatprep.mubr.bf16.mxu0 %v10064
    %10236 = vmatmul.mubr.bf16.gmra.mrb[0].mxu0 %v10063
    %v10237 = vpop.f32.mrb[0].mxu0
    %v10238 = vadd.f32 0.0, %v10237
    %v10239 = vpop.f32.mrb[0].mxu0
    %v10240 = vpop.f32.mrb[0].mxu0
    %v10241 = vadd.f32 0.0, %v10240
    %v10242 = vpop.f32.mrb[0].mxu0
    %10243 = vmatprep.mubr.bf16.mxu0 %v10066
    %10244 = vmatmul.mubr.bf16.gmra.mrb[0].mxu0 %v10065
    %v10245 = vpop.f32.mrb[0].mxu0
    %v10246 = vadd.f32 0.0, %v10245
    %v10247 = vpop.f32.mrb[0].mxu0
    %v10248 = vpop.f32.mrb[0].mxu0
    %v10249 = vadd.f32 0.0, %v10248
    %v10250 = vpop.f32.mrb[0].mxu0
    %10251 = vmatprep.mubr.bf16.mxu0 %v10068
    %10252 = vmatmul.mubr.bf16.gmra.mrb[0].mxu0 %v10067
    %v10253 = vpop.f32.mrb[0].mxu0
    %v10254 = vadd.f32 0.0, %v10253
    %v10255 = vpop.f32.mrb[0].mxu0
    %v10256 = vpop.f32.mrb[0].mxu0
    %v10257 = vadd.f32 0.0, %v10256
    %v10258 = vpop.f32.mrb[0].mxu0
    %10259 = vmatprep.mubr.bf16.mxu0 %v10070
    %10260 = vmatmul.mubr.bf16.gmra.mrb[0].mxu0 %v10069
    %v10261 = vpop.f32.mrb[0].mxu0
    %v10262 = vadd.f32 0.0, %v10261
    %v10263 = vpop.f32.mrb[0].mxu0
    %v10264 = vpop.f32.mrb[0].mxu0
    %v10265 = vadd.f32 0.0, %v10264
    %v10266 = vpop.f32.mrb[0].mxu0
    %10267 = vmatprep.mubr.bf16.mxu0 %v10072
    %10268 = vmatmul.mubr.bf16.gmra.mrb[0].mxu0 %v10071
    %v10269 = vpop.f32.mrb[0].mxu0
    %v10270 = vadd.f32 0.0, %v10269
    %v10271 = vpop.f32.mrb[0].mxu0
    %v10272 = vpop.f32.mrb[0].mxu0
    %v10273 = vadd.f32 0.0, %v10272
    %v10274 = vpop.f32.mrb[0].mxu0
    %10275 = vmatprep.mubr.bf16.mxu0 %v10074
    %10276 = vmatmul.mubr.bf16.gmra.mrb[0].mxu0 %v10073
    %v10277 = vpop.f32.mrb[0].mxu0
    %v10278 = vadd.f32 0.0, %v10277
    %v10279 = vpop.f32.mrb[0].mxu0
    %v10280 = vpop.f32.mrb[0].mxu0
    %v10281 = vadd.f32 0.0, %v10280
    %v10282 = vpop.f32.mrb[0].mxu0
    %10283 = vmatprep.mubr.bf16.mxu0 %v10076
    %10284 = vmatmul.mubr.bf16.gmra.mrb[0].mxu0 %v10075
    %v10285 = vpop.f32.mrb[0].mxu0
    %v10286 = vadd.f32 0.0, %v10285
    %v10287 = vpop.f32.mrb[0].mxu0
    %v10288 = vpop.f32.mrb[0].mxu0
    %v10289 = vadd.f32 0.0, %v10288
    %v10290 = vpop.f32.mrb[0].mxu0
    %10291 = vmatprep.mubr.bf16.mxu0 %v10078
    %10292 = vmatmul.mubr.bf16.gmra.mrb[0].mxu0 %v10077
    %v10293 = vpop.f32.mrb[0].mxu0
    %v10294 = vadd.f32 0.0, %v10293
    %v10295 = vpop.f32.mrb[0].mxu0
    %v10296 = vpop.f32.mrb[0].mxu0
    %v10297 = vadd.f32 0.0, %v10296
    %v10298 = vpop.f32.mrb[0].mxu0
    %10299 = vmatprep.mubr.bf16.mxu0 %v10080
    %10300 = vmatmul.mubr.bf16.gmra.mrb[0].mxu0 %v10079
    %v10301 = vpop.f32.mrb[0].mxu0
    %v10302 = vadd.f32 0.0, %v10301
    %v10303 = vpop.f32.mrb[0].mxu0
    %v10304 = vpop.f32.mrb[0].mxu0
    %v10305 = vadd.f32 0.0, %v10304
    %v10306 = vpop.f32.mrb[0].mxu0
    %10307 = vmatprep.mubr.bf16.mxu0 %v10082
    %10308 = vmatmul.mubr.bf16.gmra.mrb[0].mxu0 %v10081
    %v10309 = vpop.f32.mrb[0].mxu0
    %v10310 = vadd.f32 0.0, %v10309
    %v10311 = vpop.f32.mrb[0].mxu0
    %v10312 = vpop.f32.mrb[0].mxu0
    %v10313 = vadd.f32 0.0, %v10312
    %v10314 = vpop.f32.mrb[0].mxu0
    %10315 = vmatprep.mubr.bf16.mxu0 %v10084
    %10316 = vmatmul.mubr.bf16.gmra.mrb[0].mxu0 %v10083
    %v10317 = vpop.f32.mrb[0].mxu0
    %v10318 = vadd.f32 0.0, %v10317
    %v10319 = vpop.f32.mrb[0].mxu0
    %v10320 = vpop.f32.mrb[0].mxu0
    %v10321 = vadd.f32 0.0, %v10320
    %v10322 = vpop.f32.mrb[0].mxu0
    %10323 = vmatprep.mubr.bf16.mxu0 %v10086
    %10324 = vmatmul.mubr.bf16.gmra.mrb[0].mxu0 %v10085
    %v10325 = vpop.f32.mrb[0].mxu0
    %v10326 = vadd.f32 0.0, %v10325
    %v10327 = vpop.f32.mrb[0].mxu0
    %v10328 = vpop.f32.mrb[0].mxu0
    %v10329 = vadd.f32 0.0, %v10328
    %v10330 = vpop.f32.mrb[0].mxu0
    %10331 = vmatprep.mubr.bf16.mxu0 %v10088
    %10332 = vmatmul.mubr.bf16.gmra.mrb[0].mxu0 %v10087
    %v10333 = vpop.f32.mrb[0].mxu0
    %v10334 = vadd.f32 0.0, %v10333
    %v10335 = vpop.f32.mrb[0].mxu0
    %v10336 = vpop.f32.mrb[0].mxu0
    %v10337 = vadd.f32 0.0, %v10336
    %v10338 = vpop.f32.mrb[0].mxu0
    %10339 = vmatprep.mubr.bf16.mxu0 %v10090
    %10340 = vmatmul.mubr.bf16.gmra.mrb[0].mxu0 %v10089
    %v10341 = vpop.f32.mrb[0].mxu0
    %v10342 = vadd.f32 0.0, %v10341
    %v10343 = vpop.f32.mrb[0].mxu0
    %v10344 = vpop.f32.mrb[0].mxu0
    %v10345 = vadd.f32 0.0, %v10344
    %v10346 = vpop.f32.mrb[0].mxu0
    %10347 = vdwg.mxu0
    %s10348 = scalar_lea.vmem [#allocation6], 3584
    %v10349 = vld [vmem:[%s10348] sm:$0xff]
    %v10350 = vld [vmem:[%s10348 + $0x8] sm:$0xff]
    %v10351 = vld [vmem:[%s10348 + $0x10] sm:$0xff]
    %v10352 = vld [vmem:[%s10348 + $0x18] sm:$0xff]
    %v10353 = vld [vmem:[%s10348 + $0x20] sm:$0xff]
    %v10354 = vld [vmem:[%s10348 + $0x28] sm:$0xff]
    %v10355 = vld [vmem:[%s10348 + $0x30] sm:$0xff]
    %v10356 = vld [vmem:[%s10348 + $0x38] sm:$0xff]
    %v10357 = vld [vmem:[%s10348 + $0x40] sm:$0xff]
    %v10358 = vld [vmem:[%s10348 + $0x48] sm:$0xff]
    %v10359 = vld [vmem:[%s10348 + $0x50] sm:$0xff]
    %v10360 = vld [vmem:[%s10348 + $0x58] sm:$0xff]
    %v10361 = vld [vmem:[%s10348 + $0x60] sm:$0xff]
    %v10362 = vld [vmem:[%s10348 + $0x68] sm:$0xff]
    %v10363 = vld [vmem:[%s10348 + $0x70] sm:$0xff]
    %v10364 = vld [vmem:[%s10348 + $0x78] sm:$0xff]
    %v10365 = vld [vmem:[%s10348 + $0x80] sm:$0xff]
    %v10366 = vld [vmem:[%s10348 + $0x88] sm:$0xff]
    %v10367 = vld [vmem:[%s10348 + $0x90] sm:$0xff]
    %v10368 = vld [vmem:[%s10348 + $0x98] sm:$0xff]
    %v10369 = vld [vmem:[%s10348 + $0xa0] sm:$0xff]
    %v10370 = vld [vmem:[%s10348 + $0xa8] sm:$0xff]
    %v10371 = vld [vmem:[%s10348 + $0xb0] sm:$0xff]
    %v10372 = vld [vmem:[%s10348 + $0xb8] sm:$0xff]
    %v10373 = vld [vmem:[%s10348 + $0xc0] sm:$0xff]
    %v10374 = vld [vmem:[%s10348 + $0xc8] sm:$0xff]
    %v10375 = vld [vmem:[%s10348 + $0xd0] sm:$0xff]
    %v10376 = vld [vmem:[%s10348 + $0xd8] sm:$0xff]
    %v10377 = vld [vmem:[%s10348 + $0xe0] sm:$0xff]
    %v10378 = vld [vmem:[%s10348 + $0xe8] sm:$0xff]
    %v10379 = vld [vmem:[%s10348 + $0xf0] sm:$0xff]
    %v10380 = vld [vmem:[%s10348 + $0xf8] sm:$0xff]
    %v10413 = vunpack.c.l.b16 %v10349
    %v10414 = vunpack.c.h.b16 %v10349
    %v10415 = vunpack.c.l.b16 %v10350
    %v10416 = vunpack.c.h.b16 %v10350
    %v10417 = vunpack.c.l.b16 %v10351
    %v10418 = vunpack.c.h.b16 %v10351
    %v10419 = vunpack.c.l.b16 %v10352
    %v10420 = vunpack.c.h.b16 %v10352
    %v10421 = vunpack.c.l.b16 %v10353
    %v10422 = vunpack.c.h.b16 %v10353
    %v10423 = vunpack.c.l.b16 %v10354
    %v10424 = vunpack.c.h.b16 %v10354
    %v10425 = vunpack.c.l.b16 %v10355
    %v10426 = vunpack.c.h.b16 %v10355
    %v10427 = vunpack.c.l.b16 %v10356
    %v10428 = vunpack.c.h.b16 %v10356
    %v10429 = vunpack.c.l.b16 %v10357
    %v10430 = vunpack.c.h.b16 %v10357
    %v10431 = vunpack.c.l.b16 %v10358
    %v10432 = vunpack.c.h.b16 %v10358
    %v10433 = vunpack.c.l.b16 %v10359
    %v10434 = vunpack.c.h.b16 %v10359
    %v10435 = vunpack.c.l.b16 %v10360
    %v10436 = vunpack.c.h.b16 %v10360
    %v10437 = vunpack.c.l.b16 %v10361
    %v10438 = vunpack.c.h.b16 %v10361
    %v10439 = vunpack.c.l.b16 %v10362
    %v10440 = vunpack.c.h.b16 %v10362
    %v10441 = vunpack.c.l.b16 %v10363
    %v10442 = vunpack.c.h.b16 %v10363
    %v10443 = vunpack.c.l.b16 %v10364
    %v10444 = vunpack.c.h.b16 %v10364
    %v10445 = vunpack.c.l.b16 %v10365
    %v10446 = vunpack.c.h.b16 %v10365
    %v10447 = vunpack.c.l.b16 %v10366
    %v10448 = vunpack.c.h.b16 %v10366
    %v10449 = vunpack.c.l.b16 %v10367
    %v10450 = vunpack.c.h.b16 %v10367
    %v10451 = vunpack.c.l.b16 %v10368
    %v10452 = vunpack.c.h.b16 %v10368
    %v10453 = vunpack.c.l.b16 %v10369
    %v10454 = vunpack.c.h.b16 %v10369
    %v10455 = vunpack.c.l.b16 %v10370
    %v10456 = vunpack.c.h.b16 %v10370
    %v10457 = vunpack.c.l.b16 %v10371
    %v10458 = vunpack.c.h.b16 %v10371
    %v10459 = vunpack.c.l.b16 %v10372
    %v10460 = vunpack.c.h.b16 %v10372
    %v10461 = vunpack.c.l.b16 %v10373
    %v10462 = vunpack.c.h.b16 %v10373
    %v10463 = vunpack.c.l.b16 %v10374
    %v10464 = vunpack.c.h.b16 %v10374
    %v10465 = vunpack.c.l.b16 %v10375
    %v10466 = vunpack.c.h.b16 %v10375
    %v10467 = vunpack.c.l.b16 %v10376
    %v10468 = vunpack.c.h.b16 %v10376
    %v10469 = vunpack.c.l.b16 %v10377
    %v10470 = vunpack.c.h.b16 %v10377
    %v10471 = vunpack.c.l.b16 %v10378
    %v10472 = vunpack.c.h.b16 %v10378
    %v10473 = vunpack.c.l.b16 %v10379
    %v10474 = vunpack.c.h.b16 %v10379
    %v10475 = vunpack.c.l.b16 %v10380
    %v10476 = vunpack.c.h.b16 %v10380
    %v10477 = vpack.c.b16 %v10415, %v10413
    %v10478 = vpack.c.b16 %v10416, %v10414
    %v10479 = vpack.c.b16 %v10419, %v10417
    %v10480 = vpack.c.b16 %v10420, %v10418
    %v10481 = vpack.c.b16 %v10423, %v10421
    %v10482 = vpack.c.b16 %v10424, %v10422
    %v10483 = vpack.c.b16 %v10427, %v10425
    %v10484 = vpack.c.b16 %v10428, %v10426
    %v10485 = vpack.c.b16 %v10431, %v10429
    %v10486 = vpack.c.b16 %v10432, %v10430
    %v10487 = vpack.c.b16 %v10435, %v10433
    %v10488 = vpack.c.b16 %v10436, %v10434
    %v10489 = vpack.c.b16 %v10439, %v10437
    %v10490 = vpack.c.b16 %v10440, %v10438
    %v10491 = vpack.c.b16 %v10443, %v10441
    %v10492 = vpack.c.b16 %v10444, %v10442
    %v10493 = vpack.c.b16 %v10447, %v10445
    %v10494 = vpack.c.b16 %v10448, %v10446
    %v10495 = vpack.c.b16 %v10451, %v10449
    %v10496 = vpack.c.b16 %v10452, %v10450
    %v10497 = vpack.c.b16 %v10455, %v10453
    %v10498 = vpack.c.b16 %v10456, %v10454
    %v10499 = vpack.c.b16 %v10459, %v10457
    %v10500 = vpack.c.b16 %v10460, %v10458
    %v10501 = vpack.c.b16 %v10463, %v10461
    %v10502 = vpack.c.b16 %v10464, %v10462
    %v10503 = vpack.c.b16 %v10467, %v10465
    %v10504 = vpack.c.b16 %v10468, %v10466
    %v10505 = vpack.c.b16 %v10471, %v10469
    %v10506 = vpack.c.b16 %v10472, %v10470
    %v10507 = vpack.c.b16 %v10475, %v10473
    %v10508 = vpack.c.b16 %v10476, %v10474
    %10541 = vmatprep.subr.bf16.mxu0 0
    %10542 = vmatpush1.bf16.msra.mxu0 %v9545
    %10543 = vmatprep.subr.bf16.mxu0 0
    %10544 = vmatpush1.bf16.msra.mxu0 %v9547
    %10545 = vmatprep.subr.bf16.mxu0 0
    %10546 = vmatpush1.bf16.msra.mxu0 %v9549
    %10547 = vmatprep.subr.bf16.mxu0 0
    %10548 = vmatpush1.bf16.msra.mxu0 %v9551
    %10549 = vmatprep.subr.bf16.mxu0 0
    %10550 = vmatpush1.bf16.msra.mxu0 %v9553
    %10551 = vmatprep.subr.bf16.mxu0 0
    %10552 = vmatpush1.bf16.msra.mxu0 %v9555
    %10553 = vmatprep.subr.bf16.mxu0 0
    %10554 = vmatpush1.bf16.msra.mxu0 %v9557
    %10555 = vmatprep.subr.bf16.mxu0 0
    %10556 = vmatpush1.bf16.msra.mxu0 %v9559
    %10557 = vmatprep.subr.bf16.mxu0 0
    %10558 = vmatpush1.bf16.msra.mxu0 %v9561
    %10559 = vmatprep.subr.bf16.mxu0 0
    %10560 = vmatpush1.bf16.msra.mxu0 %v9563
    %10561 = vmatprep.subr.bf16.mxu0 0
    %10562 = vmatpush1.bf16.msra.mxu0 %v9565
    %10563 = vmatprep.subr.bf16.mxu0 0
    %10564 = vmatpush1.bf16.msra.mxu0 %v9567
    %10565 = vmatprep.subr.bf16.mxu0 0
    %10566 = vmatpush1.bf16.msra.mxu0 %v9569
    %10567 = vmatprep.subr.bf16.mxu0 0
    %10568 = vmatpush1.bf16.msra.mxu0 %v9571
    %10569 = vmatprep.subr.bf16.mxu0 0
    %10570 = vmatpush1.bf16.msra.mxu0 %v9573
    %10571 = vmatprep.subr.bf16.mxu0 0
    %10572 = vmatpush1.bf16.msra.mxu0 %v9575
    %10573 = vmatprep.mubr.bf16.mxu0 %v10478
    %10574 = vmatmul.mubr.bf16.gmra.mrb[0].mxu0 %v10477
    %v10575 = vpop.f32.mrb[0].mxu0
    %v10576 = vadd.f32 0.0, %v10575
    %v10577 = vpop.f32.mrb[0].mxu0
    %v10578 = vpop.f32.mrb[0].mxu0
    %v10579 = vadd.f32 0.0, %v10578
    %v10580 = vpop.f32.mrb[0].mxu0
    %10581 = vmatprep.mubr.bf16.mxu0 %v10480
    %10582 = vmatmul.mubr.bf16.gmra.mrb[0].mxu0 %v10479
    %v10583 = vpop.f32.mrb[0].mxu0
    %v10584 = vadd.f32 0.0, %v10583
    %v10585 = vpop.f32.mrb[0].mxu0
    %v10586 = vpop.f32.mrb[0].mxu0
    %v10587 = vadd.f32 0.0, %v10586
    %v10588 = vpop.f32.mrb[0].mxu0
    %10589 = vmatprep.mubr.bf16.mxu0 %v10482
    %10590 = vmatmul.mubr.bf16.gmra.mrb[0].mxu0 %v10481
    %v10591 = vpop.f32.mrb[0].mxu0
    %v10592 = vadd.f32 0.0, %v10591
    %v10593 = vpop.f32.mrb[0].mxu0
    %v10594 = vpop.f32.mrb[0].mxu0
    %v10595 = vadd.f32 0.0, %v10594
    %v10596 = vpop.f32.mrb[0].mxu0
    %10597 = vmatprep.mubr.bf16.mxu0 %v10484
    %10598 = vmatmul.mubr.bf16.gmra.mrb[0].mxu0 %v10483
    %v10599 = vpop.f32.mrb[0].mxu0
    %v10600 = vadd.f32 0.0, %v10599
    %v10601 = vpop.f32.mrb[0].mxu0
    %v10602 = vpop.f32.mrb[0].mxu0
    %v10603 = vadd.f32 0.0, %v10602
    %v10604 = vpop.f32.mrb[0].mxu0
    %10605 = vmatprep.mubr.bf16.mxu0 %v10486
    %10606 = vmatmul.mubr.bf16.gmra.mrb[0].mxu0 %v10485
    %v10607 = vpop.f32.mrb[0].mxu0
    %v10608 = vadd.f32 0.0, %v10607
    %v10609 = vpop.f32.mrb[0].mxu0
    %v10610 = vpop.f32.mrb[0].mxu0
    %v10611 = vadd.f32 0.0, %v10610
    %v10612 = vpop.f32.mrb[0].mxu0
    %10613 = vmatprep.mubr.bf16.mxu0 %v10488
    %10614 = vmatmul.mubr.bf16.gmra.mrb[0].mxu0 %v10487
    %v10615 = vpop.f32.mrb[0].mxu0
    %v10616 = vadd.f32 0.0, %v10615
    %v10617 = vpop.f32.mrb[0].mxu0
    %v10618 = vpop.f32.mrb[0].mxu0
    %v10619 = vadd.f32 0.0, %v10618
    %v10620 = vpop.f32.mrb[0].mxu0
    %10621 = vmatprep.mubr.bf16.mxu0 %v10490
    %10622 = vmatmul.mubr.bf16.gmra.mrb[0].mxu0 %v10489
    %v10623 = vpop.f32.mrb[0].mxu0
    %v10624 = vadd.f32 0.0, %v10623
    %v10625 = vpop.f32.mrb[0].mxu0
    %v10626 = vpop.f32.mrb[0].mxu0
    %v10627 = vadd.f32 0.0, %v10626
    %v10628 = vpop.f32.mrb[0].mxu0
    %10629 = vmatprep.mubr.bf16.mxu0 %v10492
    %10630 = vmatmul.mubr.bf16.gmra.mrb[0].mxu0 %v10491
    %v10631 = vpop.f32.mrb[0].mxu0
    %v10632 = vadd.f32 0.0, %v10631
    %v10633 = vpop.f32.mrb[0].mxu0
    %v10634 = vpop.f32.mrb[0].mxu0
    %v10635 = vadd.f32 0.0, %v10634
    %v10636 = vpop.f32.mrb[0].mxu0
    %10637 = vmatprep.mubr.bf16.mxu0 %v10494
    %10638 = vmatmul.mubr.bf16.gmra.mrb[0].mxu0 %v10493
    %v10639 = vpop.f32.mrb[0].mxu0
    %v10640 = vadd.f32 0.0, %v10639
    %v10641 = vpop.f32.mrb[0].mxu0
    %v10642 = vpop.f32.mrb[0].mxu0
    %v10643 = vadd.f32 0.0, %v10642
    %v10644 = vpop.f32.mrb[0].mxu0
    %10645 = vmatprep.mubr.bf16.mxu0 %v10496
    %10646 = vmatmul.mubr.bf16.gmra.mrb[0].mxu0 %v10495
    %v10647 = vpop.f32.mrb[0].mxu0
    %v10648 = vadd.f32 0.0, %v10647
    %v10649 = vpop.f32.mrb[0].mxu0
    %v10650 = vpop.f32.mrb[0].mxu0
    %v10651 = vadd.f32 0.0, %v10650
    %v10652 = vpop.f32.mrb[0].mxu0
    %10653 = vmatprep.mubr.bf16.mxu0 %v10498
    %10654 = vmatmul.mubr.bf16.gmra.mrb[0].mxu0 %v10497
    %v10655 = vpop.f32.mrb[0].mxu0
    %v10656 = vadd.f32 0.0, %v10655
    %v10657 = vpop.f32.mrb[0].mxu0
    %v10658 = vpop.f32.mrb[0].mxu0
    %v10659 = vadd.f32 0.0, %v10658
    %v10660 = vpop.f32.mrb[0].mxu0
    %10661 = vmatprep.mubr.bf16.mxu0 %v10500
    %10662 = vmatmul.mubr.bf16.gmra.mrb[0].mxu0 %v10499
    %v10663 = vpop.f32.mrb[0].mxu0
    %v10664 = vadd.f32 0.0, %v10663
    %v10665 = vpop.f32.mrb[0].mxu0
    %v10666 = vpop.f32.mrb[0].mxu0
    %v10667 = vadd.f32 0.0, %v10666
    %v10668 = vpop.f32.mrb[0].mxu0
    %10669 = vmatprep.mubr.bf16.mxu0 %v10502
    %10670 = vmatmul.mubr.bf16.gmra.mrb[0].mxu0 %v10501
    %v10671 = vpop.f32.mrb[0].mxu0
    %v10672 = vadd.f32 0.0, %v10671
    %v10673 = vpop.f32.mrb[0].mxu0
    %v10674 = vpop.f32.mrb[0].mxu0
    %v10675 = vadd.f32 0.0, %v10674
    %v10676 = vpop.f32.mrb[0].mxu0
    %10677 = vmatprep.mubr.bf16.mxu0 %v10504
    %10678 = vmatmul.mubr.bf16.gmra.mrb[0].mxu0 %v10503
    %v10679 = vpop.f32.mrb[0].mxu0
    %v10680 = vadd.f32 0.0, %v10679
    %v10681 = vpop.f32.mrb[0].mxu0
    %v10682 = vpop.f32.mrb[0].mxu0
    %v10683 = vadd.f32 0.0, %v10682
    %v10684 = vpop.f32.mrb[0].mxu0
    %10685 = vmatprep.mubr.bf16.mxu0 %v10506
    %10686 = vmatmul.mubr.bf16.gmra.mrb[0].mxu0 %v10505
    %v10687 = vpop.f32.mrb[0].mxu0
    %v10688 = vadd.f32 0.0, %v10687
    %v10689 = vpop.f32.mrb[0].mxu0
    %v10690 = vpop.f32.mrb[0].mxu0
    %v10691 = vadd.f32 0.0, %v10690
    %v10692 = vpop.f32.mrb[0].mxu0
    %10693 = vmatprep.mubr.bf16.mxu0 %v10508
    %10694 = vmatmul.mubr.bf16.gmra.mrb[0].mxu0 %v10507
    %v10695 = vpop.f32.mrb[0].mxu0
    %v10696 = vadd.f32 0.0, %v10695
    %v10697 = vpop.f32.mrb[0].mxu0
    %v10698 = vpop.f32.mrb[0].mxu0
    %v10699 = vadd.f32 0.0, %v10698
    %v10700 = vpop.f32.mrb[0].mxu0
    %10701 = vdwg.mxu0
    %10734 = vrot.lane.b32.xlu0 %v10222, 64
    %v10735 = vpop.permute.xlu0 %10734
    %10736 = vrot.lane.b32.xlu0 %v10225, 64
    %v10737 = vpop.permute.xlu0 %10736
    %10738 = vrot.lane.b32.xlu0 %v10230, 64
    %v10739 = vpop.permute.xlu0 %10738
    %10740 = vrot.lane.b32.xlu0 %v10233, 64
    %v10741 = vpop.permute.xlu0 %10740
    %10742 = vrot.lane.b32.xlu0 %v10238, 64
    %v10743 = vpop.permute.xlu0 %10742
    %10744 = vrot.lane.b32.xlu0 %v10241, 64
    %v10745 = vpop.permute.xlu0 %10744
    %10746 = vrot.lane.b32.xlu0 %v10246, 64
    %v10747 = vpop.permute.xlu0 %10746
    %10748 = vrot.lane.b32.xlu0 %v10249, 64
    %v10749 = vpop.permute.xlu0 %10748
    %10750 = vrot.lane.b32.xlu0 %v10254, 64
    %v10751 = vpop.permute.xlu0 %10750
    %10752 = vrot.lane.b32.xlu0 %v10257, 64
    %v10753 = vpop.permute.xlu0 %10752
    %10754 = vrot.lane.b32.xlu0 %v10262, 64
    %v10755 = vpop.permute.xlu0 %10754
    %10756 = vrot.lane.b32.xlu0 %v10265, 64
    %v10757 = vpop.permute.xlu0 %10756
    %10758 = vrot.lane.b32.xlu0 %v10270, 64
    %v10759 = vpop.permute.xlu0 %10758
    %10760 = vrot.lane.b32.xlu0 %v10273, 64
    %v10761 = vpop.permute.xlu0 %10760
    %10762 = vrot.lane.b32.xlu0 %v10278, 64
    %v10763 = vpop.permute.xlu0 %10762
    %10764 = vrot.lane.b32.xlu0 %v10281, 64
    %v10765 = vpop.permute.xlu0 %10764
    %10766 = vrot.lane.b32.xlu0 %v10286, 64
    %v10767 = vpop.permute.xlu0 %10766
    %10768 = vrot.lane.b32.xlu0 %v10289, 64
    %v10769 = vpop.permute.xlu0 %10768
    %10770 = vrot.lane.b32.xlu0 %v10294, 64
    %v10771 = vpop.permute.xlu0 %10770
    %10772 = vrot.lane.b32.xlu0 %v10297, 64
    %v10773 = vpop.permute.xlu0 %10772
    %10774 = vrot.lane.b32.xlu0 %v10302, 64
    %v10775 = vpop.permute.xlu0 %10774
    %10776 = vrot.lane.b32.xlu0 %v10305, 64
    %v10777 = vpop.permute.xlu0 %10776
    %10778 = vrot.lane.b32.xlu0 %v10310, 64
    %v10779 = vpop.permute.xlu0 %10778
    %10780 = vrot.lane.b32.xlu0 %v10313, 64
    %v10781 = vpop.permute.xlu0 %10780
    %10782 = vrot.lane.b32.xlu0 %v10318, 64
    %v10783 = vpop.permute.xlu0 %10782
    %10784 = vrot.lane.b32.xlu0 %v10321, 64
    %v10785 = vpop.permute.xlu0 %10784
    %10786 = vrot.lane.b32.xlu0 %v10326, 64
    %v10787 = vpop.permute.xlu0 %10786
    %10788 = vrot.lane.b32.xlu0 %v10329, 64
    %v10789 = vpop.permute.xlu0 %10788
    %10790 = vrot.lane.b32.xlu0 %v10334, 64
    %v10791 = vpop.permute.xlu0 %10790
    %10792 = vrot.lane.b32.xlu0 %v10337, 64
    %v10793 = vpop.permute.xlu0 %10792
    %10794 = vrot.lane.b32.xlu0 %v10342, 64
    %v10795 = vpop.permute.xlu0 %10794
    %10796 = vrot.lane.b32.xlu0 %v10345, 64
    %v10797 = vpop.permute.xlu0 %10796
    %v10830 = vsel %vm2336, %v9804, %v10735
    %v10831 = vsel %vm2336, %v9807, %v10737
    %v10832 = vsel %vm2336, %v9812, %v10739
    %v10833 = vsel %vm2336, %v9815, %v10741
    %v10834 = vsel %vm2336, %v9820, %v10743
    %v10835 = vsel %vm2336, %v9823, %v10745
    %v10836 = vsel %vm2336, %v9828, %v10747
    %v10837 = vsel %vm2336, %v9831, %v10749
    %v10838 = vsel %vm2336, %v9836, %v10751
    %v10839 = vsel %vm2336, %v9839, %v10753
    %v10840 = vsel %vm2336, %v9844, %v10755
    %v10841 = vsel %vm2336, %v9847, %v10757
    %v10842 = vsel %vm2336, %v9852, %v10759
    %v10843 = vsel %vm2336, %v9855, %v10761
    %v10844 = vsel %vm2336, %v9860, %v10763
    %v10845 = vsel %vm2336, %v9863, %v10765
    %v10846 = vsel %vm2336, %v9868, %v10767
    %v10847 = vsel %vm2336, %v9871, %v10769
    %v10848 = vsel %vm2336, %v9876, %v10771
    %v10849 = vsel %vm2336, %v9879, %v10773
    %v10850 = vsel %vm2336, %v9884, %v10775
    %v10851 = vsel %vm2336, %v9887, %v10777
    %v10852 = vsel %vm2336, %v9892, %v10779
    %v10853 = vsel %vm2336, %v9895, %v10781
    %v10854 = vsel %vm2336, %v9900, %v10783
    %v10855 = vsel %vm2336, %v9903, %v10785
    %v10856 = vsel %vm2336, %v9908, %v10787
    %v10857 = vsel %vm2336, %v9911, %v10789
    %v10858 = vsel %vm2336, %v9916, %v10791
    %v10859 = vsel %vm2336, %v9919, %v10793
    %v10860 = vsel %vm2336, %v9924, %v10795
    %v10861 = vsel %vm2336, %v9927, %v10797
    %s10862 = scalar_lea.vmem [#allocation10], 576
    %v10863 = vld [vmem:[%s10862] sm:$0xff]
    %v10864 = vld [vmem:[%s10862 + $0x8] sm:$0xff]
    %v10865 = vld [vmem:[%s10862 + $0x10] sm:$0xff]
    %v10866 = vld [vmem:[%s10862 + $0x18] sm:$0xff]
    %v10867 = vld [vmem:[%s10862 + $0x20] sm:$0xff]
    %v10868 = vld [vmem:[%s10862 + $0x28] sm:$0xff]
    %v10869 = vld [vmem:[%s10862 + $0x30] sm:$0xff]
    %v10870 = vld [vmem:[%s10862 + $0x38] sm:$0xff]
    %v10871 = vld [vmem:[%s10862 + $0x40] sm:$0xff]
    %v10872 = vld [vmem:[%s10862 + $0x48] sm:$0xff]
    %v10873 = vld [vmem:[%s10862 + $0x50] sm:$0xff]
    %v10874 = vld [vmem:[%s10862 + $0x58] sm:$0xff]
    %v10875 = vld [vmem:[%s10862 + $0x60] sm:$0xff]
    %v10876 = vld [vmem:[%s10862 + $0x68] sm:$0xff]
    %v10877 = vld [vmem:[%s10862 + $0x70] sm:$0xff]
    %v10878 = vld [vmem:[%s10862 + $0x78] sm:$0xff]
    %v10879 = vld [vmem:[%s10862 + $0x80] sm:$0xff]
    %v10880 = vld [vmem:[%s10862 + $0x88] sm:$0xff]
    %v10881 = vld [vmem:[%s10862 + $0x90] sm:$0xff]
    %v10882 = vld [vmem:[%s10862 + $0x98] sm:$0xff]
    %v10883 = vld [vmem:[%s10862 + $0xa0] sm:$0xff]
    %v10884 = vld [vmem:[%s10862 + $0xa8] sm:$0xff]
    %v10885 = vld [vmem:[%s10862 + $0xb0] sm:$0xff]
    %v10886 = vld [vmem:[%s10862 + $0xb8] sm:$0xff]
    %s10887 = scalar_lea.vmem [#allocation12], 6
    %v10888 = vld [vmem:[%s10887] sm:$0x3]
    %v10890 = vlaneseq
    %v10891 = vshrl.u32 %v10890, 7
    %v10892 = vsub.s32 0, %v10891
    %v10893 = vrot.slane %v10888, %v10892
    %v10894 = vlaneseq
    %v10895 = vshrl.u32 %v10894, 7
    %v10896 = vsub.s32 1, %v10895
    %v10897 = vrot.slane %v10888, %v10896
    %v10924 = vunpack.c.l.b16 %v10863
    %v10925 = vunpack.c.h.b16 %v10863
    %v10926 = vunpack.c.l.b16 %v10864
    %v10927 = vunpack.c.h.b16 %v10864
    %v10928 = vunpack.c.l.b16 %v10865
    %v10929 = vunpack.c.h.b16 %v10865
    %v10930 = vunpack.c.l.b16 %v10866
    %v10931 = vunpack.c.h.b16 %v10866
    %v10932 = vunpack.c.l.b16 %v10867
    %v10933 = vunpack.c.h.b16 %v10867
    %v10934 = vunpack.c.l.b16 %v10868
    %v10935 = vunpack.c.h.b16 %v10868
    %v10936 = vunpack.c.l.b16 %v10869
    %v10937 = vunpack.c.h.b16 %v10869
    %v10938 = vunpack.c.l.b16 %v10870
    %v10939 = vunpack.c.h.b16 %v10870
    %v10940 = vunpack.c.l.b16 %v10871
    %v10941 = vunpack.c.h.b16 %v10871
    %v10942 = vunpack.c.l.b16 %v10872
    %v10943 = vunpack.c.h.b16 %v10872
    %v10944 = vunpack.c.l.b16 %v10873
    %v10945 = vunpack.c.h.b16 %v10873
    %v10946 = vunpack.c.l.b16 %v10874
    %v10947 = vunpack.c.h.b16 %v10874
    %v10948 = vunpack.c.l.b16 %v10875
    %v10949 = vunpack.c.h.b16 %v10875
    %v10950 = vunpack.c.l.b16 %v10876
    %v10951 = vunpack.c.h.b16 %v10876
    %v10952 = vunpack.c.l.b16 %v10877
    %v10953 = vunpack.c.h.b16 %v10877
    %v10954 = vunpack.c.l.b16 %v10878
    %v10955 = vunpack.c.h.b16 %v10878
    %v10956 = vunpack.c.l.b16 %v10879
    %v10957 = vunpack.c.h.b16 %v10879
    %v10958 = vunpack.c.l.b16 %v10880
    %v10959 = vunpack.c.h.b16 %v10880
    %v10960 = vunpack.c.l.b16 %v10881
    %v10961 = vunpack.c.h.b16 %v10881
    %v10962 = vunpack.c.l.b16 %v10882
    %v10963 = vunpack.c.h.b16 %v10882
    %v10964 = vunpack.c.l.b16 %v10883
    %v10965 = vunpack.c.h.b16 %v10883
    %v10966 = vunpack.c.l.b16 %v10884
    %v10967 = vunpack.c.h.b16 %v10884
    %v10968 = vunpack.c.l.b16 %v10885
    %v10969 = vunpack.c.h.b16 %v10885
    %v10970 = vunpack.c.l.b16 %v10886
    %v10971 = vunpack.c.h.b16 %v10886
    %v10972 = vpack.c.b16 %v10926, %v10924
    %v10973 = vpack.c.b16 %v10927, %v10925
    %v10974 = vpack.c.b16 %v10930, %v10928
    %v10975 = vpack.c.b16 %v10931, %v10929
    %v10976 = vpack.c.b16 %v10934, %v10932
    %v10977 = vpack.c.b16 %v10935, %v10933
    %v10978 = vpack.c.b16 %v10938, %v10936
    %v10979 = vpack.c.b16 %v10939, %v10937
    %v10980 = vpack.c.b16 %v10942, %v10940
    %v10981 = vpack.c.b16 %v10943, %v10941
    %v10982 = vpack.c.b16 %v10946, %v10944
    %v10983 = vpack.c.b16 %v10947, %v10945
    %v10984 = vpack.c.b16 %v10950, %v10948
    %v10985 = vpack.c.b16 %v10951, %v10949
    %v10986 = vpack.c.b16 %v10954, %v10952
    %v10987 = vpack.c.b16 %v10955, %v10953
    %v10988 = vpack.c.b16 %v10958, %v10956
    %v10989 = vpack.c.b16 %v10959, %v10957
    %v10990 = vpack.c.b16 %v10962, %v10960
    %v10991 = vpack.c.b16 %v10963, %v10961
    %v10992 = vpack.c.b16 %v10966, %v10964
    %v10993 = vpack.c.b16 %v10967, %v10965
    %v10994 = vpack.c.b16 %v10970, %v10968
    %v10995 = vpack.c.b16 %v10971, %v10969
    %11020 = vmatprep.subr.bf16.mxu0 %v10973
    %11021 = vmatpush1.bf16.msra.mxu0 %v10972
    %11022 = vmatprep.subr.bf16.mxu0 %v10975
    %11023 = vmatpush1.bf16.msra.mxu0 %v10974
    %11024 = vmatprep.subr.bf16.mxu0 %v10977
    %11025 = vmatpush1.bf16.msra.mxu0 %v10976
    %11026 = vmatprep.subr.bf16.mxu0 %v10979
    %11027 = vmatpush1.bf16.msra.mxu0 %v10978
    %11028 = vmatprep.subr.bf16.mxu0 %v10981
    %11029 = vmatpush1.bf16.msra.mxu0 %v10980
    %11030 = vmatprep.subr.bf16.mxu0 %v10983
    %11031 = vmatpush1.bf16.msra.mxu0 %v10982
    %11032 = vmatprep.subr.bf16.mxu0 %v10985
    %11033 = vmatpush1.bf16.msra.mxu0 %v10984
    %11034 = vmatprep.subr.bf16.mxu0 %v10987
    %11035 = vmatpush1.bf16.msra.mxu0 %v10986
    %11036 = vmatprep.subr.bf16.mxu0 %v10989
    %11037 = vmatpush1.bf16.msra.mxu0 %v10988
    %11038 = vmatprep.subr.bf16.mxu0 %v10991
    %11039 = vmatpush1.bf16.msra.mxu0 %v10990
    %11040 = vmatprep.subr.bf16.mxu0 %v10993
    %11041 = vmatpush1.bf16.msra.mxu0 %v10992
    %11042 = vmatprep.subr.bf16.mxu0 %v10995
    %11043 = vmatpush1.bf16.msra.mxu0 %v10994
    %11044 = vmatprep.subr.bf16.mxu0 0
    %11045 = vmatpush1.bf16.msra.mxu0 0
    %11046 = vmatprep.subr.bf16.mxu0 0
    %11047 = vmatpush1.bf16.msra.mxu0 0
    %11048 = vmatprep.subr.bf16.mxu0 0
    %11049 = vmatpush1.bf16.msra.mxu0 0
    %11050 = vmatprep.subr.bf16.mxu0 0
    %11051 = vmatpush1.bf16.msra.mxu0 0
    %11052 = vmatprep.mubr.bf16.mxu0 %v9304
    %11053 = vmatmul.mubr.bf16.gmra.mrb[0].mxu0 %v9113
    %v11054 = vpop.f32.mrb[0].mxu0
    %v11055 = vadd.f32 %v10893, %v11054
    %v11056 = vpop.f32.mrb[0].mxu0
    %v11057 = vadd.f32 %v10897, %v11056
    %v11058 = vpop.f32.mrb[0].mxu0
    %v11059 = vadd.f32 %v10893, %v11058
    %v11060 = vpop.f32.mrb[0].mxu0
    %v11061 = vadd.f32 %v10897, %v11060
    %11062 = vmatprep.mubr.bf16.mxu0 %v9307
    %11063 = vmatmul.mubr.bf16.gmra.mrb[0].mxu0 %v9115
    %v11064 = vpop.f32.mrb[0].mxu0
    %v11065 = vadd.f32 %v10893, %v11064
    %v11066 = vpop.f32.mrb[0].mxu0
    %v11067 = vadd.f32 %v10897, %v11066
    %v11068 = vpop.f32.mrb[0].mxu0
    %v11069 = vadd.f32 %v10893, %v11068
    %v11070 = vpop.f32.mrb[0].mxu0
    %v11071 = vadd.f32 %v10897, %v11070
    %11072 = vmatprep.mubr.bf16.mxu0 %v9310
    %11073 = vmatmul.mubr.bf16.gmra.mrb[0].mxu0 %v9117
    %v11074 = vpop.f32.mrb[0].mxu0
    %v11075 = vadd.f32 %v10893, %v11074
    %v11076 = vpop.f32.mrb[0].mxu0
    %v11077 = vadd.f32 %v10897, %v11076
    %v11078 = vpop.f32.mrb[0].mxu0
    %v11079 = vadd.f32 %v10893, %v11078
    %v11080 = vpop.f32.mrb[0].mxu0
    %v11081 = vadd.f32 %v10897, %v11080
    %11082 = vmatprep.mubr.bf16.mxu0 %v9313
    %11083 = vmatmul.mubr.bf16.gmra.mrb[0].mxu0 %v9119
    %v11084 = vpop.f32.mrb[0].mxu0
    %v11085 = vadd.f32 %v10893, %v11084
    %v11086 = vpop.f32.mrb[0].mxu0
    %v11087 = vadd.f32 %v10897, %v11086
    %v11088 = vpop.f32.mrb[0].mxu0
    %v11089 = vadd.f32 %v10893, %v11088
    %v11090 = vpop.f32.mrb[0].mxu0
    %v11091 = vadd.f32 %v10897, %v11090
    %11092 = vmatprep.mubr.bf16.mxu0 %v9316
    %11093 = vmatmul.mubr.bf16.gmra.mrb[0].mxu0 %v9121
    %v11094 = vpop.f32.mrb[0].mxu0
    %v11095 = vadd.f32 %v10893, %v11094
    %v11096 = vpop.f32.mrb[0].mxu0
    %v11097 = vadd.f32 %v10897, %v11096
    %v11098 = vpop.f32.mrb[0].mxu0
    %v11099 = vadd.f32 %v10893, %v11098
    %v11100 = vpop.f32.mrb[0].mxu0
    %v11101 = vadd.f32 %v10897, %v11100
    %11102 = vmatprep.mubr.bf16.mxu0 %v9319
    %11103 = vmatmul.mubr.bf16.gmra.mrb[0].mxu0 %v9123
    %v11104 = vpop.f32.mrb[0].mxu0
    %v11105 = vadd.f32 %v10893, %v11104
    %v11106 = vpop.f32.mrb[0].mxu0
    %v11107 = vadd.f32 %v10897, %v11106
    %v11108 = vpop.f32.mrb[0].mxu0
    %v11109 = vadd.f32 %v10893, %v11108
    %v11110 = vpop.f32.mrb[0].mxu0
    %v11111 = vadd.f32 %v10897, %v11110
    %11112 = vmatprep.mubr.bf16.mxu0 %v9322
    %11113 = vmatmul.mubr.bf16.gmra.mrb[0].mxu0 %v9125
    %v11114 = vpop.f32.mrb[0].mxu0
    %v11115 = vadd.f32 %v10893, %v11114
    %v11116 = vpop.f32.mrb[0].mxu0
    %v11117 = vadd.f32 %v10897, %v11116
    %v11118 = vpop.f32.mrb[0].mxu0
    %v11119 = vadd.f32 %v10893, %v11118
    %v11120 = vpop.f32.mrb[0].mxu0
    %v11121 = vadd.f32 %v10897, %v11120
    %11122 = vmatprep.mubr.bf16.mxu0 %v9325
    %11123 = vmatmul.mubr.bf16.gmra.mrb[0].mxu0 %v9127
    %v11124 = vpop.f32.mrb[0].mxu0
    %v11125 = vadd.f32 %v10893, %v11124
    %v11126 = vpop.f32.mrb[0].mxu0
    %v11127 = vadd.f32 %v10897, %v11126
    %v11128 = vpop.f32.mrb[0].mxu0
    %v11129 = vadd.f32 %v10893, %v11128
    %v11130 = vpop.f32.mrb[0].mxu0
    %v11131 = vadd.f32 %v10897, %v11130
    %11132 = vmatprep.mubr.bf16.mxu0 %v9328
    %11133 = vmatmul.mubr.bf16.gmra.mrb[0].mxu0 %v9129
    %v11134 = vpop.f32.mrb[0].mxu0
    %v11135 = vadd.f32 %v10893, %v11134
    %v11136 = vpop.f32.mrb[0].mxu0
    %v11137 = vadd.f32 %v10897, %v11136
    %v11138 = vpop.f32.mrb[0].mxu0
    %v11139 = vadd.f32 %v10893, %v11138
    %v11140 = vpop.f32.mrb[0].mxu0
    %v11141 = vadd.f32 %v10897, %v11140
    %11142 = vmatprep.mubr.bf16.mxu0 %v9331
    %11143 = vmatmul.mubr.bf16.gmra.mrb[0].mxu0 %v9131
    %v11144 = vpop.f32.mrb[0].mxu0
    %v11145 = vadd.f32 %v10893, %v11144
    %v11146 = vpop.f32.mrb[0].mxu0
    %v11147 = vadd.f32 %v10897, %v11146
    %v11148 = vpop.f32.mrb[0].mxu0
    %v11149 = vadd.f32 %v10893, %v11148
    %v11150 = vpop.f32.mrb[0].mxu0
    %v11151 = vadd.f32 %v10897, %v11150
    %11152 = vmatprep.mubr.bf16.mxu0 %v9334
    %11153 = vmatmul.mubr.bf16.gmra.mrb[0].mxu0 %v9133
    %v11154 = vpop.f32.mrb[0].mxu0
    %v11155 = vadd.f32 %v10893, %v11154
    %v11156 = vpop.f32.mrb[0].mxu0
    %v11157 = vadd.f32 %v10897, %v11156
    %v11158 = vpop.f32.mrb[0].mxu0
    %v11159 = vadd.f32 %v10893, %v11158
    %v11160 = vpop.f32.mrb[0].mxu0
    %v11161 = vadd.f32 %v10897, %v11160
    %11162 = vmatprep.mubr.bf16.mxu0 %v9337
    %11163 = vmatmul.mubr.bf16.gmra.mrb[0].mxu0 %v9135
    %v11164 = vpop.f32.mrb[0].mxu0
    %v11165 = vadd.f32 %v10893, %v11164
    %v11166 = vpop.f32.mrb[0].mxu0
    %v11167 = vadd.f32 %v10897, %v11166
    %v11168 = vpop.f32.mrb[0].mxu0
    %v11169 = vadd.f32 %v10893, %v11168
    %v11170 = vpop.f32.mrb[0].mxu0
    %v11171 = vadd.f32 %v10897, %v11170
    %11172 = vmatprep.mubr.bf16.mxu0 %v9340
    %11173 = vmatmul.mubr.bf16.gmra.mrb[0].mxu0 %v9137
    %v11174 = vpop.f32.mrb[0].mxu0
    %v11175 = vadd.f32 %v10893, %v11174
    %v11176 = vpop.f32.mrb[0].mxu0
    %v11177 = vadd.f32 %v10897, %v11176
    %v11178 = vpop.f32.mrb[0].mxu0
    %v11179 = vadd.f32 %v10893, %v11178
    %v11180 = vpop.f32.mrb[0].mxu0
    %v11181 = vadd.f32 %v10897, %v11180
    %11182 = vmatprep.mubr.bf16.mxu0 %v9343
    %11183 = vmatmul.mubr.bf16.gmra.mrb[0].mxu0 %v9139
    %v11184 = vpop.f32.mrb[0].mxu0
    %v11185 = vadd.f32 %v10893, %v11184
    %v11186 = vpop.f32.mrb[0].mxu0
    %v11187 = vadd.f32 %v10897, %v11186
    %v11188 = vpop.f32.mrb[0].mxu0
    %v11189 = vadd.f32 %v10893, %v11188
    %v11190 = vpop.f32.mrb[0].mxu0
    %v11191 = vadd.f32 %v10897, %v11190
    %11192 = vmatprep.mubr.bf16.mxu0 %v9346
    %11193 = vmatmul.mubr.bf16.gmra.mrb[0].mxu0 %v9141
    %v11194 = vpop.f32.mrb[0].mxu0
    %v11195 = vadd.f32 %v10893, %v11194
    %v11196 = vpop.f32.mrb[0].mxu0
    %v11197 = vadd.f32 %v10897, %v11196
    %v11198 = vpop.f32.mrb[0].mxu0
    %v11199 = vadd.f32 %v10893, %v11198
    %v11200 = vpop.f32.mrb[0].mxu0
    %v11201 = vadd.f32 %v10897, %v11200
    %11202 = vmatprep.mubr.bf16.mxu0 %v9349
    %11203 = vmatmul.mubr.bf16.gmra.mrb[0].mxu0 %v9143
    %v11204 = vpop.f32.mrb[0].mxu0
    %v11205 = vadd.f32 %v10893, %v11204
    %v11206 = vpop.f32.mrb[0].mxu0
    %v11207 = vadd.f32 %v10897, %v11206
    %v11208 = vpop.f32.mrb[0].mxu0
    %v11209 = vadd.f32 %v10893, %v11208
    %v11210 = vpop.f32.mrb[0].mxu0
    %v11211 = vadd.f32 %v10897, %v11210
    %11212 = vdwg.mxu0
    %v11213 = vadd.f32 %v10830, %v11055
    %v11214 = vadd.f32 %v10576, %v11057
    %v11215 = vadd.f32 %v10831, %v11059
    %v11216 = vadd.f32 %v10579, %v11061
    %v11217 = vadd.f32 %v10832, %v11065
    %v11218 = vadd.f32 %v10584, %v11067
    %v11219 = vadd.f32 %v10833, %v11069
    %v11220 = vadd.f32 %v10587, %v11071
    %v11221 = vadd.f32 %v10834, %v11075
    %v11222 = vadd.f32 %v10592, %v11077
    %v11223 = vadd.f32 %v10835, %v11079
    %v11224 = vadd.f32 %v10595, %v11081
    %v11225 = vadd.f32 %v10836, %v11085
    %v11226 = vadd.f32 %v10600, %v11087
    %v11227 = vadd.f32 %v10837, %v11089
    %v11228 = vadd.f32 %v10603, %v11091
    %v11229 = vadd.f32 %v10838, %v11095
    %v11230 = vadd.f32 %v10608, %v11097
    %v11231 = vadd.f32 %v10839, %v11099
    %v11232 = vadd.f32 %v10611, %v11101
    %v11233 = vadd.f32 %v10840, %v11105
    %v11234 = vadd.f32 %v10616, %v11107
    %v11235 = vadd.f32 %v10841, %v11109
    %v11236 = vadd.f32 %v10619, %v11111
    %v11237 = vadd.f32 %v10842, %v11115
    %v11238 = vadd.f32 %v10624, %v11117
    %v11239 = vadd.f32 %v10843, %v11119
    %v11240 = vadd.f32 %v10627, %v11121
    %v11241 = vadd.f32 %v10844, %v11125
    %v11242 = vadd.f32 %v10632, %v11127
    %v11243 = vadd.f32 %v10845, %v11129
    %v11244 = vadd.f32 %v10635, %v11131
    %v11245 = vadd.f32 %v10846, %v11135
    %v11246 = vadd.f32 %v10640, %v11137
    %v11247 = vadd.f32 %v10847, %v11139
    %v11248 = vadd.f32 %v10643, %v11141
    %v11249 = vadd.f32 %v10848, %v11145
    %v11250 = vadd.f32 %v10648, %v11147
    %v11251 = vadd.f32 %v10849, %v11149
    %v11252 = vadd.f32 %v10651, %v11151
    %v11253 = vadd.f32 %v10850, %v11155
    %v11254 = vadd.f32 %v10656, %v11157
    %v11255 = vadd.f32 %v10851, %v11159
    %v11256 = vadd.f32 %v10659, %v11161
    %v11257 = vadd.f32 %v10852, %v11165
    %v11258 = vadd.f32 %v10664, %v11167
    %v11259 = vadd.f32 %v10853, %v11169
    %v11260 = vadd.f32 %v10667, %v11171
    %v11261 = vadd.f32 %v10854, %v11175
    %v11262 = vadd.f32 %v10672, %v11177
    %v11263 = vadd.f32 %v10855, %v11179
    %v11264 = vadd.f32 %v10675, %v11181
    %v11265 = vadd.f32 %v10856, %v11185
    %v11266 = vadd.f32 %v10680, %v11187
    %v11267 = vadd.f32 %v10857, %v11189
    %v11268 = vadd.f32 %v10683, %v11191
    %v11269 = vadd.f32 %v10858, %v11195
    %v11270 = vadd.f32 %v10688, %v11197
    %v11271 = vadd.f32 %v10859, %v11199
    %v11272 = vadd.f32 %v10691, %v11201
    %v11273 = vadd.f32 %v10860, %v11205
    %v11274 = vadd.f32 %v10696, %v11207
    %v11275 = vadd.f32 %v10861, %v11209
    %v11276 = vadd.f32 %v10699, %v11211
    %v11277 = vmax.f32 %v11213, 0.0
    %v11278 = vmax.f32 %v11214, 0.0
    %v11279 = vmax.f32 %v11215, 0.0
    %v11280 = vmax.f32 %v11216, 0.0
    %v11281 = vmax.f32 %v11217, 0.0
    %v11282 = vmax.f32 %v11218, 0.0
    %v11283 = vmax.f32 %v11219, 0.0
    %v11284 = vmax.f32 %v11220, 0.0
    %v11285 = vmax.f32 %v11221, 0.0
    %v11286 = vmax.f32 %v11222, 0.0
    %v11287 = vmax.f32 %v11223, 0.0
    %v11288 = vmax.f32 %v11224, 0.0
    %v11289 = vmax.f32 %v11225, 0.0
    %v11290 = vmax.f32 %v11226, 0.0
    %v11291 = vmax.f32 %v11227, 0.0
    %v11292 = vmax.f32 %v11228, 0.0
    %v11293 = vmax.f32 %v11229, 0.0
    %v11294 = vmax.f32 %v11230, 0.0
    %v11295 = vmax.f32 %v11231, 0.0
    %v11296 = vmax.f32 %v11232, 0.0
    %v11297 = vmax.f32 %v11233, 0.0
    %v11298 = vmax.f32 %v11234, 0.0
    %v11299 = vmax.f32 %v11235, 0.0
    %v11300 = vmax.f32 %v11236, 0.0
    %v11301 = vmax.f32 %v11237, 0.0
    %v11302 = vmax.f32 %v11238, 0.0
    %v11303 = vmax.f32 %v11239, 0.0
    %v11304 = vmax.f32 %v11240, 0.0
    %v11305 = vmax.f32 %v11241, 0.0
    %v11306 = vmax.f32 %v11242, 0.0
    %v11307 = vmax.f32 %v11243, 0.0
    %v11308 = vmax.f32 %v11244, 0.0
    %v11309 = vmax.f32 %v11245, 0.0
    %v11310 = vmax.f32 %v11246, 0.0
    %v11311 = vmax.f32 %v11247, 0.0
    %v11312 = vmax.f32 %v11248, 0.0
    %v11313 = vmax.f32 %v11249, 0.0
    %v11314 = vmax.f32 %v11250, 0.0
    %v11315 = vmax.f32 %v11251, 0.0
    %v11316 = vmax.f32 %v11252, 0.0
    %v11317 = vmax.f32 %v11253, 0.0
    %v11318 = vmax.f32 %v11254, 0.0
    %v11319 = vmax.f32 %v11255, 0.0
    %v11320 = vmax.f32 %v11256, 0.0
    %v11321 = vmax.f32 %v11257, 0.0
    %v11322 = vmax.f32 %v11258, 0.0
    %v11323 = vmax.f32 %v11259, 0.0
    %v11324 = vmax.f32 %v11260, 0.0
    %v11325 = vmax.f32 %v11261, 0.0
    %v11326 = vmax.f32 %v11262, 0.0
    %v11327 = vmax.f32 %v11263, 0.0
    %v11328 = vmax.f32 %v11264, 0.0
    %v11329 = vmax.f32 %v11265, 0.0
    %v11330 = vmax.f32 %v11266, 0.0
    %v11331 = vmax.f32 %v11267, 0.0
    %v11332 = vmax.f32 %v11268, 0.0
    %v11333 = vmax.f32 %v11269, 0.0
    %v11334 = vmax.f32 %v11270, 0.0
    %v11335 = vmax.f32 %v11271, 0.0
    %v11336 = vmax.f32 %v11272, 0.0
    %v11337 = vmax.f32 %v11273, 0.0
    %v11338 = vmax.f32 %v11274, 0.0
    %v11339 = vmax.f32 %v11275, 0.0
    %v11340 = vmax.f32 %v11276, 0.0
    %v11341 = vld [vmem:[#allocation16] sm:$0xff]
    %v11342 = vld [vmem:[#allocation16 + $0x8] sm:$0xff]
    %v11343 = vpack.c.bf16 %v11279, %v11277
    %v11344 = vpack.c.bf16 %v11280, %v11278
    %v11345 = vpack.c.bf16 %v11283, %v11281
    %v11346 = vpack.c.bf16 %v11284, %v11282
    %v11347 = vpack.c.bf16 %v11287, %v11285
    %v11348 = vpack.c.bf16 %v11288, %v11286
    %v11349 = vpack.c.bf16 %v11291, %v11289
    %v11350 = vpack.c.bf16 %v11292, %v11290
    %v11351 = vpack.c.bf16 %v11295, %v11293
    %v11352 = vpack.c.bf16 %v11296, %v11294
    %v11353 = vpack.c.bf16 %v11299, %v11297
    %v11354 = vpack.c.bf16 %v11300, %v11298
    %v11355 = vpack.c.bf16 %v11303, %v11301
    %v11356 = vpack.c.bf16 %v11304, %v11302
    %v11357 = vpack.c.bf16 %v11307, %v11305
    %v11358 = vpack.c.bf16 %v11308, %v11306
    %v11359 = vpack.c.bf16 %v11311, %v11309
    %v11360 = vpack.c.bf16 %v11312, %v11310
    %v11361 = vpack.c.bf16 %v11315, %v11313
    %v11362 = vpack.c.bf16 %v11316, %v11314
    %v11363 = vpack.c.bf16 %v11319, %v11317
    %v11364 = vpack.c.bf16 %v11320, %v11318
    %v11365 = vpack.c.bf16 %v11323, %v11321
    %v11366 = vpack.c.bf16 %v11324, %v11322
    %v11367 = vpack.c.bf16 %v11327, %v11325
    %v11368 = vpack.c.bf16 %v11328, %v11326
    %v11369 = vpack.c.bf16 %v11331, %v11329
    %v11370 = vpack.c.bf16 %v11332, %v11330
    %v11371 = vpack.c.bf16 %v11335, %v11333
    %v11372 = vpack.c.bf16 %v11336, %v11334
    %v11373 = vpack.c.bf16 %v11339, %v11337
    %v11374 = vpack.c.bf16 %v11340, %v11338
    %v11377 = vunpack.c.l.b16 %v11341
    %v11378 = vunpack.c.h.b16 %v11341
    %v11379 = vunpack.c.l.b16 %v11342
    %v11380 = vunpack.c.h.b16 %v11342
    %v11381 = vpack.c.b16 %v11379, %v11377
    %v11382 = vpack.c.b16 %v11380, %v11378
    %11385 = vmatprep.subr.bf16.mxu0 %v11344
    %11386 = vmatpush1.bf16.msra.mxu0 %v11343
    %11387 = vmatprep.subr.bf16.mxu0 %v11346
    %11388 = vmatpush1.bf16.msra.mxu0 %v11345
    %11389 = vmatprep.subr.bf16.mxu0 %v11348
    %11390 = vmatpush1.bf16.msra.mxu0 %v11347
    %11391 = vmatprep.subr.bf16.mxu0 %v11350
    %11392 = vmatpush1.bf16.msra.mxu0 %v11349
    %11393 = vmatprep.subr.bf16.mxu0 %v11352
    %11394 = vmatpush1.bf16.msra.mxu0 %v11351
    %11395 = vmatprep.subr.bf16.mxu0 %v11354
    %11396 = vmatpush1.bf16.msra.mxu0 %v11353
    %11397 = vmatprep.subr.bf16.mxu0 %v11356
    %11398 = vmatpush1.bf16.msra.mxu0 %v11355
    %11399 = vmatprep.subr.bf16.mxu0 %v11358
    %11400 = vmatpush1.bf16.msra.mxu0 %v11357
    %11401 = vmatprep.subr.bf16.mxu0 %v11360
    %11402 = vmatpush1.bf16.msra.mxu0 %v11359
    %11403 = vmatprep.subr.bf16.mxu0 %v11362
    %11404 = vmatpush1.bf16.msra.mxu0 %v11361
    %11405 = vmatprep.subr.bf16.mxu0 %v11364
    %11406 = vmatpush1.bf16.msra.mxu0 %v11363
    %11407 = vmatprep.subr.bf16.mxu0 %v11366
    %11408 = vmatpush1.bf16.msra.mxu0 %v11365
    %11409 = vmatprep.subr.bf16.mxu0 %v11368
    %11410 = vmatpush1.bf16.msra.mxu0 %v11367
    %11411 = vmatprep.subr.bf16.mxu0 %v11370
    %11412 = vmatpush1.bf16.msra.mxu0 %v11369
    %11413 = vmatprep.subr.bf16.mxu0 %v11372
    %11414 = vmatpush1.bf16.msra.mxu0 %v11371
    %11415 = vmatprep.subr.bf16.mxu0 %v11374
    %11416 = vmatpush1.bf16.msra.mxu0 %v11373
    %11417 = vmatprep.mubr.bf16.mxu0 %v11382
    %11418 = vmatmul.mubr.bf16.gmra.mrb[0].mxu0 %v11381
    %v11419 = vpop.f32.mrb[0].mxu0
    %v11420 = vadd.f32 0.0, %v11419
    %v11421 = vpop.f32.mrb[0].mxu0
    %v11422 = vadd.f32 0.0, %v11421
    %v11423 = vpop.f32.mrb[0].mxu0
    %v11424 = vadd.f32 0.0, %v11423
    %v11425 = vpop.f32.mrb[0].mxu0
    %v11426 = vadd.f32 0.0, %v11425
    %11427 = vdwg.mxu0
    %v11428 = vpack.c.bf16 %v11424, %v11420
    %v11429 = vpack.c.bf16 %v11426, %v11422
    %v11430 = vld [vmem:[#allocation13] sm:$0xf]
    %v11431 = vld [vmem:[#allocation13 + $0x4] sm:$0xf]
    %v11432 = vld [vmem:[#allocation13 + $0x8] sm:$0xf]
    %v11433 = vld [vmem:[#allocation13 + $0xc] sm:$0xf]
    %v11434 = vld [vmem:[#allocation13 + $0x10] sm:$0xf]
    %v11435 = vld [vmem:[#allocation13 + $0x14] sm:$0xf]
    %v11436 = vld [vmem:[#allocation13 + $0x18] sm:$0xf]
    %v11437 = vld [vmem:[#allocation13 + $0x1c] sm:$0xf]
    %v11438 = vld [vmem:[#allocation13 + $0x20] sm:$0xf]
    %v11439 = vld [vmem:[#allocation13 + $0x24] sm:$0xf]
    %v11440 = vld [vmem:[#allocation13 + $0x28] sm:$0xf]
    %v11441 = vld [vmem:[#allocation13 + $0x2c] sm:$0xf]
    %v11442 = vld [vmem:[#allocation13 + $0x30] sm:$0xf]
    %v11443 = vld [vmem:[#allocation13 + $0x34] sm:$0xf]
    %v11444 = vld [vmem:[#allocation13 + $0x38] sm:$0xf]
    %v11445 = vld [vmem:[#allocation13 + $0x3c] sm:$0xf]
    %v11446 = vld [vmem:[#allocation13 + $0x40] sm:$0xf]
    %v11447 = vld [vmem:[#allocation13 + $0x44] sm:$0xf]
    %v11448 = vld [vmem:[#allocation13 + $0x48] sm:$0xf]
    %v11449 = vld [vmem:[#allocation13 + $0x4c] sm:$0xf]
    %v11450 = vld [vmem:[#allocation13 + $0x50] sm:$0xf]
    %v11451 = vld [vmem:[#allocation13 + $0x54] sm:$0xf]
    %v11452 = vld [vmem:[#allocation13 + $0x58] sm:$0xf]
    %v11453 = vld [vmem:[#allocation13 + $0x5c] sm:$0xf]
    %v11454 = vld [vmem:[#allocation15] sm:$0x1]
    %v11456 = vlaneseq
    %v11457 = vshrl.u32 %v11456, 7
    %v11458 = vsub.s32 0, %v11457
    %v11459 = vrot.slane %v11454, %v11458
    %v11485 = vunpack.c.l.b16 %v11430
    %v11486 = vunpack.c.l.b16 %v11431
    %v11487 = vunpack.c.l.b16 %v11432
    %v11488 = vunpack.c.l.b16 %v11433
    %v11489 = vunpack.c.l.b16 %v11434
    %v11490 = vunpack.c.l.b16 %v11435
    %v11491 = vunpack.c.l.b16 %v11436
    %v11492 = vunpack.c.l.b16 %v11437
    %v11493 = vunpack.c.l.b16 %v11438
    %v11494 = vunpack.c.l.b16 %v11439
    %v11495 = vunpack.c.l.b16 %v11440
    %v11496 = vunpack.c.l.b16 %v11441
    %v11497 = vunpack.c.l.b16 %v11442
    %v11498 = vunpack.c.l.b16 %v11443
    %v11499 = vunpack.c.l.b16 %v11444
    %v11500 = vunpack.c.l.b16 %v11445
    %v11501 = vunpack.c.l.b16 %v11446
    %v11502 = vunpack.c.l.b16 %v11447
    %v11503 = vunpack.c.l.b16 %v11448
    %v11504 = vunpack.c.l.b16 %v11449
    %v11505 = vunpack.c.l.b16 %v11450
    %v11506 = vunpack.c.l.b16 %v11451
    %v11507 = vunpack.c.l.b16 %v11452
    %v11508 = vunpack.c.l.b16 %v11453
    %v11509 = vpack.c.b16 %v11486, %v11485
    %v11510 = vpack.c.b16 %v11488, %v11487
    %v11511 = vpack.c.b16 %v11490, %v11489
    %v11512 = vpack.c.b16 %v11492, %v11491
    %v11513 = vpack.c.b16 %v11494, %v11493
    %v11514 = vpack.c.b16 %v11496, %v11495
    %v11515 = vpack.c.b16 %v11498, %v11497
    %v11516 = vpack.c.b16 %v11500, %v11499
    %v11517 = vpack.c.b16 %v11502, %v11501
    %v11518 = vpack.c.b16 %v11504, %v11503
    %v11519 = vpack.c.b16 %v11506, %v11505
    %v11520 = vpack.c.b16 %v11508, %v11507
    %v11534 = vsel %vm2336, %v11429, 0
    %11536 = vmatprep.subr.bf16.mxu0 0
    %11537 = vmatpush1.bf16.msra.mxu0 %v11509
    %11538 = vmatprep.subr.bf16.mxu0 0
    %11539 = vmatpush1.bf16.msra.mxu0 %v11510
    %11540 = vmatprep.subr.bf16.mxu0 0
    %11541 = vmatpush1.bf16.msra.mxu0 %v11511
    %11542 = vmatprep.subr.bf16.mxu0 0
    %11543 = vmatpush1.bf16.msra.mxu0 %v11512
    %11544 = vmatprep.subr.bf16.mxu0 0
    %11545 = vmatpush1.bf16.msra.mxu0 %v11513
    %11546 = vmatprep.subr.bf16.mxu0 0
    %11547 = vmatpush1.bf16.msra.mxu0 %v11514
    %11548 = vmatprep.subr.bf16.mxu0 0
    %11549 = vmatpush1.bf16.msra.mxu0 %v11515
    %11550 = vmatprep.subr.bf16.mxu0 0
    %11551 = vmatpush1.bf16.msra.mxu0 %v11516
    %11552 = vmatprep.subr.bf16.mxu0 0
    %11553 = vmatpush1.bf16.msra.mxu0 %v11517
    %11554 = vmatprep.subr.bf16.mxu0 0
    %11555 = vmatpush1.bf16.msra.mxu0 %v11518
    %11556 = vmatprep.subr.bf16.mxu0 0
    %11557 = vmatpush1.bf16.msra.mxu0 %v11519
    %11558 = vmatprep.subr.bf16.mxu0 0
    %11559 = vmatpush1.bf16.msra.mxu0 %v11520
    %11560 = vmatprep.subr.bf16.mxu0 0
    %11561 = vmatpush1.bf16.msra.mxu0 0
    %11562 = vmatprep.subr.bf16.mxu0 0
    %11563 = vmatpush1.bf16.msra.mxu0 0
    %11564 = vmatprep.subr.bf16.mxu0 0
    %11565 = vmatpush1.bf16.msra.mxu0 0
    %11566 = vmatprep.subr.bf16.mxu0 0
    %11567 = vmatpush1.bf16.msra.mxu0 0
    %11568 = vmatprep.mubr.bf16.mxu0 %v11534
    %11569 = vmatmul.mubr.bf16.gmra.mrb[0].mxu0 %v11428
    %v11570 = vpop.f32.mrb[0].mxu0
    %v11571 = vadd.f32 %v11459, %v11570
    %v11572 = vpop.f32.mrb[0].mxu0
    %v11573 = vpop.f32.mrb[0].mxu0
    %v11574 = vadd.f32 %v11459, %v11573
    %v11575 = vpop.f32.mrb[0].mxu0
    %11576 = vdwg.mxu0
    %11577 = vst [vmem:[%s11] sm:$0xff] %v11571
    %11578 = vst [vmem:[%s11 + $0x8] sm:$0xff] %v11574
    // Predicated region
    $region86: #{pallas_forward.1} parent=1 // pred_check
      _
    $region87: #{pallas_forward.1} parent=1 // pred_check_branch
      %11580 = sbr.rel (0) target = $region89
    $region88: #{pallas_forward.1} parent=1 // pred_region
      _
    $region89: #{pallas_forward.1} parent=1 // pred_fallthru
      _
    // Predicated region
    $region90: #{pallas_forward.1} parent=1 // pred_check
      _
    $region91: #{pallas_forward.1} parent=1 // pred_check_branch
      %11582 = sbr.rel (0) target = $region93
    $region92: #{pallas_forward.1} parent=1 // pred_region
      _
    $region93: #{pallas_forward.1} parent=1 // pred_fallthru
      _
    %11583 = vsyncpa [#allocation3], 1
    %11584 = vsyncpa [#allocation5], 1
    %11585 = vsyncpa [#allocation8], 1
    %11586 = vsyncpa [#allocation11], 1
    %11587 = vsyncpa [#allocation14], 1
    %11588 = vsyncpa [#allocation17], 1

</llo_original>
